<compile_context>
chip_gen: v7x
topology: tpu7x:2x2x1
jax: 0.10.0
libtpu: 0.0.40
codegen_flags: <defaults>
</compile_context>

<pallas_src>
import jax
import jax.numpy as jnp
from jax.experimental import pallas as pl
from jax.experimental.pallas import tpu as pltpu

EPS = 1e-5


def _pick_tm(M):
    for tm in (512, 256, 128):
        if M % tm == 0:
            return tm
    assert M % 8 == 0, "pixel count must be a multiple of 8"
    return M


# ---------- fused 3-branch 1x1 conv (one MXU matmul) + BN partial stats ------
def _fused_1x1_kernel(x_ref, w_ref, b_ref, y_ref, s_ref, ss_ref):
    @pl.when(pl.program_id(0) == 0)
    def _():
        s_ref[...] = jnp.zeros_like(s_ref)
        ss_ref[...] = jnp.zeros_like(ss_ref)

    y = jnp.dot(x_ref[...].astype(jnp.bfloat16), w_ref[...],
                preferred_element_type=jnp.float32) + b_ref[...]
    y_ref[...] = y
    s_ref[...] += jnp.sum(y, axis=0, keepdims=True)
    ss_ref[...] += jnp.sum(y * y, axis=0, keepdims=True)


def fused_conv1x1(x_mc, w_cat, b_cat):
    # x_mc: (M, 256) f32; w_cat: (256, 384) bf16; b_cat: (1, 384) f32
    M, Cin = x_mc.shape
    Cout = w_cat.shape[1]
    tm = _pick_tm(M)
    return pl.pallas_call(
        _fused_1x1_kernel,
        out_shape=(jax.ShapeDtypeStruct((M, Cout), jnp.float32),
                   jax.ShapeDtypeStruct((1, Cout), jnp.float32),
                   jax.ShapeDtypeStruct((1, Cout), jnp.float32)),
        grid=(M // tm,),
        in_specs=[
            pl.BlockSpec((tm, Cin), lambda i: (i, 0)),
            pl.BlockSpec((Cin, Cout), lambda i: (0, 0)),
            pl.BlockSpec((1, Cout), lambda i: (0, 0)),
        ],
        out_specs=(
            pl.BlockSpec((tm, Cout), lambda i: (i, 0)),
            pl.BlockSpec((1, Cout), lambda i: (0, 0)),   # stat accumulators
            pl.BlockSpec((1, Cout), lambda i: (0, 0)),
        ),
        compiler_params=pltpu.CompilerParams(
            dimension_semantics=("arbitrary",)),  # stats accumulate over tiles
    )(x_mc, w_cat, b_cat)


# ---- fused: BN affine + PReLU + spatial pad + KxK 'same' conv + bias --------
def _make_branch_kernel(K, NB, H, W):
    p = K // 2

    def kernel(t_ref, scale_ref, shift_ref, alpha_ref, w_ref, b_ref,
               o_ref, xpad_ref):
        # t_ref: (NB, H, W, 128) f32 pre-BN activations (padded chans are 0)
        y = t_ref[...] * scale_ref[...] + shift_ref[...]
        act = jnp.where(y >= 0.0, y, alpha_ref[...] * y)

        # spatial zero padding via VMEM scratch
        xpad_ref[...] = jnp.zeros_like(xpad_ref)
        xpad_ref[:, p:p + H, p:p + W, :] = act
        x = xpad_ref[...]                              # (NB, H+2p, W+2p, 128)

        acc = jnp.zeros((NB * H * W, 128), jnp.float32)
        for kx in range(K):
            # one sublane-shifted view per kx, reused across all ky taps
            xk = x[:, :, kx:kx + W, :].astype(jnp.bfloat16)
            for ky in range(K):
                patch = xk[:, ky:ky + H].reshape(NB * H * W, 128)
                acc = acc + jnp.dot(patch, w_ref[ky * K + kx],
                                    preferred_element_type=jnp.float32)
        o_ref[...] = acc + b_ref[...]

    return kernel


def branch_conv(t_nhwc, scale, shift, alpha, w, b, K):
    # t_nhwc: (N, H, W, 128) f32; w: (K*K, 128, 128) bf16; b: (1, 128) f32
    N, H, W, C = t_nhwc.shape
    assert C == 128
    # fold batch into the per-tap matmul M dimension (target M >= 128)
    NB = 1
    for cand in range(min(N, max(1, 128 // (H * W))), 0, -1):
        if N % cand == 0:
            NB = cand
            break
    Hp, Wp = H + (K - 1), W + (K - 1)
    return pl.pallas_call(
        _make_branch_kernel(K, NB, H, W),
        out_shape=jax.ShapeDtypeStruct((N * H * W, 128), jnp.float32),
        grid=(N // NB,),
        in_specs=[
            pl.BlockSpec((NB, H, W, C), lambda g: (g, 0, 0, 0)),
            pl.BlockSpec((1, C), lambda g: (0, 0)),
            pl.BlockSpec((1, C), lambda g: (0, 0)),
            pl.BlockSpec((1, 1), lambda g: (0, 0)),
            pl.BlockSpec((K * K, C, C), lambda g: (0, 0, 0)),
            pl.BlockSpec((1, C), lambda g: (0, 0)),
        ],
        out_specs=pl.BlockSpec((NB * H * W, 128), lambda g: (g, 0)),
        scratch_shapes=[pltpu.VMEM((NB, Hp, Wp, C), jnp.float32)],
        compiler_params=pltpu.CompilerParams(
            dimension_semantics=("parallel",)),
    )(t_nhwc, scale, shift, alpha, w, b)


# ------------- fused final: in-kernel batch stats + BN affine + PReLU --------
def _final_bn_prelu_kernel(x_ref, g_ref, b_ref, a_ref, o_ref):
    x = x_ref[...]                                   # (M, 256) f32
    inv_m = 1.0 / x.shape[0]
    mean = jnp.sum(x, axis=0, keepdims=True) * inv_m
    d = x - mean
    var = jnp.sum(d * d, axis=0, keepdims=True) * inv_m   # biased (ddof=0)
    scale = g_ref[...] * jax.lax.rsqrt(var + EPS)
    shift = b_ref[...] - mean * scale
    y = x * scale + shift
    o_ref[...] = jnp.where(y >= 0.0, y, a_ref[...] * y)


def final_bn_prelu(x_mc, gamma, beta, alpha):
    M, C = x_mc.shape
    return pl.pallas_call(
        _final_bn_prelu_kernel,
        out_shape=jax.ShapeDtypeStruct((M, C), jnp.float32),
        grid=(1,),
        in_specs=[
            pl.BlockSpec((M, C), lambda i: (0, 0)),
            pl.BlockSpec((1, C), lambda i: (0, 0)),
            pl.BlockSpec((1, C), lambda i: (0, 0)),
            pl.BlockSpec((1, 1), lambda i: (0, 0)),
        ],
        out_specs=pl.BlockSpec((M, C), lambda i: (0, 0)),
    )(x_mc, gamma, beta, alpha)


# ---------------------------------- forward ----------------------------------
def mod_inception_forward(x_nchw, prm):
    N, C, H, W = x_nchw.shape
    assert C == 256, "module is only well-formed at channels=256 (60+70+126)"
    x = jnp.transpose(x_nchw, (0, 2, 3, 1)).astype(jnp.float32)   # NHWC
    M = N * H * W
    xf = x.reshape(M, C)

    # fused three-branch 1x1 conv (+ per-channel sum / sumsq for branch BN)
    y_pad, s, ss = fused_conv1x1(xf, prm["w_1x1"], prm["b_1x1"])

    # tiny (384,) finalize of training-mode BN stats -> scale/shift
    mean = s[0] / M
    var = jnp.maximum(ss[0] / M - mean * mean, 0.0)               # biased var
    scale_all = prm["bn_branch_gamma"] * jax.lax.rsqrt(var + EPS)
    shift_all = prm["bn_branch_beta"] - mean * scale_all

    y1p = y_pad[:, 0:128]                                         # branch 1
    t2p = y_pad[:, 128:256].reshape(N, H, W, 128)                 # branch 2
    t3p = y_pad[:, 256:384].reshape(N, H, W, 128)                 # branch 3

    c3 = branch_conv(t2p, scale_all[128:256].reshape(1, 128),
                     shift_all[128:256].reshape(1, 128), prm["prelu2_a"],
                     prm["w3x3"], prm["b3x3"], K=3)
    c5 = branch_conv(t3p, scale_all[256:384].reshape(1, 128),
                     shift_all[256:384].reshape(1, 128), prm["prelu3_a"],
                     prm["w5x5"], prm["b5x5"], K=5)

    cat = jnp.concatenate([y1p[:, :60], c3[:, :70], c5[:, :126]], axis=-1)
    out = final_bn_prelu(cat, prm["bn_gamma"], prm["bn_beta"], prm["prelu_a"])
    return out.reshape(N, H, W, C).transpose(0, 3, 1, 2)          # back to NCHW


# --------------------------- deterministic params ----------------------------
def init_params(key, channels=256):
    assert channels == 256
    ks = jax.random.split(key, 10)

    def w(k, shape, fan_in):
        return jax.random.normal(k, shape, jnp.float32) / jnp.sqrt(float(fan_in))

    def b(k, n):
        return 0.01 * jax.random.normal(k, (n,), jnp.float32)

    w1 = w(ks[0], (channels, 60), channels);          b1 = b(ks[1], 60)
    w2a = w(ks[2], (channels, 70), channels);         b2a = b(ks[3], 70)
    w2b = w(ks[4], (9, 70, 70), 70 * 9);              b2b = b(ks[5], 70)
    w3a = w(ks[6], (channels, 126), channels);        b3a = b(ks[7], 126)
    w3b = w(ks[8], (25, 126, 126), 126 * 25);         b3b = b(ks[9], 126)

    p = {}
    # fused, lane-padded 1x1 weights: (256, 384) = [w1|0][w2a|0][w3a|0]
    wcat = jnp.zeros((channels, 384), jnp.float32)
    wcat = wcat.at[:, 0:60].set(w1).at[:, 128:198].set(w2a).at[:, 256:382].set(w3a)
    bcat = jnp.zeros((384,), jnp.float32)
    bcat = bcat.at[0:60].set(b1).at[128:198].set(b2a).at[256:382].set(b3a)
    p["w_1x1"] = wcat.astype(jnp.bfloat16)            # bf16 MXU operand
    p["b_1x1"] = bcat.reshape(1, 384)

    # branch BN gamma/beta packed into the same padded 384 layout
    # (padded / branch-1 slots are 0 -> padded channels stay exactly 0)
    g = jnp.zeros((384,), jnp.float32)
    g = g.at[128:198].set(jnp.ones((70,), jnp.float32))
    g = g.at[256:382].set(jnp.ones((126,), jnp.float32))
    p["bn_branch_gamma"] = g
    p["bn_branch_beta"] = jnp.zeros((384,), jnp.float32)

    # KxK conv weights / biases, channel-padded 70->128 and 126->128
    w2b_p = jnp.zeros((9, 128, 128), jnp.float32).at[:, :70, :70].set(w2b)
    w3b_p = jnp.zeros((25, 128, 128), jnp.float32).at[:, :126, :126].set(w3b)
    p["w3x3"] = w2b_p.astype(jnp.bfloat16)
    p["b3x3"] = jnp.zeros((128,), jnp.float32).at[:70].set(b2b).reshape(1, 128)
    p["w5x5"] = w3b_p.astype(jnp.bfloat16)
    p["b5x5"] = jnp.zeros((128,), jnp.float32).at[:126].set(b3b).reshape(1, 128)

    # final BatchNorm / PReLU at PyTorch default init
    p["bn_gamma"] = jnp.ones((1, channels), jnp.float32)
    p["bn_beta"] = jnp.zeros((1, channels), jnp.float32)
    p["prelu2_a"] = jnp.full((1, 1), 0.25, jnp.float32)
    p["prelu3_a"] = jnp.full((1, 1), 0.25, jnp.float32)
    p["prelu_a"] = jnp.full((1, 1), 0.25, jnp.float32)
    return p


if __name__ == "__main__":
    key = jax.random.PRNGKey(0)
    kx_, kp_ = jax.random.split(key)
    # channels MUST be 256: the final BatchNorm2d(channels) sees 60+70+126=256.
    channels, N, H, W = 256, 2, 8, 8
    x = jax.random.normal(kx_, (N, channels, H, W), jnp.float32)
    params = init_params(kp_, channels)

    fwd = jax.jit(mod_inception_forward)
    out = fwd(x, params)
    jax.block_until_ready(out)
    assert out.shape == (N, channels, H, W) and out.dtype == jnp.float32
    print("KERNEL_OK")
</pallas_src>

<mosaic_0001>
module attributes {stable_mosaic.version = 11 : i64} {
  func.func @_fused_1x1_kernel(%arg0: i32, %arg1: memref<128x256xf32, #tpu.memory_space<vmem>>, %arg2: memref<256x384xbf16, #tpu.memory_space<vmem>>, %arg3: memref<1x384xf32, #tpu.memory_space<vmem>>, %arg4: memref<128x384xf32, #tpu.memory_space<vmem>>, %arg5: memref<1x384xf32, #tpu.memory_space<vmem>>, %arg6: memref<1x384xf32, #tpu.memory_space<vmem>>) attributes {dimension_semantics = [#tpu.dimension_semantics<arbitrary>], iteration_bounds = array<i64: 1>, scalar_prefetch = 0 : i64, scratch_operands = 0 : i64, tpu.core_type = #tpu.core_type<tc>, window_params = [{transform_indices = @transform_0, window_bounds = array<i64: 128, 256>}, {pipeline_mode = #tpu.pipeline_mode<synchronous>, transform_indices = @transform_1, window_bounds = array<i64: 256, 384>}, {pipeline_mode = #tpu.pipeline_mode<synchronous>, transform_indices = @transform_2, window_bounds = array<i64: 1, 384>}, {transform_indices = @transform_3, window_bounds = array<i64: 128, 384>}, {pipeline_mode = #tpu.pipeline_mode<synchronous>, transform_indices = @transform_4, window_bounds = array<i64: 1, 384>}, {pipeline_mode = #tpu.pipeline_mode<synchronous>, transform_indices = @transform_5, window_bounds = array<i64: 1, 384>}]} {
    %c0_i32 = arith.constant 0 : i32
    %0 = arith.cmpi eq, %arg0, %c0_i32 : i32
    %1 = arith.extui %0 : i1 to i32
    %c0_i32_0 = arith.constant 0 : i32
    %2 = arith.cmpi ne, %1, %c0_i32_0 : i32
    scf.if %2 {
      %cst_18 = arith.constant 0.000000e+00 : f32
      %22 = vector.broadcast %cst_18 : f32 to vector<1x384xf32>
      %c0_19 = arith.constant 0 : index
      %c0_20 = arith.constant 0 : index
      %23 = vector.load %arg5[%c0_19, %c0_20] : memref<1x384xf32, #tpu.memory_space<vmem>>, vector<1x384xf32>
      tpu.vector_store %arg5[%c0_19, %c0_20], %22 {strides = array<i32>} : memref<1x384xf32, #tpu.memory_space<vmem>>, vector<1x384xf32>,
      %cst_21 = arith.constant 0.000000e+00 : f32
      %24 = vector.broadcast %cst_21 : f32 to vector<1x384xf32>
      %c0_22 = arith.constant 0 : index
      %c0_23 = arith.constant 0 : index
      %25 = vector.load %arg6[%c0_22, %c0_23] : memref<1x384xf32, #tpu.memory_space<vmem>>, vector<1x384xf32>
      tpu.vector_store %arg6[%c0_22, %c0_23], %24 {strides = array<i32>} : memref<1x384xf32, #tpu.memory_space<vmem>>, vector<1x384xf32>,
    } else {
    }
    %c0 = arith.constant 0 : index
    %c0_1 = arith.constant 0 : index
    %3 = vector.load %arg1[%c0, %c0_1] : memref<128x256xf32, #tpu.memory_space<vmem>>, vector<128x256xf32>
    %4 = arith.truncf %3 : vector<128x256xf32> to vector<128x256xbf16>
    %c0_2 = arith.constant 0 : index
    %c0_3 = arith.constant 0 : index
    %5 = vector.load %arg2[%c0_2, %c0_3] : memref<256x384xbf16, #tpu.memory_space<vmem>>, vector<256x384xbf16>
    %cst = arith.constant dense<0.000000e+00> : vector<128x384xf32>
    %6 = tpu.matmul %4, %5, %cst {dimension_numbers = #tpu.dot_dimension_numbers<[1], [0], [0], [1], [0, 0, 1, 1], [], []>} : vector<128x256xbf16>, vector<256x384xbf16>, vector<128x384xf32> -> vector<128x384xf32>
    %c0_4 = arith.constant 0 : index
    %c0_5 = arith.constant 0 : index
    %7 = vector.load %arg3[%c0_4, %c0_5] : memref<1x384xf32, #tpu.memory_space<vmem>>, vector<1x384xf32>
    %8 = vector.broadcast %7 : vector<1x384xf32> to vector<128x384xf32>
    %9 = arith.addf %6, %8 : vector<128x384xf32>
    %c0_6 = arith.constant 0 : index
    %c0_7 = arith.constant 0 : index
    %10 = vector.load %arg4[%c0_6, %c0_7] : memref<128x384xf32, #tpu.memory_space<vmem>>, vector<128x384xf32>
    tpu.vector_store %arg4[%c0_6, %c0_7], %9 {strides = array<i32>} : memref<128x384xf32, #tpu.memory_space<vmem>>, vector<128x384xf32>,
    %c0_8 = arith.constant 0 : index
    %c0_9 = arith.constant 0 : index
    %11 = vector.load %arg5[%c0_8, %c0_9] : memref<1x384xf32, #tpu.memory_space<vmem>>, vector<1x384xf32>
    %cst_10 = arith.constant dense<0.000000e+00> : vector<384xf32>
    %12 = vector.multi_reduction <add>, %9, %cst_10 [0] : vector<128x384xf32> to vector<384xf32>
    %13 = vector.shape_cast %12 : vector<384xf32> to vector<1x384xf32>
    %14 = arith.addf %11, %13 : vector<1x384xf32>
    %c0_11 = arith.constant 0 : index
    %c0_12 = arith.constant 0 : index
    %15 = vector.load %arg5[%c0_11, %c0_12] : memref<1x384xf32, #tpu.memory_space<vmem>>, vector<1x384xf32>
    tpu.vector_store %arg5[%c0_11, %c0_12], %14 {strides = array<i32>} : memref<1x384xf32, #tpu.memory_space<vmem>>, vector<1x384xf32>,
    %c0_13 = arith.constant 0 : index
    %c0_14 = arith.constant 0 : index
    %16 = vector.load %arg6[%c0_13, %c0_14] : memref<1x384xf32, #tpu.memory_space<vmem>>, vector<1x384xf32>
    %17 = arith.mulf %9, %9 : vector<128x384xf32>
    %cst_15 = arith.constant dense<0.000000e+00> : vector<384xf32>
    %18 = vector.multi_reduction <add>, %17, %cst_15 [0] : vector<128x384xf32> to vector<384xf32>
    %19 = vector.shape_cast %18 : vector<384xf32> to vector<1x384xf32>
    %20 = arith.addf %16, %19 : vector<1x384xf32>
    %c0_16 = arith.constant 0 : index
    %c0_17 = arith.constant 0 : index
    %21 = vector.load %arg6[%c0_16, %c0_17] : memref<1x384xf32, #tpu.memory_space<vmem>>, vector<1x384xf32>
    tpu.vector_store %arg6[%c0_16, %c0_17], %20 {strides = array<i32>} : memref<1x384xf32, #tpu.memory_space<vmem>>, vector<1x384xf32>,
    return
  }
  func.func @transform_0(%arg0: i32) -> (i32, i32) {
    %c0_i32 = arith.constant 0 : i32
    %c0_i32_0 = arith.constant 0 : i32
    return %arg0, %c0_i32 : i32, i32
  }
  func.func @transform_1(%arg0: i32) -> (i32, i32) {
    %c0_i32 = arith.constant 0 : i32
    %c0_i32_0 = arith.constant 0 : i32
    %c0_i32_1 = arith.constant 0 : i32
    return %c0_i32, %c0_i32_0 : i32, i32
  }
  func.func @transform_2(%arg0: i32) -> (i32, i32) {
    %c0_i32 = arith.constant 0 : i32
    %c0_i32_0 = arith.constant 0 : i32
    %c0_i32_1 = arith.constant 0 : i32
    return %c0_i32, %c0_i32_0 : i32, i32
  }
  func.func @transform_3(%arg0: i32) -> (i32, i32) {
    %c0_i32 = arith.constant 0 : i32
    %c0_i32_0 = arith.constant 0 : i32
    return %arg0, %c0_i32 : i32, i32
  }
  func.func @transform_4(%arg0: i32) -> (i32, i32) {
    %c0_i32 = arith.constant 0 : i32
    %c0_i32_0 = arith.constant 0 : i32
    %c0_i32_1 = arith.constant 0 : i32
    return %c0_i32, %c0_i32_0 : i32, i32
  }
  func.func @transform_5(%arg0: i32) -> (i32, i32) {
    %c0_i32 = arith.constant 0 : i32
    %c0_i32_0 = arith.constant 0 : i32
    %c0_i32_1 = arith.constant 0 : i32
    return %c0_i32, %c0_i32_0 : i32, i32
  }
}

module attributes {stable_mosaic.version = 11 : i64} {
  func.func @kernel(%arg0: i32, %arg1: memref<2x8x8x128xf32, #tpu.memory_space<vmem>>, %arg2: memref<1x128xf32, #tpu.memory_space<vmem>>, %arg3: memref<1x128xf32, #tpu.memory_space<vmem>>, %arg4: memref<1x1xf32, #tpu.memory_space<vmem>>, %arg5: memref<9x128x128xbf16, #tpu.memory_space<vmem>>, %arg6: memref<1x128xf32, #tpu.memory_space<vmem>>, %arg7: memref<128x128xf32, #tpu.memory_space<vmem>>, %arg8: memref<2x10x10x128xf32, #tpu.memory_space<vmem>>) attributes {dimension_semantics = [#tpu.dimension_semantics<parallel>], iteration_bounds = array<i64: 1>, scalar_prefetch = 0 : i64, scratch_operands = 1 : i64, tpu.core_type = #tpu.core_type<tc>, window_params = [{transform_indices = @transform_0, window_bounds = array<i64: 2, 8, 8, 128>}, {pipeline_mode = #tpu.pipeline_mode<synchronous>, transform_indices = @transform_1, window_bounds = array<i64: 1, 128>}, {pipeline_mode = #tpu.pipeline_mode<synchronous>, transform_indices = @transform_2, window_bounds = array<i64: 1, 128>}, {pipeline_mode = #tpu.pipeline_mode<synchronous>, transform_indices = @transform_3, window_bounds = array<i64: 1, 1>}, {pipeline_mode = #tpu.pipeline_mode<synchronous>, transform_indices = @transform_4, window_bounds = array<i64: 9, 128, 128>}, {pipeline_mode = #tpu.pipeline_mode<synchronous>, transform_indices = @transform_5, window_bounds = array<i64: 1, 128>}, {transform_indices = @transform_6, window_bounds = array<i64: 128, 128>}]} {
    %c0 = arith.constant 0 : index
    %c0_0 = arith.constant 0 : index
    %c0_1 = arith.constant 0 : index
    %c0_2 = arith.constant 0 : index
    %0 = vector.load %arg1[%c0, %c0_0, %c0_1, %c0_2] : memref<2x8x8x128xf32, #tpu.memory_space<vmem>>, vector<2x8x8x128xf32>
    %c0_3 = arith.constant 0 : index
    %c0_4 = arith.constant 0 : index
    %1 = vector.load %arg2[%c0_3, %c0_4] : memref<1x128xf32, #tpu.memory_space<vmem>>, vector<1x128xf32>
    %2 = vector.shape_cast %1 : vector<1x128xf32> to vector<1x1x1x128xf32>
    %3 = vector.broadcast %2 : vector<1x1x1x128xf32> to vector<2x8x8x128xf32>
    %4 = arith.mulf %0, %3 : vector<2x8x8x128xf32>
    %c0_5 = arith.constant 0 : index
    %c0_6 = arith.constant 0 : index
    %5 = vector.load %arg3[%c0_5, %c0_6] : memref<1x128xf32, #tpu.memory_space<vmem>>, vector<1x128xf32>
    %6 = vector.shape_cast %5 : vector<1x128xf32> to vector<1x1x1x128xf32>
    %7 = vector.broadcast %6 : vector<1x1x1x128xf32> to vector<2x8x8x128xf32>
    %8 = arith.addf %4, %7 : vector<2x8x8x128xf32>
    %cst = arith.constant 0.000000e+00 : f32
    %9 = vector.broadcast %cst : f32 to vector<2x8x8x128xf32>
    %10 = arith.cmpf oge, %8, %9 : vector<2x8x8x128xf32>
    %c0_7 = arith.constant 0 : index
    %c0_8 = arith.constant 0 : index
    %11 = vector.load %arg4[%c0_7, %c0_8] : memref<1x1xf32, #tpu.memory_space<vmem>>, vector<1x1xf32>
    %12 = vector.shape_cast %11 : vector<1x1xf32> to vector<1x1x1x1xf32>
    %13 = vector.broadcast %12 : vector<1x1x1x1xf32> to vector<2x8x8x128xf32>
    %14 = arith.mulf %13, %8 : vector<2x8x8x128xf32>
    %15 = arith.select %10, %8, %14 : vector<2x8x8x128xi1>, vector<2x8x8x128xf32>
    %cst_9 = arith.constant 0.000000e+00 : f32
    %16 = vector.broadcast %cst_9 : f32 to vector<2x10x10x128xf32>
    %c0_10 = arith.constant 0 : index
    %c0_11 = arith.constant 0 : index
    %c0_12 = arith.constant 0 : index
    %c0_13 = arith.constant 0 : index
    %17 = vector.load %arg8[%c0_10, %c0_11, %c0_12, %c0_13] : memref<2x10x10x128xf32, #tpu.memory_space<vmem>>, vector<2x10x10x128xf32>
    tpu.vector_store %arg8[%c0_10, %c0_11, %c0_12, %c0_13], %16 {strides = array<i32>} : memref<2x10x10x128xf32, #tpu.memory_space<vmem>>, vector<2x10x10x128xf32>,
    %c0_14 = arith.constant 0 : index
    %c1 = arith.constant 1 : index
    %c1_15 = arith.constant 1 : index
    %c0_16 = arith.constant 0 : index
    %18 = vector.load %arg8[%c0_14, %c1, %c1_15, %c0_16] : memref<2x10x10x128xf32, #tpu.memory_space<vmem>>, vector<2x8x8x128xf32>
    tpu.vector_store %arg8[%c0_14, %c1, %c1_15, %c0_16], %15 {strides = array<i32>} : memref<2x10x10x128xf32, #tpu.memory_space<vmem>>, vector<2x8x8x128xf32>,
    %c0_17 = arith.constant 0 : index
    %c0_18 = arith.constant 0 : index
    %c0_19 = arith.constant 0 : index
    %c0_20 = arith.constant 0 : index
    %19 = vector.load %arg8[%c0_17, %c0_18, %c0_19, %c0_20] : memref<2x10x10x128xf32, #tpu.memory_space<vmem>>, vector<2x10x10x128xf32>
    %cst_21 = arith.constant 0.000000e+00 : f32
    %20 = vector.broadcast %cst_21 : f32 to vector<128x128xf32>
    %21 = vector.extract_strided_slice %19 {offsets = [0, 0, 0, 0], sizes = [2, 10, 8, 128], strides = [1, 1, 1, 1]} : vector<2x10x10x128xf32> to vector<2x10x8x128xf32>
    %22 = arith.truncf %21 : vector<2x10x8x128xf32> to vector<2x10x8x128xbf16>
    %23 = vector.extract_strided_slice %22 {offsets = [0, 0, 0, 0], sizes = [2, 8, 8, 128], strides = [1, 1, 1, 1]} : vector<2x10x8x128xbf16> to vector<2x8x8x128xbf16>
    %24 = vector.shape_cast %23 : vector<2x8x8x128xbf16> to vector<128x128xbf16>
    %c0_22 = arith.constant 0 : index
    %c0_23 = arith.constant 0 : index
    %c0_24 = arith.constant 0 : index
    %25 = vector.load %arg5[%c0_22, %c0_23, %c0_24] : memref<9x128x128xbf16, #tpu.memory_space<vmem>>, vector<1x128x128xbf16>
    %26 = vector.shape_cast %25 : vector<1x128x128xbf16> to vector<128x128xbf16>
    %cst_25 = arith.constant dense<0.000000e+00> : vector<128x128xf32>
    %27 = tpu.matmul %24, %26, %cst_25 {dimension_numbers = #tpu.dot_dimension_numbers<[1], [0], [0], [1], [0, 0, 1, 1], [], []>} : vector<128x128xbf16>, vector<128x128xbf16>, vector<128x128xf32> -> vector<128x128xf32>
    %28 = arith.addf %20, %27 : vector<128x128xf32>
    %29 = vector.extract_strided_slice %22 {offsets = [0, 1, 0, 0], sizes = [2, 8, 8, 128], strides = [1, 1, 1, 1]} : vector<2x10x8x128xbf16> to vector<2x8x8x128xbf16>
    %30 = vector.shape_cast %29 : vector<2x8x8x128xbf16> to vector<128x128xbf16>
    %c3 = arith.constant 3 : index
    %c0_26 = arith.constant 0 : index
    %c0_27 = arith.constant 0 : index
    %31 = vector.load %arg5[%c3, %c0_26, %c0_27] : memref<9x128x128xbf16, #tpu.memory_space<vmem>>, vector<1x128x128xbf16>
    %32 = vector.shape_cast %31 : vector<1x128x128xbf16> to vector<128x128xbf16>
    %cst_28 = arith.constant dense<0.000000e+00> : vector<128x128xf32>
    %33 = tpu.matmul %30, %32, %cst_28 {dimension_numbers = #tpu.dot_dimension_numbers<[1], [0], [0], [1], [0, 0, 1, 1], [], []>} : vector<128x128xbf16>, vector<128x128xbf16>, vector<128x128xf32> -> vector<128x128xf32>
    %34 = arith.addf %28, %33 : vector<128x128xf32>
    %35 = vector.extract_strided_slice %22 {offsets = [0, 2, 0, 0], sizes = [2, 8, 8, 128], strides = [1, 1, 1, 1]} : vector<2x10x8x128xbf16> to vector<2x8x8x128xbf16>
    %36 = vector.shape_cast %35 : vector<2x8x8x128xbf16> to vector<128x128xbf16>
    %c6 = arith.constant 6 : index
    %c0_29 = arith.constant 0 : index
    %c0_30 = arith.constant 0 : index
    %37 = vector.load %arg5[%c6, %c0_29, %c0_30] : memref<9x128x128xbf16, #tpu.memory_space<vmem>>, vector<1x128x128xbf16>
    %38 = vector.shape_cast %37 : vector<1x128x128xbf16> to vector<128x128xbf16>
    %cst_31 = arith.constant dense<0.000000e+00> : vector<128x128xf32>
    %39 = tpu.matmul %36, %38, %cst_31 {dimension_numbers = #tpu.dot_dimension_numbers<[1], [0], [0], [1], [0, 0, 1, 1], [], []>} : vector<128x128xbf16>, vector<128x128xbf16>, vector<128x128xf32> -> vector<128x128xf32>
    %40 = arith.addf %34, %39 : vector<128x128xf32>
    %41 = vector.extract_strided_slice %19 {offsets = [0, 0, 1, 0], sizes = [2, 10, 8, 128], strides = [1, 1, 1, 1]} : vector<2x10x10x128xf32> to vector<2x10x8x128xf32>
    %42 = arith.truncf %41 : vector<2x10x8x128xf32> to vector<2x10x8x128xbf16>
    %43 = vector.extract_strided_slice %42 {offsets = [0, 0, 0, 0], sizes = [2, 8, 8, 128], strides = [1, 1, 1, 1]} : vector<2x10x8x128xbf16> to vector<2x8x8x128xbf16>
    %44 = vector.shape_cast %43 : vector<2x8x8x128xbf16> to vector<128x128xbf16>
    %c1_32 = arith.constant 1 : index
    %c0_33 = arith.constant 0 : index
    %c0_34 = arith.constant 0 : index
    %45 = vector.load %arg5[%c1_32, %c0_33, %c0_34] : memref<9x128x128xbf16, #tpu.memory_space<vmem>>, vector<1x128x128xbf16>
    %46 = vector.shape_cast %45 : vector<1x128x128xbf16> to vector<128x128xbf16>
    %cst_35 = arith.constant dense<0.000000e+00> : vector<128x128xf32>
    %47 = tpu.matmul %44, %46, %cst_35 {dimension_numbers = #tpu.dot_dimension_numbers<[1], [0], [0], [1], [0, 0, 1, 1], [], []>} : vector<128x128xbf16>, vector<128x128xbf16>, vector<128x128xf32> -> vector<128x128xf32>
    %48 = arith.addf %40, %47 : vector<128x128xf32>
    %49 = vector.extract_strided_slice %42 {offsets = [0, 1, 0, 0], sizes = [2, 8, 8, 128], strides = [1, 1, 1, 1]} : vector<2x10x8x128xbf16> to vector<2x8x8x128xbf16>
    %50 = vector.shape_cast %49 : vector<2x8x8x128xbf16> to vector<128x128xbf16>
    %c4 = arith.constant 4 : index
    %c0_36 = arith.constant 0 : index
    %c0_37 = arith.constant 0 : index
    %51 = vector.load %arg5[%c4, %c0_36, %c0_37] : memref<9x128x128xbf16, #tpu.memory_space<vmem>>, vector<1x128x128xbf16>
    %52 = vector.shape_cast %51 : vector<1x128x128xbf16> to vector<128x128xbf16>
    %cst_38 = arith.constant dense<0.000000e+00> : vector<128x128xf32>
    %53 = tpu.matmul %50, %52, %cst_38 {dimension_numbers = #tpu.dot_dimension_numbers<[1], [0], [0], [1], [0, 0, 1, 1], [], []>} : vector<128x128xbf16>, vector<128x128xbf16>, vector<128x128xf32> -> vector<128x128xf32>
    %54 = arith.addf %48, %53 : vector<128x128xf32>
    %55 = vector.extract_strided_slice %42 {offsets = [0, 2, 0, 0], sizes = [2, 8, 8, 128], strides = [1, 1, 1, 1]} : vector<2x10x8x128xbf16> to vector<2x8x8x128xbf16>
    %56 = vector.shape_cast %55 : vector<2x8x8x128xbf16> to vector<128x128xbf16>
    %c7 = arith.constant 7 : index
    %c0_39 = arith.constant 0 : index
    %c0_40 = arith.constant 0 : index
    %57 = vector.load %arg5[%c7, %c0_39, %c0_40] : memref<9x128x128xbf16, #tpu.memory_space<vmem>>, vector<1x128x128xbf16>
    %58 = vector.shape_cast %57 : vector<1x128x128xbf16> to vector<128x128xbf16>
    %cst_41 = arith.constant dense<0.000000e+00> : vector<128x128xf32>
    %59 = tpu.matmul %56, %58, %cst_41 {dimension_numbers = #tpu.dot_dimension_numbers<[1], [0], [0], [1], [0, 0, 1, 1], [], []>} : vector<128x128xbf16>, vector<128x128xbf16>, vector<128x128xf32> -> vector<128x128xf32>
    %60 = arith.addf %54, %59 : vector<128x128xf32>
    %61 = vector.extract_strided_slice %19 {offsets = [0, 0, 2, 0], sizes = [2, 10, 8, 128], strides = [1, 1, 1, 1]} : vector<2x10x10x128xf32> to vector<2x10x8x128xf32>
    %62 = arith.truncf %61 : vector<2x10x8x128xf32> to vector<2x10x8x128xbf16>
    %63 = vector.extract_strided_slice %62 {offsets = [0, 0, 0, 0], sizes = [2, 8, 8, 128], strides = [1, 1, 1, 1]} : vector<2x10x8x128xbf16> to vector<2x8x8x128xbf16>
    %64 = vector.shape_cast %63 : vector<2x8x8x128xbf16> to vector<128x128xbf16>
    %c2 = arith.constant 2 : index
    %c0_42 = arith.constant 0 : index
    %c0_43 = arith.constant 0 : index
    %65 = vector.load %arg5[%c2, %c0_42, %c0_43] : memref<9x128x128xbf16, #tpu.memory_space<vmem>>, vector<1x128x128xbf16>
    %66 = vector.shape_cast %65 : vector<1x128x128xbf16> to vector<128x128xbf16>
    %cst_44 = arith.constant dense<0.000000e+00> : vector<128x128xf32>
    %67 = tpu.matmul %64, %66, %cst_44 {dimension_numbers = #tpu.dot_dimension_numbers<[1], [0], [0], [1], [0, 0, 1, 1], [], []>} : vector<128x128xbf16>, vector<128x128xbf16>, vector<128x128xf32> -> vector<128x128xf32>
    %68 = arith.addf %60, %67 : vector<128x128xf32>
    %69 = vector.extract_strided_slice %62 {offsets = [0, 1, 0, 0], sizes = [2, 8, 8, 128], strides = [1, 1, 1, 1]} : vector<2x10x8x128xbf16> to vector<2x8x8x128xbf16>
    %70 = vector.shape_cast %69 : vector<2x8x8x128xbf16> to vector<128x128xbf16>
    %c5 = arith.constant 5 : index
    %c0_45 = arith.constant 0 : index
    %c0_46 = arith.constant 0 : index
    %71 = vector.load %arg5[%c5, %c0_45, %c0_46] : memref<9x128x128xbf16, #tpu.memory_space<vmem>>, vector<1x128x128xbf16>
    %72 = vector.shape_cast %71 : vector<1x128x128xbf16> to vector<128x128xbf16>
    %cst_47 = arith.constant dense<0.000000e+00> : vector<128x128xf32>
    %73 = tpu.matmul %70, %72, %cst_47 {dimension_numbers = #tpu.dot_dimension_numbers<[1], [0], [0], [1], [0, 0, 1, 1], [], []>} : vector<128x128xbf16>, vector<128x128xbf16>, vector<128x128xf32> -> vector<128x128xf32>
    %74 = arith.addf %68, %73 : vector<128x128xf32>
    %75 = vector.extract_strided_slice %62 {offsets = [0, 2, 0, 0], sizes = [2, 8, 8, 128], strides = [1, 1, 1, 1]} : vector<2x10x8x128xbf16> to vector<2x8x8x128xbf16>
    %76 = vector.shape_cast %75 : vector<2x8x8x128xbf16> to vector<128x128xbf16>
    %c8 = arith.constant 8 : index
    %c0_48 = arith.constant 0 : index
    %c0_49 = arith.constant 0 : index
    %77 = vector.load %arg5[%c8, %c0_48, %c0_49] : memref<9x128x128xbf16, #tpu.memory_space<vmem>>, vector<1x128x128xbf16>
    %78 = vector.shape_cast %77 : vector<1x128x128xbf16> to vector<128x128xbf16>
    %cst_50 = arith.constant dense<0.000000e+00> : vector<128x128xf32>
    %79 = tpu.matmul %76, %78, %cst_50 {dimension_numbers = #tpu.dot_dimension_numbers<[1], [0], [0], [1], [0, 0, 1, 1], [], []>} : vector<128x128xbf16>, vector<128x128xbf16>, vector<128x128xf32> -> vector<128x128xf32>
    %80 = arith.addf %74, %79 : vector<128x128xf32>
    %c0_51 = arith.constant 0 : index
    %c0_52 = arith.constant 0 : index
    %81 = vector.load %arg6[%c0_51, %c0_52] : memref<1x128xf32, #tpu.memory_space<vmem>>, vector<1x128xf32>
    %82 = vector.broadcast %81 : vector<1x128xf32> to vector<128x128xf32>
    %83 = arith.addf %80, %82 : vector<128x128xf32>
    %c0_53 = arith.constant 0 : index
    %c0_54 = arith.constant 0 : index
    %84 = vector.load %arg7[%c0_53, %c0_54] : memref<128x128xf32, #tpu.memory_space<vmem>>, vector<128x128xf32>
    tpu.vector_store %arg7[%c0_53, %c0_54], %83 {strides = array<i32>} : memref<128x128xf32, #tpu.memory_space<vmem>>, vector<128x128xf32>,
    return
  }
  func.func @transform_0(%arg0: i32) -> (i32, i32, i32, i32) {
    %c0_i32 = arith.constant 0 : i32
    %c0_i32_0 = arith.constant 0 : i32
    %c0_i32_1 = arith.constant 0 : i32
    %c0_i32_2 = arith.constant 0 : i32
    return %arg0, %c0_i32, %c0_i32_0, %c0_i32_1 : i32, i32, i32, i32
  }
  func.func @transform_1(%arg0: i32) -> (i32, i32) {
    %c0_i32 = arith.constant 0 : i32
    %c0_i32_0 = arith.constant 0 : i32
    %c0_i32_1 = arith.constant 0 : i32
    return %c0_i32, %c0_i32_0 : i32, i32
  }
  func.func @transform_2(%arg0: i32) -> (i32, i32) {
    %c0_i32 = arith.constant 0 : i32
    %c0_i32_0 = arith.constant 0 : i32
    %c0_i32_1 = arith.constant 0 : i32
    return %c0_i32, %c0_i32_0 : i32, i32
  }
  func.func @transform_3(%arg0: i32) -> (i32, i32) {
    %c0_i32 = arith.constant 0 : i32
    %c0_i32_0 = arith.constant 0 : i32
    %c0_i32_1 = arith.constant 0 : i32
    return %c0_i32, %c0_i32_0 : i32, i32
  }
  func.func @transform_4(%arg0: i32) -> (i32, i32, i32) {
    %c0_i32 = arith.constant 0 : i32
    %c0_i32_0 = arith.constant 0 : i32
    %c0_i32_1 = arith.constant 0 : i32
    %c0_i32_2 = arith.constant 0 : i32
    return %c0_i32, %c0_i32_0, %c0_i32_1 : i32, i32, i32
  }
  func.func @transform_5(%arg0: i32) -> (i32, i32) {
    %c0_i32 = arith.constant 0 : i32
    %c0_i32_0 = arith.constant 0 : i32
    %c0_i32_1 = arith.constant 0 : i32
    return %c0_i32, %c0_i32_0 : i32, i32
  }
  func.func @transform_6(%arg0: i32) -> (i32, i32) {
    %c0_i32 = arith.constant 0 : i32
    %c0_i32_0 = arith.constant 0 : i32
    return %arg0, %c0_i32 : i32, i32
  }
}

module attributes {stable_mosaic.version = 11 : i64} {
  func.func @kernel(%arg0: i32, %arg1: memref<2x8x8x128xf32, #tpu.memory_space<vmem>>, %arg2: memref<1x128xf32, #tpu.memory_space<vmem>>, %arg3: memref<1x128xf32, #tpu.memory_space<vmem>>, %arg4: memref<1x1xf32, #tpu.memory_space<vmem>>, %arg5: memref<25x128x128xbf16, #tpu.memory_space<vmem>>, %arg6: memref<1x128xf32, #tpu.memory_space<vmem>>, %arg7: memref<128x128xf32, #tpu.memory_space<vmem>>, %arg8: memref<2x12x12x128xf32, #tpu.memory_space<vmem>>) attributes {dimension_semantics = [#tpu.dimension_semantics<parallel>], iteration_bounds = array<i64: 1>, scalar_prefetch = 0 : i64, scratch_operands = 1 : i64, tpu.core_type = #tpu.core_type<tc>, window_params = [{transform_indices = @transform_0, window_bounds = array<i64: 2, 8, 8, 128>}, {pipeline_mode = #tpu.pipeline_mode<synchronous>, transform_indices = @transform_1, window_bounds = array<i64: 1, 128>}, {pipeline_mode = #tpu.pipeline_mode<synchronous>, transform_indices = @transform_2, window_bounds = array<i64: 1, 128>}, {pipeline_mode = #tpu.pipeline_mode<synchronous>, transform_indices = @transform_3, window_bounds = array<i64: 1, 1>}, {pipeline_mode = #tpu.pipeline_mode<synchronous>, transform_indices = @transform_4, window_bounds = array<i64: 25, 128, 128>}, {pipeline_mode = #tpu.pipeline_mode<synchronous>, transform_indices = @transform_5, window_bounds = array<i64: 1, 128>}, {transform_indices = @transform_6, window_bounds = array<i64: 128, 128>}]} {
    %c0 = arith.constant 0 : index
    %c0_0 = arith.constant 0 : index
    %c0_1 = arith.constant 0 : index
    %c0_2 = arith.constant 0 : index
    %0 = vector.load %arg1[%c0, %c0_0, %c0_1, %c0_2] : memref<2x8x8x128xf32, #tpu.memory_space<vmem>>, vector<2x8x8x128xf32>
    %c0_3 = arith.constant 0 : index
    %c0_4 = arith.constant 0 : index
    %1 = vector.load %arg2[%c0_3, %c0_4] : memref<1x128xf32, #tpu.memory_space<vmem>>, vector<1x128xf32>
    %2 = vector.shape_cast %1 : vector<1x128xf32> to vector<1x1x1x128xf32>
    %3 = vector.broadcast %2 : vector<1x1x1x128xf32> to vector<2x8x8x128xf32>
    %4 = arith.mulf %0, %3 : vector<2x8x8x128xf32>
    %c0_5 = arith.constant 0 : index
    %c0_6 = arith.constant 0 : index
    %5 = vector.load %arg3[%c0_5, %c0_6] : memref<1x128xf32, #tpu.memory_space<vmem>>, vector<1x128xf32>
    %6 = vector.shape_cast %5 : vector<1x128xf32> to vector<1x1x1x128xf32>
    %7 = vector.broadcast %6 : vector<1x1x1x128xf32> to vector<2x8x8x128xf32>
    %8 = arith.addf %4, %7 : vector<2x8x8x128xf32>
    %cst = arith.constant 0.000000e+00 : f32
    %9 = vector.broadcast %cst : f32 to vector<2x8x8x128xf32>
    %10 = arith.cmpf oge, %8, %9 : vector<2x8x8x128xf32>
    %c0_7 = arith.constant 0 : index
    %c0_8 = arith.constant 0 : index
    %11 = vector.load %arg4[%c0_7, %c0_8] : memref<1x1xf32, #tpu.memory_space<vmem>>, vector<1x1xf32>
    %12 = vector.shape_cast %11 : vector<1x1xf32> to vector<1x1x1x1xf32>
    %13 = vector.broadcast %12 : vector<1x1x1x1xf32> to vector<2x8x8x128xf32>
    %14 = arith.mulf %13, %8 : vector<2x8x8x128xf32>
    %15 = arith.select %10, %8, %14 : vector<2x8x8x128xi1>, vector<2x8x8x128xf32>
    %cst_9 = arith.constant 0.000000e+00 : f32
    %16 = vector.broadcast %cst_9 : f32 to vector<2x12x12x128xf32>
    %c0_10 = arith.constant 0 : index
    %c0_11 = arith.constant 0 : index
    %c0_12 = arith.constant 0 : index
    %c0_13 = arith.constant 0 : index
    %17 = vector.load %arg8[%c0_10, %c0_11, %c0_12, %c0_13] : memref<2x12x12x128xf32, #tpu.memory_space<vmem>>, vector<2x12x12x128xf32>
    tpu.vector_store %arg8[%c0_10, %c0_11, %c0_12, %c0_13], %16 {strides = array<i32>} : memref<2x12x12x128xf32, #tpu.memory_space<vmem>>, vector<2x12x12x128xf32>,
    %c0_14 = arith.constant 0 : index
    %c2 = arith.constant 2 : index
    %c2_15 = arith.constant 2 : index
    %c0_16 = arith.constant 0 : index
    %18 = vector.load %arg8[%c0_14, %c2, %c2_15, %c0_16] : memref<2x12x12x128xf32, #tpu.memory_space<vmem>>, vector<2x8x8x128xf32>
    tpu.vector_store %arg8[%c0_14, %c2, %c2_15, %c0_16], %15 {strides = array<i32>} : memref<2x12x12x128xf32, #tpu.memory_space<vmem>>, vector<2x8x8x128xf32>,
    %c0_17 = arith.constant 0 : index
    %c0_18 = arith.constant 0 : index
    %c0_19 = arith.constant 0 : index
    %c0_20 = arith.constant 0 : index
    %19 = vector.load %arg8[%c0_17, %c0_18, %c0_19, %c0_20] : memref<2x12x12x128xf32, #tpu.memory_space<vmem>>, vector<2x12x12x128xf32>
    %cst_21 = arith.constant 0.000000e+00 : f32
    %20 = vector.broadcast %cst_21 : f32 to vector<128x128xf32>
    %21 = vector.extract_strided_slice %19 {offsets = [0, 0, 0, 0], sizes = [2, 12, 8, 128], strides = [1, 1, 1, 1]} : vector<2x12x12x128xf32> to vector<2x12x8x128xf32>
    %22 = arith.truncf %21 : vector<2x12x8x128xf32> to vector<2x12x8x128xbf16>
    %23 = vector.extract_strided_slice %22 {offsets = [0, 0, 0, 0], sizes = [2, 8, 8, 128], strides = [1, 1, 1, 1]} : vector<2x12x8x128xbf16> to vector<2x8x8x128xbf16>
    %24 = vector.shape_cast %23 : vector<2x8x8x128xbf16> to vector<128x128xbf16>
    %c0_22 = arith.constant 0 : index
    %c0_23 = arith.constant 0 : index
    %c0_24 = arith.constant 0 : index
    %25 = vector.load %arg5[%c0_22, %c0_23, %c0_24] : memref<25x128x128xbf16, #tpu.memory_space<vmem>>, vector<1x128x128xbf16>
    %26 = vector.shape_cast %25 : vector<1x128x128xbf16> to vector<128x128xbf16>
    %cst_25 = arith.constant dense<0.000000e+00> : vector<128x128xf32>
    %27 = tpu.matmul %24, %26, %cst_25 {dimension_numbers = #tpu.dot_dimension_numbers<[1], [0], [0], [1], [0, 0, 1, 1], [], []>} : vector<128x128xbf16>, vector<128x128xbf16>, vector<128x128xf32> -> vector<128x128xf32>
    %28 = arith.addf %20, %27 : vector<128x128xf32>
    %29 = vector.extract_strided_slice %22 {offsets = [0, 1, 0, 0], sizes = [2, 8, 8, 128], strides = [1, 1, 1, 1]} : vector<2x12x8x128xbf16> to vector<2x8x8x128xbf16>
    %30 = vector.shape_cast %29 : vector<2x8x8x128xbf16> to vector<128x128xbf16>
    %c5 = arith.constant 5 : index
    %c0_26 = arith.constant 0 : index
    %c0_27 = arith.constant 0 : index
    %31 = vector.load %arg5[%c5, %c0_26, %c0_27] : memref<25x128x128xbf16, #tpu.memory_space<vmem>>, vector<1x128x128xbf16>
    %32 = vector.shape_cast %31 : vector<1x128x128xbf16> to vector<128x128xbf16>
    %cst_28 = arith.constant dense<0.000000e+00> : vector<128x128xf32>
    %33 = tpu.matmul %30, %32, %cst_28 {dimension_numbers = #tpu.dot_dimension_numbers<[1], [0], [0], [1], [0, 0, 1, 1], [], []>} : vector<128x128xbf16>, vector<128x128xbf16>, vector<128x128xf32> -> vector<128x128xf32>
    %34 = arith.addf %28, %33 : vector<128x128xf32>
    %35 = vector.extract_strided_slice %22 {offsets = [0, 2, 0, 0], sizes = [2, 8, 8, 128], strides = [1, 1, 1, 1]} : vector<2x12x8x128xbf16> to vector<2x8x8x128xbf16>
    %36 = vector.shape_cast %35 : vector<2x8x8x128xbf16> to vector<128x128xbf16>
    %c10 = arith.constant 10 : index
    %c0_29 = arith.constant 0 : index
    %c0_30 = arith.constant 0 : index
    %37 = vector.load %arg5[%c10, %c0_29, %c0_30] : memref<25x128x128xbf16, #tpu.memory_space<vmem>>, vector<1x128x128xbf16>
    %38 = vector.shape_cast %37 : vector<1x128x128xbf16> to vector<128x128xbf16>
    %cst_31 = arith.constant dense<0.000000e+00> : vector<128x128xf32>
    %39 = tpu.matmul %36, %38, %cst_31 {dimension_numbers = #tpu.dot_dimension_numbers<[1], [0], [0], [1], [0, 0, 1, 1], [], []>} : vector<128x128xbf16>, vector<128x128xbf16>, vector<128x128xf32> -> vector<128x128xf32>
    %40 = arith.addf %34, %39 : vector<128x128xf32>
    %41 = vector.extract_strided_slice %22 {offsets = [0, 3, 0, 0], sizes = [2, 8, 8, 128], strides = [1, 1, 1, 1]} : vector<2x12x8x128xbf16> to vector<2x8x8x128xbf16>
    %42 = vector.shape_cast %41 : vector<2x8x8x128xbf16> to vector<128x128xbf16>
    %c15 = arith.constant 15 : index
    %c0_32 = arith.constant 0 : index
    %c0_33 = arith.constant 0 : index
    %43 = vector.load %arg5[%c15, %c0_32, %c0_33] : memref<25x128x128xbf16, #tpu.memory_space<vmem>>, vector<1x128x128xbf16>
    %44 = vector.shape_cast %43 : vector<1x128x128xbf16> to vector<128x128xbf16>
    %cst_34 = arith.constant dense<0.000000e+00> : vector<128x128xf32>
    %45 = tpu.matmul %42, %44, %cst_34 {dimension_numbers = #tpu.dot_dimension_numbers<[1], [0], [0], [1], [0, 0, 1, 1], [], []>} : vector<128x128xbf16>, vector<128x128xbf16>, vector<128x128xf32> -> vector<128x128xf32>
    %46 = arith.addf %40, %45 : vector<128x128xf32>
    %47 = vector.extract_strided_slice %22 {offsets = [0, 4, 0, 0], sizes = [2, 8, 8, 128], strides = [1, 1, 1, 1]} : vector<2x12x8x128xbf16> to vector<2x8x8x128xbf16>
    %48 = vector.shape_cast %47 : vector<2x8x8x128xbf16> to vector<128x128xbf16>
    %c20 = arith.constant 20 : index
    %c0_35 = arith.constant 0 : index
    %c0_36 = arith.constant 0 : index
    %49 = vector.load %arg5[%c20, %c0_35, %c0_36] : memref<25x128x128xbf16, #tpu.memory_space<vmem>>, vector<1x128x128xbf16>
    %50 = vector.shape_cast %49 : vector<1x128x128xbf16> to vector<128x128xbf16>
    %cst_37 = arith.constant dense<0.000000e+00> : vector<128x128xf32>
    %51 = tpu.matmul %48, %50, %cst_37 {dimension_numbers = #tpu.dot_dimension_numbers<[1], [0], [0], [1], [0, 0, 1, 1], [], []>} : vector<128x128xbf16>, vector<128x128xbf16>, vector<128x128xf32> -> vector<128x128xf32>
    %52 = arith.addf %46, %51 : vector<128x128xf32>
    %53 = vector.extract_strided_slice %19 {offsets = [0, 0, 1, 0], sizes = [2, 12, 8, 128], strides = [1, 1, 1, 1]} : vector<2x12x12x128xf32> to vector<2x12x8x128xf32>
    %54 = arith.truncf %53 : vector<2x12x8x128xf32> to vector<2x12x8x128xbf16>
    %55 = vector.extract_strided_slice %54 {offsets = [0, 0, 0, 0], sizes = [2, 8, 8, 128], strides = [1, 1, 1, 1]} : vector<2x12x8x128xbf16> to vector<2x8x8x128xbf16>
    %56 = vector.shape_cast %55 : vector<2x8x8x128xbf16> to vector<128x128xbf16>
    %c1 = arith.constant 1 : index
    %c0_38 = arith.constant 0 : index
    %c0_39 = arith.constant 0 : index
    %57 = vector.load %arg5[%c1, %c0_38, %c0_39] : memref<25x128x128xbf16, #tpu.memory_space<vmem>>, vector<1x128x128xbf16>
    %58 = vector.shape_cast %57 : vector<1x128x128xbf16> to vector<128x128xbf16>
    %cst_40 = arith.constant dense<0.000000e+00> : vector<128x128xf32>
    %59 = tpu.matmul %56, %58, %cst_40 {dimension_numbers = #tpu.dot_dimension_numbers<[1], [0], [0], [1], [0, 0, 1, 1], [], []>} : vector<128x128xbf16>, vector<128x128xbf16>, vector<128x128xf32> -> vector<128x128xf32>
    %60 = arith.addf %52, %59 : vector<128x128xf32>
    %61 = vector.extract_strided_slice %54 {offsets = [0, 1, 0, 0], sizes = [2, 8, 8, 128], strides = [1, 1, 1, 1]} : vector<2x12x8x128xbf16> to vector<2x8x8x128xbf16>
    %62 = vector.shape_cast %61 : vector<2x8x8x128xbf16> to vector<128x128xbf16>
    %c6 = arith.constant 6 : index
    %c0_41 = arith.constant 0 : index
    %c0_42 = arith.constant 0 : index
    %63 = vector.load %arg5[%c6, %c0_41, %c0_42] : memref<25x128x128xbf16, #tpu.memory_space<vmem>>, vector<1x128x128xbf16>
    %64 = vector.shape_cast %63 : vector<1x128x128xbf16> to vector<128x128xbf16>
    %cst_43 = arith.constant dense<0.000000e+00> : vector<128x128xf32>
    %65 = tpu.matmul %62, %64, %cst_43 {dimension_numbers = #tpu.dot_dimension_numbers<[1], [0], [0], [1], [0, 0, 1, 1], [], []>} : vector<128x128xbf16>, vector<128x128xbf16>, vector<128x128xf32> -> vector<128x128xf32>
    %66 = arith.addf %60, %65 : vector<128x128xf32>
    %67 = vector.extract_strided_slice %54 {offsets = [0, 2, 0, 0], sizes = [2, 8, 8, 128], strides = [1, 1, 1, 1]} : vector<2x12x8x128xbf16> to vector<2x8x8x128xbf16>
    %68 = vector.shape_cast %67 : vector<2x8x8x128xbf16> to vector<128x128xbf16>
    %c11 = arith.constant 11 : index
    %c0_44 = arith.constant 0 : index
    %c0_45 = arith.constant 0 : index
    %69 = vector.load %arg5[%c11, %c0_44, %c0_45] : memref<25x128x128xbf16, #tpu.memory_space<vmem>>, vector<1x128x128xbf16>
    %70 = vector.shape_cast %69 : vector<1x128x128xbf16> to vector<128x128xbf16>
    %cst_46 = arith.constant dense<0.000000e+00> : vector<128x128xf32>
    %71 = tpu.matmul %68, %70, %cst_46 {dimension_numbers = #tpu.dot_dimension_numbers<[1], [0], [0], [1], [0, 0, 1, 1], [], []>} : vector<128x128xbf16>, vector<128x128xbf16>, vector<128x128xf32> -> vector<128x128xf32>
    %72 = arith.addf %66, %71 : vector<128x128xf32>
    %73 = vector.extract_strided_slice %54 {offsets = [0, 3, 0, 0], sizes = [2, 8, 8, 128], strides = [1, 1, 1, 1]} : vector<2x12x8x128xbf16> to vector<2x8x8x128xbf16>
    %74 = vector.shape_cast %73 : vector<2x8x8x128xbf16> to vector<128x128xbf16>
    %c16 = arith.constant 16 : index
    %c0_47 = arith.constant 0 : index
    %c0_48 = arith.constant 0 : index
    %75 = vector.load %arg5[%c16, %c0_47, %c0_48] : memref<25x128x128xbf16, #tpu.memory_space<vmem>>, vector<1x128x128xbf16>
    %76 = vector.shape_cast %75 : vector<1x128x128xbf16> to vector<128x128xbf16>
    %cst_49 = arith.constant dense<0.000000e+00> : vector<128x128xf32>
    %77 = tpu.matmul %74, %76, %cst_49 {dimension_numbers = #tpu.dot_dimension_numbers<[1], [0], [0], [1], [0, 0, 1, 1], [], []>} : vector<128x128xbf16>, vector<128x128xbf16>, vector<128x128xf32> -> vector<128x128xf32>
    %78 = arith.addf %72, %77 : vector<128x128xf32>
    %79 = vector.extract_strided_slice %54 {offsets = [0, 4, 0, 0], sizes = [2, 8, 8, 128], strides = [1, 1, 1, 1]} : vector<2x12x8x128xbf16> to vector<2x8x8x128xbf16>
    %80 = vector.shape_cast %79 : vector<2x8x8x128xbf16> to vector<128x128xbf16>
    %c21 = arith.constant 21 : index
    %c0_50 = arith.constant 0 : index
    %c0_51 = arith.constant 0 : index
    %81 = vector.load %arg5[%c21, %c0_50, %c0_51] : memref<25x128x128xbf16, #tpu.memory_space<vmem>>, vector<1x128x128xbf16>
    %82 = vector.shape_cast %81 : vector<1x128x128xbf16> to vector<128x128xbf16>
    %cst_52 = arith.constant dense<0.000000e+00> : vector<128x128xf32>
    %83 = tpu.matmul %80, %82, %cst_52 {dimension_numbers = #tpu.dot_dimension_numbers<[1], [0], [0], [1], [0, 0, 1, 1], [], []>} : vector<128x128xbf16>, vector<128x128xbf16>, vector<128x128xf32> -> vector<128x128xf32>
    %84 = arith.addf %78, %83 : vector<128x128xf32>
    %85 = vector.extract_strided_slice %19 {offsets = [0, 0, 2, 0], sizes = [2, 12, 8, 128], strides = [1, 1, 1, 1]} : vector<2x12x12x128xf32> to vector<2x12x8x128xf32>
    %86 = arith.truncf %85 : vector<2x12x8x128xf32> to vector<2x12x8x128xbf16>
    %87 = vector.extract_strided_slice %86 {offsets = [0, 0, 0, 0], sizes = [2, 8, 8, 128], strides = [1, 1, 1, 1]} : vector<2x12x8x128xbf16> to vector<2x8x8x128xbf16>
    %88 = vector.shape_cast %87 : vector<2x8x8x128xbf16> to vector<128x128xbf16>
    %c2_53 = arith.constant 2 : index
    %c0_54 = arith.constant 0 : index
    %c0_55 = arith.constant 0 : index
    %89 = vector.load %arg5[%c2_53, %c0_54, %c0_55] : memref<25x128x128xbf16, #tpu.memory_space<vmem>>, vector<1x128x128xbf16>
    %90 = vector.shape_cast %89 : vector<1x128x128xbf16> to vector<128x128xbf16>
    %cst_56 = arith.constant dense<0.000000e+00> : vector<128x128xf32>
    %91 = tpu.matmul %88, %90, %cst_56 {dimension_numbers = #tpu.dot_dimension_numbers<[1], [0], [0], [1], [0, 0, 1, 1], [], []>} : vector<128x128xbf16>, vector<128x128xbf16>, vector<128x128xf32> -> vector<128x128xf32>
    %92 = arith.addf %84, %91 : vector<128x128xf32>
    %93 = vector.extract_strided_slice %86 {offsets = [0, 1, 0, 0], sizes = [2, 8, 8, 128], strides = [1, 1, 1, 1]} : vector<2x12x8x128xbf16> to vector<2x8x8x128xbf16>
    %94 = vector.shape_cast %93 : vector<2x8x8x128xbf16> to vector<128x128xbf16>
    %c7 = arith.constant 7 : index
    %c0_57 = arith.constant 0 : index
    %c0_58 = arith.constant 0 : index
    %95 = vector.load %arg5[%c7, %c0_57, %c0_58] : memref<25x128x128xbf16, #tpu.memory_space<vmem>>, vector<1x128x128xbf16>
    %96 = vector.shape_cast %95 : vector<1x128x128xbf16> to vector<128x128xbf16>
    %cst_59 = arith.constant dense<0.000000e+00> : vector<128x128xf32>
    %97 = tpu.matmul %94, %96, %cst_59 {dimension_numbers = #tpu.dot_dimension_numbers<[1], [0], [0], [1], [0, 0, 1, 1], [], []>} : vector<128x128xbf16>, vector<128x128xbf16>, vector<128x128xf32> -> vector<128x128xf32>
    %98 = arith.addf %92, %97 : vector<128x128xf32>
    %99 = vector.extract_strided_slice %86 {offsets = [0, 2, 0, 0], sizes = [2, 8, 8, 128], strides = [1, 1, 1, 1]} : vector<2x12x8x128xbf16> to vector<2x8x8x128xbf16>
    %100 = vector.shape_cast %99 : vector<2x8x8x128xbf16> to vector<128x128xbf16>
    %c12 = arith.constant 12 : index
    %c0_60 = arith.constant 0 : index
    %c0_61 = arith.constant 0 : index
    %101 = vector.load %arg5[%c12, %c0_60, %c0_61] : memref<25x128x128xbf16, #tpu.memory_space<vmem>>, vector<1x128x128xbf16>
    %102 = vector.shape_cast %101 : vector<1x128x128xbf16> to vector<128x128xbf16>
    %cst_62 = arith.constant dense<0.000000e+00> : vector<128x128xf32>
    %103 = tpu.matmul %100, %102, %cst_62 {dimension_numbers = #tpu.dot_dimension_numbers<[1], [0], [0], [1], [0, 0, 1, 1], [], []>} : vector<128x128xbf16>, vector<128x128xbf16>, vector<128x128xf32> -> vector<128x128xf32>
    %104 = arith.addf %98, %103 : vector<128x128xf32>
    %105 = vector.extract_strided_slice %86 {offsets = [0, 3, 0, 0], sizes = [2, 8, 8, 128], strides = [1, 1, 1, 1]} : vector<2x12x8x128xbf16> to vector<2x8x8x128xbf16>
    %106 = vector.shape_cast %105 : vector<2x8x8x128xbf16> to vector<128x128xbf16>
    %c17 = arith.constant 17 : index
    %c0_63 = arith.constant 0 : index
    %c0_64 = arith.constant 0 : index
    %107 = vector.load %arg5[%c17, %c0_63, %c0_64] : memref<25x128x128xbf16, #tpu.memory_space<vmem>>, vector<1x128x128xbf16>
    %108 = vector.shape_cast %107 : vector<1x128x128xbf16> to vector<128x128xbf16>
    %cst_65 = arith.constant dense<0.000000e+00> : vector<128x128xf32>
    %109 = tpu.matmul %106, %108, %cst_65 {dimension_numbers = #tpu.dot_dimension_numbers<[1], [0], [0], [1], [0, 0, 1, 1], [], []>} : vector<128x128xbf16>, vector<128x128xbf16>, vector<128x128xf32> -> vector<128x128xf32>
    %110 = arith.addf %104, %109 : vector<128x128xf32>
    %111 = vector.extract_strided_slice %86 {offsets = [0, 4, 0, 0], sizes = [2, 8, 8, 128], strides = [1, 1, 1, 1]} : vector<2x12x8x128xbf16> to vector<2x8x8x128xbf16>
    %112 = vector.shape_cast %111 : vector<2x8x8x128xbf16> to vector<128x128xbf16>
    %c22 = arith.constant 22 : index
    %c0_66 = arith.constant 0 : index
    %c0_67 = arith.constant 0 : index
    %113 = vector.load %arg5[%c22, %c0_66, %c0_67] : memref<25x128x128xbf16, #tpu.memory_space<vmem>>, vector<1x128x128xbf16>
    %114 = vector.shape_cast %113 : vector<1x128x128xbf16> to vector<128x128xbf16>
    %cst_68 = arith.constant dense<0.000000e+00> : vector<128x128xf32>
    %115 = tpu.matmul %112, %114, %cst_68 {dimension_numbers = #tpu.dot_dimension_numbers<[1], [0], [0], [1], [0, 0, 1, 1], [], []>} : vector<128x128xbf16>, vector<128x128xbf16>, vector<128x128xf32> -> vector<128x128xf32>
    %116 = arith.addf %110, %115 : vector<128x128xf32>
    %117 = vector.extract_strided_slice %19 {offsets = [0, 0, 3, 0], sizes = [2, 12, 8, 128], strides = [1, 1, 1, 1]} : vector<2x12x12x128xf32> to vector<2x12x8x128xf32>
    %118 = arith.truncf %117 : vector<2x12x8x128xf32> to vector<2x12x8x128xbf16>
    %119 = vector.extract_strided_slice %118 {offsets = [0, 0, 0, 0], sizes = [2, 8, 8, 128], strides = [1, 1, 1, 1]} : vector<2x12x8x128xbf16> to vector<2x8x8x128xbf16>
    %120 = vector.shape_cast %119 : vector<2x8x8x128xbf16> to vector<128x128xbf16>
    %c3 = arith.constant 3 : index
    %c0_69 = arith.constant 0 : index
    %c0_70 = arith.constant 0 : index
    %121 = vector.load %arg5[%c3, %c0_69, %c0_70] : memref<25x128x128xbf16, #tpu.memory_space<vmem>>, vector<1x128x128xbf16>
    %122 = vector.shape_cast %121 : vector<1x128x128xbf16> to vector<128x128xbf16>
    %cst_71 = arith.constant dense<0.000000e+00> : vector<128x128xf32>
    %123 = tpu.matmul %120, %122, %cst_71 {dimension_numbers = #tpu.dot_dimension_numbers<[1], [0], [0], [1], [0, 0, 1, 1], [], []>} : vector<128x128xbf16>, vector<128x128xbf16>, vector<128x128xf32> -> vector<128x128xf32>
    %124 = arith.addf %116, %123 : vector<128x128xf32>
    %125 = vector.extract_strided_slice %118 {offsets = [0, 1, 0, 0], sizes = [2, 8, 8, 128], strides = [1, 1, 1, 1]} : vector<2x12x8x128xbf16> to vector<2x8x8x128xbf16>
    %126 = vector.shape_cast %125 : vector<2x8x8x128xbf16> to vector<128x128xbf16>
    %c8 = arith.constant 8 : index
    %c0_72 = arith.constant 0 : index
    %c0_73 = arith.constant 0 : index
    %127 = vector.load %arg5[%c8, %c0_72, %c0_73] : memref<25x128x128xbf16, #tpu.memory_space<vmem>>, vector<1x128x128xbf16>
    %128 = vector.shape_cast %127 : vector<1x128x128xbf16> to vector<128x128xbf16>
    %cst_74 = arith.constant dense<0.000000e+00> : vector<128x128xf32>
    %129 = tpu.matmul %126, %128, %cst_74 {dimension_numbers = #tpu.dot_dimension_numbers<[1], [0], [0], [1], [0, 0, 1, 1], [], []>} : vector<128x128xbf16>, vector<128x128xbf16>, vector<128x128xf32> -> vector<128x128xf32>
    %130 = arith.addf %124, %129 : vector<128x128xf32>
    %131 = vector.extract_strided_slice %118 {offsets = [0, 2, 0, 0], sizes = [2, 8, 8, 128], strides = [1, 1, 1, 1]} : vector<2x12x8x128xbf16> to vector<2x8x8x128xbf16>
    %132 = vector.shape_cast %131 : vector<2x8x8x128xbf16> to vector<128x128xbf16>
    %c13 = arith.constant 13 : index
    %c0_75 = arith.constant 0 : index
    %c0_76 = arith.constant 0 : index
    %133 = vector.load %arg5[%c13, %c0_75, %c0_76] : memref<25x128x128xbf16, #tpu.memory_space<vmem>>, vector<1x128x128xbf16>
    %134 = vector.shape_cast %133 : vector<1x128x128xbf16> to vector<128x128xbf16>
    %cst_77 = arith.constant dense<0.000000e+00> : vector<128x128xf32>
    %135 = tpu.matmul %132, %134, %cst_77 {dimension_numbers = #tpu.dot_dimension_numbers<[1], [0], [0], [1], [0, 0, 1, 1], [], []>} : vector<128x128xbf16>, vector<128x128xbf16>, vector<128x128xf32> -> vector<128x128xf32>
    %136 = arith.addf %130, %135 : vector<128x128xf32>
    %137 = vector.extract_strided_slice %118 {offsets = [0, 3, 0, 0], sizes = [2, 8, 8, 128], strides = [1, 1, 1, 1]} : vector<2x12x8x128xbf16> to vector<2x8x8x128xbf16>
    %138 = vector.shape_cast %137 : vector<2x8x8x128xbf16> to vector<128x128xbf16>
    %c18 = arith.constant 18 : index
    %c0_78 = arith.constant 0 : index
    %c0_79 = arith.constant 0 : index
    %139 = vector.load %arg5[%c18, %c0_78, %c0_79] : memref<25x128x128xbf16, #tpu.memory_space<vmem>>, vector<1x128x128xbf16>
    %140 = vector.shape_cast %139 : vector<1x128x128xbf16> to vector<128x128xbf16>
    %cst_80 = arith.constant dense<0.000000e+00> : vector<128x128xf32>
    %141 = tpu.matmul %138, %140, %cst_80 {dimension_numbers = #tpu.dot_dimension_numbers<[1], [0], [0], [1], [0, 0, 1, 1], [], []>} : vector<128x128xbf16>, vector<128x128xbf16>, vector<128x128xf32> -> vector<128x128xf32>
    %142 = arith.addf %136, %141 : vector<128x128xf32>
    %143 = vector.extract_strided_slice %118 {offsets = [0, 4, 0, 0], sizes = [2, 8, 8, 128], strides = [1, 1, 1, 1]} : vector<2x12x8x128xbf16> to vector<2x8x8x128xbf16>
    %144 = vector.shape_cast %143 : vector<2x8x8x128xbf16> to vector<128x128xbf16>
    %c23 = arith.constant 23 : index
    %c0_81 = arith.constant 0 : index
    %c0_82 = arith.constant 0 : index
    %145 = vector.load %arg5[%c23, %c0_81, %c0_82] : memref<25x128x128xbf16, #tpu.memory_space<vmem>>, vector<1x128x128xbf16>
    %146 = vector.shape_cast %145 : vector<1x128x128xbf16> to vector<128x128xbf16>
    %cst_83 = arith.constant dense<0.000000e+00> : vector<128x128xf32>
    %147 = tpu.matmul %144, %146, %cst_83 {dimension_numbers = #tpu.dot_dimension_numbers<[1], [0], [0], [1], [0, 0, 1, 1], [], []>} : vector<128x128xbf16>, vector<128x128xbf16>, vector<128x128xf32> -> vector<128x128xf32>
    %148 = arith.addf %142, %147 : vector<128x128xf32>
    %149 = vector.extract_strided_slice %19 {offsets = [0, 0, 4, 0], sizes = [2, 12, 8, 128], strides = [1, 1, 1, 1]} : vector<2x12x12x128xf32> to vector<2x12x8x128xf32>
    %150 = arith.truncf %149 : vector<2x12x8x128xf32> to vector<2x12x8x128xbf16>
    %151 = vector.extract_strided_slice %150 {offsets = [0, 0, 0, 0], sizes = [2, 8, 8, 128], strides = [1, 1, 1, 1]} : vector<2x12x8x128xbf16> to vector<2x8x8x128xbf16>
    %152 = vector.shape_cast %151 : vector<2x8x8x128xbf16> to vector<128x128xbf16>
    %c4 = arith.constant 4 : index
    %c0_84 = arith.constant 0 : index
    %c0_85 = arith.constant 0 : index
    %153 = vector.load %arg5[%c4, %c0_84, %c0_85] : memref<25x128x128xbf16, #tpu.memory_space<vmem>>, vector<1x128x128xbf16>
    %154 = vector.shape_cast %153 : vector<1x128x128xbf16> to vector<128x128xbf16>
    %cst_86 = arith.constant dense<0.000000e+00> : vector<128x128xf32>
    %155 = tpu.matmul %152, %154, %cst_86 {dimension_numbers = #tpu.dot_dimension_numbers<[1], [0], [0], [1], [0, 0, 1, 1], [], []>} : vector<128x128xbf16>, vector<128x128xbf16>, vector<128x128xf32> -> vector<128x128xf32>
    %156 = arith.addf %148, %155 : vector<128x128xf32>
    %157 = vector.extract_strided_slice %150 {offsets = [0, 1, 0, 0], sizes = [2, 8, 8, 128], strides = [1, 1, 1, 1]} : vector<2x12x8x128xbf16> to vector<2x8x8x128xbf16>
    %158 = vector.shape_cast %157 : vector<2x8x8x128xbf16> to vector<128x128xbf16>
    %c9 = arith.constant 9 : index
    %c0_87 = arith.constant 0 : index
    %c0_88 = arith.constant 0 : index
    %159 = vector.load %arg5[%c9, %c0_87, %c0_88] : memref<25x128x128xbf16, #tpu.memory_space<vmem>>, vector<1x128x128xbf16>
    %160 = vector.shape_cast %159 : vector<1x128x128xbf16> to vector<128x128xbf16>
    %cst_89 = arith.constant dense<0.000000e+00> : vector<128x128xf32>
    %161 = tpu.matmul %158, %160, %cst_89 {dimension_numbers = #tpu.dot_dimension_numbers<[1], [0], [0], [1], [0, 0, 1, 1], [], []>} : vector<128x128xbf16>, vector<128x128xbf16>, vector<128x128xf32> -> vector<128x128xf32>
    %162 = arith.addf %156, %161 : vector<128x128xf32>
    %163 = vector.extract_strided_slice %150 {offsets = [0, 2, 0, 0], sizes = [2, 8, 8, 128], strides = [1, 1, 1, 1]} : vector<2x12x8x128xbf16> to vector<2x8x8x128xbf16>
    %164 = vector.shape_cast %163 : vector<2x8x8x128xbf16> to vector<128x128xbf16>
    %c14 = arith.constant 14 : index
    %c0_90 = arith.constant 0 : index
    %c0_91 = arith.constant 0 : index
    %165 = vector.load %arg5[%c14, %c0_90, %c0_91] : memref<25x128x128xbf16, #tpu.memory_space<vmem>>, vector<1x128x128xbf16>
    %166 = vector.shape_cast %165 : vector<1x128x128xbf16> to vector<128x128xbf16>
    %cst_92 = arith.constant dense<0.000000e+00> : vector<128x128xf32>
    %167 = tpu.matmul %164, %166, %cst_92 {dimension_numbers = #tpu.dot_dimension_numbers<[1], [0], [0], [1], [0, 0, 1, 1], [], []>} : vector<128x128xbf16>, vector<128x128xbf16>, vector<128x128xf32> -> vector<128x128xf32>
    %168 = arith.addf %162, %167 : vector<128x128xf32>
    %169 = vector.extract_strided_slice %150 {offsets = [0, 3, 0, 0], sizes = [2, 8, 8, 128], strides = [1, 1, 1, 1]} : vector<2x12x8x128xbf16> to vector<2x8x8x128xbf16>
    %170 = vector.shape_cast %169 : vector<2x8x8x128xbf16> to vector<128x128xbf16>
    %c19 = arith.constant 19 : index
    %c0_93 = arith.constant 0 : index
    %c0_94 = arith.constant 0 : index
    %171 = vector.load %arg5[%c19, %c0_93, %c0_94] : memref<25x128x128xbf16, #tpu.memory_space<vmem>>, vector<1x128x128xbf16>
    %172 = vector.shape_cast %171 : vector<1x128x128xbf16> to vector<128x128xbf16>
    %cst_95 = arith.constant dense<0.000000e+00> : vector<128x128xf32>
    %173 = tpu.matmul %170, %172, %cst_95 {dimension_numbers = #tpu.dot_dimension_numbers<[1], [0], [0], [1], [0, 0, 1, 1], [], []>} : vector<128x128xbf16>, vector<128x128xbf16>, vector<128x128xf32> -> vector<128x128xf32>
    %174 = arith.addf %168, %173 : vector<128x128xf32>
    %175 = vector.extract_strided_slice %150 {offsets = [0, 4, 0, 0], sizes = [2, 8, 8, 128], strides = [1, 1, 1, 1]} : vector<2x12x8x128xbf16> to vector<2x8x8x128xbf16>
    %176 = vector.shape_cast %175 : vector<2x8x8x128xbf16> to vector<128x128xbf16>
    %c24 = arith.constant 24 : index
    %c0_96 = arith.constant 0 : index
    %c0_97 = arith.constant 0 : index
    %177 = vector.load %arg5[%c24, %c0_96, %c0_97] : memref<25x128x128xbf16, #tpu.memory_space<vmem>>, vector<1x128x128xbf16>
    %178 = vector.shape_cast %177 : vector<1x128x128xbf16> to vector<128x128xbf16>
    %cst_98 = arith.constant dense<0.000000e+00> : vector<128x128xf32>
    %179 = tpu.matmul %176, %178, %cst_98 {dimension_numbers = #tpu.dot_dimension_numbers<[1], [0], [0], [1], [0, 0, 1, 1], [], []>} : vector<128x128xbf16>, vector<128x128xbf16>, vector<128x128xf32> -> vector<128x128xf32>
    %180 = arith.addf %174, %179 : vector<128x128xf32>
    %c0_99 = arith.constant 0 : index
    %c0_100 = arith.constant 0 : index
    %181 = vector.load %arg6[%c0_99, %c0_100] : memref<1x128xf32, #tpu.memory_space<vmem>>, vector<1x128xf32>
    %182 = vector.broadcast %181 : vector<1x128xf32> to vector<128x128xf32>
    %183 = arith.addf %180, %182 : vector<128x128xf32>
    %c0_101 = arith.constant 0 : index
    %c0_102 = arith.constant 0 : index
    %184 = vector.load %arg7[%c0_101, %c0_102] : memref<128x128xf32, #tpu.memory_space<vmem>>, vector<128x128xf32>
    tpu.vector_store %arg7[%c0_101, %c0_102], %183 {strides = array<i32>} : memref<128x128xf32, #tpu.memory_space<vmem>>, vector<128x128xf32>,
    return
  }
  func.func @transform_0(%arg0: i32) -> (i32, i32, i32, i32) {
    %c0_i32 = arith.constant 0 : i32
    %c0_i32_0 = arith.constant 0 : i32
    %c0_i32_1 = arith.constant 0 : i32
    %c0_i32_2 = arith.constant 0 : i32
    return %arg0, %c0_i32, %c0_i32_0, %c0_i32_1 : i32, i32, i32, i32
  }
  func.func @transform_1(%arg0: i32) -> (i32, i32) {
    %c0_i32 = arith.constant 0 : i32
    %c0_i32_0 = arith.constant 0 : i32
    %c0_i32_1 = arith.constant 0 : i32
    return %c0_i32, %c0_i32_0 : i32, i32
  }
  func.func @transform_2(%arg0: i32) -> (i32, i32) {
    %c0_i32 = arith.constant 0 : i32
    %c0_i32_0 = arith.constant 0 : i32
    %c0_i32_1 = arith.constant 0 : i32
    return %c0_i32, %c0_i32_0 : i32, i32
  }
  func.func @transform_3(%arg0: i32) -> (i32, i32) {
    %c0_i32 = arith.constant 0 : i32
    %c0_i32_0 = arith.constant 0 : i32
    %c0_i32_1 = arith.constant 0 : i32
    return %c0_i32, %c0_i32_0 : i32, i32
  }
  func.func @transform_4(%arg0: i32) -> (i32, i32, i32) {
    %c0_i32 = arith.constant 0 : i32
    %c0_i32_0 = arith.constant 0 : i32
    %c0_i32_1 = arith.constant 0 : i32
    %c0_i32_2 = arith.constant 0 : i32
    return %c0_i32, %c0_i32_0, %c0_i32_1 : i32, i32, i32
  }
  func.func @transform_5(%arg0: i32) -> (i32, i32) {
    %c0_i32 = arith.constant 0 : i32
    %c0_i32_0 = arith.constant 0 : i32
    %c0_i32_1 = arith.constant 0 : i32
    return %c0_i32, %c0_i32_0 : i32, i32
  }
  func.func @transform_6(%arg0: i32) -> (i32, i32) {
    %c0_i32 = arith.constant 0 : i32
    %c0_i32_0 = arith.constant 0 : i32
    return %arg0, %c0_i32 : i32, i32
  }
}

module attributes {stable_mosaic.version = 11 : i64} {
  func.func @_final_bn_prelu_kernel(%arg0: i32, %arg1: memref<128x256xf32, #tpu.memory_space<vmem>>, %arg2: memref<1x256xf32, #tpu.memory_space<vmem>>, %arg3: memref<1x256xf32, #tpu.memory_space<vmem>>, %arg4: memref<1x1xf32, #tpu.memory_space<vmem>>, %arg5: memref<128x256xf32, #tpu.memory_space<vmem>>) attributes {dimension_semantics = [#tpu.dimension_semantics<arbitrary>], iteration_bounds = array<i64: 1>, scalar_prefetch = 0 : i64, scratch_operands = 0 : i64, tpu.core_type = #tpu.core_type<tc>, window_params = [{pipeline_mode = #tpu.pipeline_mode<synchronous>, transform_indices = @transform_0, window_bounds = array<i64: 128, 256>}, {pipeline_mode = #tpu.pipeline_mode<synchronous>, transform_indices = @transform_1, window_bounds = array<i64: 1, 256>}, {pipeline_mode = #tpu.pipeline_mode<synchronous>, transform_indices = @transform_2, window_bounds = array<i64: 1, 256>}, {pipeline_mode = #tpu.pipeline_mode<synchronous>, transform_indices = @transform_3, window_bounds = array<i64: 1, 1>}, {pipeline_mode = #tpu.pipeline_mode<synchronous>, transform_indices = @transform_4, window_bounds = array<i64: 128, 256>}]} {
    %c0 = arith.constant 0 : index
    %c0_0 = arith.constant 0 : index
    %0 = vector.load %arg1[%c0, %c0_0] : memref<128x256xf32, #tpu.memory_space<vmem>>, vector<128x256xf32>
    %cst = arith.constant dense<0.000000e+00> : vector<256xf32>
    %1 = vector.multi_reduction <add>, %0, %cst [0] : vector<128x256xf32> to vector<256xf32>
    %2 = vector.shape_cast %1 : vector<256xf32> to vector<1x256xf32>
    %cst_1 = arith.constant 7.812500e-03 : f32
    %3 = vector.broadcast %cst_1 : f32 to vector<1x256xf32>
    %4 = arith.mulf %2, %3 : vector<1x256xf32>
    %5 = vector.broadcast %4 : vector<1x256xf32> to vector<128x256xf32>
    %6 = arith.subf %0, %5 : vector<128x256xf32>
    %7 = arith.mulf %6, %6 : vector<128x256xf32>
    %cst_2 = arith.constant dense<0.000000e+00> : vector<256xf32>
    %8 = vector.multi_reduction <add>, %7, %cst_2 [0] : vector<128x256xf32> to vector<256xf32>
    %9 = vector.shape_cast %8 : vector<256xf32> to vector<1x256xf32>
    %cst_3 = arith.constant 7.812500e-03 : f32
    %10 = vector.broadcast %cst_3 : f32 to vector<1x256xf32>
    %11 = arith.mulf %9, %10 : vector<1x256xf32>
    %c0_4 = arith.constant 0 : index
    %c0_5 = arith.constant 0 : index
    %12 = vector.load %arg2[%c0_4, %c0_5] : memref<1x256xf32, #tpu.memory_space<vmem>>, vector<1x256xf32>
    %cst_6 = arith.constant 9.99999974E-6 : f32
    %13 = vector.broadcast %cst_6 : f32 to vector<1x256xf32>
    %14 = arith.addf %11, %13 : vector<1x256xf32>
    %15 = math.rsqrt %14 : vector<1x256xf32>
    %16 = arith.mulf %12, %15 : vector<1x256xf32>
    %c0_7 = arith.constant 0 : index
    %c0_8 = arith.constant 0 : index
    %17 = vector.load %arg3[%c0_7, %c0_8] : memref<1x256xf32, #tpu.memory_space<vmem>>, vector<1x256xf32>
    %18 = arith.mulf %4, %16 : vector<1x256xf32>
    %19 = arith.subf %17, %18 : vector<1x256xf32>
    %20 = vector.broadcast %16 : vector<1x256xf32> to vector<128x256xf32>
    %21 = arith.mulf %0, %20 : vector<128x256xf32>
    %22 = vector.broadcast %19 : vector<1x256xf32> to vector<128x256xf32>
    %23 = arith.addf %21, %22 : vector<128x256xf32>
    %cst_9 = arith.constant 0.000000e+00 : f32
    %24 = vector.broadcast %cst_9 : f32 to vector<128x256xf32>
    %25 = arith.cmpf oge, %23, %24 : vector<128x256xf32>
    %c0_10 = arith.constant 0 : index
    %c0_11 = arith.constant 0 : index
    %26 = vector.load %arg4[%c0_10, %c0_11] : memref<1x1xf32, #tpu.memory_space<vmem>>, vector<1x1xf32>
    %27 = vector.broadcast %26 : vector<1x1xf32> to vector<128x256xf32>
    %28 = arith.mulf %27, %23 : vector<128x256xf32>
    %29 = arith.select %25, %23, %28 : vector<128x256xi1>, vector<128x256xf32>
    %c0_12 = arith.constant 0 : index
    %c0_13 = arith.constant 0 : index
    %30 = vector.load %arg5[%c0_12, %c0_13] : memref<128x256xf32, #tpu.memory_space<vmem>>, vector<128x256xf32>
    tpu.vector_store %arg5[%c0_12, %c0_13], %29 {strides = array<i32>} : memref<128x256xf32, #tpu.memory_space<vmem>>, vector<128x256xf32>,
    return
  }
  func.func @transform_0(%arg0: i32) -> (i32, i32) {
    %c0_i32 = arith.constant 0 : i32
    %c0_i32_0 = arith.constant 0 : i32
    %c0_i32_1 = arith.constant 0 : i32
    return %c0_i32, %c0_i32_0 : i32, i32
  }
  func.func @transform_1(%arg0: i32) -> (i32, i32) {
    %c0_i32 = arith.constant 0 : i32
    %c0_i32_0 = arith.constant 0 : i32
    %c0_i32_1 = arith.constant 0 : i32
    return %c0_i32, %c0_i32_0 : i32, i32
  }
  func.func @transform_2(%arg0: i32) -> (i32, i32) {
    %c0_i32 = arith.constant 0 : i32
    %c0_i32_0 = arith.constant 0 : i32
    %c0_i32_1 = arith.constant 0 : i32
    return %c0_i32, %c0_i32_0 : i32, i32
  }
  func.func @transform_3(%arg0: i32) -> (i32, i32) {
    %c0_i32 = arith.constant 0 : i32
    %c0_i32_0 = arith.constant 0 : i32
    %c0_i32_1 = arith.constant 0 : i32
    return %c0_i32, %c0_i32_0 : i32, i32
  }
  func.func @transform_4(%arg0: i32) -> (i32, i32) {
    %c0_i32 = arith.constant 0 : i32
    %c0_i32_0 = arith.constant 0 : i32
    %c0_i32_1 = arith.constant 0 : i32
    return %c0_i32, %c0_i32_0 : i32, i32
  }
}

</mosaic_0001>

<llo_original>
// kernel: mod_inception_forward.4
$region0: #{mod_inception_forward.4}
  #allocation0 [shape = 'u32[]', space=smem, size = 0x4, offset = 0x4, fixed_abs, tag = 'smem constant byte address 0x4 - core index']
  #allocation1 [shape = 'u32[144,128]{1,0:T(1,128)}', space=vmem, size = 0x12000, scoped, tag = 'internal scratch']
  %s0 = inlined_call_operand.hbm [shape: f32[128,256], index: 0, kind: input, shape index: {}]
  %s1 = inlined_call_operand.hbm [shape: bf16[256,384], index: 1, kind: input, shape index: {}]
  %s2 = inlined_call_operand.vmem [shape: f32[1,384], index: 2, kind: input, shape index: {}]
  %s3 = inlined_call_operand.vmem [shape: f32[128,384], index: 3, kind: output, shape index: {0}]
  %s4 = inlined_call_operand.vmem [shape: f32[1,384], index: 4, kind: output, shape index: {1}]
  %s5 = inlined_call_operand.vmem [shape: f32[1,384], index: 5, kind: output, shape index: {2}]
  %6 = xla_tuple %s3, %s4, %s5
  %s7 = sld [smem:[#allocation0]]
  $region50: #{mod_inception_forward.4} parent=0
    _
  %s9 = ssub.s32 1, %s7
  %s10 = scalar_select 0, %s9, %s7
  $region1: #{mod_inception_forward.4} parent=0
    #allocation2 [shape = 'u8[131072]{0}', space=vmem, size = 0x20000, scoped, tag = 'input window, operand 0, single buffered']
    #allocation3 [shape = 's32[1]{0}', space=sflag, size = 0x4, scoped, tag = 'scoped memory for mod_inception_forward.4']
    #allocation4 [shape = 'u8[196608]{0}', space=vmem, size = 0x30000, scoped, tag = 'input window, operand 1, single buffered']
    #allocation5 [shape = 's32[1]{0}', space=sflag, size = 0x4, scoped, tag = 'scoped memory for mod_inception_forward.4']
    %11 = vsyncpa [#allocation3], 0
    %12 = vsyncpa [#allocation5], 0
    // Predicated region
    $region2: #{mod_inception_forward.4} parent=1 // pred_check
      _
    $region3: #{mod_inception_forward.4} parent=1 // pred_check_branch
      %14 = sbr.rel (0) target = $region5
    $region4: #{mod_inception_forward.4} parent=1 // pred_region
      %s16 = ssub.s32 4096, 4096
      %17 = vsyncadd [#allocation3], %s16
      %s18 = sshll.u32 [#allocation2], 4
      %s19 = int_to_ptr.vmem [resolvable:$true] %s18
      %24 = dma.hbm_to_vmem [thread:$0]  %s0, 4096, %s19, [#allocation3], 256, 256, 16
    $region5: #{mod_inception_forward.4} parent=1 // pred_fallthru
      _
    // Predicated region
    $region6: #{mod_inception_forward.4} parent=1 // pred_check
      _
    $region7: #{mod_inception_forward.4} parent=1 // pred_check_branch
      %26 = sbr.rel (0) target = $region9
    $region8: #{mod_inception_forward.4} parent=1 // pred_region
      %s28 = ssub.s32 6144, 6144
      %29 = vsyncadd [#allocation5], %s28
      %s30 = sshll.u32 [#allocation4], 4
      %s31 = int_to_ptr.vmem [resolvable:$true] %s30
      %36 = dma.hbm_to_vmem [thread:$0]  %s1, 6144, %s31, [#allocation5], 192, 192, 12
    $region9: #{mod_inception_forward.4} parent=1 // pred_fallthru
      _
    // Predicated region
    $region10: #{mod_inception_forward.4} parent=1 // pred_check
      _
    $region11: #{mod_inception_forward.4} parent=1 // pred_check_branch
      %38 = sbr.rel (0) target = $region13
    $region12: #{mod_inception_forward.4} parent=1 // pred_region
      _
    $region13: #{mod_inception_forward.4} parent=1 // pred_fallthru
      _
    // Predicated region
    $region14: #{mod_inception_forward.4} parent=1 // pred_check
      _
    $region15: #{mod_inception_forward.4} parent=1 // pred_check_branch
      %40 = sbr.rel (0) target = $region17
    $region16: #{mod_inception_forward.4} parent=1 // pred_region
      %41 = dma.done [#allocation3], 4096
    $region17: #{mod_inception_forward.4} parent=1 // pred_fallthru
      _
    // Predicated region
    $region18: #{mod_inception_forward.4} parent=1 // pred_check
      _
    $region19: #{mod_inception_forward.4} parent=1 // pred_check_branch
      %43 = sbr.rel (0) target = $region21
    $region20: #{mod_inception_forward.4} parent=1 // pred_region
      %44 = dma.done [#allocation5], 6144
    $region21: #{mod_inception_forward.4} parent=1 // pred_fallthru
      _
    %p46 = scmp.eq.s32.totalorder 0, 0
    // Predicated region
    $region22: #{mod_inception_forward.4} parent=1 // pred_check
      %p47 = pneg %p46
    $region23: #{mod_inception_forward.4} parent=1 // pred_check_branch
      %49 = sbr.rel (%p47) target = $region25
    $region24: #{mod_inception_forward.4} parent=1 // pred_region
      %v50 = vlaneseq
      %vm51 = vcmp.ge.s32.totalorder %v50, 0
      %vm52 = vcmp.lt.s32.totalorder %v50, 384
      %vm53 = vmand %vm51, %vm52
      %54 = vst.msk [vmem:[%s4] sm:$0x7] %vm53, 0.0
      %55 = vst.msk [vmem:[%s5] sm:$0x7] %vm53, 0.0
    $region25: #{mod_inception_forward.4} parent=1 // pred_fallthru
      _
    %v56 = vld [vmem:[#allocation2] sm:$0xff]
    %v57 = vld [vmem:[#allocation2 + $0x8] sm:$0xff]
    %v58 = vld [vmem:[#allocation2 + $0x10] sm:$0xff]
    %v59 = vld [vmem:[#allocation2 + $0x18] sm:$0xff]
    %v60 = vld [vmem:[#allocation2 + $0x20] sm:$0xff]
    %v61 = vld [vmem:[#allocation2 + $0x28] sm:$0xff]
    %v62 = vld [vmem:[#allocation2 + $0x30] sm:$0xff]
    %v63 = vld [vmem:[#allocation2 + $0x38] sm:$0xff]
    %v64 = vld [vmem:[#allocation2 + $0x40] sm:$0xff]
    %v65 = vld [vmem:[#allocation2 + $0x48] sm:$0xff]
    %v66 = vld [vmem:[#allocation2 + $0x50] sm:$0xff]
    %v67 = vld [vmem:[#allocation2 + $0x58] sm:$0xff]
    %v68 = vld [vmem:[#allocation2 + $0x60] sm:$0xff]
    %v69 = vld [vmem:[#allocation2 + $0x68] sm:$0xff]
    %v70 = vld [vmem:[#allocation2 + $0x70] sm:$0xff]
    %v71 = vld [vmem:[#allocation2 + $0x78] sm:$0xff]
    %v72 = vld [vmem:[#allocation2 + $0x80] sm:$0xff]
    %v73 = vld [vmem:[#allocation2 + $0x88] sm:$0xff]
    %v74 = vld [vmem:[#allocation2 + $0x90] sm:$0xff]
    %v75 = vld [vmem:[#allocation2 + $0x98] sm:$0xff]
    %v76 = vld [vmem:[#allocation2 + $0xa0] sm:$0xff]
    %v77 = vld [vmem:[#allocation2 + $0xa8] sm:$0xff]
    %v78 = vld [vmem:[#allocation2 + $0xb0] sm:$0xff]
    %v79 = vld [vmem:[#allocation2 + $0xb8] sm:$0xff]
    %v80 = vld [vmem:[#allocation2 + $0xc0] sm:$0xff]
    %v81 = vld [vmem:[#allocation2 + $0xc8] sm:$0xff]
    %v82 = vld [vmem:[#allocation2 + $0xd0] sm:$0xff]
    %v83 = vld [vmem:[#allocation2 + $0xd8] sm:$0xff]
    %v84 = vld [vmem:[#allocation2 + $0xe0] sm:$0xff]
    %v85 = vld [vmem:[#allocation2 + $0xe8] sm:$0xff]
    %v86 = vld [vmem:[#allocation2 + $0xf0] sm:$0xff]
    %v87 = vld [vmem:[#allocation2 + $0xf8] sm:$0xff]
    %v88 = vpack.c.bf16 %v58, %v56
    %v89 = vpack.c.bf16 %v59, %v57
    %v90 = vpack.c.bf16 %v62, %v60
    %v91 = vpack.c.bf16 %v63, %v61
    %v92 = vpack.c.bf16 %v66, %v64
    %v93 = vpack.c.bf16 %v67, %v65
    %v94 = vpack.c.bf16 %v70, %v68
    %v95 = vpack.c.bf16 %v71, %v69
    %v96 = vpack.c.bf16 %v74, %v72
    %v97 = vpack.c.bf16 %v75, %v73
    %v98 = vpack.c.bf16 %v78, %v76
    %v99 = vpack.c.bf16 %v79, %v77
    %v100 = vpack.c.bf16 %v82, %v80
    %v101 = vpack.c.bf16 %v83, %v81
    %v102 = vpack.c.bf16 %v86, %v84
    %v103 = vpack.c.bf16 %v87, %v85
    %v104 = vld [vmem:[#allocation4] sm:$0xff]
    %v105 = vld [vmem:[#allocation4 + $0x8] sm:$0xf]
    %v106 = vld [vmem:[#allocation4 + $0xc] sm:$0xff]
    %v107 = vld [vmem:[#allocation4 + $0x14] sm:$0xf]
    %v108 = vld [vmem:[#allocation4 + $0x18] sm:$0xff]
    %v109 = vld [vmem:[#allocation4 + $0x20] sm:$0xf]
    %v110 = vld [vmem:[#allocation4 + $0x24] sm:$0xff]
    %v111 = vld [vmem:[#allocation4 + $0x2c] sm:$0xf]
    %v112 = vld [vmem:[#allocation4 + $0x30] sm:$0xff]
    %v113 = vld [vmem:[#allocation4 + $0x38] sm:$0xf]
    %v114 = vld [vmem:[#allocation4 + $0x3c] sm:$0xff]
    %v115 = vld [vmem:[#allocation4 + $0x44] sm:$0xf]
    %v116 = vld [vmem:[#allocation4 + $0x48] sm:$0xff]
    %v117 = vld [vmem:[#allocation4 + $0x50] sm:$0xf]
    %v118 = vld [vmem:[#allocation4 + $0x54] sm:$0xff]
    %v119 = vld [vmem:[#allocation4 + $0x5c] sm:$0xf]
    %v120 = vld [vmem:[#allocation4 + $0x60] sm:$0xff]
    %v121 = vld [vmem:[#allocation4 + $0x68] sm:$0xf]
    %v122 = vld [vmem:[#allocation4 + $0x6c] sm:$0xff]
    %v123 = vld [vmem:[#allocation4 + $0x74] sm:$0xf]
    %v124 = vld [vmem:[#allocation4 + $0x78] sm:$0xff]
    %v125 = vld [vmem:[#allocation4 + $0x80] sm:$0xf]
    %v126 = vld [vmem:[#allocation4 + $0x84] sm:$0xff]
    %v127 = vld [vmem:[#allocation4 + $0x8c] sm:$0xf]
    %v128 = vld [vmem:[#allocation4 + $0x90] sm:$0xff]
    %v129 = vld [vmem:[#allocation4 + $0x98] sm:$0xf]
    %v130 = vld [vmem:[#allocation4 + $0x9c] sm:$0xff]
    %v131 = vld [vmem:[#allocation4 + $0xa4] sm:$0xf]
    %v132 = vld [vmem:[#allocation4 + $0xa8] sm:$0xff]
    %v133 = vld [vmem:[#allocation4 + $0xb0] sm:$0xf]
    %v134 = vld [vmem:[#allocation4 + $0xb4] sm:$0xff]
    %v135 = vld [vmem:[#allocation4 + $0xbc] sm:$0xf]
    %v136 = vld [vmem:[#allocation4 + $0xc0] sm:$0xff]
    %v137 = vld [vmem:[#allocation4 + $0xc8] sm:$0xf]
    %v138 = vld [vmem:[#allocation4 + $0xcc] sm:$0xff]
    %v139 = vld [vmem:[#allocation4 + $0xd4] sm:$0xf]
    %v140 = vld [vmem:[#allocation4 + $0xd8] sm:$0xff]
    %v141 = vld [vmem:[#allocation4 + $0xe0] sm:$0xf]
    %v142 = vld [vmem:[#allocation4 + $0xe4] sm:$0xff]
    %v143 = vld [vmem:[#allocation4 + $0xec] sm:$0xf]
    %v144 = vld [vmem:[#allocation4 + $0xf0] sm:$0xff]
    %v145 = vld [vmem:[#allocation4 + $0xf8] sm:$0xf]
    %v146 = vld [vmem:[#allocation4 + $0xfc] sm:$0xff]
    %v147 = vld [vmem:[#allocation4 + $0x104] sm:$0xf]
    %v148 = vld [vmem:[#allocation4 + $0x108] sm:$0xff]
    %v149 = vld [vmem:[#allocation4 + $0x110] sm:$0xf]
    %v150 = vld [vmem:[#allocation4 + $0x114] sm:$0xff]
    %v151 = vld [vmem:[#allocation4 + $0x11c] sm:$0xf]
    %v152 = vld [vmem:[#allocation4 + $0x120] sm:$0xff]
    %v153 = vld [vmem:[#allocation4 + $0x128] sm:$0xf]
    %v154 = vld [vmem:[#allocation4 + $0x12c] sm:$0xff]
    %v155 = vld [vmem:[#allocation4 + $0x134] sm:$0xf]
    %v156 = vld [vmem:[#allocation4 + $0x138] sm:$0xff]
    %v157 = vld [vmem:[#allocation4 + $0x140] sm:$0xf]
    %v158 = vld [vmem:[#allocation4 + $0x144] sm:$0xff]
    %v159 = vld [vmem:[#allocation4 + $0x14c] sm:$0xf]
    %v160 = vld [vmem:[#allocation4 + $0x150] sm:$0xff]
    %v161 = vld [vmem:[#allocation4 + $0x158] sm:$0xf]
    %v162 = vld [vmem:[#allocation4 + $0x15c] sm:$0xff]
    %v163 = vld [vmem:[#allocation4 + $0x164] sm:$0xf]
    %v164 = vld [vmem:[#allocation4 + $0x168] sm:$0xff]
    %v165 = vld [vmem:[#allocation4 + $0x170] sm:$0xf]
    %v166 = vld [vmem:[#allocation4 + $0x174] sm:$0xff]
    %v167 = vld [vmem:[#allocation4 + $0x17c] sm:$0xf]
    %v168 = vld [vmem:[%s2] sm:$0x7]
    %v170 = vlaneseq
    %v171 = vshrl.u32 %v170, 7
    %v172 = vsub.s32 0, %v171
    %v173 = vrot.slane %v168, %v172
    %v174 = vlaneseq
    %v175 = vshrl.u32 %v174, 7
    %v176 = vsub.s32 1, %v175
    %v177 = vrot.slane %v168, %v176
    %v178 = vlaneseq
    %v179 = vshrl.u32 %v178, 7
    %v180 = vsub.s32 2, %v179
    %v181 = vrot.slane %v168, %v180
    %v249 = vunpack.c.l.b16 %v104
    %v250 = vunpack.c.h.b16 %v104
    %v251 = vunpack.c.l.b16 %v105
    %v252 = vunpack.c.l.b16 %v106
    %v253 = vunpack.c.h.b16 %v106
    %v254 = vunpack.c.l.b16 %v107
    %v255 = vunpack.c.l.b16 %v108
    %v256 = vunpack.c.h.b16 %v108
    %v257 = vunpack.c.l.b16 %v109
    %v258 = vunpack.c.l.b16 %v110
    %v259 = vunpack.c.h.b16 %v110
    %v260 = vunpack.c.l.b16 %v111
    %v261 = vunpack.c.l.b16 %v112
    %v262 = vunpack.c.h.b16 %v112
    %v263 = vunpack.c.l.b16 %v113
    %v264 = vunpack.c.l.b16 %v114
    %v265 = vunpack.c.h.b16 %v114
    %v266 = vunpack.c.l.b16 %v115
    %v267 = vunpack.c.l.b16 %v116
    %v268 = vunpack.c.h.b16 %v116
    %v269 = vunpack.c.l.b16 %v117
    %v270 = vunpack.c.l.b16 %v118
    %v271 = vunpack.c.h.b16 %v118
    %v272 = vunpack.c.l.b16 %v119
    %v273 = vunpack.c.l.b16 %v120
    %v274 = vunpack.c.h.b16 %v120
    %v275 = vunpack.c.l.b16 %v121
    %v276 = vunpack.c.l.b16 %v122
    %v277 = vunpack.c.h.b16 %v122
    %v278 = vunpack.c.l.b16 %v123
    %v279 = vunpack.c.l.b16 %v124
    %v280 = vunpack.c.h.b16 %v124
    %v281 = vunpack.c.l.b16 %v125
    %v282 = vunpack.c.l.b16 %v126
    %v283 = vunpack.c.h.b16 %v126
    %v284 = vunpack.c.l.b16 %v127
    %v285 = vunpack.c.l.b16 %v128
    %v286 = vunpack.c.h.b16 %v128
    %v287 = vunpack.c.l.b16 %v129
    %v288 = vunpack.c.l.b16 %v130
    %v289 = vunpack.c.h.b16 %v130
    %v290 = vunpack.c.l.b16 %v131
    %v291 = vunpack.c.l.b16 %v132
    %v292 = vunpack.c.h.b16 %v132
    %v293 = vunpack.c.l.b16 %v133
    %v294 = vunpack.c.l.b16 %v134
    %v295 = vunpack.c.h.b16 %v134
    %v296 = vunpack.c.l.b16 %v135
    %v297 = vunpack.c.l.b16 %v136
    %v298 = vunpack.c.h.b16 %v136
    %v299 = vunpack.c.l.b16 %v137
    %v300 = vunpack.c.l.b16 %v138
    %v301 = vunpack.c.h.b16 %v138
    %v302 = vunpack.c.l.b16 %v139
    %v303 = vunpack.c.l.b16 %v140
    %v304 = vunpack.c.h.b16 %v140
    %v305 = vunpack.c.l.b16 %v141
    %v306 = vunpack.c.l.b16 %v142
    %v307 = vunpack.c.h.b16 %v142
    %v308 = vunpack.c.l.b16 %v143
    %v309 = vunpack.c.l.b16 %v144
    %v310 = vunpack.c.h.b16 %v144
    %v311 = vunpack.c.l.b16 %v145
    %v312 = vunpack.c.l.b16 %v146
    %v313 = vunpack.c.h.b16 %v146
    %v314 = vunpack.c.l.b16 %v147
    %v315 = vunpack.c.l.b16 %v148
    %v316 = vunpack.c.h.b16 %v148
    %v317 = vunpack.c.l.b16 %v149
    %v318 = vunpack.c.l.b16 %v150
    %v319 = vunpack.c.h.b16 %v150
    %v320 = vunpack.c.l.b16 %v151
    %v321 = vunpack.c.l.b16 %v152
    %v322 = vunpack.c.h.b16 %v152
    %v323 = vunpack.c.l.b16 %v153
    %v324 = vunpack.c.l.b16 %v154
    %v325 = vunpack.c.h.b16 %v154
    %v326 = vunpack.c.l.b16 %v155
    %v327 = vunpack.c.l.b16 %v156
    %v328 = vunpack.c.h.b16 %v156
    %v329 = vunpack.c.l.b16 %v157
    %v330 = vunpack.c.l.b16 %v158
    %v331 = vunpack.c.h.b16 %v158
    %v332 = vunpack.c.l.b16 %v159
    %v333 = vunpack.c.l.b16 %v160
    %v334 = vunpack.c.h.b16 %v160
    %v335 = vunpack.c.l.b16 %v161
    %v336 = vunpack.c.l.b16 %v162
    %v337 = vunpack.c.h.b16 %v162
    %v338 = vunpack.c.l.b16 %v163
    %v339 = vunpack.c.l.b16 %v164
    %v340 = vunpack.c.h.b16 %v164
    %v341 = vunpack.c.l.b16 %v165
    %v342 = vunpack.c.l.b16 %v166
    %v343 = vunpack.c.h.b16 %v166
    %v344 = vunpack.c.l.b16 %v167
    %v345 = vpack.c.b16 %v252, %v249
    %v346 = vpack.c.b16 %v253, %v250
    %v347 = vpack.c.b16 %v254, %v251
    %v348 = vpack.c.b16 %v258, %v255
    %v349 = vpack.c.b16 %v259, %v256
    %v350 = vpack.c.b16 %v260, %v257
    %v351 = vpack.c.b16 %v264, %v261
    %v352 = vpack.c.b16 %v265, %v262
    %v353 = vpack.c.b16 %v266, %v263
    %v354 = vpack.c.b16 %v270, %v267
    %v355 = vpack.c.b16 %v271, %v268
    %v356 = vpack.c.b16 %v272, %v269
    %v357 = vpack.c.b16 %v276, %v273
    %v358 = vpack.c.b16 %v277, %v274
    %v359 = vpack.c.b16 %v278, %v275
    %v360 = vpack.c.b16 %v282, %v279
    %v361 = vpack.c.b16 %v283, %v280
    %v362 = vpack.c.b16 %v284, %v281
    %v363 = vpack.c.b16 %v288, %v285
    %v364 = vpack.c.b16 %v289, %v286
    %v365 = vpack.c.b16 %v290, %v287
    %v366 = vpack.c.b16 %v294, %v291
    %v367 = vpack.c.b16 %v295, %v292
    %v368 = vpack.c.b16 %v296, %v293
    %v369 = vpack.c.b16 %v300, %v297
    %v370 = vpack.c.b16 %v301, %v298
    %v371 = vpack.c.b16 %v302, %v299
    %v372 = vpack.c.b16 %v306, %v303
    %v373 = vpack.c.b16 %v307, %v304
    %v374 = vpack.c.b16 %v308, %v305
    %v375 = vpack.c.b16 %v312, %v309
    %v376 = vpack.c.b16 %v313, %v310
    %v377 = vpack.c.b16 %v314, %v311
    %v378 = vpack.c.b16 %v318, %v315
    %v379 = vpack.c.b16 %v319, %v316
    %v380 = vpack.c.b16 %v320, %v317
    %v381 = vpack.c.b16 %v324, %v321
    %v382 = vpack.c.b16 %v325, %v322
    %v383 = vpack.c.b16 %v326, %v323
    %v384 = vpack.c.b16 %v330, %v327
    %v385 = vpack.c.b16 %v331, %v328
    %v386 = vpack.c.b16 %v332, %v329
    %v387 = vpack.c.b16 %v336, %v333
    %v388 = vpack.c.b16 %v337, %v334
    %v389 = vpack.c.b16 %v338, %v335
    %v390 = vpack.c.b16 %v342, %v339
    %v391 = vpack.c.b16 %v343, %v340
    %v392 = vpack.c.b16 %v344, %v341
    %441 = vmatprep.subr.bf16.mxu0 %v346
    %442 = vmatpush1.bf16.msra.mxu0 %v345
    %443 = vmatprep.subr.bf16.mxu0 %v349
    %444 = vmatpush1.bf16.msra.mxu0 %v348
    %445 = vmatprep.subr.bf16.mxu0 %v352
    %446 = vmatpush1.bf16.msra.mxu0 %v351
    %447 = vmatprep.subr.bf16.mxu0 %v355
    %448 = vmatpush1.bf16.msra.mxu0 %v354
    %449 = vmatprep.subr.bf16.mxu0 %v358
    %450 = vmatpush1.bf16.msra.mxu0 %v357
    %451 = vmatprep.subr.bf16.mxu0 %v361
    %452 = vmatpush1.bf16.msra.mxu0 %v360
    %453 = vmatprep.subr.bf16.mxu0 %v364
    %454 = vmatpush1.bf16.msra.mxu0 %v363
    %455 = vmatprep.subr.bf16.mxu0 %v367
    %456 = vmatpush1.bf16.msra.mxu0 %v366
    %457 = vmatprep.subr.bf16.mxu0 %v370
    %458 = vmatpush1.bf16.msra.mxu0 %v369
    %459 = vmatprep.subr.bf16.mxu0 %v373
    %460 = vmatpush1.bf16.msra.mxu0 %v372
    %461 = vmatprep.subr.bf16.mxu0 %v376
    %462 = vmatpush1.bf16.msra.mxu0 %v375
    %463 = vmatprep.subr.bf16.mxu0 %v379
    %464 = vmatpush1.bf16.msra.mxu0 %v378
    %465 = vmatprep.subr.bf16.mxu0 %v382
    %466 = vmatpush1.bf16.msra.mxu0 %v381
    %467 = vmatprep.subr.bf16.mxu0 %v385
    %468 = vmatpush1.bf16.msra.mxu0 %v384
    %469 = vmatprep.subr.bf16.mxu0 %v388
    %470 = vmatpush1.bf16.msra.mxu0 %v387
    %471 = vmatprep.subr.bf16.mxu0 %v391
    %472 = vmatpush1.bf16.msra.mxu0 %v390
    %473 = vmatprep.mubr.bf16.mxu0 %v89
    %474 = vmatmul.mubr.bf16.gmra.mrb[0].mxu0 %v88
    %v475 = vpop.f32.mrb[0].mxu0
    %v476 = vadd.f32 %v173, %v475
    %v477 = vpop.f32.mrb[0].mxu0
    %v478 = vadd.f32 %v177, %v477
    %v479 = vpop.f32.mrb[0].mxu0
    %v480 = vadd.f32 %v173, %v479
    %v481 = vpop.f32.mrb[0].mxu0
    %v482 = vadd.f32 %v177, %v481
    %483 = vmatprep.mubr.bf16.mxu0 %v91
    %484 = vmatmul.mubr.bf16.gmra.mrb[0].mxu0 %v90
    %v485 = vpop.f32.mrb[0].mxu0
    %v486 = vadd.f32 %v173, %v485
    %v487 = vpop.f32.mrb[0].mxu0
    %v488 = vadd.f32 %v177, %v487
    %v489 = vpop.f32.mrb[0].mxu0
    %v490 = vadd.f32 %v173, %v489
    %v491 = vpop.f32.mrb[0].mxu0
    %v492 = vadd.f32 %v177, %v491
    %493 = vmatprep.mubr.bf16.mxu0 %v93
    %494 = vmatmul.mubr.bf16.gmra.mrb[0].mxu0 %v92
    %v495 = vpop.f32.mrb[0].mxu0
    %v496 = vadd.f32 %v173, %v495
    %v497 = vpop.f32.mrb[0].mxu0
    %v498 = vadd.f32 %v177, %v497
    %v499 = vpop.f32.mrb[0].mxu0
    %v500 = vadd.f32 %v173, %v499
    %v501 = vpop.f32.mrb[0].mxu0
    %v502 = vadd.f32 %v177, %v501
    %503 = vmatprep.mubr.bf16.mxu0 %v95
    %504 = vmatmul.mubr.bf16.gmra.mrb[0].mxu0 %v94
    %v505 = vpop.f32.mrb[0].mxu0
    %v506 = vadd.f32 %v173, %v505
    %v507 = vpop.f32.mrb[0].mxu0
    %v508 = vadd.f32 %v177, %v507
    %v509 = vpop.f32.mrb[0].mxu0
    %v510 = vadd.f32 %v173, %v509
    %v511 = vpop.f32.mrb[0].mxu0
    %v512 = vadd.f32 %v177, %v511
    %513 = vmatprep.mubr.bf16.mxu0 %v97
    %514 = vmatmul.mubr.bf16.gmra.mrb[0].mxu0 %v96
    %v515 = vpop.f32.mrb[0].mxu0
    %v516 = vadd.f32 %v173, %v515
    %v517 = vpop.f32.mrb[0].mxu0
    %v518 = vadd.f32 %v177, %v517
    %v519 = vpop.f32.mrb[0].mxu0
    %v520 = vadd.f32 %v173, %v519
    %v521 = vpop.f32.mrb[0].mxu0
    %v522 = vadd.f32 %v177, %v521
    %523 = vmatprep.mubr.bf16.mxu0 %v99
    %524 = vmatmul.mubr.bf16.gmra.mrb[0].mxu0 %v98
    %v525 = vpop.f32.mrb[0].mxu0
    %v526 = vadd.f32 %v173, %v525
    %v527 = vpop.f32.mrb[0].mxu0
    %v528 = vadd.f32 %v177, %v527
    %v529 = vpop.f32.mrb[0].mxu0
    %v530 = vadd.f32 %v173, %v529
    %v531 = vpop.f32.mrb[0].mxu0
    %v532 = vadd.f32 %v177, %v531
    %533 = vmatprep.mubr.bf16.mxu0 %v101
    %534 = vmatmul.mubr.bf16.gmra.mrb[0].mxu0 %v100
    %v535 = vpop.f32.mrb[0].mxu0
    %v536 = vadd.f32 %v173, %v535
    %v537 = vpop.f32.mrb[0].mxu0
    %v538 = vadd.f32 %v177, %v537
    %v539 = vpop.f32.mrb[0].mxu0
    %v540 = vadd.f32 %v173, %v539
    %v541 = vpop.f32.mrb[0].mxu0
    %v542 = vadd.f32 %v177, %v541
    %543 = vmatprep.mubr.bf16.mxu0 %v103
    %544 = vmatmul.mubr.bf16.gmra.mrb[0].mxu0 %v102
    %v545 = vpop.f32.mrb[0].mxu0
    %v546 = vadd.f32 %v173, %v545
    %v547 = vpop.f32.mrb[0].mxu0
    %v548 = vadd.f32 %v177, %v547
    %v549 = vpop.f32.mrb[0].mxu0
    %v550 = vadd.f32 %v173, %v549
    %v551 = vpop.f32.mrb[0].mxu0
    %v552 = vadd.f32 %v177, %v551
    %553 = vdwg.mxu0
    %554 = vmatprep.subr.bf16.mxu0 0
    %555 = vmatpush1.bf16.msra.mxu0 %v347
    %556 = vmatprep.subr.bf16.mxu0 0
    %557 = vmatpush1.bf16.msra.mxu0 %v350
    %558 = vmatprep.subr.bf16.mxu0 0
    %559 = vmatpush1.bf16.msra.mxu0 %v353
    %560 = vmatprep.subr.bf16.mxu0 0
    %561 = vmatpush1.bf16.msra.mxu0 %v356
    %562 = vmatprep.subr.bf16.mxu0 0
    %563 = vmatpush1.bf16.msra.mxu0 %v359
    %564 = vmatprep.subr.bf16.mxu0 0
    %565 = vmatpush1.bf16.msra.mxu0 %v362
    %566 = vmatprep.subr.bf16.mxu0 0
    %567 = vmatpush1.bf16.msra.mxu0 %v365
    %568 = vmatprep.subr.bf16.mxu0 0
    %569 = vmatpush1.bf16.msra.mxu0 %v368
    %570 = vmatprep.subr.bf16.mxu0 0
    %571 = vmatpush1.bf16.msra.mxu0 %v371
    %572 = vmatprep.subr.bf16.mxu0 0
    %573 = vmatpush1.bf16.msra.mxu0 %v374
    %574 = vmatprep.subr.bf16.mxu0 0
    %575 = vmatpush1.bf16.msra.mxu0 %v377
    %576 = vmatprep.subr.bf16.mxu0 0
    %577 = vmatpush1.bf16.msra.mxu0 %v380
    %578 = vmatprep.subr.bf16.mxu0 0
    %579 = vmatpush1.bf16.msra.mxu0 %v383
    %580 = vmatprep.subr.bf16.mxu0 0
    %581 = vmatpush1.bf16.msra.mxu0 %v386
    %582 = vmatprep.subr.bf16.mxu0 0
    %583 = vmatpush1.bf16.msra.mxu0 %v389
    %584 = vmatprep.subr.bf16.mxu0 0
    %585 = vmatpush1.bf16.msra.mxu0 %v392
    %586 = vmatprep.mubr.bf16.mxu0 %v89
    %587 = vmatmul.mubr.bf16.gmra.mrb[0].mxu0 %v88
    %v588 = vpop.f32.mrb[0].mxu0
    %v589 = vadd.f32 %v181, %v588
    %v590 = vpop.f32.mrb[0].mxu0
    %v591 = vpop.f32.mrb[0].mxu0
    %v592 = vadd.f32 %v181, %v591
    %v593 = vpop.f32.mrb[0].mxu0
    %594 = vmatprep.mubr.bf16.mxu0 %v91
    %595 = vmatmul.mubr.bf16.gmra.mrb[0].mxu0 %v90
    %v596 = vpop.f32.mrb[0].mxu0
    %v597 = vadd.f32 %v181, %v596
    %v598 = vpop.f32.mrb[0].mxu0
    %v599 = vpop.f32.mrb[0].mxu0
    %v600 = vadd.f32 %v181, %v599
    %v601 = vpop.f32.mrb[0].mxu0
    %602 = vmatprep.mubr.bf16.mxu0 %v93
    %603 = vmatmul.mubr.bf16.gmra.mrb[0].mxu0 %v92
    %v604 = vpop.f32.mrb[0].mxu0
    %v605 = vadd.f32 %v181, %v604
    %v606 = vpop.f32.mrb[0].mxu0
    %v607 = vpop.f32.mrb[0].mxu0
    %v608 = vadd.f32 %v181, %v607
    %v609 = vpop.f32.mrb[0].mxu0
    %610 = vmatprep.mubr.bf16.mxu0 %v95
    %611 = vmatmul.mubr.bf16.gmra.mrb[0].mxu0 %v94
    %v612 = vpop.f32.mrb[0].mxu0
    %v613 = vadd.f32 %v181, %v612
    %v614 = vpop.f32.mrb[0].mxu0
    %v615 = vpop.f32.mrb[0].mxu0
    %v616 = vadd.f32 %v181, %v615
    %v617 = vpop.f32.mrb[0].mxu0
    %618 = vmatprep.mubr.bf16.mxu0 %v97
    %619 = vmatmul.mubr.bf16.gmra.mrb[0].mxu0 %v96
    %v620 = vpop.f32.mrb[0].mxu0
    %v621 = vadd.f32 %v181, %v620
    %v622 = vpop.f32.mrb[0].mxu0
    %v623 = vpop.f32.mrb[0].mxu0
    %v624 = vadd.f32 %v181, %v623
    %v625 = vpop.f32.mrb[0].mxu0
    %626 = vmatprep.mubr.bf16.mxu0 %v99
    %627 = vmatmul.mubr.bf16.gmra.mrb[0].mxu0 %v98
    %v628 = vpop.f32.mrb[0].mxu0
    %v629 = vadd.f32 %v181, %v628
    %v630 = vpop.f32.mrb[0].mxu0
    %v631 = vpop.f32.mrb[0].mxu0
    %v632 = vadd.f32 %v181, %v631
    %v633 = vpop.f32.mrb[0].mxu0
    %634 = vmatprep.mubr.bf16.mxu0 %v101
    %635 = vmatmul.mubr.bf16.gmra.mrb[0].mxu0 %v100
    %v636 = vpop.f32.mrb[0].mxu0
    %v637 = vadd.f32 %v181, %v636
    %v638 = vpop.f32.mrb[0].mxu0
    %v639 = vpop.f32.mrb[0].mxu0
    %v640 = vadd.f32 %v181, %v639
    %v641 = vpop.f32.mrb[0].mxu0
    %642 = vmatprep.mubr.bf16.mxu0 %v103
    %643 = vmatmul.mubr.bf16.gmra.mrb[0].mxu0 %v102
    %v644 = vpop.f32.mrb[0].mxu0
    %v645 = vadd.f32 %v181, %v644
    %v646 = vpop.f32.mrb[0].mxu0
    %v647 = vpop.f32.mrb[0].mxu0
    %v648 = vadd.f32 %v181, %v647
    %v649 = vpop.f32.mrb[0].mxu0
    %650 = vdwg.mxu0
    %651 = vst [vmem:[%s3] sm:$0xff] %v476
    %652 = vst [vmem:[%s3 + $0x8] sm:$0xff] %v478
    %653 = vst [vmem:[%s3 + $0x10] sm:$0xff] %v589
    %654 = vst [vmem:[%s3 + $0x18] sm:$0xff] %v480
    %655 = vst [vmem:[%s3 + $0x20] sm:$0xff] %v482
    %656 = vst [vmem:[%s3 + $0x28] sm:$0xff] %v592
    %657 = vst [vmem:[%s3 + $0x30] sm:$0xff] %v486
    %658 = vst [vmem:[%s3 + $0x38] sm:$0xff] %v488
    %659 = vst [vmem:[%s3 + $0x40] sm:$0xff] %v597
    %660 = vst [vmem:[%s3 + $0x48] sm:$0xff] %v490
    %661 = vst [vmem:[%s3 + $0x50] sm:$0xff] %v492
    %662 = vst [vmem:[%s3 + $0x58] sm:$0xff] %v600
    %663 = vst [vmem:[%s3 + $0x60] sm:$0xff] %v496
    %664 = vst [vmem:[%s3 + $0x68] sm:$0xff] %v498
    %665 = vst [vmem:[%s3 + $0x70] sm:$0xff] %v605
    %666 = vst [vmem:[%s3 + $0x78] sm:$0xff] %v500
    %667 = vst [vmem:[%s3 + $0x80] sm:$0xff] %v502
    %668 = vst [vmem:[%s3 + $0x88] sm:$0xff] %v608
    %669 = vst [vmem:[%s3 + $0x90] sm:$0xff] %v506
    %670 = vst [vmem:[%s3 + $0x98] sm:$0xff] %v508
    %671 = vst [vmem:[%s3 + $0xa0] sm:$0xff] %v613
    %672 = vst [vmem:[%s3 + $0xa8] sm:$0xff] %v510
    %673 = vst [vmem:[%s3 + $0xb0] sm:$0xff] %v512
    %674 = vst [vmem:[%s3 + $0xb8] sm:$0xff] %v616
    %675 = vst [vmem:[%s3 + $0xc0] sm:$0xff] %v516
    %676 = vst [vmem:[%s3 + $0xc8] sm:$0xff] %v518
    %677 = vst [vmem:[%s3 + $0xd0] sm:$0xff] %v621
    %678 = vst [vmem:[%s3 + $0xd8] sm:$0xff] %v520
    %679 = vst [vmem:[%s3 + $0xe0] sm:$0xff] %v522
    %680 = vst [vmem:[%s3 + $0xe8] sm:$0xff] %v624
    %681 = vst [vmem:[%s3 + $0xf0] sm:$0xff] %v526
    %682 = vst [vmem:[%s3 + $0xf8] sm:$0xff] %v528
    %683 = vst [vmem:[%s3 + $0x100] sm:$0xff] %v629
    %684 = vst [vmem:[%s3 + $0x108] sm:$0xff] %v530
    %685 = vst [vmem:[%s3 + $0x110] sm:$0xff] %v532
    %686 = vst [vmem:[%s3 + $0x118] sm:$0xff] %v632
    %687 = vst [vmem:[%s3 + $0x120] sm:$0xff] %v536
    %688 = vst [vmem:[%s3 + $0x128] sm:$0xff] %v538
    %689 = vst [vmem:[%s3 + $0x130] sm:$0xff] %v637
    %690 = vst [vmem:[%s3 + $0x138] sm:$0xff] %v540
    %691 = vst [vmem:[%s3 + $0x140] sm:$0xff] %v542
    %692 = vst [vmem:[%s3 + $0x148] sm:$0xff] %v640
    %693 = vst [vmem:[%s3 + $0x150] sm:$0xff] %v546
    %694 = vst [vmem:[%s3 + $0x158] sm:$0xff] %v548
    %695 = vst [vmem:[%s3 + $0x160] sm:$0xff] %v645
    %696 = vst [vmem:[%s3 + $0x168] sm:$0xff] %v550
    %697 = vst [vmem:[%s3 + $0x170] sm:$0xff] %v552
    %698 = vst [vmem:[%s3 + $0x178] sm:$0xff] %v648
    %v699 = vld [vmem:[%s4] sm:$0x7]
    %v700 = vadd.f32 %v476, %v480
    %v701 = vadd.f32 %v700, %v486
    %v702 = vadd.f32 %v701, %v490
    %v703 = vadd.f32 %v702, %v496
    %v704 = vadd.f32 %v703, %v500
    %v705 = vadd.f32 %v704, %v506
    %v706 = vadd.f32 %v705, %v510
    %v707 = vadd.f32 %v706, %v516
    %v708 = vadd.f32 %v707, %v520
    %v709 = vadd.f32 %v708, %v526
    %v710 = vadd.f32 %v709, %v530
    %v711 = vadd.f32 %v710, %v536
    %v712 = vadd.f32 %v711, %v540
    %v713 = vadd.f32 %v712, %v546
    %v714 = vadd.f32 %v713, %v550
    %v715 = vrot.slane %v714, 4
    %v716 = vadd.f32 %v714, %v715
    %v717 = vrot.slane %v716, 2
    %v718 = vadd.f32 %v716, %v717
    %v719 = vrot.slane %v718, 1
    %v720 = vadd.f32 %v718, %v719
    %v721 = vadd.f32 %v478, %v482
    %v722 = vadd.f32 %v721, %v488
    %v723 = vadd.f32 %v722, %v492
    %v724 = vadd.f32 %v723, %v498
    %v725 = vadd.f32 %v724, %v502
    %v726 = vadd.f32 %v725, %v508
    %v727 = vadd.f32 %v726, %v512
    %v728 = vadd.f32 %v727, %v518
    %v729 = vadd.f32 %v728, %v522
    %v730 = vadd.f32 %v729, %v528
    %v731 = vadd.f32 %v730, %v532
    %v732 = vadd.f32 %v731, %v538
    %v733 = vadd.f32 %v732, %v542
    %v734 = vadd.f32 %v733, %v548
    %v735 = vadd.f32 %v734, %v552
    %v736 = vrot.slane %v735, 4
    %v737 = vadd.f32 %v735, %v736
    %v738 = vrot.slane %v737, 2
    %v739 = vadd.f32 %v737, %v738
    %v740 = vrot.slane %v739, 1
    %v741 = vadd.f32 %v739, %v740
    %v742 = vadd.f32 %v589, %v592
    %v743 = vadd.f32 %v742, %v597
    %v744 = vadd.f32 %v743, %v600
    %v745 = vadd.f32 %v744, %v605
    %v746 = vadd.f32 %v745, %v608
    %v747 = vadd.f32 %v746, %v613
    %v748 = vadd.f32 %v747, %v616
    %v749 = vadd.f32 %v748, %v621
    %v750 = vadd.f32 %v749, %v624
    %v751 = vadd.f32 %v750, %v629
    %v752 = vadd.f32 %v751, %v632
    %v753 = vadd.f32 %v752, %v637
    %v754 = vadd.f32 %v753, %v640
    %v755 = vadd.f32 %v754, %v645
    %v756 = vadd.f32 %v755, %v648
    %v757 = vrot.slane %v756, 4
    %v758 = vadd.f32 %v756, %v757
    %v759 = vrot.slane %v758, 2
    %v760 = vadd.f32 %v758, %v759
    %v761 = vrot.slane %v760, 1
    %v762 = vadd.f32 %v760, %v761
    %v766 = vcombine.low %v720, %v741
    %v768 = vunpack.c.l.s4 1966171168
    %v769 = vunpack.c.0.s8 %v768
    %v770 = vlaneseq
    %v771 = vshrl.u32 %v770, 7
    %v772 = vsub.s32 %v769, %v771
    %v773 = vrot.slane %v766, %v772
    %v775 = vunpack.c.l.s4 1966171168
    %v776 = vunpack.c.0.s8 %v775
    %v777 = vlaneseq
    %v778 = vshrl.u32 %v777, 7
    %v779 = vsub.s32 %v776, %v778
    %v780 = vrot.slane %v762, %v779
    %v781 = vcombine.low %v773, %v780
    %v783 = vunpack.c.l.s4 1966171168
    %v784 = vunpack.c.0.s8 %v783
    %v785 = vlaneseq
    %v786 = vshrl.u32 %v785, 7
    %v787 = vsub.s32 %v784, %v786
    %v788 = vrot.slane %v781, %v787
    %v790 = vadd.f32 %v699, %v788
    %v791 = vlaneseq
    %vm792 = vcmp.ge.s32.totalorder %v791, 0
    %vm793 = vcmp.lt.s32.totalorder %v791, 384
    %vm794 = vmand %vm792, %vm793
    %795 = vst.msk [vmem:[%s4] sm:$0x7] %vm794, %v790
    %v796 = vld [vmem:[%s5] sm:$0x7]
    %v797 = vmul.f32 %v476, %v476
    %v798 = vmul.f32 %v478, %v478
    %v799 = vmul.f32 %v589, %v589
    %v800 = vmul.f32 %v480, %v480
    %v801 = vmul.f32 %v482, %v482
    %v802 = vmul.f32 %v592, %v592
    %v803 = vmul.f32 %v486, %v486
    %v804 = vmul.f32 %v488, %v488
    %v805 = vmul.f32 %v597, %v597
    %v806 = vmul.f32 %v490, %v490
    %v807 = vmul.f32 %v492, %v492
    %v808 = vmul.f32 %v600, %v600
    %v809 = vmul.f32 %v496, %v496
    %v810 = vmul.f32 %v498, %v498
    %v811 = vmul.f32 %v605, %v605
    %v812 = vmul.f32 %v500, %v500
    %v813 = vmul.f32 %v502, %v502
    %v814 = vmul.f32 %v608, %v608
    %v815 = vmul.f32 %v506, %v506
    %v816 = vmul.f32 %v508, %v508
    %v817 = vmul.f32 %v613, %v613
    %v818 = vmul.f32 %v510, %v510
    %v819 = vmul.f32 %v512, %v512
    %v820 = vmul.f32 %v616, %v616
    %v821 = vmul.f32 %v516, %v516
    %v822 = vmul.f32 %v518, %v518
    %v823 = vmul.f32 %v621, %v621
    %v824 = vmul.f32 %v520, %v520
    %v825 = vmul.f32 %v522, %v522
    %v826 = vmul.f32 %v624, %v624
    %v827 = vmul.f32 %v526, %v526
    %v828 = vmul.f32 %v528, %v528
    %v829 = vmul.f32 %v629, %v629
    %v830 = vmul.f32 %v530, %v530
    %v831 = vmul.f32 %v532, %v532
    %v832 = vmul.f32 %v632, %v632
    %v833 = vmul.f32 %v536, %v536
    %v834 = vmul.f32 %v538, %v538
    %v835 = vmul.f32 %v637, %v637
    %v836 = vmul.f32 %v540, %v540
    %v837 = vmul.f32 %v542, %v542
    %v838 = vmul.f32 %v640, %v640
    %v839 = vmul.f32 %v546, %v546
    %v840 = vmul.f32 %v548, %v548
    %v841 = vmul.f32 %v645, %v645
    %v842 = vmul.f32 %v550, %v550
    %v843 = vmul.f32 %v552, %v552
    %v844 = vmul.f32 %v648, %v648
    %v845 = vadd.f32 %v797, %v800
    %v846 = vadd.f32 %v845, %v803
    %v847 = vadd.f32 %v846, %v806
    %v848 = vadd.f32 %v847, %v809
    %v849 = vadd.f32 %v848, %v812
    %v850 = vadd.f32 %v849, %v815
    %v851 = vadd.f32 %v850, %v818
    %v852 = vadd.f32 %v851, %v821
    %v853 = vadd.f32 %v852, %v824
    %v854 = vadd.f32 %v853, %v827
    %v855 = vadd.f32 %v854, %v830
    %v856 = vadd.f32 %v855, %v833
    %v857 = vadd.f32 %v856, %v836
    %v858 = vadd.f32 %v857, %v839
    %v859 = vadd.f32 %v858, %v842
    %v860 = vrot.slane %v859, 4
    %v861 = vadd.f32 %v859, %v860
    %v862 = vrot.slane %v861, 2
    %v863 = vadd.f32 %v861, %v862
    %v864 = vrot.slane %v863, 1
    %v865 = vadd.f32 %v863, %v864
    %v866 = vadd.f32 %v798, %v801
    %v867 = vadd.f32 %v866, %v804
    %v868 = vadd.f32 %v867, %v807
    %v869 = vadd.f32 %v868, %v810
    %v870 = vadd.f32 %v869, %v813
    %v871 = vadd.f32 %v870, %v816
    %v872 = vadd.f32 %v871, %v819
    %v873 = vadd.f32 %v872, %v822
    %v874 = vadd.f32 %v873, %v825
    %v875 = vadd.f32 %v874, %v828
    %v876 = vadd.f32 %v875, %v831
    %v877 = vadd.f32 %v876, %v834
    %v878 = vadd.f32 %v877, %v837
    %v879 = vadd.f32 %v878, %v840
    %v880 = vadd.f32 %v879, %v843
    %v881 = vrot.slane %v880, 4
    %v882 = vadd.f32 %v880, %v881
    %v883 = vrot.slane %v882, 2
    %v884 = vadd.f32 %v882, %v883
    %v885 = vrot.slane %v884, 1
    %v886 = vadd.f32 %v884, %v885
    %v887 = vadd.f32 %v799, %v802
    %v888 = vadd.f32 %v887, %v805
    %v889 = vadd.f32 %v888, %v808
    %v890 = vadd.f32 %v889, %v811
    %v891 = vadd.f32 %v890, %v814
    %v892 = vadd.f32 %v891, %v817
    %v893 = vadd.f32 %v892, %v820
    %v894 = vadd.f32 %v893, %v823
    %v895 = vadd.f32 %v894, %v826
    %v896 = vadd.f32 %v895, %v829
    %v897 = vadd.f32 %v896, %v832
    %v898 = vadd.f32 %v897, %v835
    %v899 = vadd.f32 %v898, %v838
    %v900 = vadd.f32 %v899, %v841
    %v901 = vadd.f32 %v900, %v844
    %v902 = vrot.slane %v901, 4
    %v903 = vadd.f32 %v901, %v902
    %v904 = vrot.slane %v903, 2
    %v905 = vadd.f32 %v903, %v904
    %v906 = vrot.slane %v905, 1
    %v907 = vadd.f32 %v905, %v906
    %v911 = vcombine.low %v865, %v886
    %v913 = vunpack.c.l.s4 1966171168
    %v914 = vunpack.c.0.s8 %v913
    %v915 = vlaneseq
    %v916 = vshrl.u32 %v915, 7
    %v917 = vsub.s32 %v914, %v916
    %v918 = vrot.slane %v911, %v917
    %v920 = vunpack.c.l.s4 1966171168
    %v921 = vunpack.c.0.s8 %v920
    %v922 = vlaneseq
    %v923 = vshrl.u32 %v922, 7
    %v924 = vsub.s32 %v921, %v923
    %v925 = vrot.slane %v907, %v924
    %v926 = vcombine.low %v918, %v925
    %v928 = vunpack.c.l.s4 1966171168
    %v929 = vunpack.c.0.s8 %v928
    %v930 = vlaneseq
    %v931 = vshrl.u32 %v930, 7
    %v932 = vsub.s32 %v929, %v931
    %v933 = vrot.slane %v926, %v932
    %v935 = vadd.f32 %v796, %v933
    %936 = vst.msk [vmem:[%s5] sm:$0x7] %vm794, %v935
    // Predicated region
    $region26: #{mod_inception_forward.4} parent=1 // pred_check
      _
    $region27: #{mod_inception_forward.4} parent=1 // pred_check_branch
      %938 = sbr.rel (0) target = $region29
    $region28: #{mod_inception_forward.4} parent=1 // pred_region
      _
    $region29: #{mod_inception_forward.4} parent=1 // pred_fallthru
      _
    // Predicated region
    $region30: #{mod_inception_forward.4} parent=1 // pred_check
      _
    $region31: #{mod_inception_forward.4} parent=1 // pred_check_branch
      %940 = sbr.rel (0) target = $region33
    $region32: #{mod_inception_forward.4} parent=1 // pred_region
      _
    $region33: #{mod_inception_forward.4} parent=1 // pred_fallthru
      _
    // Predicated region
    $region34: #{mod_inception_forward.4} parent=1 // pred_check
      _
    $region35: #{mod_inception_forward.4} parent=1 // pred_check_branch
      %942 = sbr.rel (0) target = $region37
    $region36: #{mod_inception_forward.4} parent=1 // pred_region
      _
    $region37: #{mod_inception_forward.4} parent=1 // pred_fallthru
      _
    // Predicated region
    $region38: #{mod_inception_forward.4} parent=1 // pred_check
      _
    $region39: #{mod_inception_forward.4} parent=1 // pred_check_branch
      %944 = sbr.rel (0) target = $region41
    $region40: #{mod_inception_forward.4} parent=1 // pred_region
      _
    $region41: #{mod_inception_forward.4} parent=1 // pred_fallthru
      _
    // Predicated region
    $region42: #{mod_inception_forward.4} parent=1 // pred_check
      _
    $region43: #{mod_inception_forward.4} parent=1 // pred_check_branch
      %946 = sbr.rel (0) target = $region45
    $region44: #{mod_inception_forward.4} parent=1 // pred_region
      _
    $region45: #{mod_inception_forward.4} parent=1 // pred_fallthru
      _
    // Predicated region
    $region46: #{mod_inception_forward.4} parent=1 // pred_check
      _
    $region47: #{mod_inception_forward.4} parent=1 // pred_check_branch
      %948 = sbr.rel (0) target = $region49
    $region48: #{mod_inception_forward.4} parent=1 // pred_region
      _
    $region49: #{mod_inception_forward.4} parent=1 // pred_fallthru
      _
    %949 = vsyncpa [#allocation3], 1
    %950 = vsyncpa [#allocation5], 1

// kernel: mod_inception_forward.7
$region0: #{mod_inception_forward.7}
  #allocation0 [shape = 'u32[]', space=smem, size = 0x4, offset = 0x4, fixed_abs, tag = 'smem constant byte address 0x4 - core index']
  #allocation1 [shape = 'u32[144,128]{1,0:T(1,128)}', space=vmem, size = 0x12000, scoped, tag = 'internal scratch']
  #allocation2 [shape = 'f32[1,1]{1,0:T(1,128)S(1)}', space=vmem, size = 0x200, scoped, tag = 'scoped memory for mod_inception_forward.7']
  %s0 = inlined_call_operand.vmem [shape: f32[128,256], index: 0, kind: input, shape index: {}]
  %s1 = inlined_call_operand.vmem [shape: f32[1,256], index: 1, kind: input, shape index: {}]
  %s2 = inlined_call_operand.vmem [shape: f32[1,256], index: 2, kind: input, shape index: {}]
  %s3 = inlined_call_operand.<no memory space> [shape: f32[1,1], index: 3, kind: input, shape index: {}]
  %s4 = inlined_call_operand.hbm [shape: f32[128,256], index: 4, kind: output, shape index: {}]
  %s5 = sld [smem:[#allocation0]]
  $region26: #{mod_inception_forward.7} parent=0
    _
  %s7 = ssub.s32 1, %s5
  %s8 = scalar_select 0, %s7, %s5
  %v9 = vstv %s3
  %10 = vst [vmem:[#allocation2] sm:$0x1] %v9
  $region1: #{mod_inception_forward.7} parent=0
    #allocation3 [shape = 'u8[131072]{0}', space=vmem, size = 0x20000, scoped, tag = 'output window, operand 0, single buffered']
    #allocation4 [shape = 's32[1]{0}', space=sflag, size = 0x4, scoped, tag = 'scoped memory for mod_inception_forward.7']
    %11 = vsyncpa [#allocation4], 0
    // Predicated region
    $region2: #{mod_inception_forward.7} parent=1 // pred_check
      _
    $region3: #{mod_inception_forward.7} parent=1 // pred_check_branch
      %13 = sbr.rel (0) target = $region5
    $region4: #{mod_inception_forward.7} parent=1 // pred_region
      _
    $region5: #{mod_inception_forward.7} parent=1 // pred_fallthru
      _
    // Predicated region
    $region6: #{mod_inception_forward.7} parent=1 // pred_check
      _
    $region7: #{mod_inception_forward.7} parent=1 // pred_check_branch
      %15 = sbr.rel (0) target = $region9
    $region8: #{mod_inception_forward.7} parent=1 // pred_region
      _
    $region9: #{mod_inception_forward.7} parent=1 // pred_fallthru
      _
    // Predicated region
    $region10: #{mod_inception_forward.7} parent=1 // pred_check
      _
    $region11: #{mod_inception_forward.7} parent=1 // pred_check_branch
      %17 = sbr.rel (0) target = $region13
    $region12: #{mod_inception_forward.7} parent=1 // pred_region
      _
    $region13: #{mod_inception_forward.7} parent=1 // pred_fallthru
      _
    // Predicated region
    $region14: #{mod_inception_forward.7} parent=1 // pred_check
      _
    $region15: #{mod_inception_forward.7} parent=1 // pred_check_branch
      %19 = sbr.rel (0) target = $region17
    $region16: #{mod_inception_forward.7} parent=1 // pred_region
      _
    $region17: #{mod_inception_forward.7} parent=1 // pred_fallthru
      _
    %v20 = vld [vmem:[%s0] sm:$0xff]
    %v21 = vld [vmem:[%s0 + $0x8] sm:$0xff]
    %v22 = vld [vmem:[%s0 + $0x10] sm:$0xff]
    %v23 = vld [vmem:[%s0 + $0x18] sm:$0xff]
    %v24 = vld [vmem:[%s0 + $0x20] sm:$0xff]
    %v25 = vld [vmem:[%s0 + $0x28] sm:$0xff]
    %v26 = vld [vmem:[%s0 + $0x30] sm:$0xff]
    %v27 = vld [vmem:[%s0 + $0x38] sm:$0xff]
    %v28 = vld [vmem:[%s0 + $0x40] sm:$0xff]
    %v29 = vld [vmem:[%s0 + $0x48] sm:$0xff]
    %v30 = vld [vmem:[%s0 + $0x50] sm:$0xff]
    %v31 = vld [vmem:[%s0 + $0x58] sm:$0xff]
    %v32 = vld [vmem:[%s0 + $0x60] sm:$0xff]
    %v33 = vld [vmem:[%s0 + $0x68] sm:$0xff]
    %v34 = vld [vmem:[%s0 + $0x70] sm:$0xff]
    %v35 = vld [vmem:[%s0 + $0x78] sm:$0xff]
    %v36 = vld [vmem:[%s0 + $0x80] sm:$0xff]
    %v37 = vld [vmem:[%s0 + $0x88] sm:$0xff]
    %v38 = vld [vmem:[%s0 + $0x90] sm:$0xff]
    %v39 = vld [vmem:[%s0 + $0x98] sm:$0xff]
    %v40 = vld [vmem:[%s0 + $0xa0] sm:$0xff]
    %v41 = vld [vmem:[%s0 + $0xa8] sm:$0xff]
    %v42 = vld [vmem:[%s0 + $0xb0] sm:$0xff]
    %v43 = vld [vmem:[%s0 + $0xb8] sm:$0xff]
    %v44 = vld [vmem:[%s0 + $0xc0] sm:$0xff]
    %v45 = vld [vmem:[%s0 + $0xc8] sm:$0xff]
    %v46 = vld [vmem:[%s0 + $0xd0] sm:$0xff]
    %v47 = vld [vmem:[%s0 + $0xd8] sm:$0xff]
    %v48 = vld [vmem:[%s0 + $0xe0] sm:$0xff]
    %v49 = vld [vmem:[%s0 + $0xe8] sm:$0xff]
    %v50 = vld [vmem:[%s0 + $0xf0] sm:$0xff]
    %v51 = vld [vmem:[%s0 + $0xf8] sm:$0xff]
    %v52 = vadd.f32 %v20, %v22
    %v53 = vadd.f32 %v52, %v24
    %v54 = vadd.f32 %v53, %v26
    %v55 = vadd.f32 %v54, %v28
    %v56 = vadd.f32 %v55, %v30
    %v57 = vadd.f32 %v56, %v32
    %v58 = vadd.f32 %v57, %v34
    %v59 = vadd.f32 %v58, %v36
    %v60 = vadd.f32 %v59, %v38
    %v61 = vadd.f32 %v60, %v40
    %v62 = vadd.f32 %v61, %v42
    %v63 = vadd.f32 %v62, %v44
    %v64 = vadd.f32 %v63, %v46
    %v65 = vadd.f32 %v64, %v48
    %v66 = vadd.f32 %v65, %v50
    %v67 = vrot.slane %v66, 4
    %v68 = vadd.f32 %v66, %v67
    %v69 = vrot.slane %v68, 2
    %v70 = vadd.f32 %v68, %v69
    %v71 = vrot.slane %v70, 1
    %v72 = vadd.f32 %v70, %v71
    %v73 = vadd.f32 %v21, %v23
    %v74 = vadd.f32 %v73, %v25
    %v75 = vadd.f32 %v74, %v27
    %v76 = vadd.f32 %v75, %v29
    %v77 = vadd.f32 %v76, %v31
    %v78 = vadd.f32 %v77, %v33
    %v79 = vadd.f32 %v78, %v35
    %v80 = vadd.f32 %v79, %v37
    %v81 = vadd.f32 %v80, %v39
    %v82 = vadd.f32 %v81, %v41
    %v83 = vadd.f32 %v82, %v43
    %v84 = vadd.f32 %v83, %v45
    %v85 = vadd.f32 %v84, %v47
    %v86 = vadd.f32 %v85, %v49
    %v87 = vadd.f32 %v86, %v51
    %v88 = vrot.slane %v87, 4
    %v89 = vadd.f32 %v87, %v88
    %v90 = vrot.slane %v89, 2
    %v91 = vadd.f32 %v89, %v90
    %v92 = vrot.slane %v91, 1
    %v93 = vadd.f32 %v91, %v92
    %v94 = vmul.f32 %v72, 0.0078125
    %v95 = vmul.f32 %v93, 0.0078125
    %v96 = vsub.f32 %v20, %v94
    %v97 = vsub.f32 %v21, %v95
    %v98 = vsub.f32 %v22, %v94
    %v99 = vsub.f32 %v23, %v95
    %v100 = vsub.f32 %v24, %v94
    %v101 = vsub.f32 %v25, %v95
    %v102 = vsub.f32 %v26, %v94
    %v103 = vsub.f32 %v27, %v95
    %v104 = vsub.f32 %v28, %v94
    %v105 = vsub.f32 %v29, %v95
    %v106 = vsub.f32 %v30, %v94
    %v107 = vsub.f32 %v31, %v95
    %v108 = vsub.f32 %v32, %v94
    %v109 = vsub.f32 %v33, %v95
    %v110 = vsub.f32 %v34, %v94
    %v111 = vsub.f32 %v35, %v95
    %v112 = vsub.f32 %v36, %v94
    %v113 = vsub.f32 %v37, %v95
    %v114 = vsub.f32 %v38, %v94
    %v115 = vsub.f32 %v39, %v95
    %v116 = vsub.f32 %v40, %v94
    %v117 = vsub.f32 %v41, %v95
    %v118 = vsub.f32 %v42, %v94
    %v119 = vsub.f32 %v43, %v95
    %v120 = vsub.f32 %v44, %v94
    %v121 = vsub.f32 %v45, %v95
    %v122 = vsub.f32 %v46, %v94
    %v123 = vsub.f32 %v47, %v95
    %v124 = vsub.f32 %v48, %v94
    %v125 = vsub.f32 %v49, %v95
    %v126 = vsub.f32 %v50, %v94
    %v127 = vsub.f32 %v51, %v95
    %v128 = vmul.f32 %v96, %v96
    %v129 = vmul.f32 %v97, %v97
    %v130 = vmul.f32 %v98, %v98
    %v131 = vmul.f32 %v99, %v99
    %v132 = vmul.f32 %v100, %v100
    %v133 = vmul.f32 %v101, %v101
    %v134 = vmul.f32 %v102, %v102
    %v135 = vmul.f32 %v103, %v103
    %v136 = vmul.f32 %v104, %v104
    %v137 = vmul.f32 %v105, %v105
    %v138 = vmul.f32 %v106, %v106
    %v139 = vmul.f32 %v107, %v107
    %v140 = vmul.f32 %v108, %v108
    %v141 = vmul.f32 %v109, %v109
    %v142 = vmul.f32 %v110, %v110
    %v143 = vmul.f32 %v111, %v111
    %v144 = vmul.f32 %v112, %v112
    %v145 = vmul.f32 %v113, %v113
    %v146 = vmul.f32 %v114, %v114
    %v147 = vmul.f32 %v115, %v115
    %v148 = vmul.f32 %v116, %v116
    %v149 = vmul.f32 %v117, %v117
    %v150 = vmul.f32 %v118, %v118
    %v151 = vmul.f32 %v119, %v119
    %v152 = vmul.f32 %v120, %v120
    %v153 = vmul.f32 %v121, %v121
    %v154 = vmul.f32 %v122, %v122
    %v155 = vmul.f32 %v123, %v123
    %v156 = vmul.f32 %v124, %v124
    %v157 = vmul.f32 %v125, %v125
    %v158 = vmul.f32 %v126, %v126
    %v159 = vmul.f32 %v127, %v127
    %v160 = vadd.f32 %v128, %v130
    %v161 = vadd.f32 %v160, %v132
    %v162 = vadd.f32 %v161, %v134
    %v163 = vadd.f32 %v162, %v136
    %v164 = vadd.f32 %v163, %v138
    %v165 = vadd.f32 %v164, %v140
    %v166 = vadd.f32 %v165, %v142
    %v167 = vadd.f32 %v166, %v144
    %v168 = vadd.f32 %v167, %v146
    %v169 = vadd.f32 %v168, %v148
    %v170 = vadd.f32 %v169, %v150
    %v171 = vadd.f32 %v170, %v152
    %v172 = vadd.f32 %v171, %v154
    %v173 = vadd.f32 %v172, %v156
    %v174 = vadd.f32 %v173, %v158
    %v175 = vrot.slane %v174, 4
    %v176 = vadd.f32 %v174, %v175
    %v177 = vrot.slane %v176, 2
    %v178 = vadd.f32 %v176, %v177
    %v179 = vrot.slane %v178, 1
    %v180 = vadd.f32 %v178, %v179
    %v181 = vadd.f32 %v129, %v131
    %v182 = vadd.f32 %v181, %v133
    %v183 = vadd.f32 %v182, %v135
    %v184 = vadd.f32 %v183, %v137
    %v185 = vadd.f32 %v184, %v139
    %v186 = vadd.f32 %v185, %v141
    %v187 = vadd.f32 %v186, %v143
    %v188 = vadd.f32 %v187, %v145
    %v189 = vadd.f32 %v188, %v147
    %v190 = vadd.f32 %v189, %v149
    %v191 = vadd.f32 %v190, %v151
    %v192 = vadd.f32 %v191, %v153
    %v193 = vadd.f32 %v192, %v155
    %v194 = vadd.f32 %v193, %v157
    %v195 = vadd.f32 %v194, %v159
    %v196 = vrot.slane %v195, 4
    %v197 = vadd.f32 %v195, %v196
    %v198 = vrot.slane %v197, 2
    %v199 = vadd.f32 %v197, %v198
    %v200 = vrot.slane %v199, 1
    %v201 = vadd.f32 %v199, %v200
    %v202 = vmul.f32 %v180, 0.0078125
    %v203 = vmul.f32 %v201, 0.0078125
    %v204 = vld [vmem:[%s1] sm:$0x3]
    %v205 = vadd.f32 %v202, 1e-05
    %v206 = vadd.f32 %v203, 1e-05
    %v207 = vrsqrt.pop %v205
    %v208 = vrsqrt.pop %v206
    %v211 = vcombine.low %v207, %v208
    %v213 = vunpack.c.l.s4 1966171168
    %v214 = vunpack.c.0.s8 %v213
    %v215 = vlaneseq
    %v216 = vshrl.u32 %v215, 7
    %v217 = vsub.s32 %v214, %v216
    %v218 = vrot.slane %v211, %v217
    %v220 = vunpack.c.l.s4 1966171168
    %v221 = vunpack.c.0.s8 %v220
    %v222 = vlaneseq
    %v223 = vshrl.u32 %v222, 7
    %v224 = vsub.s32 %v221, %v223
    %v225 = vrot.slane %v218, %v224
    %v227 = vmul.f32 %v204, %v225
    %v228 = vld [vmem:[%s2] sm:$0x3]
    %v230 = vlaneseq
    %v231 = vshrl.u32 %v230, 7
    %v232 = vsub.s32 0, %v231
    %v233 = vrot.slane %v227, %v232
    %v234 = vlaneseq
    %v235 = vshrl.u32 %v234, 7
    %v236 = vsub.s32 1, %v235
    %v237 = vrot.slane %v227, %v236
    %v240 = vmul.f32 %v94, %v233
    %v241 = vmul.f32 %v95, %v237
    %v244 = vcombine.low %v240, %v241
    %v246 = vunpack.c.l.s4 1966171168
    %v247 = vunpack.c.0.s8 %v246
    %v248 = vlaneseq
    %v249 = vshrl.u32 %v248, 7
    %v250 = vsub.s32 %v247, %v249
    %v251 = vrot.slane %v244, %v250
    %v253 = vunpack.c.l.s4 1966171168
    %v254 = vunpack.c.0.s8 %v253
    %v255 = vlaneseq
    %v256 = vshrl.u32 %v255, 7
    %v257 = vsub.s32 %v254, %v256
    %v258 = vrot.slane %v251, %v257
    %v260 = vsub.f32 %v228, %v258
    %v261 = vmul.f32 %v20, %v233
    %v262 = vmul.f32 %v21, %v237
    %v263 = vmul.f32 %v22, %v233
    %v264 = vmul.f32 %v23, %v237
    %v265 = vmul.f32 %v24, %v233
    %v266 = vmul.f32 %v25, %v237
    %v267 = vmul.f32 %v26, %v233
    %v268 = vmul.f32 %v27, %v237
    %v269 = vmul.f32 %v28, %v233
    %v270 = vmul.f32 %v29, %v237
    %v271 = vmul.f32 %v30, %v233
    %v272 = vmul.f32 %v31, %v237
    %v273 = vmul.f32 %v32, %v233
    %v274 = vmul.f32 %v33, %v237
    %v275 = vmul.f32 %v34, %v233
    %v276 = vmul.f32 %v35, %v237
    %v277 = vmul.f32 %v36, %v233
    %v278 = vmul.f32 %v37, %v237
    %v279 = vmul.f32 %v38, %v233
    %v280 = vmul.f32 %v39, %v237
    %v281 = vmul.f32 %v40, %v233
    %v282 = vmul.f32 %v41, %v237
    %v283 = vmul.f32 %v42, %v233
    %v284 = vmul.f32 %v43, %v237
    %v285 = vmul.f32 %v44, %v233
    %v286 = vmul.f32 %v45, %v237
    %v287 = vmul.f32 %v46, %v233
    %v288 = vmul.f32 %v47, %v237
    %v289 = vmul.f32 %v48, %v233
    %v290 = vmul.f32 %v49, %v237
    %v291 = vmul.f32 %v50, %v233
    %v292 = vmul.f32 %v51, %v237
    %v294 = vlaneseq
    %v295 = vshrl.u32 %v294, 7
    %v296 = vsub.s32 0, %v295
    %v297 = vrot.slane %v260, %v296
    %v298 = vlaneseq
    %v299 = vshrl.u32 %v298, 7
    %v300 = vsub.s32 1, %v299
    %v301 = vrot.slane %v260, %v300
    %v304 = vadd.f32 %v261, %v297
    %v305 = vadd.f32 %v262, %v301
    %v306 = vadd.f32 %v263, %v297
    %v307 = vadd.f32 %v264, %v301
    %v308 = vadd.f32 %v265, %v297
    %v309 = vadd.f32 %v266, %v301
    %v310 = vadd.f32 %v267, %v297
    %v311 = vadd.f32 %v268, %v301
    %v312 = vadd.f32 %v269, %v297
    %v313 = vadd.f32 %v270, %v301
    %v314 = vadd.f32 %v271, %v297
    %v315 = vadd.f32 %v272, %v301
    %v316 = vadd.f32 %v273, %v297
    %v317 = vadd.f32 %v274, %v301
    %v318 = vadd.f32 %v275, %v297
    %v319 = vadd.f32 %v276, %v301
    %v320 = vadd.f32 %v277, %v297
    %v321 = vadd.f32 %v278, %v301
    %v322 = vadd.f32 %v279, %v297
    %v323 = vadd.f32 %v280, %v301
    %v324 = vadd.f32 %v281, %v297
    %v325 = vadd.f32 %v282, %v301
    %v326 = vadd.f32 %v283, %v297
    %v327 = vadd.f32 %v284, %v301
    %v328 = vadd.f32 %v285, %v297
    %v329 = vadd.f32 %v286, %v301
    %v330 = vadd.f32 %v287, %v297
    %v331 = vadd.f32 %v288, %v301
    %v332 = vadd.f32 %v289, %v297
    %v333 = vadd.f32 %v290, %v301
    %v334 = vadd.f32 %v291, %v297
    %v335 = vadd.f32 %v292, %v301
    %vm336 = vcmp.ge.f32.partialorder %v304, 0.0
    %vm337 = vcmp.ge.f32.partialorder %v305, 0.0
    %vm338 = vcmp.ge.f32.partialorder %v306, 0.0
    %vm339 = vcmp.ge.f32.partialorder %v307, 0.0
    %vm340 = vcmp.ge.f32.partialorder %v308, 0.0
    %vm341 = vcmp.ge.f32.partialorder %v309, 0.0
    %vm342 = vcmp.ge.f32.partialorder %v310, 0.0
    %vm343 = vcmp.ge.f32.partialorder %v311, 0.0
    %vm344 = vcmp.ge.f32.partialorder %v312, 0.0
    %vm345 = vcmp.ge.f32.partialorder %v313, 0.0
    %vm346 = vcmp.ge.f32.partialorder %v314, 0.0
    %vm347 = vcmp.ge.f32.partialorder %v315, 0.0
    %vm348 = vcmp.ge.f32.partialorder %v316, 0.0
    %vm349 = vcmp.ge.f32.partialorder %v317, 0.0
    %vm350 = vcmp.ge.f32.partialorder %v318, 0.0
    %vm351 = vcmp.ge.f32.partialorder %v319, 0.0
    %vm352 = vcmp.ge.f32.partialorder %v320, 0.0
    %vm353 = vcmp.ge.f32.partialorder %v321, 0.0
    %vm354 = vcmp.ge.f32.partialorder %v322, 0.0
    %vm355 = vcmp.ge.f32.partialorder %v323, 0.0
    %vm356 = vcmp.ge.f32.partialorder %v324, 0.0
    %vm357 = vcmp.ge.f32.partialorder %v325, 0.0
    %vm358 = vcmp.ge.f32.partialorder %v326, 0.0
    %vm359 = vcmp.ge.f32.partialorder %v327, 0.0
    %vm360 = vcmp.ge.f32.partialorder %v328, 0.0
    %vm361 = vcmp.ge.f32.partialorder %v329, 0.0
    %vm362 = vcmp.ge.f32.partialorder %v330, 0.0
    %vm363 = vcmp.ge.f32.partialorder %v331, 0.0
    %vm364 = vcmp.ge.f32.partialorder %v332, 0.0
    %vm365 = vcmp.ge.f32.partialorder %v333, 0.0
    %vm366 = vcmp.ge.f32.partialorder %v334, 0.0
    %vm367 = vcmp.ge.f32.partialorder %v335, 0.0
    %v368 = vld [vmem:[#allocation2] sm:$0x1]
    %v370 = vlaneseq
    %v371 = vshrl.u32 %v370, 7
    %v372 = vsub.s32 0, %v371
    %v373 = vrot.slane %v368, %v372
    %374 = vset.pattern.permute.xlu0 0
    %375 = vperm.xlu0 %374, %v373
    %v376 = vpop.permute.xlu0 %375
    %v378 = vmul.f32 %v376, %v304
    %v379 = vmul.f32 %v376, %v305
    %v380 = vmul.f32 %v376, %v306
    %v381 = vmul.f32 %v376, %v307
    %v382 = vmul.f32 %v376, %v308
    %v383 = vmul.f32 %v376, %v309
    %v384 = vmul.f32 %v376, %v310
    %v385 = vmul.f32 %v376, %v311
    %v386 = vmul.f32 %v376, %v312
    %v387 = vmul.f32 %v376, %v313
    %v388 = vmul.f32 %v376, %v314
    %v389 = vmul.f32 %v376, %v315
    %v390 = vmul.f32 %v376, %v316
    %v391 = vmul.f32 %v376, %v317
    %v392 = vmul.f32 %v376, %v318
    %v393 = vmul.f32 %v376, %v319
    %v394 = vmul.f32 %v376, %v320
    %v395 = vmul.f32 %v376, %v321
    %v396 = vmul.f32 %v376, %v322
    %v397 = vmul.f32 %v376, %v323
    %v398 = vmul.f32 %v376, %v324
    %v399 = vmul.f32 %v376, %v325
    %v400 = vmul.f32 %v376, %v326
    %v401 = vmul.f32 %v376, %v327
    %v402 = vmul.f32 %v376, %v328
    %v403 = vmul.f32 %v376, %v329
    %v404 = vmul.f32 %v376, %v330
    %v405 = vmul.f32 %v376, %v331
    %v406 = vmul.f32 %v376, %v332
    %v407 = vmul.f32 %v376, %v333
    %v408 = vmul.f32 %v376, %v334
    %v409 = vmul.f32 %v376, %v335
    %v410 = vsel %vm336, %v304, %v378
    %v411 = vsel %vm337, %v305, %v379
    %v412 = vsel %vm338, %v306, %v380
    %v413 = vsel %vm339, %v307, %v381
    %v414 = vsel %vm340, %v308, %v382
    %v415 = vsel %vm341, %v309, %v383
    %v416 = vsel %vm342, %v310, %v384
    %v417 = vsel %vm343, %v311, %v385
    %v418 = vsel %vm344, %v312, %v386
    %v419 = vsel %vm345, %v313, %v387
    %v420 = vsel %vm346, %v314, %v388
    %v421 = vsel %vm347, %v315, %v389
    %v422 = vsel %vm348, %v316, %v390
    %v423 = vsel %vm349, %v317, %v391
    %v424 = vsel %vm350, %v318, %v392
    %v425 = vsel %vm351, %v319, %v393
    %v426 = vsel %vm352, %v320, %v394
    %v427 = vsel %vm353, %v321, %v395
    %v428 = vsel %vm354, %v322, %v396
    %v429 = vsel %vm355, %v323, %v397
    %v430 = vsel %vm356, %v324, %v398
    %v431 = vsel %vm357, %v325, %v399
    %v432 = vsel %vm358, %v326, %v400
    %v433 = vsel %vm359, %v327, %v401
    %v434 = vsel %vm360, %v328, %v402
    %v435 = vsel %vm361, %v329, %v403
    %v436 = vsel %vm362, %v330, %v404
    %v437 = vsel %vm363, %v331, %v405
    %v438 = vsel %vm364, %v332, %v406
    %v439 = vsel %vm365, %v333, %v407
    %v440 = vsel %vm366, %v334, %v408
    %v441 = vsel %vm367, %v335, %v409
    %442 = vst [vmem:[#allocation3] sm:$0xff] %v410
    %443 = vst [vmem:[#allocation3 + $0x8] sm:$0xff] %v411
    %444 = vst [vmem:[#allocation3 + $0x10] sm:$0xff] %v412
    %445 = vst [vmem:[#allocation3 + $0x18] sm:$0xff] %v413
    %446 = vst [vmem:[#allocation3 + $0x20] sm:$0xff] %v414
    %447 = vst [vmem:[#allocation3 + $0x28] sm:$0xff] %v415
    %448 = vst [vmem:[#allocation3 + $0x30] sm:$0xff] %v416
    %449 = vst [vmem:[#allocation3 + $0x38] sm:$0xff] %v417
    %450 = vst [vmem:[#allocation3 + $0x40] sm:$0xff] %v418
    %451 = vst [vmem:[#allocation3 + $0x48] sm:$0xff] %v419
    %452 = vst [vmem:[#allocation3 + $0x50] sm:$0xff] %v420
    %453 = vst [vmem:[#allocation3 + $0x58] sm:$0xff] %v421
    %454 = vst [vmem:[#allocation3 + $0x60] sm:$0xff] %v422
    %455 = vst [vmem:[#allocation3 + $0x68] sm:$0xff] %v423
    %456 = vst [vmem:[#allocation3 + $0x70] sm:$0xff] %v424
    %457 = vst [vmem:[#allocation3 + $0x78] sm:$0xff] %v425
    %458 = vst [vmem:[#allocation3 + $0x80] sm:$0xff] %v426
    %459 = vst [vmem:[#allocation3 + $0x88] sm:$0xff] %v427
    %460 = vst [vmem:[#allocation3 + $0x90] sm:$0xff] %v428
    %461 = vst [vmem:[#allocation3 + $0x98] sm:$0xff] %v429
    %462 = vst [vmem:[#allocation3 + $0xa0] sm:$0xff] %v430
    %463 = vst [vmem:[#allocation3 + $0xa8] sm:$0xff] %v431
    %464 = vst [vmem:[#allocation3 + $0xb0] sm:$0xff] %v432
    %465 = vst [vmem:[#allocation3 + $0xb8] sm:$0xff] %v433
    %466 = vst [vmem:[#allocation3 + $0xc0] sm:$0xff] %v434
    %467 = vst [vmem:[#allocation3 + $0xc8] sm:$0xff] %v435
    %468 = vst [vmem:[#allocation3 + $0xd0] sm:$0xff] %v436
    %469 = vst [vmem:[#allocation3 + $0xd8] sm:$0xff] %v437
    %470 = vst [vmem:[#allocation3 + $0xe0] sm:$0xff] %v438
    %471 = vst [vmem:[#allocation3 + $0xe8] sm:$0xff] %v439
    %472 = vst [vmem:[#allocation3 + $0xf0] sm:$0xff] %v440
    %473 = vst [vmem:[#allocation3 + $0xf8] sm:$0xff] %v441
    // Predicated region
    $region18: #{mod_inception_forward.7} parent=1 // pred_check
      _
    $region19: #{mod_inception_forward.7} parent=1 // pred_check_branch
      %475 = sbr.rel (0) target = $region21
    $region20: #{mod_inception_forward.7} parent=1 // pred_region
      %s477 = ssub.s32 4096, 4096
      %478 = vsyncadd [#allocation4], %s477
      %s479 = sshll.u32 [#allocation3], 4
      %s480 = int_to_ptr.vmem [resolvable:$true] %s479
      %485 = dma.vmem_to_hbm [thread:$0]  %s480, 4096, %s4, [#allocation4], 256, 256, 16
    $region21: #{mod_inception_forward.7} parent=1 // pred_fallthru
      _
    // Predicated region
    $region22: #{mod_inception_forward.7} parent=1 // pred_check
      _
    $region23: #{mod_inception_forward.7} parent=1 // pred_check_branch
      %487 = sbr.rel (0) target = $region25
    $region24: #{mod_inception_forward.7} parent=1 // pred_region
      %488 = dma.done [#allocation4], 4096
    $region25: #{mod_inception_forward.7} parent=1 // pred_fallthru
      _
    %489 = vsyncpa [#allocation4], 1

// kernel: mod_inception_forward.5
$region0: #{mod_inception_forward.5}
  #allocation0 [shape = 'u32[]', space=smem, size = 0x4, offset = 0x4, fixed_abs, tag = 'smem constant byte address 0x4 - core index']
  #allocation1 [shape = 'u32[144,128]{1,0:T(1,128)}', space=vmem, size = 0x12000, scoped, tag = 'internal scratch']
  #allocation2 [shape = 'f32[2,10,10,128]{3,2,1,0:T(8,128)}', space=vmem, size = 0x28000, scoped, tag = 'scratch operand']
  #allocation3 [shape = 'f32[1,1]{1,0:T(1,128)S(1)}', space=vmem, size = 0x200, scoped, tag = 'scoped memory for mod_inception_forward.5']
  %s0 = inlined_call_operand.vmem [shape: f32[2,8,8,128], index: 0, kind: input, shape index: {}]
  %s1 = inlined_call_operand.vmem [shape: f32[1,128], index: 1, kind: input, shape index: {}]
  %s2 = inlined_call_operand.vmem [shape: f32[1,128], index: 2, kind: input, shape index: {}]
  %s3 = inlined_call_operand.<no memory space> [shape: f32[1,1], index: 3, kind: input, shape index: {}]
  %s4 = inlined_call_operand.hbm [shape: bf16[9,128,128], index: 4, kind: input, shape index: {}]
  %s5 = inlined_call_operand.vmem [shape: f32[1,128], index: 5, kind: input, shape index: {}]
  %s6 = inlined_call_operand.vmem [shape: f32[128,128], index: 6, kind: output, shape index: {}]
  %s7 = sld [smem:[#allocation0]]
  $region38: #{mod_inception_forward.5} parent=0
    _
  %s9 = ssub.s32 1, %s7
  %s10 = scalar_select 0, %s9, %s7
  %v11 = vstv %s3
  %12 = vst [vmem:[#allocation3] sm:$0x1] %v11
  $region1: #{mod_inception_forward.5} parent=0
    #allocation4 [shape = 'u8[294912]{0}', space=vmem, size = 0x48000, scoped, tag = 'input window, operand 4, single buffered']
    #allocation5 [shape = 's32[1]{0}', space=sflag, size = 0x4, scoped, tag = 'scoped memory for mod_inception_forward.5']
    %13 = vsyncpa [#allocation5], 0
    // Predicated region
    $region2: #{mod_inception_forward.5} parent=1 // pred_check
      _
    $region3: #{mod_inception_forward.5} parent=1 // pred_check_branch
      %15 = sbr.rel (0) target = $region5
    $region4: #{mod_inception_forward.5} parent=1 // pred_region
      _
    $region5: #{mod_inception_forward.5} parent=1 // pred_fallthru
      _
    // Predicated region
    $region6: #{mod_inception_forward.5} parent=1 // pred_check
      _
    $region7: #{mod_inception_forward.5} parent=1 // pred_check_branch
      %17 = sbr.rel (0) target = $region9
    $region8: #{mod_inception_forward.5} parent=1 // pred_region
      _
    $region9: #{mod_inception_forward.5} parent=1 // pred_fallthru
      _
    // Predicated region
    $region10: #{mod_inception_forward.5} parent=1 // pred_check
      _
    $region11: #{mod_inception_forward.5} parent=1 // pred_check_branch
      %19 = sbr.rel (0) target = $region13
    $region12: #{mod_inception_forward.5} parent=1 // pred_region
      _
    $region13: #{mod_inception_forward.5} parent=1 // pred_fallthru
      _
    // Predicated region
    $region14: #{mod_inception_forward.5} parent=1 // pred_check
      _
    $region15: #{mod_inception_forward.5} parent=1 // pred_check_branch
      %21 = sbr.rel (0) target = $region17
    $region16: #{mod_inception_forward.5} parent=1 // pred_region
      _
    $region17: #{mod_inception_forward.5} parent=1 // pred_fallthru
      _
    // Predicated region
    $region18: #{mod_inception_forward.5} parent=1 // pred_check
      _
    $region19: #{mod_inception_forward.5} parent=1 // pred_check_branch
      %23 = sbr.rel (0) target = $region21
    $region20: #{mod_inception_forward.5} parent=1 // pred_region
      %s25 = ssub.s32 9216, 9216
      %26 = vsyncadd [#allocation5], %s25
      %s27 = sshll.u32 [#allocation4], 4
      %s28 = int_to_ptr.vmem [resolvable:$true] %s27
      %33 = dma.hbm_to_vmem [thread:$0]  %s4, 9216, %s28, [#allocation5], 64, 64, 4
    $region21: #{mod_inception_forward.5} parent=1 // pred_fallthru
      _
    // Predicated region
    $region22: #{mod_inception_forward.5} parent=1 // pred_check
      _
    $region23: #{mod_inception_forward.5} parent=1 // pred_check_branch
      %35 = sbr.rel (0) target = $region25
    $region24: #{mod_inception_forward.5} parent=1 // pred_region
      _
    $region25: #{mod_inception_forward.5} parent=1 // pred_fallthru
      _
    // Predicated region
    $region26: #{mod_inception_forward.5} parent=1 // pred_check
      _
    $region27: #{mod_inception_forward.5} parent=1 // pred_check_branch
      %37 = sbr.rel (0) target = $region29
    $region28: #{mod_inception_forward.5} parent=1 // pred_region
      %38 = dma.done [#allocation5], 9216
    $region29: #{mod_inception_forward.5} parent=1 // pred_fallthru
      _
    %v40 = vld [vmem:[%s0] sm:$0xff]
    %v41 = vld [vmem:[%s0 + $0x8] sm:$0xff]
    %v42 = vld [vmem:[%s0 + $0x10] sm:$0xff]
    %v43 = vld [vmem:[%s0 + $0x18] sm:$0xff]
    %v44 = vld [vmem:[%s0 + $0x20] sm:$0xff]
    %v45 = vld [vmem:[%s0 + $0x28] sm:$0xff]
    %v46 = vld [vmem:[%s0 + $0x30] sm:$0xff]
    %v47 = vld [vmem:[%s0 + $0x38] sm:$0xff]
    %v48 = vld [vmem:[%s0 + $0x40] sm:$0xff]
    %v49 = vld [vmem:[%s0 + $0x48] sm:$0xff]
    %v50 = vld [vmem:[%s0 + $0x50] sm:$0xff]
    %v51 = vld [vmem:[%s0 + $0x58] sm:$0xff]
    %v52 = vld [vmem:[%s0 + $0x60] sm:$0xff]
    %v53 = vld [vmem:[%s0 + $0x68] sm:$0xff]
    %v54 = vld [vmem:[%s0 + $0x70] sm:$0xff]
    %v55 = vld [vmem:[%s0 + $0x78] sm:$0xff]
    %v56 = vld [vmem:[%s1] sm:$0x1]
    %v58 = vlaneseq
    %v59 = vshrl.u32 %v58, 7
    %v60 = vsub.s32 0, %v59
    %v61 = vrot.slane %v56, %v60
    %v63 = vmul.f32 %v40, %v61
    %v64 = vmul.f32 %v41, %v61
    %v65 = vmul.f32 %v42, %v61
    %v66 = vmul.f32 %v43, %v61
    %v67 = vmul.f32 %v44, %v61
    %v68 = vmul.f32 %v45, %v61
    %v69 = vmul.f32 %v46, %v61
    %v70 = vmul.f32 %v47, %v61
    %v71 = vmul.f32 %v48, %v61
    %v72 = vmul.f32 %v49, %v61
    %v73 = vmul.f32 %v50, %v61
    %v74 = vmul.f32 %v51, %v61
    %v75 = vmul.f32 %v52, %v61
    %v76 = vmul.f32 %v53, %v61
    %v77 = vmul.f32 %v54, %v61
    %v78 = vmul.f32 %v55, %v61
    %v79 = vld [vmem:[%s2] sm:$0x1]
    %v81 = vlaneseq
    %v82 = vshrl.u32 %v81, 7
    %v83 = vsub.s32 0, %v82
    %v84 = vrot.slane %v79, %v83
    %v86 = vadd.f32 %v63, %v84
    %v87 = vadd.f32 %v64, %v84
    %v88 = vadd.f32 %v65, %v84
    %v89 = vadd.f32 %v66, %v84
    %v90 = vadd.f32 %v67, %v84
    %v91 = vadd.f32 %v68, %v84
    %v92 = vadd.f32 %v69, %v84
    %v93 = vadd.f32 %v70, %v84
    %v94 = vadd.f32 %v71, %v84
    %v95 = vadd.f32 %v72, %v84
    %v96 = vadd.f32 %v73, %v84
    %v97 = vadd.f32 %v74, %v84
    %v98 = vadd.f32 %v75, %v84
    %v99 = vadd.f32 %v76, %v84
    %v100 = vadd.f32 %v77, %v84
    %v101 = vadd.f32 %v78, %v84
    %vm102 = vcmp.ge.f32.partialorder %v86, 0.0
    %vm103 = vcmp.ge.f32.partialorder %v87, 0.0
    %vm104 = vcmp.ge.f32.partialorder %v88, 0.0
    %vm105 = vcmp.ge.f32.partialorder %v89, 0.0
    %vm106 = vcmp.ge.f32.partialorder %v90, 0.0
    %vm107 = vcmp.ge.f32.partialorder %v91, 0.0
    %vm108 = vcmp.ge.f32.partialorder %v92, 0.0
    %vm109 = vcmp.ge.f32.partialorder %v93, 0.0
    %vm110 = vcmp.ge.f32.partialorder %v94, 0.0
    %vm111 = vcmp.ge.f32.partialorder %v95, 0.0
    %vm112 = vcmp.ge.f32.partialorder %v96, 0.0
    %vm113 = vcmp.ge.f32.partialorder %v97, 0.0
    %vm114 = vcmp.ge.f32.partialorder %v98, 0.0
    %vm115 = vcmp.ge.f32.partialorder %v99, 0.0
    %vm116 = vcmp.ge.f32.partialorder %v100, 0.0
    %vm117 = vcmp.ge.f32.partialorder %v101, 0.0
    %v118 = vld [vmem:[#allocation3] sm:$0x1]
    %v120 = vlaneseq
    %v121 = vshrl.u32 %v120, 7
    %v122 = vsub.s32 0, %v121
    %v123 = vrot.slane %v118, %v122
    %124 = vset.pattern.permute.xlu0 0
    %125 = vperm.xlu0 %124, %v123
    %v126 = vpop.permute.xlu0 %125
    %v128 = vmul.f32 %v126, %v86
    %v129 = vmul.f32 %v126, %v87
    %v130 = vmul.f32 %v126, %v88
    %v131 = vmul.f32 %v126, %v89
    %v132 = vmul.f32 %v126, %v90
    %v133 = vmul.f32 %v126, %v91
    %v134 = vmul.f32 %v126, %v92
    %v135 = vmul.f32 %v126, %v93
    %v136 = vmul.f32 %v126, %v94
    %v137 = vmul.f32 %v126, %v95
    %v138 = vmul.f32 %v126, %v96
    %v139 = vmul.f32 %v126, %v97
    %v140 = vmul.f32 %v126, %v98
    %v141 = vmul.f32 %v126, %v99
    %v142 = vmul.f32 %v126, %v100
    %v143 = vmul.f32 %v126, %v101
    %v144 = vsel %vm102, %v86, %v128
    %v145 = vsel %vm103, %v87, %v129
    %v146 = vsel %vm104, %v88, %v130
    %v147 = vsel %vm105, %v89, %v131
    %v148 = vsel %vm106, %v90, %v132
    %v149 = vsel %vm107, %v91, %v133
    %v150 = vsel %vm108, %v92, %v134
    %v151 = vsel %vm109, %v93, %v135
    %v152 = vsel %vm110, %v94, %v136
    %v153 = vsel %vm111, %v95, %v137
    %v154 = vsel %vm112, %v96, %v138
    %v155 = vsel %vm113, %v97, %v139
    %v156 = vsel %vm114, %v98, %v140
    %v157 = vsel %vm115, %v99, %v141
    %v158 = vsel %vm116, %v100, %v142
    %v159 = vsel %vm117, %v101, %v143
    %160 = vst [vmem:[#allocation2] sm:$0xff] 0.0
    %161 = vst [vmem:[#allocation2 + $0x8] sm:$0x3] 0.0
    %162 = vst [vmem:[#allocation2 + $0x10] sm:$0xff] 0.0
    %163 = vst [vmem:[#allocation2 + $0x18] sm:$0x3] 0.0
    %164 = vst [vmem:[#allocation2 + $0x20] sm:$0xff] 0.0
    %165 = vst [vmem:[#allocation2 + $0x28] sm:$0x3] 0.0
    %166 = vst [vmem:[#allocation2 + $0x30] sm:$0xff] 0.0
    %167 = vst [vmem:[#allocation2 + $0x38] sm:$0x3] 0.0
    %168 = vst [vmem:[#allocation2 + $0x40] sm:$0xff] 0.0
    %169 = vst [vmem:[#allocation2 + $0x48] sm:$0x3] 0.0
    %170 = vst [vmem:[#allocation2 + $0x50] sm:$0xff] 0.0
    %171 = vst [vmem:[#allocation2 + $0x58] sm:$0x3] 0.0
    %172 = vst [vmem:[#allocation2 + $0x60] sm:$0xff] 0.0
    %173 = vst [vmem:[#allocation2 + $0x68] sm:$0x3] 0.0
    %174 = vst [vmem:[#allocation2 + $0x70] sm:$0xff] 0.0
    %175 = vst [vmem:[#allocation2 + $0x78] sm:$0x3] 0.0
    %176 = vst [vmem:[#allocation2 + $0x80] sm:$0xff] 0.0
    %177 = vst [vmem:[#allocation2 + $0x88] sm:$0x3] 0.0
    %178 = vst [vmem:[#allocation2 + $0x90] sm:$0xff] 0.0
    %179 = vst [vmem:[#allocation2 + $0x98] sm:$0x3] 0.0
    %180 = vst [vmem:[#allocation2 + $0xa0] sm:$0xff] 0.0
    %181 = vst [vmem:[#allocation2 + $0xa8] sm:$0x3] 0.0
    %182 = vst [vmem:[#allocation2 + $0xb0] sm:$0xff] 0.0
    %183 = vst [vmem:[#allocation2 + $0xb8] sm:$0x3] 0.0
    %184 = vst [vmem:[#allocation2 + $0xc0] sm:$0xff] 0.0
    %185 = vst [vmem:[#allocation2 + $0xc8] sm:$0x3] 0.0
    %186 = vst [vmem:[#allocation2 + $0xd0] sm:$0xff] 0.0
    %187 = vst [vmem:[#allocation2 + $0xd8] sm:$0x3] 0.0
    %188 = vst [vmem:[#allocation2 + $0xe0] sm:$0xff] 0.0
    %189 = vst [vmem:[#allocation2 + $0xe8] sm:$0x3] 0.0
    %190 = vst [vmem:[#allocation2 + $0xf0] sm:$0xff] 0.0
    %191 = vst [vmem:[#allocation2 + $0xf8] sm:$0x3] 0.0
    %192 = vst [vmem:[#allocation2 + $0x100] sm:$0xff] 0.0
    %193 = vst [vmem:[#allocation2 + $0x108] sm:$0x3] 0.0
    %194 = vst [vmem:[#allocation2 + $0x110] sm:$0xff] 0.0
    %195 = vst [vmem:[#allocation2 + $0x118] sm:$0x3] 0.0
    %196 = vst [vmem:[#allocation2 + $0x120] sm:$0xff] 0.0
    %197 = vst [vmem:[#allocation2 + $0x128] sm:$0x3] 0.0
    %198 = vst [vmem:[#allocation2 + $0x130] sm:$0xff] 0.0
    %199 = vst [vmem:[#allocation2 + $0x138] sm:$0x3] 0.0
    %s200 = scalar_lea.vmem [#allocation2], 16
    %201 = vst [vmem:[%s200 + $0x1] sm:$0xff] %v144
    %202 = vst [vmem:[%s200 + $0x11] sm:$0xff] %v145
    %203 = vst [vmem:[%s200 + $0x21] sm:$0xff] %v146
    %204 = vst [vmem:[%s200 + $0x31] sm:$0xff] %v147
    %205 = vst [vmem:[%s200 + $0x41] sm:$0xff] %v148
    %206 = vst [vmem:[%s200 + $0x51] sm:$0xff] %v149
    %207 = vst [vmem:[%s200 + $0x61] sm:$0xff] %v150
    %208 = vst [vmem:[%s200 + $0x71] sm:$0xff] %v151
    %209 = vst [vmem:[%s200 + $0xa1] sm:$0xff] %v152
    %210 = vst [vmem:[%s200 + $0xb1] sm:$0xff] %v153
    %211 = vst [vmem:[%s200 + $0xc1] sm:$0xff] %v154
    %212 = vst [vmem:[%s200 + $0xd1] sm:$0xff] %v155
    %213 = vst [vmem:[%s200 + $0xe1] sm:$0xff] %v156
    %214 = vst [vmem:[%s200 + $0xf1] sm:$0xff] %v157
    %215 = vst [vmem:[%s200 + $0x101] sm:$0xff] %v158
    %216 = vst [vmem:[%s200 + $0x111] sm:$0xff] %v159
    %v217 = vld [vmem:[#allocation2] sm:$0xff]
    %v218 = vld [vmem:[#allocation2 + $0x8] sm:$0x3]
    %v219 = vld [vmem:[#allocation2 + $0x10] sm:$0xff]
    %v220 = vld [vmem:[#allocation2 + $0x18] sm:$0x3]
    %v221 = vld [vmem:[#allocation2 + $0x20] sm:$0xff]
    %v222 = vld [vmem:[#allocation2 + $0x28] sm:$0x3]
    %v223 = vld [vmem:[#allocation2 + $0x30] sm:$0xff]
    %v224 = vld [vmem:[#allocation2 + $0x38] sm:$0x3]
    %v225 = vld [vmem:[#allocation2 + $0x40] sm:$0xff]
    %v226 = vld [vmem:[#allocation2 + $0x48] sm:$0x3]
    %v227 = vld [vmem:[#allocation2 + $0x50] sm:$0xff]
    %v228 = vld [vmem:[#allocation2 + $0x58] sm:$0x3]
    %v229 = vld [vmem:[#allocation2 + $0x60] sm:$0xff]
    %v230 = vld [vmem:[#allocation2 + $0x68] sm:$0x3]
    %v231 = vld [vmem:[#allocation2 + $0x70] sm:$0xff]
    %v232 = vld [vmem:[#allocation2 + $0x78] sm:$0x3]
    %v233 = vld [vmem:[#allocation2 + $0x80] sm:$0xff]
    %v234 = vld [vmem:[#allocation2 + $0x88] sm:$0x3]
    %v235 = vld [vmem:[#allocation2 + $0x90] sm:$0xff]
    %v236 = vld [vmem:[#allocation2 + $0x98] sm:$0x3]
    %v237 = vld [vmem:[#allocation2 + $0xa0] sm:$0xff]
    %v238 = vld [vmem:[#allocation2 + $0xa8] sm:$0x3]
    %v239 = vld [vmem:[#allocation2 + $0xb0] sm:$0xff]
    %v240 = vld [vmem:[#allocation2 + $0xb8] sm:$0x3]
    %v241 = vld [vmem:[#allocation2 + $0xc0] sm:$0xff]
    %v242 = vld [vmem:[#allocation2 + $0xc8] sm:$0x3]
    %v243 = vld [vmem:[#allocation2 + $0xd0] sm:$0xff]
    %v244 = vld [vmem:[#allocation2 + $0xd8] sm:$0x3]
    %v245 = vld [vmem:[#allocation2 + $0xe0] sm:$0xff]
    %v246 = vld [vmem:[#allocation2 + $0xe8] sm:$0x3]
    %v247 = vld [vmem:[#allocation2 + $0xf0] sm:$0xff]
    %v248 = vld [vmem:[#allocation2 + $0xf8] sm:$0x3]
    %v249 = vld [vmem:[#allocation2 + $0x100] sm:$0xff]
    %v250 = vld [vmem:[#allocation2 + $0x108] sm:$0x3]
    %v251 = vld [vmem:[#allocation2 + $0x110] sm:$0xff]
    %v252 = vld [vmem:[#allocation2 + $0x118] sm:$0x3]
    %v253 = vld [vmem:[#allocation2 + $0x120] sm:$0xff]
    %v254 = vld [vmem:[#allocation2 + $0x128] sm:$0x3]
    %v255 = vld [vmem:[#allocation2 + $0x130] sm:$0xff]
    %v256 = vld [vmem:[#allocation2 + $0x138] sm:$0x3]
    %v257 = vpack.c.bf16 %v217, %v217
    %v258 = vpack.c.bf16 %v219, %v219
    %v259 = vpack.c.bf16 %v221, %v221
    %v260 = vpack.c.bf16 %v223, %v223
    %v261 = vpack.c.bf16 %v225, %v225
    %v262 = vpack.c.bf16 %v227, %v227
    %v263 = vpack.c.bf16 %v229, %v229
    %v264 = vpack.c.bf16 %v231, %v231
    %v265 = vpack.c.bf16 %v233, %v233
    %v266 = vpack.c.bf16 %v235, %v235
    %v267 = vpack.c.bf16 %v237, %v237
    %v268 = vpack.c.bf16 %v239, %v239
    %v269 = vpack.c.bf16 %v241, %v241
    %v270 = vpack.c.bf16 %v243, %v243
    %v271 = vpack.c.bf16 %v245, %v245
    %v272 = vpack.c.bf16 %v247, %v247
    %v273 = vpack.c.bf16 %v249, %v249
    %v274 = vpack.c.bf16 %v251, %v251
    %v275 = vpack.c.bf16 %v253, %v253
    %v276 = vpack.c.bf16 %v255, %v255
    %v277 = vld [vmem:[#allocation4] sm:$0xf]
    %v278 = vld [vmem:[#allocation4 + $0x4] sm:$0xf]
    %v279 = vld [vmem:[#allocation4 + $0x8] sm:$0xf]
    %v280 = vld [vmem:[#allocation4 + $0xc] sm:$0xf]
    %v281 = vld [vmem:[#allocation4 + $0x10] sm:$0xf]
    %v282 = vld [vmem:[#allocation4 + $0x14] sm:$0xf]
    %v283 = vld [vmem:[#allocation4 + $0x18] sm:$0xf]
    %v284 = vld [vmem:[#allocation4 + $0x1c] sm:$0xf]
    %v285 = vld [vmem:[#allocation4 + $0x20] sm:$0xf]
    %v286 = vld [vmem:[#allocation4 + $0x24] sm:$0xf]
    %v287 = vld [vmem:[#allocation4 + $0x28] sm:$0xf]
    %v288 = vld [vmem:[#allocation4 + $0x2c] sm:$0xf]
    %v289 = vld [vmem:[#allocation4 + $0x30] sm:$0xf]
    %v290 = vld [vmem:[#allocation4 + $0x34] sm:$0xf]
    %v291 = vld [vmem:[#allocation4 + $0x38] sm:$0xf]
    %v292 = vld [vmem:[#allocation4 + $0x3c] sm:$0xf]
    %s293 = scalar_lea.vmem [#allocation4], 192
    %v294 = vld [vmem:[%s293] sm:$0xf]
    %v295 = vld [vmem:[%s293 + $0x4] sm:$0xf]
    %v296 = vld [vmem:[%s293 + $0x8] sm:$0xf]
    %v297 = vld [vmem:[%s293 + $0xc] sm:$0xf]
    %v298 = vld [vmem:[%s293 + $0x10] sm:$0xf]
    %v299 = vld [vmem:[%s293 + $0x14] sm:$0xf]
    %v300 = vld [vmem:[%s293 + $0x18] sm:$0xf]
    %v301 = vld [vmem:[%s293 + $0x1c] sm:$0xf]
    %v302 = vld [vmem:[%s293 + $0x20] sm:$0xf]
    %v303 = vld [vmem:[%s293 + $0x24] sm:$0xf]
    %v304 = vld [vmem:[%s293 + $0x28] sm:$0xf]
    %v305 = vld [vmem:[%s293 + $0x2c] sm:$0xf]
    %v306 = vld [vmem:[%s293 + $0x30] sm:$0xf]
    %v307 = vld [vmem:[%s293 + $0x34] sm:$0xf]
    %v308 = vld [vmem:[%s293 + $0x38] sm:$0xf]
    %v309 = vld [vmem:[%s293 + $0x3c] sm:$0xf]
    %v326 = vunpack.c.l.b16 %v258
    %v327 = vunpack.c.l.b16 %v259
    %v328 = vunpack.c.l.b16 %v260
    %v329 = vunpack.c.l.b16 %v261
    %v330 = vunpack.c.l.b16 %v262
    %v331 = vunpack.c.l.b16 %v263
    %v332 = vunpack.c.l.b16 %v264
    %v333 = vunpack.c.l.b16 %v265
    %v334 = vunpack.c.l.b16 %v268
    %v335 = vunpack.c.l.b16 %v269
    %v336 = vunpack.c.l.b16 %v270
    %v337 = vunpack.c.l.b16 %v271
    %v338 = vunpack.c.l.b16 %v272
    %v339 = vunpack.c.l.b16 %v273
    %v340 = vunpack.c.l.b16 %v274
    %v341 = vunpack.c.l.b16 %v275
    %v342 = vpack.c.b16 %v327, %v326
    %v343 = vpack.c.b16 %v329, %v328
    %v344 = vpack.c.b16 %v331, %v330
    %v345 = vpack.c.b16 %v333, %v332
    %v346 = vpack.c.b16 %v335, %v334
    %v347 = vpack.c.b16 %v337, %v336
    %v348 = vpack.c.b16 %v339, %v338
    %v349 = vpack.c.b16 %v341, %v340
    %v374 = vunpack.c.l.b16 %v294
    %v375 = vunpack.c.l.b16 %v295
    %v376 = vunpack.c.l.b16 %v296
    %v377 = vunpack.c.l.b16 %v297
    %v378 = vunpack.c.l.b16 %v298
    %v379 = vunpack.c.l.b16 %v299
    %v380 = vunpack.c.l.b16 %v300
    %v381 = vunpack.c.l.b16 %v301
    %v382 = vunpack.c.l.b16 %v302
    %v383 = vunpack.c.l.b16 %v303
    %v384 = vunpack.c.l.b16 %v304
    %v385 = vunpack.c.l.b16 %v305
    %v386 = vunpack.c.l.b16 %v306
    %v387 = vunpack.c.l.b16 %v307
    %v388 = vunpack.c.l.b16 %v308
    %v389 = vunpack.c.l.b16 %v309
    %v390 = vpack.c.b16 %v375, %v374
    %v391 = vpack.c.b16 %v377, %v376
    %v392 = vpack.c.b16 %v379, %v378
    %v393 = vpack.c.b16 %v381, %v380
    %v394 = vpack.c.b16 %v383, %v382
    %v395 = vpack.c.b16 %v385, %v384
    %v396 = vpack.c.b16 %v387, %v386
    %v397 = vpack.c.b16 %v389, %v388
    %406 = vmatprep.subr.bf16.mxu0 0
    %407 = vmatpush1.bf16.msra.mxu0 %v390
    %408 = vmatprep.subr.bf16.mxu0 0
    %409 = vmatpush1.bf16.msra.mxu0 %v391
    %410 = vmatprep.subr.bf16.mxu0 0
    %411 = vmatpush1.bf16.msra.mxu0 %v392
    %412 = vmatprep.subr.bf16.mxu0 0
    %413 = vmatpush1.bf16.msra.mxu0 %v393
    %414 = vmatprep.subr.bf16.mxu0 0
    %415 = vmatpush1.bf16.msra.mxu0 %v394
    %416 = vmatprep.subr.bf16.mxu0 0
    %417 = vmatpush1.bf16.msra.mxu0 %v395
    %418 = vmatprep.subr.bf16.mxu0 0
    %419 = vmatpush1.bf16.msra.mxu0 %v396
    %420 = vmatprep.subr.bf16.mxu0 0
    %421 = vmatpush1.bf16.msra.mxu0 %v397
    %422 = vmatprep.subr.bf16.mxu0 0
    %423 = vmatpush1.bf16.msra.mxu0 0
    %424 = vmatprep.subr.bf16.mxu0 0
    %425 = vmatpush1.bf16.msra.mxu0 0
    %426 = vmatprep.subr.bf16.mxu0 0
    %427 = vmatpush1.bf16.msra.mxu0 0
    %428 = vmatprep.subr.bf16.mxu0 0
    %429 = vmatpush1.bf16.msra.mxu0 0
    %430 = vmatprep.subr.bf16.mxu0 0
    %431 = vmatpush1.bf16.msra.mxu0 0
    %432 = vmatprep.subr.bf16.mxu0 0
    %433 = vmatpush1.bf16.msra.mxu0 0
    %434 = vmatprep.subr.bf16.mxu0 0
    %435 = vmatpush1.bf16.msra.mxu0 0
    %436 = vmatprep.subr.bf16.mxu0 0
    %437 = vmatpush1.bf16.msra.mxu0 0
    %438 = vmatprep.mubr.bf16.mxu0 0
    %439 = vmatmul.mubr.bf16.gmra.mrb[0].mxu0 %v342
    %v440 = vpop.f32.mrb[0].mxu0
    %v441 = vadd.f32 0.0, %v440
    %v442 = vpop.f32.mrb[0].mxu0
    %v443 = vpop.f32.mrb[0].mxu0
    %v444 = vadd.f32 0.0, %v443
    %v445 = vpop.f32.mrb[0].mxu0
    %446 = vmatprep.mubr.bf16.mxu0 0
    %447 = vmatmul.mubr.bf16.gmra.mrb[0].mxu0 %v343
    %v448 = vpop.f32.mrb[0].mxu0
    %v449 = vadd.f32 0.0, %v448
    %v450 = vpop.f32.mrb[0].mxu0
    %v451 = vpop.f32.mrb[0].mxu0
    %v452 = vadd.f32 0.0, %v451
    %v453 = vpop.f32.mrb[0].mxu0
    %454 = vmatprep.mubr.bf16.mxu0 0
    %455 = vmatmul.mubr.bf16.gmra.mrb[0].mxu0 %v344
    %v456 = vpop.f32.mrb[0].mxu0
    %v457 = vadd.f32 0.0, %v456
    %v458 = vpop.f32.mrb[0].mxu0
    %v459 = vpop.f32.mrb[0].mxu0
    %v460 = vadd.f32 0.0, %v459
    %v461 = vpop.f32.mrb[0].mxu0
    %462 = vmatprep.mubr.bf16.mxu0 0
    %463 = vmatmul.mubr.bf16.gmra.mrb[0].mxu0 %v345
    %v464 = vpop.f32.mrb[0].mxu0
    %v465 = vadd.f32 0.0, %v464
    %v466 = vpop.f32.mrb[0].mxu0
    %v467 = vpop.f32.mrb[0].mxu0
    %v468 = vadd.f32 0.0, %v467
    %v469 = vpop.f32.mrb[0].mxu0
    %470 = vmatprep.mubr.bf16.mxu0 0
    %471 = vmatmul.mubr.bf16.gmra.mrb[0].mxu0 %v346
    %v472 = vpop.f32.mrb[0].mxu0
    %v473 = vadd.f32 0.0, %v472
    %v474 = vpop.f32.mrb[0].mxu0
    %v475 = vpop.f32.mrb[0].mxu0
    %v476 = vadd.f32 0.0, %v475
    %v477 = vpop.f32.mrb[0].mxu0
    %478 = vmatprep.mubr.bf16.mxu0 0
    %479 = vmatmul.mubr.bf16.gmra.mrb[0].mxu0 %v347
    %v480 = vpop.f32.mrb[0].mxu0
    %v481 = vadd.f32 0.0, %v480
    %v482 = vpop.f32.mrb[0].mxu0
    %v483 = vpop.f32.mrb[0].mxu0
    %v484 = vadd.f32 0.0, %v483
    %v485 = vpop.f32.mrb[0].mxu0
    %486 = vmatprep.mubr.bf16.mxu0 0
    %487 = vmatmul.mubr.bf16.gmra.mrb[0].mxu0 %v348
    %v488 = vpop.f32.mrb[0].mxu0
    %v489 = vadd.f32 0.0, %v488
    %v490 = vpop.f32.mrb[0].mxu0
    %v491 = vpop.f32.mrb[0].mxu0
    %v492 = vadd.f32 0.0, %v491
    %v493 = vpop.f32.mrb[0].mxu0
    %494 = vmatprep.mubr.bf16.mxu0 0
    %495 = vmatmul.mubr.bf16.gmra.mrb[0].mxu0 %v349
    %v496 = vpop.f32.mrb[0].mxu0
    %v497 = vadd.f32 0.0, %v496
    %v498 = vpop.f32.mrb[0].mxu0
    %v499 = vpop.f32.mrb[0].mxu0
    %v500 = vadd.f32 0.0, %v499
    %v501 = vpop.f32.mrb[0].mxu0
    %502 = vdwg.mxu0
    %v505 = vunpack.c.l.b16 %v257
    %v506 = vunpack.c.l.b16 %v267
    %v507 = vpack.c.b16 %v326, %v505
    %v508 = vpack.c.b16 %v328, %v327
    %v509 = vpack.c.b16 %v330, %v329
    %v510 = vpack.c.b16 %v332, %v331
    %v511 = vpack.c.b16 %v334, %v506
    %v512 = vpack.c.b16 %v336, %v335
    %v513 = vpack.c.b16 %v338, %v337
    %v514 = vpack.c.b16 %v340, %v339
    %v539 = vunpack.c.l.b16 %v277
    %v540 = vunpack.c.l.b16 %v278
    %v541 = vunpack.c.l.b16 %v279
    %v542 = vunpack.c.l.b16 %v280
    %v543 = vunpack.c.l.b16 %v281
    %v544 = vunpack.c.l.b16 %v282
    %v545 = vunpack.c.l.b16 %v283
    %v546 = vunpack.c.l.b16 %v284
    %v547 = vunpack.c.l.b16 %v285
    %v548 = vunpack.c.l.b16 %v286
    %v549 = vunpack.c.l.b16 %v287
    %v550 = vunpack.c.l.b16 %v288
    %v551 = vunpack.c.l.b16 %v289
    %v552 = vunpack.c.l.b16 %v290
    %v553 = vunpack.c.l.b16 %v291
    %v554 = vunpack.c.l.b16 %v292
    %v555 = vpack.c.b16 %v540, %v539
    %v556 = vpack.c.b16 %v542, %v541
    %v557 = vpack.c.b16 %v544, %v543
    %v558 = vpack.c.b16 %v546, %v545
    %v559 = vpack.c.b16 %v548, %v547
    %v560 = vpack.c.b16 %v550, %v549
    %v561 = vpack.c.b16 %v552, %v551
    %v562 = vpack.c.b16 %v554, %v553
    %571 = vmatprep.subr.bf16.mxu0 0
    %572 = vmatpush1.bf16.msra.mxu0 %v555
    %573 = vmatprep.subr.bf16.mxu0 0
    %574 = vmatpush1.bf16.msra.mxu0 %v556
    %575 = vmatprep.subr.bf16.mxu0 0
    %576 = vmatpush1.bf16.msra.mxu0 %v557
    %577 = vmatprep.subr.bf16.mxu0 0
    %578 = vmatpush1.bf16.msra.mxu0 %v558
    %579 = vmatprep.subr.bf16.mxu0 0
    %580 = vmatpush1.bf16.msra.mxu0 %v559
    %581 = vmatprep.subr.bf16.mxu0 0
    %582 = vmatpush1.bf16.msra.mxu0 %v560
    %583 = vmatprep.subr.bf16.mxu0 0
    %584 = vmatpush1.bf16.msra.mxu0 %v561
    %585 = vmatprep.subr.bf16.mxu0 0
    %586 = vmatpush1.bf16.msra.mxu0 %v562
    %587 = vmatprep.subr.bf16.mxu0 0
    %588 = vmatpush1.bf16.msra.mxu0 0
    %589 = vmatprep.subr.bf16.mxu0 0
    %590 = vmatpush1.bf16.msra.mxu0 0
    %591 = vmatprep.subr.bf16.mxu0 0
    %592 = vmatpush1.bf16.msra.mxu0 0
    %593 = vmatprep.subr.bf16.mxu0 0
    %594 = vmatpush1.bf16.msra.mxu0 0
    %595 = vmatprep.subr.bf16.mxu0 0
    %596 = vmatpush1.bf16.msra.mxu0 0
    %597 = vmatprep.subr.bf16.mxu0 0
    %598 = vmatpush1.bf16.msra.mxu0 0
    %599 = vmatprep.subr.bf16.mxu0 0
    %600 = vmatpush1.bf16.msra.mxu0 0
    %601 = vmatprep.subr.bf16.mxu0 0
    %602 = vmatpush1.bf16.msra.mxu0 0
    %603 = vmatprep.mubr.bf16.mxu0 0
    %604 = vmatmul.mubr.bf16.gmra.mrb[0].mxu0 %v507
    %v605 = vpop.f32.mrb[0].mxu0
    %v606 = vadd.f32 %v441, %v605
    %v607 = vpop.f32.mrb[0].mxu0
    %v608 = vpop.f32.mrb[0].mxu0
    %v609 = vadd.f32 %v444, %v608
    %v610 = vpop.f32.mrb[0].mxu0
    %611 = vmatprep.mubr.bf16.mxu0 0
    %612 = vmatmul.mubr.bf16.gmra.mrb[0].mxu0 %v508
    %v613 = vpop.f32.mrb[0].mxu0
    %v614 = vadd.f32 %v449, %v613
    %v615 = vpop.f32.mrb[0].mxu0
    %v616 = vpop.f32.mrb[0].mxu0
    %v617 = vadd.f32 %v452, %v616
    %v618 = vpop.f32.mrb[0].mxu0
    %619 = vmatprep.mubr.bf16.mxu0 0
    %620 = vmatmul.mubr.bf16.gmra.mrb[0].mxu0 %v509
    %v621 = vpop.f32.mrb[0].mxu0
    %v622 = vadd.f32 %v457, %v621
    %v623 = vpop.f32.mrb[0].mxu0
    %v624 = vpop.f32.mrb[0].mxu0
    %v625 = vadd.f32 %v460, %v624
    %v626 = vpop.f32.mrb[0].mxu0
    %627 = vmatprep.mubr.bf16.mxu0 0
    %628 = vmatmul.mubr.bf16.gmra.mrb[0].mxu0 %v510
    %v629 = vpop.f32.mrb[0].mxu0
    %v630 = vadd.f32 %v465, %v629
    %v631 = vpop.f32.mrb[0].mxu0
    %v632 = vpop.f32.mrb[0].mxu0
    %v633 = vadd.f32 %v468, %v632
    %v634 = vpop.f32.mrb[0].mxu0
    %635 = vmatprep.mubr.bf16.mxu0 0
    %636 = vmatmul.mubr.bf16.gmra.mrb[0].mxu0 %v511
    %v637 = vpop.f32.mrb[0].mxu0
    %v638 = vadd.f32 %v473, %v637
    %v639 = vpop.f32.mrb[0].mxu0
    %v640 = vpop.f32.mrb[0].mxu0
    %v641 = vadd.f32 %v476, %v640
    %v642 = vpop.f32.mrb[0].mxu0
    %643 = vmatprep.mubr.bf16.mxu0 0
    %644 = vmatmul.mubr.bf16.gmra.mrb[0].mxu0 %v512
    %v645 = vpop.f32.mrb[0].mxu0
    %v646 = vadd.f32 %v481, %v645
    %v647 = vpop.f32.mrb[0].mxu0
    %v648 = vpop.f32.mrb[0].mxu0
    %v649 = vadd.f32 %v484, %v648
    %v650 = vpop.f32.mrb[0].mxu0
    %651 = vmatprep.mubr.bf16.mxu0 0
    %652 = vmatmul.mubr.bf16.gmra.mrb[0].mxu0 %v513
    %v653 = vpop.f32.mrb[0].mxu0
    %v654 = vadd.f32 %v489, %v653
    %v655 = vpop.f32.mrb[0].mxu0
    %v656 = vpop.f32.mrb[0].mxu0
    %v657 = vadd.f32 %v492, %v656
    %v658 = vpop.f32.mrb[0].mxu0
    %659 = vmatprep.mubr.bf16.mxu0 0
    %660 = vmatmul.mubr.bf16.gmra.mrb[0].mxu0 %v514
    %v661 = vpop.f32.mrb[0].mxu0
    %v662 = vadd.f32 %v497, %v661
    %v663 = vpop.f32.mrb[0].mxu0
    %v664 = vpop.f32.mrb[0].mxu0
    %v665 = vadd.f32 %v500, %v664
    %v666 = vpop.f32.mrb[0].mxu0
    %667 = vdwg.mxu0
    %s668 = scalar_lea.vmem [#allocation4], 384
    %v669 = vld [vmem:[%s668] sm:$0xf]
    %v670 = vld [vmem:[%s668 + $0x4] sm:$0xf]
    %v671 = vld [vmem:[%s668 + $0x8] sm:$0xf]
    %v672 = vld [vmem:[%s668 + $0xc] sm:$0xf]
    %v673 = vld [vmem:[%s668 + $0x10] sm:$0xf]
    %v674 = vld [vmem:[%s668 + $0x14] sm:$0xf]
    %v675 = vld [vmem:[%s668 + $0x18] sm:$0xf]
    %v676 = vld [vmem:[%s668 + $0x1c] sm:$0xf]
    %v677 = vld [vmem:[%s668 + $0x20] sm:$0xf]
    %v678 = vld [vmem:[%s668 + $0x24] sm:$0xf]
    %v679 = vld [vmem:[%s668 + $0x28] sm:$0xf]
    %v680 = vld [vmem:[%s668 + $0x2c] sm:$0xf]
    %v681 = vld [vmem:[%s668 + $0x30] sm:$0xf]
    %v682 = vld [vmem:[%s668 + $0x34] sm:$0xf]
    %v683 = vld [vmem:[%s668 + $0x38] sm:$0xf]
    %v684 = vld [vmem:[%s668 + $0x3c] sm:$0xf]
    %v687 = vunpack.c.l.b16 %v266
    %v688 = vunpack.c.l.b16 %v276
    %v689 = vpack.c.b16 %v687, %v333
    %v690 = vpack.c.b16 %v688, %v341
    %v709 = vunpack.c.l.b16 %v669
    %v710 = vunpack.c.l.b16 %v670
    %v711 = vunpack.c.l.b16 %v671
    %v712 = vunpack.c.l.b16 %v672
    %v713 = vunpack.c.l.b16 %v673
    %v714 = vunpack.c.l.b16 %v674
    %v715 = vunpack.c.l.b16 %v675
    %v716 = vunpack.c.l.b16 %v676
    %v717 = vunpack.c.l.b16 %v677
    %v718 = vunpack.c.l.b16 %v678
    %v719 = vunpack.c.l.b16 %v679
    %v720 = vunpack.c.l.b16 %v680
    %v721 = vunpack.c.l.b16 %v681
    %v722 = vunpack.c.l.b16 %v682
    %v723 = vunpack.c.l.b16 %v683
    %v724 = vunpack.c.l.b16 %v684
    %v725 = vpack.c.b16 %v710, %v709
    %v726 = vpack.c.b16 %v712, %v711
    %v727 = vpack.c.b16 %v714, %v713
    %v728 = vpack.c.b16 %v716, %v715
    %v729 = vpack.c.b16 %v718, %v717
    %v730 = vpack.c.b16 %v720, %v719
    %v731 = vpack.c.b16 %v722, %v721
    %v732 = vpack.c.b16 %v724, %v723
    %741 = vmatprep.subr.bf16.mxu0 0
    %742 = vmatpush1.bf16.msra.mxu0 %v725
    %743 = vmatprep.subr.bf16.mxu0 0
    %744 = vmatpush1.bf16.msra.mxu0 %v726
    %745 = vmatprep.subr.bf16.mxu0 0
    %746 = vmatpush1.bf16.msra.mxu0 %v727
    %747 = vmatprep.subr.bf16.mxu0 0
    %748 = vmatpush1.bf16.msra.mxu0 %v728
    %749 = vmatprep.subr.bf16.mxu0 0
    %750 = vmatpush1.bf16.msra.mxu0 %v729
    %751 = vmatprep.subr.bf16.mxu0 0
    %752 = vmatpush1.bf16.msra.mxu0 %v730
    %753 = vmatprep.subr.bf16.mxu0 0
    %754 = vmatpush1.bf16.msra.mxu0 %v731
    %755 = vmatprep.subr.bf16.mxu0 0
    %756 = vmatpush1.bf16.msra.mxu0 %v732
    %757 = vmatprep.subr.bf16.mxu0 0
    %758 = vmatpush1.bf16.msra.mxu0 0
    %759 = vmatprep.subr.bf16.mxu0 0
    %760 = vmatpush1.bf16.msra.mxu0 0
    %761 = vmatprep.subr.bf16.mxu0 0
    %762 = vmatpush1.bf16.msra.mxu0 0
    %763 = vmatprep.subr.bf16.mxu0 0
    %764 = vmatpush1.bf16.msra.mxu0 0
    %765 = vmatprep.subr.bf16.mxu0 0
    %766 = vmatpush1.bf16.msra.mxu0 0
    %767 = vmatprep.subr.bf16.mxu0 0
    %768 = vmatpush1.bf16.msra.mxu0 0
    %769 = vmatprep.subr.bf16.mxu0 0
    %770 = vmatpush1.bf16.msra.mxu0 0
    %771 = vmatprep.subr.bf16.mxu0 0
    %772 = vmatpush1.bf16.msra.mxu0 0
    %773 = vmatprep.mubr.bf16.mxu0 0
    %774 = vmatmul.mubr.bf16.gmra.mrb[0].mxu0 %v508
    %v775 = vpop.f32.mrb[0].mxu0
    %v776 = vadd.f32 0.0, %v775
    %v777 = vpop.f32.mrb[0].mxu0
    %v778 = vpop.f32.mrb[0].mxu0
    %v779 = vadd.f32 0.0, %v778
    %v780 = vpop.f32.mrb[0].mxu0
    %781 = vmatprep.mubr.bf16.mxu0 0
    %782 = vmatmul.mubr.bf16.gmra.mrb[0].mxu0 %v509
    %v783 = vpop.f32.mrb[0].mxu0
    %v784 = vadd.f32 0.0, %v783
    %v785 = vpop.f32.mrb[0].mxu0
    %v786 = vpop.f32.mrb[0].mxu0
    %v787 = vadd.f32 0.0, %v786
    %v788 = vpop.f32.mrb[0].mxu0
    %789 = vmatprep.mubr.bf16.mxu0 0
    %790 = vmatmul.mubr.bf16.gmra.mrb[0].mxu0 %v510
    %v791 = vpop.f32.mrb[0].mxu0
    %v792 = vadd.f32 0.0, %v791
    %v793 = vpop.f32.mrb[0].mxu0
    %v794 = vpop.f32.mrb[0].mxu0
    %v795 = vadd.f32 0.0, %v794
    %v796 = vpop.f32.mrb[0].mxu0
    %797 = vmatprep.mubr.bf16.mxu0 0
    %798 = vmatmul.mubr.bf16.gmra.mrb[0].mxu0 %v689
    %v799 = vpop.f32.mrb[0].mxu0
    %v800 = vadd.f32 0.0, %v799
    %v801 = vpop.f32.mrb[0].mxu0
    %v802 = vpop.f32.mrb[0].mxu0
    %v803 = vadd.f32 0.0, %v802
    %v804 = vpop.f32.mrb[0].mxu0
    %805 = vmatprep.mubr.bf16.mxu0 0
    %806 = vmatmul.mubr.bf16.gmra.mrb[0].mxu0 %v512
    %v807 = vpop.f32.mrb[0].mxu0
    %v808 = vadd.f32 0.0, %v807
    %v809 = vpop.f32.mrb[0].mxu0
    %v810 = vpop.f32.mrb[0].mxu0
    %v811 = vadd.f32 0.0, %v810
    %v812 = vpop.f32.mrb[0].mxu0
    %813 = vmatprep.mubr.bf16.mxu0 0
    %814 = vmatmul.mubr.bf16.gmra.mrb[0].mxu0 %v513
    %v815 = vpop.f32.mrb[0].mxu0
    %v816 = vadd.f32 0.0, %v815
    %v817 = vpop.f32.mrb[0].mxu0
    %v818 = vpop.f32.mrb[0].mxu0
    %v819 = vadd.f32 0.0, %v818
    %v820 = vpop.f32.mrb[0].mxu0
    %821 = vmatprep.mubr.bf16.mxu0 0
    %822 = vmatmul.mubr.bf16.gmra.mrb[0].mxu0 %v514
    %v823 = vpop.f32.mrb[0].mxu0
    %v824 = vadd.f32 0.0, %v823
    %v825 = vpop.f32.mrb[0].mxu0
    %v826 = vpop.f32.mrb[0].mxu0
    %v827 = vadd.f32 0.0, %v826
    %v828 = vpop.f32.mrb[0].mxu0
    %829 = vmatprep.mubr.bf16.mxu0 0
    %830 = vmatmul.mubr.bf16.gmra.mrb[0].mxu0 %v690
    %v831 = vpop.f32.mrb[0].mxu0
    %v832 = vadd.f32 0.0, %v831
    %v833 = vpop.f32.mrb[0].mxu0
    %v834 = vpop.f32.mrb[0].mxu0
    %v835 = vadd.f32 0.0, %v834
    %v836 = vpop.f32.mrb[0].mxu0
    %837 = vdwg.mxu0
    %v838 = vadd.f32 %v606, %v776
    %v839 = vadd.f32 %v609, %v779
    %v840 = vadd.f32 %v614, %v784
    %v841 = vadd.f32 %v617, %v787
    %v842 = vadd.f32 %v622, %v792
    %v843 = vadd.f32 %v625, %v795
    %v844 = vadd.f32 %v630, %v800
    %v845 = vadd.f32 %v633, %v803
    %v846 = vadd.f32 %v638, %v808
    %v847 = vadd.f32 %v641, %v811
    %v848 = vadd.f32 %v646, %v816
    %v849 = vadd.f32 %v649, %v819
    %v850 = vadd.f32 %v654, %v824
    %v851 = vadd.f32 %v657, %v827
    %v852 = vadd.f32 %v662, %v832
    %v853 = vadd.f32 %v665, %v835
    %v854 = vpack.c.bf16 %v218, %v217
    %v855 = vpack.c.bf16 %v220, %v219
    %v856 = vpack.c.bf16 %v222, %v221
    %v857 = vpack.c.bf16 %v224, %v223
    %v858 = vpack.c.bf16 %v226, %v225
    %v859 = vpack.c.bf16 %v228, %v227
    %v860 = vpack.c.bf16 %v230, %v229
    %v861 = vpack.c.bf16 %v232, %v231
    %v862 = vpack.c.bf16 %v234, %v233
    %v863 = vpack.c.bf16 %v236, %v235
    %v864 = vpack.c.bf16 %v238, %v237
    %v865 = vpack.c.bf16 %v240, %v239
    %v866 = vpack.c.bf16 %v242, %v241
    %v867 = vpack.c.bf16 %v244, %v243
    %v868 = vpack.c.bf16 %v246, %v245
    %v869 = vpack.c.bf16 %v248, %v247
    %v870 = vpack.c.bf16 %v250, %v249
    %v871 = vpack.c.bf16 %v252, %v251
    %v872 = vpack.c.bf16 %v254, %v253
    %v873 = vpack.c.bf16 %v256, %v255
    %v890 = vunpack.c.l.b16 %v854
    %v891 = vunpack.c.h.b16 %v854
    %v892 = vunpack.c.l.b16 %v855
    %v893 = vunpack.c.h.b16 %v855
    %v894 = vunpack.c.l.b16 %v856
    %v895 = vunpack.c.h.b16 %v856
    %v896 = vunpack.c.l.b16 %v857
    %v897 = vunpack.c.h.b16 %v857
    %v898 = vunpack.c.l.b16 %v858
    %v899 = vunpack.c.h.b16 %v858
    %v900 = vunpack.c.l.b16 %v859
    %v901 = vunpack.c.h.b16 %v859
    %v902 = vunpack.c.l.b16 %v860
    %v903 = vunpack.c.h.b16 %v860
    %v904 = vunpack.c.l.b16 %v861
    %v905 = vunpack.c.h.b16 %v861
    %v906 = vunpack.c.l.b16 %v864
    %v907 = vunpack.c.h.b16 %v864
    %v908 = vunpack.c.l.b16 %v865
    %v909 = vunpack.c.h.b16 %v865
    %v910 = vunpack.c.l.b16 %v866
    %v911 = vunpack.c.h.b16 %v866
    %v912 = vunpack.c.l.b16 %v867
    %v913 = vunpack.c.h.b16 %v867
    %v914 = vunpack.c.l.b16 %v868
    %v915 = vunpack.c.h.b16 %v868
    %v916 = vunpack.c.l.b16 %v869
    %v917 = vunpack.c.h.b16 %v869
    %v918 = vunpack.c.l.b16 %v870
    %v919 = vunpack.c.h.b16 %v870
    %v920 = vunpack.c.l.b16 %v871
    %v921 = vunpack.c.h.b16 %v871
    %v922 = vpack.c.b16 %v890, %v890
    %v923 = vpack.c.b16 %v891, %v891
    %v924 = vpack.c.b16 %v892, %v892
    %v925 = vpack.c.b16 %v893, %v893
    %v926 = vpack.c.b16 %v894, %v894
    %v927 = vpack.c.b16 %v895, %v895
    %v928 = vpack.c.b16 %v896, %v896
    %v929 = vpack.c.b16 %v897, %v897
    %v930 = vpack.c.b16 %v898, %v898
    %v931 = vpack.c.b16 %v899, %v899
    %v932 = vpack.c.b16 %v900, %v900
    %v933 = vpack.c.b16 %v901, %v901
    %v934 = vpack.c.b16 %v902, %v902
    %v935 = vpack.c.b16 %v903, %v903
    %v936 = vpack.c.b16 %v904, %v904
    %v937 = vpack.c.b16 %v905, %v905
    %v938 = vpack.c.b16 %v906, %v906
    %v939 = vpack.c.b16 %v907, %v907
    %v940 = vpack.c.b16 %v908, %v908
    %v941 = vpack.c.b16 %v909, %v909
    %v942 = vpack.c.b16 %v910, %v910
    %v943 = vpack.c.b16 %v911, %v911
    %v944 = vpack.c.b16 %v912, %v912
    %v945 = vpack.c.b16 %v913, %v913
    %v946 = vpack.c.b16 %v914, %v914
    %v947 = vpack.c.b16 %v915, %v915
    %v948 = vpack.c.b16 %v916, %v916
    %v949 = vpack.c.b16 %v917, %v917
    %v950 = vpack.c.b16 %v918, %v918
    %v951 = vpack.c.b16 %v919, %v919
    %v952 = vpack.c.b16 %v920, %v920
    %v953 = vpack.c.b16 %v921, %v921
    %vm954 = vsmask.f32 3328
    %vm955 = vsmask.f32 7440
    %vm956 = vmor %vm954, %vm955
    %v958 = vshrl.u32 %v922, 16
    %v960 = vrot.slane %v958, 4
    %v961 = vshll.u32 %v922, 16
    %v963 = vrot.slane %v961, 5
    %v964 = vor.u32 %v960, %v963
    %v965 = vrot.slane %v964, 4
    %v967 = vshll.u32 %v923, 16
    %v969 = vrot.slane %v967, 5
    %v970 = vsel %vm956, %v965, %v969
    %v972 = vshrl.u32 %v924, 16
    %v974 = vrot.slane %v972, 4
    %v975 = vshll.u32 %v924, 16
    %v977 = vrot.slane %v975, 5
    %v978 = vor.u32 %v974, %v977
    %v979 = vrot.slane %v978, 4
    %v981 = vshll.u32 %v925, 16
    %v983 = vrot.slane %v981, 5
    %v984 = vsel %vm956, %v979, %v983
    %v986 = vshrl.u32 %v926, 16
    %v988 = vrot.slane %v986, 4
    %v989 = vshll.u32 %v926, 16
    %v991 = vrot.slane %v989, 5
    %v992 = vor.u32 %v988, %v991
    %v993 = vrot.slane %v992, 4
    %v995 = vshll.u32 %v927, 16
    %v997 = vrot.slane %v995, 5
    %v998 = vsel %vm956, %v993, %v997
    %v1000 = vshrl.u32 %v928, 16
    %v1002 = vrot.slane %v1000, 4
    %v1003 = vshll.u32 %v928, 16
    %v1005 = vrot.slane %v1003, 5
    %v1006 = vor.u32 %v1002, %v1005
    %v1007 = vrot.slane %v1006, 4
    %v1009 = vshll.u32 %v929, 16
    %v1011 = vrot.slane %v1009, 5
    %v1012 = vsel %vm956, %v1007, %v1011
    %v1014 = vshrl.u32 %v930, 16
    %v1016 = vrot.slane %v1014, 4
    %v1017 = vshll.u32 %v930, 16
    %v1019 = vrot.slane %v1017, 5
    %v1020 = vor.u32 %v1016, %v1019
    %v1021 = vrot.slane %v1020, 4
    %v1023 = vshll.u32 %v931, 16
    %v1025 = vrot.slane %v1023, 5
    %v1026 = vsel %vm956, %v1021, %v1025
    %v1028 = vshrl.u32 %v932, 16
    %v1030 = vrot.slane %v1028, 4
    %v1031 = vshll.u32 %v932, 16
    %v1033 = vrot.slane %v1031, 5
    %v1034 = vor.u32 %v1030, %v1033
    %v1035 = vrot.slane %v1034, 4
    %v1037 = vshll.u32 %v933, 16
    %v1039 = vrot.slane %v1037, 5
    %v1040 = vsel %vm956, %v1035, %v1039
    %v1042 = vshrl.u32 %v934, 16
    %v1044 = vrot.slane %v1042, 4
    %v1045 = vshll.u32 %v934, 16
    %v1047 = vrot.slane %v1045, 5
    %v1048 = vor.u32 %v1044, %v1047
    %v1049 = vrot.slane %v1048, 4
    %v1051 = vshll.u32 %v935, 16
    %v1053 = vrot.slane %v1051, 5
    %v1054 = vsel %vm956, %v1049, %v1053
    %v1056 = vshrl.u32 %v936, 16
    %v1058 = vrot.slane %v1056, 4
    %v1059 = vshll.u32 %v936, 16
    %v1061 = vrot.slane %v1059, 5
    %v1062 = vor.u32 %v1058, %v1061
    %v1063 = vrot.slane %v1062, 4
    %v1065 = vshll.u32 %v937, 16
    %v1067 = vrot.slane %v1065, 5
    %v1068 = vsel %vm956, %v1063, %v1067
    %v1070 = vshrl.u32 %v938, 16
    %v1072 = vrot.slane %v1070, 4
    %v1073 = vshll.u32 %v938, 16
    %v1075 = vrot.slane %v1073, 5
    %v1076 = vor.u32 %v1072, %v1075
    %v1077 = vrot.slane %v1076, 4
    %v1079 = vshll.u32 %v939, 16
    %v1081 = vrot.slane %v1079, 5
    %v1082 = vsel %vm956, %v1077, %v1081
    %v1084 = vshrl.u32 %v940, 16
    %v1086 = vrot.slane %v1084, 4
    %v1087 = vshll.u32 %v940, 16
    %v1089 = vrot.slane %v1087, 5
    %v1090 = vor.u32 %v1086, %v1089
    %v1091 = vrot.slane %v1090, 4
    %v1093 = vshll.u32 %v941, 16
    %v1095 = vrot.slane %v1093, 5
    %v1096 = vsel %vm956, %v1091, %v1095
    %v1098 = vshrl.u32 %v942, 16
    %v1100 = vrot.slane %v1098, 4
    %v1101 = vshll.u32 %v942, 16
    %v1103 = vrot.slane %v1101, 5
    %v1104 = vor.u32 %v1100, %v1103
    %v1105 = vrot.slane %v1104, 4
    %v1107 = vshll.u32 %v943, 16
    %v1109 = vrot.slane %v1107, 5
    %v1110 = vsel %vm956, %v1105, %v1109
    %v1112 = vshrl.u32 %v944, 16
    %v1114 = vrot.slane %v1112, 4
    %v1115 = vshll.u32 %v944, 16
    %v1117 = vrot.slane %v1115, 5
    %v1118 = vor.u32 %v1114, %v1117
    %v1119 = vrot.slane %v1118, 4
    %v1121 = vshll.u32 %v945, 16
    %v1123 = vrot.slane %v1121, 5
    %v1124 = vsel %vm956, %v1119, %v1123
    %v1126 = vshrl.u32 %v946, 16
    %v1128 = vrot.slane %v1126, 4
    %v1129 = vshll.u32 %v946, 16
    %v1131 = vrot.slane %v1129, 5
    %v1132 = vor.u32 %v1128, %v1131
    %v1133 = vrot.slane %v1132, 4
    %v1135 = vshll.u32 %v947, 16
    %v1137 = vrot.slane %v1135, 5
    %v1138 = vsel %vm956, %v1133, %v1137
    %v1140 = vshrl.u32 %v948, 16
    %v1142 = vrot.slane %v1140, 4
    %v1143 = vshll.u32 %v948, 16
    %v1145 = vrot.slane %v1143, 5
    %v1146 = vor.u32 %v1142, %v1145
    %v1147 = vrot.slane %v1146, 4
    %v1149 = vshll.u32 %v949, 16
    %v1151 = vrot.slane %v1149, 5
    %v1152 = vsel %vm956, %v1147, %v1151
    %v1154 = vshrl.u32 %v950, 16
    %v1156 = vrot.slane %v1154, 4
    %v1157 = vshll.u32 %v950, 16
    %v1159 = vrot.slane %v1157, 5
    %v1160 = vor.u32 %v1156, %v1159
    %v1161 = vrot.slane %v1160, 4
    %v1163 = vshll.u32 %v951, 16
    %v1165 = vrot.slane %v1163, 5
    %v1166 = vsel %vm956, %v1161, %v1165
    %v1168 = vshrl.u32 %v952, 16
    %v1170 = vrot.slane %v1168, 4
    %v1171 = vshll.u32 %v952, 16
    %v1173 = vrot.slane %v1171, 5
    %v1174 = vor.u32 %v1170, %v1173
    %v1175 = vrot.slane %v1174, 4
    %v1177 = vshll.u32 %v953, 16
    %v1179 = vrot.slane %v1177, 5
    %v1180 = vsel %vm956, %v1175, %v1179
    %s1181 = scalar_lea.vmem [#allocation4], 64
    %v1182 = vld [vmem:[%s1181] sm:$0xf]
    %v1183 = vld [vmem:[%s1181 + $0x4] sm:$0xf]
    %v1184 = vld [vmem:[%s1181 + $0x8] sm:$0xf]
    %v1185 = vld [vmem:[%s1181 + $0xc] sm:$0xf]
    %v1186 = vld [vmem:[%s1181 + $0x10] sm:$0xf]
    %v1187 = vld [vmem:[%s1181 + $0x14] sm:$0xf]
    %v1188 = vld [vmem:[%s1181 + $0x18] sm:$0xf]
    %v1189 = vld [vmem:[%s1181 + $0x1c] sm:$0xf]
    %v1190 = vld [vmem:[%s1181 + $0x20] sm:$0xf]
    %v1191 = vld [vmem:[%s1181 + $0x24] sm:$0xf]
    %v1192 = vld [vmem:[%s1181 + $0x28] sm:$0xf]
    %v1193 = vld [vmem:[%s1181 + $0x2c] sm:$0xf]
    %v1194 = vld [vmem:[%s1181 + $0x30] sm:$0xf]
    %v1195 = vld [vmem:[%s1181 + $0x34] sm:$0xf]
    %v1196 = vld [vmem:[%s1181 + $0x38] sm:$0xf]
    %v1197 = vld [vmem:[%s1181 + $0x3c] sm:$0xf]
    %v1198 = vunpack.c.l.b16 %v970
    %v1199 = vunpack.c.l.b16 %v984
    %v1200 = vunpack.c.l.b16 %v998
    %v1201 = vunpack.c.l.b16 %v1012
    %v1202 = vunpack.c.l.b16 %v1026
    %v1203 = vunpack.c.l.b16 %v1040
    %v1204 = vunpack.c.l.b16 %v1054
    %v1205 = vunpack.c.l.b16 %v1068
    %v1206 = vunpack.c.l.b16 %v1082
    %v1207 = vunpack.c.l.b16 %v1096
    %v1208 = vunpack.c.l.b16 %v1110
    %v1209 = vunpack.c.l.b16 %v1124
    %v1210 = vunpack.c.l.b16 %v1138
    %v1211 = vunpack.c.l.b16 %v1152
    %v1212 = vunpack.c.l.b16 %v1166
    %v1213 = vunpack.c.l.b16 %v1180
    %v1214 = vpack.c.b16 %v1199, %v1198
    %v1215 = vpack.c.b16 %v1201, %v1200
    %v1216 = vpack.c.b16 %v1203, %v1202
    %v1217 = vpack.c.b16 %v1205, %v1204
    %v1218 = vpack.c.b16 %v1207, %v1206
    %v1219 = vpack.c.b16 %v1209, %v1208
    %v1220 = vpack.c.b16 %v1211, %v1210
    %v1221 = vpack.c.b16 %v1213, %v1212
    %v1246 = vunpack.c.l.b16 %v1182
    %v1247 = vunpack.c.l.b16 %v1183
    %v1248 = vunpack.c.l.b16 %v1184
    %v1249 = vunpack.c.l.b16 %v1185
    %v1250 = vunpack.c.l.b16 %v1186
    %v1251 = vunpack.c.l.b16 %v1187
    %v1252 = vunpack.c.l.b16 %v1188
    %v1253 = vunpack.c.l.b16 %v1189
    %v1254 = vunpack.c.l.b16 %v1190
    %v1255 = vunpack.c.l.b16 %v1191
    %v1256 = vunpack.c.l.b16 %v1192
    %v1257 = vunpack.c.l.b16 %v1193
    %v1258 = vunpack.c.l.b16 %v1194
    %v1259 = vunpack.c.l.b16 %v1195
    %v1260 = vunpack.c.l.b16 %v1196
    %v1261 = vunpack.c.l.b16 %v1197
    %v1262 = vpack.c.b16 %v1247, %v1246
    %v1263 = vpack.c.b16 %v1249, %v1248
    %v1264 = vpack.c.b16 %v1251, %v1250
    %v1265 = vpack.c.b16 %v1253, %v1252
    %v1266 = vpack.c.b16 %v1255, %v1254
    %v1267 = vpack.c.b16 %v1257, %v1256
    %v1268 = vpack.c.b16 %v1259, %v1258
    %v1269 = vpack.c.b16 %v1261, %v1260
    %1278 = vmatprep.subr.bf16.mxu0 0
    %1279 = vmatpush1.bf16.msra.mxu0 %v1262
    %1280 = vmatprep.subr.bf16.mxu0 0
    %1281 = vmatpush1.bf16.msra.mxu0 %v1263
    %1282 = vmatprep.subr.bf16.mxu0 0
    %1283 = vmatpush1.bf16.msra.mxu0 %v1264
    %1284 = vmatprep.subr.bf16.mxu0 0
    %1285 = vmatpush1.bf16.msra.mxu0 %v1265
    %1286 = vmatprep.subr.bf16.mxu0 0
    %1287 = vmatpush1.bf16.msra.mxu0 %v1266
    %1288 = vmatprep.subr.bf16.mxu0 0
    %1289 = vmatpush1.bf16.msra.mxu0 %v1267
    %1290 = vmatprep.subr.bf16.mxu0 0
    %1291 = vmatpush1.bf16.msra.mxu0 %v1268
    %1292 = vmatprep.subr.bf16.mxu0 0
    %1293 = vmatpush1.bf16.msra.mxu0 %v1269
    %1294 = vmatprep.subr.bf16.mxu0 0
    %1295 = vmatpush1.bf16.msra.mxu0 0
    %1296 = vmatprep.subr.bf16.mxu0 0
    %1297 = vmatpush1.bf16.msra.mxu0 0
    %1298 = vmatprep.subr.bf16.mxu0 0
    %1299 = vmatpush1.bf16.msra.mxu0 0
    %1300 = vmatprep.subr.bf16.mxu0 0
    %1301 = vmatpush1.bf16.msra.mxu0 0
    %1302 = vmatprep.subr.bf16.mxu0 0
    %1303 = vmatpush1.bf16.msra.mxu0 0
    %1304 = vmatprep.subr.bf16.mxu0 0
    %1305 = vmatpush1.bf16.msra.mxu0 0
    %1306 = vmatprep.subr.bf16.mxu0 0
    %1307 = vmatpush1.bf16.msra.mxu0 0
    %1308 = vmatprep.subr.bf16.mxu0 0
    %1309 = vmatpush1.bf16.msra.mxu0 0
    %1310 = vmatprep.mubr.bf16.mxu0 0
    %1311 = vmatmul.mubr.bf16.gmra.mrb[0].mxu0 %v1214
    %v1312 = vpop.f32.mrb[0].mxu0
    %v1313 = vadd.f32 0.0, %v1312
    %v1314 = vpop.f32.mrb[0].mxu0
    %v1315 = vpop.f32.mrb[0].mxu0
    %v1316 = vadd.f32 0.0, %v1315
    %v1317 = vpop.f32.mrb[0].mxu0
    %1318 = vmatprep.mubr.bf16.mxu0 0
    %1319 = vmatmul.mubr.bf16.gmra.mrb[0].mxu0 %v1215
    %v1320 = vpop.f32.mrb[0].mxu0
    %v1321 = vadd.f32 0.0, %v1320
    %v1322 = vpop.f32.mrb[0].mxu0
    %v1323 = vpop.f32.mrb[0].mxu0
    %v1324 = vadd.f32 0.0, %v1323
    %v1325 = vpop.f32.mrb[0].mxu0
    %1326 = vmatprep.mubr.bf16.mxu0 0
    %1327 = vmatmul.mubr.bf16.gmra.mrb[0].mxu0 %v1216
    %v1328 = vpop.f32.mrb[0].mxu0
    %v1329 = vadd.f32 0.0, %v1328
    %v1330 = vpop.f32.mrb[0].mxu0
    %v1331 = vpop.f32.mrb[0].mxu0
    %v1332 = vadd.f32 0.0, %v1331
    %v1333 = vpop.f32.mrb[0].mxu0
    %1334 = vmatprep.mubr.bf16.mxu0 0
    %1335 = vmatmul.mubr.bf16.gmra.mrb[0].mxu0 %v1217
    %v1336 = vpop.f32.mrb[0].mxu0
    %v1337 = vadd.f32 0.0, %v1336
    %v1338 = vpop.f32.mrb[0].mxu0
    %v1339 = vpop.f32.mrb[0].mxu0
    %v1340 = vadd.f32 0.0, %v1339
    %v1341 = vpop.f32.mrb[0].mxu0
    %1342 = vmatprep.mubr.bf16.mxu0 0
    %1343 = vmatmul.mubr.bf16.gmra.mrb[0].mxu0 %v1218
    %v1344 = vpop.f32.mrb[0].mxu0
    %v1345 = vadd.f32 0.0, %v1344
    %v1346 = vpop.f32.mrb[0].mxu0
    %v1347 = vpop.f32.mrb[0].mxu0
    %v1348 = vadd.f32 0.0, %v1347
    %v1349 = vpop.f32.mrb[0].mxu0
    %1350 = vmatprep.mubr.bf16.mxu0 0
    %1351 = vmatmul.mubr.bf16.gmra.mrb[0].mxu0 %v1219
    %v1352 = vpop.f32.mrb[0].mxu0
    %v1353 = vadd.f32 0.0, %v1352
    %v1354 = vpop.f32.mrb[0].mxu0
    %v1355 = vpop.f32.mrb[0].mxu0
    %v1356 = vadd.f32 0.0, %v1355
    %v1357 = vpop.f32.mrb[0].mxu0
    %1358 = vmatprep.mubr.bf16.mxu0 0
    %1359 = vmatmul.mubr.bf16.gmra.mrb[0].mxu0 %v1220
    %v1360 = vpop.f32.mrb[0].mxu0
    %v1361 = vadd.f32 0.0, %v1360
    %v1362 = vpop.f32.mrb[0].mxu0
    %v1363 = vpop.f32.mrb[0].mxu0
    %v1364 = vadd.f32 0.0, %v1363
    %v1365 = vpop.f32.mrb[0].mxu0
    %1366 = vmatprep.mubr.bf16.mxu0 0
    %1367 = vmatmul.mubr.bf16.gmra.mrb[0].mxu0 %v1221
    %v1368 = vpop.f32.mrb[0].mxu0
    %v1369 = vadd.f32 0.0, %v1368
    %v1370 = vpop.f32.mrb[0].mxu0
    %v1371 = vpop.f32.mrb[0].mxu0
    %v1372 = vadd.f32 0.0, %v1371
    %v1373 = vpop.f32.mrb[0].mxu0
    %1374 = vdwg.mxu0
    %v1375 = vadd.f32 %v838, %v1313
    %v1376 = vadd.f32 %v839, %v1316
    %v1377 = vadd.f32 %v840, %v1321
    %v1378 = vadd.f32 %v841, %v1324
    %v1379 = vadd.f32 %v842, %v1329
    %v1380 = vadd.f32 %v843, %v1332
    %v1381 = vadd.f32 %v844, %v1337
    %v1382 = vadd.f32 %v845, %v1340
    %v1383 = vadd.f32 %v846, %v1345
    %v1384 = vadd.f32 %v847, %v1348
    %v1385 = vadd.f32 %v848, %v1353
    %v1386 = vadd.f32 %v849, %v1356
    %v1387 = vadd.f32 %v850, %v1361
    %v1388 = vadd.f32 %v851, %v1364
    %v1389 = vadd.f32 %v852, %v1369
    %v1390 = vadd.f32 %v853, %v1372
    %v1393 = vunpack.c.l.b16 %v862
    %v1394 = vunpack.c.h.b16 %v862
    %v1395 = vunpack.c.l.b16 %v872
    %v1396 = vunpack.c.h.b16 %v872
    %v1397 = vpack.c.b16 %v1393, %v1393
    %v1398 = vpack.c.b16 %v1394, %v1394
    %v1399 = vpack.c.b16 %v1395, %v1395
    %v1400 = vpack.c.b16 %v1396, %v1396
    %v1402 = vshrl.u32 %v1397, 16
    %v1404 = vrot.slane %v1402, 4
    %v1405 = vshll.u32 %v1397, 16
    %v1407 = vrot.slane %v1405, 5
    %v1408 = vor.u32 %v1404, %v1407
    %v1409 = vrot.slane %v1408, 4
    %v1411 = vshll.u32 %v1398, 16
    %v1413 = vrot.slane %v1411, 5
    %v1414 = vsel %vm956, %v1409, %v1413
    %v1416 = vshrl.u32 %v1399, 16
    %v1418 = vrot.slane %v1416, 4
    %v1419 = vshll.u32 %v1399, 16
    %v1421 = vrot.slane %v1419, 5
    %v1422 = vor.u32 %v1418, %v1421
    %v1423 = vrot.slane %v1422, 4
    %v1425 = vshll.u32 %v1400, 16
    %v1427 = vrot.slane %v1425, 5
    %v1428 = vsel %vm956, %v1423, %v1427
    %s1429 = scalar_lea.vmem [#allocation4], 256
    %v1430 = vld [vmem:[%s1429] sm:$0xf]
    %v1431 = vld [vmem:[%s1429 + $0x4] sm:$0xf]
    %v1432 = vld [vmem:[%s1429 + $0x8] sm:$0xf]
    %v1433 = vld [vmem:[%s1429 + $0xc] sm:$0xf]
    %v1434 = vld [vmem:[%s1429 + $0x10] sm:$0xf]
    %v1435 = vld [vmem:[%s1429 + $0x14] sm:$0xf]
    %v1436 = vld [vmem:[%s1429 + $0x18] sm:$0xf]
    %v1437 = vld [vmem:[%s1429 + $0x1c] sm:$0xf]
    %v1438 = vld [vmem:[%s1429 + $0x20] sm:$0xf]
    %v1439 = vld [vmem:[%s1429 + $0x24] sm:$0xf]
    %v1440 = vld [vmem:[%s1429 + $0x28] sm:$0xf]
    %v1441 = vld [vmem:[%s1429 + $0x2c] sm:$0xf]
    %v1442 = vld [vmem:[%s1429 + $0x30] sm:$0xf]
    %v1443 = vld [vmem:[%s1429 + $0x34] sm:$0xf]
    %v1444 = vld [vmem:[%s1429 + $0x38] sm:$0xf]
    %v1445 = vld [vmem:[%s1429 + $0x3c] sm:$0xf]
    %v1446 = vunpack.c.l.b16 %v1414
    %v1447 = vunpack.c.l.b16 %v1428
    %v1448 = vpack.c.b16 %v1200, %v1199
    %v1449 = vpack.c.b16 %v1202, %v1201
    %v1450 = vpack.c.b16 %v1204, %v1203
    %v1451 = vpack.c.b16 %v1446, %v1205
    %v1452 = vpack.c.b16 %v1208, %v1207
    %v1453 = vpack.c.b16 %v1210, %v1209
    %v1454 = vpack.c.b16 %v1212, %v1211
    %v1455 = vpack.c.b16 %v1447, %v1213
    %v1480 = vunpack.c.l.b16 %v1430
    %v1481 = vunpack.c.l.b16 %v1431
    %v1482 = vunpack.c.l.b16 %v1432
    %v1483 = vunpack.c.l.b16 %v1433
    %v1484 = vunpack.c.l.b16 %v1434
    %v1485 = vunpack.c.l.b16 %v1435
    %v1486 = vunpack.c.l.b16 %v1436
    %v1487 = vunpack.c.l.b16 %v1437
    %v1488 = vunpack.c.l.b16 %v1438
    %v1489 = vunpack.c.l.b16 %v1439
    %v1490 = vunpack.c.l.b16 %v1440
    %v1491 = vunpack.c.l.b16 %v1441
    %v1492 = vunpack.c.l.b16 %v1442
    %v1493 = vunpack.c.l.b16 %v1443
    %v1494 = vunpack.c.l.b16 %v1444
    %v1495 = vunpack.c.l.b16 %v1445
    %v1496 = vpack.c.b16 %v1481, %v1480
    %v1497 = vpack.c.b16 %v1483, %v1482
    %v1498 = vpack.c.b16 %v1485, %v1484
    %v1499 = vpack.c.b16 %v1487, %v1486
    %v1500 = vpack.c.b16 %v1489, %v1488
    %v1501 = vpack.c.b16 %v1491, %v1490
    %v1502 = vpack.c.b16 %v1493, %v1492
    %v1503 = vpack.c.b16 %v1495, %v1494
    %1512 = vmatprep.subr.bf16.mxu0 0
    %1513 = vmatpush1.bf16.msra.mxu0 %v1496
    %1514 = vmatprep.subr.bf16.mxu0 0
    %1515 = vmatpush1.bf16.msra.mxu0 %v1497
    %1516 = vmatprep.subr.bf16.mxu0 0
    %1517 = vmatpush1.bf16.msra.mxu0 %v1498
    %1518 = vmatprep.subr.bf16.mxu0 0
    %1519 = vmatpush1.bf16.msra.mxu0 %v1499
    %1520 = vmatprep.subr.bf16.mxu0 0
    %1521 = vmatpush1.bf16.msra.mxu0 %v1500
    %1522 = vmatprep.subr.bf16.mxu0 0
    %1523 = vmatpush1.bf16.msra.mxu0 %v1501
    %1524 = vmatprep.subr.bf16.mxu0 0
    %1525 = vmatpush1.bf16.msra.mxu0 %v1502
    %1526 = vmatprep.subr.bf16.mxu0 0
    %1527 = vmatpush1.bf16.msra.mxu0 %v1503
    %1528 = vmatprep.subr.bf16.mxu0 0
    %1529 = vmatpush1.bf16.msra.mxu0 0
    %1530 = vmatprep.subr.bf16.mxu0 0
    %1531 = vmatpush1.bf16.msra.mxu0 0
    %1532 = vmatprep.subr.bf16.mxu0 0
    %1533 = vmatpush1.bf16.msra.mxu0 0
    %1534 = vmatprep.subr.bf16.mxu0 0
    %1535 = vmatpush1.bf16.msra.mxu0 0
    %1536 = vmatprep.subr.bf16.mxu0 0
    %1537 = vmatpush1.bf16.msra.mxu0 0
    %1538 = vmatprep.subr.bf16.mxu0 0
    %1539 = vmatpush1.bf16.msra.mxu0 0
    %1540 = vmatprep.subr.bf16.mxu0 0
    %1541 = vmatpush1.bf16.msra.mxu0 0
    %1542 = vmatprep.subr.bf16.mxu0 0
    %1543 = vmatpush1.bf16.msra.mxu0 0
    %1544 = vmatprep.mubr.bf16.mxu0 0
    %1545 = vmatmul.mubr.bf16.gmra.mrb[0].mxu0 %v1448
    %v1546 = vpop.f32.mrb[0].mxu0
    %v1547 = vadd.f32 0.0, %v1546
    %v1548 = vpop.f32.mrb[0].mxu0
    %v1549 = vpop.f32.mrb[0].mxu0
    %v1550 = vadd.f32 0.0, %v1549
    %v1551 = vpop.f32.mrb[0].mxu0
    %1552 = vmatprep.mubr.bf16.mxu0 0
    %1553 = vmatmul.mubr.bf16.gmra.mrb[0].mxu0 %v1449
    %v1554 = vpop.f32.mrb[0].mxu0
    %v1555 = vadd.f32 0.0, %v1554
    %v1556 = vpop.f32.mrb[0].mxu0
    %v1557 = vpop.f32.mrb[0].mxu0
    %v1558 = vadd.f32 0.0, %v1557
    %v1559 = vpop.f32.mrb[0].mxu0
    %1560 = vmatprep.mubr.bf16.mxu0 0
    %1561 = vmatmul.mubr.bf16.gmra.mrb[0].mxu0 %v1450
    %v1562 = vpop.f32.mrb[0].mxu0
    %v1563 = vadd.f32 0.0, %v1562
    %v1564 = vpop.f32.mrb[0].mxu0
    %v1565 = vpop.f32.mrb[0].mxu0
    %v1566 = vadd.f32 0.0, %v1565
    %v1567 = vpop.f32.mrb[0].mxu0
    %1568 = vmatprep.mubr.bf16.mxu0 0
    %1569 = vmatmul.mubr.bf16.gmra.mrb[0].mxu0 %v1451
    %v1570 = vpop.f32.mrb[0].mxu0
    %v1571 = vadd.f32 0.0, %v1570
    %v1572 = vpop.f32.mrb[0].mxu0
    %v1573 = vpop.f32.mrb[0].mxu0
    %v1574 = vadd.f32 0.0, %v1573
    %v1575 = vpop.f32.mrb[0].mxu0
    %1576 = vmatprep.mubr.bf16.mxu0 0
    %1577 = vmatmul.mubr.bf16.gmra.mrb[0].mxu0 %v1452
    %v1578 = vpop.f32.mrb[0].mxu0
    %v1579 = vadd.f32 0.0, %v1578
    %v1580 = vpop.f32.mrb[0].mxu0
    %v1581 = vpop.f32.mrb[0].mxu0
    %v1582 = vadd.f32 0.0, %v1581
    %v1583 = vpop.f32.mrb[0].mxu0
    %1584 = vmatprep.mubr.bf16.mxu0 0
    %1585 = vmatmul.mubr.bf16.gmra.mrb[0].mxu0 %v1453
    %v1586 = vpop.f32.mrb[0].mxu0
    %v1587 = vadd.f32 0.0, %v1586
    %v1588 = vpop.f32.mrb[0].mxu0
    %v1589 = vpop.f32.mrb[0].mxu0
    %v1590 = vadd.f32 0.0, %v1589
    %v1591 = vpop.f32.mrb[0].mxu0
    %1592 = vmatprep.mubr.bf16.mxu0 0
    %1593 = vmatmul.mubr.bf16.gmra.mrb[0].mxu0 %v1454
    %v1594 = vpop.f32.mrb[0].mxu0
    %v1595 = vadd.f32 0.0, %v1594
    %v1596 = vpop.f32.mrb[0].mxu0
    %v1597 = vpop.f32.mrb[0].mxu0
    %v1598 = vadd.f32 0.0, %v1597
    %v1599 = vpop.f32.mrb[0].mxu0
    %1600 = vmatprep.mubr.bf16.mxu0 0
    %1601 = vmatmul.mubr.bf16.gmra.mrb[0].mxu0 %v1455
    %v1602 = vpop.f32.mrb[0].mxu0
    %v1603 = vadd.f32 0.0, %v1602
    %v1604 = vpop.f32.mrb[0].mxu0
    %v1605 = vpop.f32.mrb[0].mxu0
    %v1606 = vadd.f32 0.0, %v1605
    %v1607 = vpop.f32.mrb[0].mxu0
    %1608 = vdwg.mxu0
    %v1609 = vadd.f32 %v1375, %v1547
    %v1610 = vadd.f32 %v1376, %v1550
    %v1611 = vadd.f32 %v1377, %v1555
    %v1612 = vadd.f32 %v1378, %v1558
    %v1613 = vadd.f32 %v1379, %v1563
    %v1614 = vadd.f32 %v1380, %v1566
    %v1615 = vadd.f32 %v1381, %v1571
    %v1616 = vadd.f32 %v1382, %v1574
    %v1617 = vadd.f32 %v1383, %v1579
    %v1618 = vadd.f32 %v1384, %v1582
    %v1619 = vadd.f32 %v1385, %v1587
    %v1620 = vadd.f32 %v1386, %v1590
    %v1621 = vadd.f32 %v1387, %v1595
    %v1622 = vadd.f32 %v1388, %v1598
    %v1623 = vadd.f32 %v1389, %v1603
    %v1624 = vadd.f32 %v1390, %v1606
    %v1627 = vunpack.c.l.b16 %v863
    %v1628 = vunpack.c.h.b16 %v863
    %v1629 = vunpack.c.l.b16 %v873
    %v1630 = vunpack.c.h.b16 %v873
    %v1631 = vpack.c.b16 %v1627, %v1627
    %v1632 = vpack.c.b16 %v1628, %v1628
    %v1633 = vpack.c.b16 %v1629, %v1629
    %v1634 = vpack.c.b16 %v1630, %v1630
    %v1636 = vshrl.u32 %v1631, 16
    %v1638 = vrot.slane %v1636, 4
    %v1639 = vshll.u32 %v1631, 16
    %v1641 = vrot.slane %v1639, 5
    %v1642 = vor.u32 %v1638, %v1641
    %v1643 = vrot.slane %v1642, 4
    %v1645 = vshll.u32 %v1632, 16
    %v1647 = vrot.slane %v1645, 5
    %v1648 = vsel %vm956, %v1643, %v1647
    %v1650 = vshrl.u32 %v1633, 16
    %v1652 = vrot.slane %v1650, 4
    %v1653 = vshll.u32 %v1633, 16
    %v1655 = vrot.slane %v1653, 5
    %v1656 = vor.u32 %v1652, %v1655
    %v1657 = vrot.slane %v1656, 4
    %v1659 = vshll.u32 %v1634, 16
    %v1661 = vrot.slane %v1659, 5
    %v1662 = vsel %vm956, %v1657, %v1661
    %s1663 = scalar_lea.vmem [#allocation4], 448
    %v1664 = vld [vmem:[%s1663] sm:$0xf]
    %v1665 = vld [vmem:[%s1663 + $0x4] sm:$0xf]
    %v1666 = vld [vmem:[%s1663 + $0x8] sm:$0xf]
    %v1667 = vld [vmem:[%s1663 + $0xc] sm:$0xf]
    %v1668 = vld [vmem:[%s1663 + $0x10] sm:$0xf]
    %v1669 = vld [vmem:[%s1663 + $0x14] sm:$0xf]
    %v1670 = vld [vmem:[%s1663 + $0x18] sm:$0xf]
    %v1671 = vld [vmem:[%s1663 + $0x1c] sm:$0xf]
    %v1672 = vld [vmem:[%s1663 + $0x20] sm:$0xf]
    %v1673 = vld [vmem:[%s1663 + $0x24] sm:$0xf]
    %v1674 = vld [vmem:[%s1663 + $0x28] sm:$0xf]
    %v1675 = vld [vmem:[%s1663 + $0x2c] sm:$0xf]
    %v1676 = vld [vmem:[%s1663 + $0x30] sm:$0xf]
    %v1677 = vld [vmem:[%s1663 + $0x34] sm:$0xf]
    %v1678 = vld [vmem:[%s1663 + $0x38] sm:$0xf]
    %v1679 = vld [vmem:[%s1663 + $0x3c] sm:$0xf]
    %v1680 = vunpack.c.l.b16 %v1648
    %v1681 = vunpack.c.l.b16 %v1662
    %v1682 = vpack.c.b16 %v1680, %v1446
    %v1683 = vpack.c.b16 %v1681, %v1447
    %v1702 = vunpack.c.l.b16 %v1664
    %v1703 = vunpack.c.l.b16 %v1665
    %v1704 = vunpack.c.l.b16 %v1666
    %v1705 = vunpack.c.l.b16 %v1667
    %v1706 = vunpack.c.l.b16 %v1668
    %v1707 = vunpack.c.l.b16 %v1669
    %v1708 = vunpack.c.l.b16 %v1670
    %v1709 = vunpack.c.l.b16 %v1671
    %v1710 = vunpack.c.l.b16 %v1672
    %v1711 = vunpack.c.l.b16 %v1673
    %v1712 = vunpack.c.l.b16 %v1674
    %v1713 = vunpack.c.l.b16 %v1675
    %v1714 = vunpack.c.l.b16 %v1676
    %v1715 = vunpack.c.l.b16 %v1677
    %v1716 = vunpack.c.l.b16 %v1678
    %v1717 = vunpack.c.l.b16 %v1679
    %v1718 = vpack.c.b16 %v1703, %v1702
    %v1719 = vpack.c.b16 %v1705, %v1704
    %v1720 = vpack.c.b16 %v1707, %v1706
    %v1721 = vpack.c.b16 %v1709, %v1708
    %v1722 = vpack.c.b16 %v1711, %v1710
    %v1723 = vpack.c.b16 %v1713, %v1712
    %v1724 = vpack.c.b16 %v1715, %v1714
    %v1725 = vpack.c.b16 %v1717, %v1716
    %1734 = vmatprep.subr.bf16.mxu0 0
    %1735 = vmatpush1.bf16.msra.mxu0 %v1718
    %1736 = vmatprep.subr.bf16.mxu0 0
    %1737 = vmatpush1.bf16.msra.mxu0 %v1719
    %1738 = vmatprep.subr.bf16.mxu0 0
    %1739 = vmatpush1.bf16.msra.mxu0 %v1720
    %1740 = vmatprep.subr.bf16.mxu0 0
    %1741 = vmatpush1.bf16.msra.mxu0 %v1721
    %1742 = vmatprep.subr.bf16.mxu0 0
    %1743 = vmatpush1.bf16.msra.mxu0 %v1722
    %1744 = vmatprep.subr.bf16.mxu0 0
    %1745 = vmatpush1.bf16.msra.mxu0 %v1723
    %1746 = vmatprep.subr.bf16.mxu0 0
    %1747 = vmatpush1.bf16.msra.mxu0 %v1724
    %1748 = vmatprep.subr.bf16.mxu0 0
    %1749 = vmatpush1.bf16.msra.mxu0 %v1725
    %1750 = vmatprep.subr.bf16.mxu0 0
    %1751 = vmatpush1.bf16.msra.mxu0 0
    %1752 = vmatprep.subr.bf16.mxu0 0
    %1753 = vmatpush1.bf16.msra.mxu0 0
    %1754 = vmatprep.subr.bf16.mxu0 0
    %1755 = vmatpush1.bf16.msra.mxu0 0
    %1756 = vmatprep.subr.bf16.mxu0 0
    %1757 = vmatpush1.bf16.msra.mxu0 0
    %1758 = vmatprep.subr.bf16.mxu0 0
    %1759 = vmatpush1.bf16.msra.mxu0 0
    %1760 = vmatprep.subr.bf16.mxu0 0
    %1761 = vmatpush1.bf16.msra.mxu0 0
    %1762 = vmatprep.subr.bf16.mxu0 0
    %1763 = vmatpush1.bf16.msra.mxu0 0
    %1764 = vmatprep.subr.bf16.mxu0 0
    %1765 = vmatpush1.bf16.msra.mxu0 0
    %1766 = vmatprep.mubr.bf16.mxu0 0
    %1767 = vmatmul.mubr.bf16.gmra.mrb[0].mxu0 %v1215
    %v1768 = vpop.f32.mrb[0].mxu0
    %v1769 = vadd.f32 0.0, %v1768
    %v1770 = vpop.f32.mrb[0].mxu0
    %v1771 = vpop.f32.mrb[0].mxu0
    %v1772 = vadd.f32 0.0, %v1771
    %v1773 = vpop.f32.mrb[0].mxu0
    %1774 = vmatprep.mubr.bf16.mxu0 0
    %1775 = vmatmul.mubr.bf16.gmra.mrb[0].mxu0 %v1216
    %v1776 = vpop.f32.mrb[0].mxu0
    %v1777 = vadd.f32 0.0, %v1776
    %v1778 = vpop.f32.mrb[0].mxu0
    %v1779 = vpop.f32.mrb[0].mxu0
    %v1780 = vadd.f32 0.0, %v1779
    %v1781 = vpop.f32.mrb[0].mxu0
    %1782 = vmatprep.mubr.bf16.mxu0 0
    %1783 = vmatmul.mubr.bf16.gmra.mrb[0].mxu0 %v1217
    %v1784 = vpop.f32.mrb[0].mxu0
    %v1785 = vadd.f32 0.0, %v1784
    %v1786 = vpop.f32.mrb[0].mxu0
    %v1787 = vpop.f32.mrb[0].mxu0
    %v1788 = vadd.f32 0.0, %v1787
    %v1789 = vpop.f32.mrb[0].mxu0
    %1790 = vmatprep.mubr.bf16.mxu0 0
    %1791 = vmatmul.mubr.bf16.gmra.mrb[0].mxu0 %v1682
    %v1792 = vpop.f32.mrb[0].mxu0
    %v1793 = vadd.f32 0.0, %v1792
    %v1794 = vpop.f32.mrb[0].mxu0
    %v1795 = vpop.f32.mrb[0].mxu0
    %v1796 = vadd.f32 0.0, %v1795
    %v1797 = vpop.f32.mrb[0].mxu0
    %1798 = vmatprep.mubr.bf16.mxu0 0
    %1799 = vmatmul.mubr.bf16.gmra.mrb[0].mxu0 %v1219
    %v1800 = vpop.f32.mrb[0].mxu0
    %v1801 = vadd.f32 0.0, %v1800
    %v1802 = vpop.f32.mrb[0].mxu0
    %v1803 = vpop.f32.mrb[0].mxu0
    %v1804 = vadd.f32 0.0, %v1803
    %v1805 = vpop.f32.mrb[0].mxu0
    %1806 = vmatprep.mubr.bf16.mxu0 0
    %1807 = vmatmul.mubr.bf16.gmra.mrb[0].mxu0 %v1220
    %v1808 = vpop.f32.mrb[0].mxu0
    %v1809 = vadd.f32 0.0, %v1808
    %v1810 = vpop.f32.mrb[0].mxu0
    %v1811 = vpop.f32.mrb[0].mxu0
    %v1812 = vadd.f32 0.0, %v1811
    %v1813 = vpop.f32.mrb[0].mxu0
    %1814 = vmatprep.mubr.bf16.mxu0 0
    %1815 = vmatmul.mubr.bf16.gmra.mrb[0].mxu0 %v1221
    %v1816 = vpop.f32.mrb[0].mxu0
    %v1817 = vadd.f32 0.0, %v1816
    %v1818 = vpop.f32.mrb[0].mxu0
    %v1819 = vpop.f32.mrb[0].mxu0
    %v1820 = vadd.f32 0.0, %v1819
    %v1821 = vpop.f32.mrb[0].mxu0
    %1822 = vmatprep.mubr.bf16.mxu0 0
    %1823 = vmatmul.mubr.bf16.gmra.mrb[0].mxu0 %v1683
    %v1824 = vpop.f32.mrb[0].mxu0
    %v1825 = vadd.f32 0.0, %v1824
    %v1826 = vpop.f32.mrb[0].mxu0
    %v1827 = vpop.f32.mrb[0].mxu0
    %v1828 = vadd.f32 0.0, %v1827
    %v1829 = vpop.f32.mrb[0].mxu0
    %1830 = vdwg.mxu0
    %v1831 = vadd.f32 %v1609, %v1769
    %v1832 = vadd.f32 %v1610, %v1772
    %v1833 = vadd.f32 %v1611, %v1777
    %v1834 = vadd.f32 %v1612, %v1780
    %v1835 = vadd.f32 %v1613, %v1785
    %v1836 = vadd.f32 %v1614, %v1788
    %v1837 = vadd.f32 %v1615, %v1793
    %v1838 = vadd.f32 %v1616, %v1796
    %v1839 = vadd.f32 %v1617, %v1801
    %v1840 = vadd.f32 %v1618, %v1804
    %v1841 = vadd.f32 %v1619, %v1809
    %v1842 = vadd.f32 %v1620, %v1812
    %v1843 = vadd.f32 %v1621, %v1817
    %v1844 = vadd.f32 %v1622, %v1820
    %v1845 = vadd.f32 %v1623, %v1825
    %v1846 = vadd.f32 %v1624, %v1828
    %vm1847 = vcmask 1042432
    %vm1848 = vcmask 1046532
    %vm1849 = vmor %vm1847, %vm1848
    %v1850 = vrot.slane %v922, 5
    %v1851 = vrot.slane %v1850, 4
    %v1852 = vrot.slane %v923, 5
    %v1853 = vsel %vm1849, %v1851, %v1852
    %v1854 = vrot.slane %v924, 5
    %v1855 = vrot.slane %v1854, 4
    %v1856 = vrot.slane %v925, 5
    %v1857 = vsel %vm1849, %v1855, %v1856
    %v1858 = vrot.slane %v926, 5
    %v1859 = vrot.slane %v1858, 4
    %v1860 = vrot.slane %v927, 5
    %v1861 = vsel %vm1849, %v1859, %v1860
    %v1862 = vrot.slane %v928, 5
    %v1863 = vrot.slane %v1862, 4
    %v1864 = vrot.slane %v929, 5
    %v1865 = vsel %vm1849, %v1863, %v1864
    %v1866 = vrot.slane %v930, 5
    %v1867 = vrot.slane %v1866, 4
    %v1868 = vrot.slane %v931, 5
    %v1869 = vsel %vm1849, %v1867, %v1868
    %v1870 = vrot.slane %v932, 5
    %v1871 = vrot.slane %v1870, 4
    %v1872 = vrot.slane %v933, 5
    %v1873 = vsel %vm1849, %v1871, %v1872
    %v1874 = vrot.slane %v934, 5
    %v1875 = vrot.slane %v1874, 4
    %v1876 = vrot.slane %v935, 5
    %v1877 = vsel %vm1849, %v1875, %v1876
    %v1878 = vrot.slane %v936, 5
    %v1879 = vrot.slane %v1878, 4
    %v1880 = vrot.slane %v937, 5
    %v1881 = vsel %vm1849, %v1879, %v1880
    %v1882 = vrot.slane %v938, 5
    %v1883 = vrot.slane %v1882, 4
    %v1884 = vrot.slane %v939, 5
    %v1885 = vsel %vm1849, %v1883, %v1884
    %v1886 = vrot.slane %v940, 5
    %v1887 = vrot.slane %v1886, 4
    %v1888 = vrot.slane %v941, 5
    %v1889 = vsel %vm1849, %v1887, %v1888
    %v1890 = vrot.slane %v942, 5
    %v1891 = vrot.slane %v1890, 4
    %v1892 = vrot.slane %v943, 5
    %v1893 = vsel %vm1849, %v1891, %v1892
    %v1894 = vrot.slane %v944, 5
    %v1895 = vrot.slane %v1894, 4
    %v1896 = vrot.slane %v945, 5
    %v1897 = vsel %vm1849, %v1895, %v1896
    %v1898 = vrot.slane %v946, 5
    %v1899 = vrot.slane %v1898, 4
    %v1900 = vrot.slane %v947, 5
    %v1901 = vsel %vm1849, %v1899, %v1900
    %v1902 = vrot.slane %v948, 5
    %v1903 = vrot.slane %v1902, 4
    %v1904 = vrot.slane %v949, 5
    %v1905 = vsel %vm1849, %v1903, %v1904
    %v1906 = vrot.slane %v950, 5
    %v1907 = vrot.slane %v1906, 4
    %v1908 = vrot.slane %v951, 5
    %v1909 = vsel %vm1849, %v1907, %v1908
    %v1910 = vrot.slane %v952, 5
    %v1911 = vrot.slane %v1910, 4
    %v1912 = vrot.slane %v953, 5
    %v1913 = vsel %vm1849, %v1911, %v1912
    %s1914 = scalar_lea.vmem [#allocation4], 128
    %v1915 = vld [vmem:[%s1914] sm:$0xf]
    %v1916 = vld [vmem:[%s1914 + $0x4] sm:$0xf]
    %v1917 = vld [vmem:[%s1914 + $0x8] sm:$0xf]
    %v1918 = vld [vmem:[%s1914 + $0xc] sm:$0xf]
    %v1919 = vld [vmem:[%s1914 + $0x10] sm:$0xf]
    %v1920 = vld [vmem:[%s1914 + $0x14] sm:$0xf]
    %v1921 = vld [vmem:[%s1914 + $0x18] sm:$0xf]
    %v1922 = vld [vmem:[%s1914 + $0x1c] sm:$0xf]
    %v1923 = vld [vmem:[%s1914 + $0x20] sm:$0xf]
    %v1924 = vld [vmem:[%s1914 + $0x24] sm:$0xf]
    %v1925 = vld [vmem:[%s1914 + $0x28] sm:$0xf]
    %v1926 = vld [vmem:[%s1914 + $0x2c] sm:$0xf]
    %v1927 = vld [vmem:[%s1914 + $0x30] sm:$0xf]
    %v1928 = vld [vmem:[%s1914 + $0x34] sm:$0xf]
    %v1929 = vld [vmem:[%s1914 + $0x38] sm:$0xf]
    %v1930 = vld [vmem:[%s1914 + $0x3c] sm:$0xf]
    %v1931 = vunpack.c.l.b16 %v1853
    %v1932 = vunpack.c.l.b16 %v1857
    %v1933 = vunpack.c.l.b16 %v1861
    %v1934 = vunpack.c.l.b16 %v1865
    %v1935 = vunpack.c.l.b16 %v1869
    %v1936 = vunpack.c.l.b16 %v1873
    %v1937 = vunpack.c.l.b16 %v1877
    %v1938 = vunpack.c.l.b16 %v1881
    %v1939 = vunpack.c.l.b16 %v1885
    %v1940 = vunpack.c.l.b16 %v1889
    %v1941 = vunpack.c.l.b16 %v1893
    %v1942 = vunpack.c.l.b16 %v1897
    %v1943 = vunpack.c.l.b16 %v1901
    %v1944 = vunpack.c.l.b16 %v1905
    %v1945 = vunpack.c.l.b16 %v1909
    %v1946 = vunpack.c.l.b16 %v1913
    %v1947 = vpack.c.b16 %v1932, %v1931
    %v1948 = vpack.c.b16 %v1934, %v1933
    %v1949 = vpack.c.b16 %v1936, %v1935
    %v1950 = vpack.c.b16 %v1938, %v1937
    %v1951 = vpack.c.b16 %v1940, %v1939
    %v1952 = vpack.c.b16 %v1942, %v1941
    %v1953 = vpack.c.b16 %v1944, %v1943
    %v1954 = vpack.c.b16 %v1946, %v1945
    %v1979 = vunpack.c.l.b16 %v1915
    %v1980 = vunpack.c.l.b16 %v1916
    %v1981 = vunpack.c.l.b16 %v1917
    %v1982 = vunpack.c.l.b16 %v1918
    %v1983 = vunpack.c.l.b16 %v1919
    %v1984 = vunpack.c.l.b16 %v1920
    %v1985 = vunpack.c.l.b16 %v1921
    %v1986 = vunpack.c.l.b16 %v1922
    %v1987 = vunpack.c.l.b16 %v1923
    %v1988 = vunpack.c.l.b16 %v1924
    %v1989 = vunpack.c.l.b16 %v1925
    %v1990 = vunpack.c.l.b16 %v1926
    %v1991 = vunpack.c.l.b16 %v1927
    %v1992 = vunpack.c.l.b16 %v1928
    %v1993 = vunpack.c.l.b16 %v1929
    %v1994 = vunpack.c.l.b16 %v1930
    %v1995 = vpack.c.b16 %v1980, %v1979
    %v1996 = vpack.c.b16 %v1982, %v1981
    %v1997 = vpack.c.b16 %v1984, %v1983
    %v1998 = vpack.c.b16 %v1986, %v1985
    %v1999 = vpack.c.b16 %v1988, %v1987
    %v2000 = vpack.c.b16 %v1990, %v1989
    %v2001 = vpack.c.b16 %v1992, %v1991
    %v2002 = vpack.c.b16 %v1994, %v1993
    %2011 = vmatprep.subr.bf16.mxu0 0
    %2012 = vmatpush1.bf16.msra.mxu0 %v1995
    %2013 = vmatprep.subr.bf16.mxu0 0
    %2014 = vmatpush1.bf16.msra.mxu0 %v1996
    %2015 = vmatprep.subr.bf16.mxu0 0
    %2016 = vmatpush1.bf16.msra.mxu0 %v1997
    %2017 = vmatprep.subr.bf16.mxu0 0
    %2018 = vmatpush1.bf16.msra.mxu0 %v1998
    %2019 = vmatprep.subr.bf16.mxu0 0
    %2020 = vmatpush1.bf16.msra.mxu0 %v1999
    %2021 = vmatprep.subr.bf16.mxu0 0
    %2022 = vmatpush1.bf16.msra.mxu0 %v2000
    %2023 = vmatprep.subr.bf16.mxu0 0
    %2024 = vmatpush1.bf16.msra.mxu0 %v2001
    %2025 = vmatprep.subr.bf16.mxu0 0
    %2026 = vmatpush1.bf16.msra.mxu0 %v2002
    %2027 = vmatprep.subr.bf16.mxu0 0
    %2028 = vmatpush1.bf16.msra.mxu0 0
    %2029 = vmatprep.subr.bf16.mxu0 0
    %2030 = vmatpush1.bf16.msra.mxu0 0
    %2031 = vmatprep.subr.bf16.mxu0 0
    %2032 = vmatpush1.bf16.msra.mxu0 0
    %2033 = vmatprep.subr.bf16.mxu0 0
    %2034 = vmatpush1.bf16.msra.mxu0 0
    %2035 = vmatprep.subr.bf16.mxu0 0
    %2036 = vmatpush1.bf16.msra.mxu0 0
    %2037 = vmatprep.subr.bf16.mxu0 0
    %2038 = vmatpush1.bf16.msra.mxu0 0
    %2039 = vmatprep.subr.bf16.mxu0 0
    %2040 = vmatpush1.bf16.msra.mxu0 0
    %2041 = vmatprep.subr.bf16.mxu0 0
    %2042 = vmatpush1.bf16.msra.mxu0 0
    %2043 = vmatprep.mubr.bf16.mxu0 0
    %2044 = vmatmul.mubr.bf16.gmra.mrb[0].mxu0 %v1947
    %v2045 = vpop.f32.mrb[0].mxu0
    %v2046 = vadd.f32 0.0, %v2045
    %v2047 = vpop.f32.mrb[0].mxu0
    %v2048 = vpop.f32.mrb[0].mxu0
    %v2049 = vadd.f32 0.0, %v2048
    %v2050 = vpop.f32.mrb[0].mxu0
    %2051 = vmatprep.mubr.bf16.mxu0 0
    %2052 = vmatmul.mubr.bf16.gmra.mrb[0].mxu0 %v1948
    %v2053 = vpop.f32.mrb[0].mxu0
    %v2054 = vadd.f32 0.0, %v2053
    %v2055 = vpop.f32.mrb[0].mxu0
    %v2056 = vpop.f32.mrb[0].mxu0
    %v2057 = vadd.f32 0.0, %v2056
    %v2058 = vpop.f32.mrb[0].mxu0
    %2059 = vmatprep.mubr.bf16.mxu0 0
    %2060 = vmatmul.mubr.bf16.gmra.mrb[0].mxu0 %v1949
    %v2061 = vpop.f32.mrb[0].mxu0
    %v2062 = vadd.f32 0.0, %v2061
    %v2063 = vpop.f32.mrb[0].mxu0
    %v2064 = vpop.f32.mrb[0].mxu0
    %v2065 = vadd.f32 0.0, %v2064
    %v2066 = vpop.f32.mrb[0].mxu0
    %2067 = vmatprep.mubr.bf16.mxu0 0
    %2068 = vmatmul.mubr.bf16.gmra.mrb[0].mxu0 %v1950
    %v2069 = vpop.f32.mrb[0].mxu0
    %v2070 = vadd.f32 0.0, %v2069
    %v2071 = vpop.f32.mrb[0].mxu0
    %v2072 = vpop.f32.mrb[0].mxu0
    %v2073 = vadd.f32 0.0, %v2072
    %v2074 = vpop.f32.mrb[0].mxu0
    %2075 = vmatprep.mubr.bf16.mxu0 0
    %2076 = vmatmul.mubr.bf16.gmra.mrb[0].mxu0 %v1951
    %v2077 = vpop.f32.mrb[0].mxu0
    %v2078 = vadd.f32 0.0, %v2077
    %v2079 = vpop.f32.mrb[0].mxu0
    %v2080 = vpop.f32.mrb[0].mxu0
    %v2081 = vadd.f32 0.0, %v2080
    %v2082 = vpop.f32.mrb[0].mxu0
    %2083 = vmatprep.mubr.bf16.mxu0 0
    %2084 = vmatmul.mubr.bf16.gmra.mrb[0].mxu0 %v1952
    %v2085 = vpop.f32.mrb[0].mxu0
    %v2086 = vadd.f32 0.0, %v2085
    %v2087 = vpop.f32.mrb[0].mxu0
    %v2088 = vpop.f32.mrb[0].mxu0
    %v2089 = vadd.f32 0.0, %v2088
    %v2090 = vpop.f32.mrb[0].mxu0
    %2091 = vmatprep.mubr.bf16.mxu0 0
    %2092 = vmatmul.mubr.bf16.gmra.mrb[0].mxu0 %v1953
    %v2093 = vpop.f32.mrb[0].mxu0
    %v2094 = vadd.f32 0.0, %v2093
    %v2095 = vpop.f32.mrb[0].mxu0
    %v2096 = vpop.f32.mrb[0].mxu0
    %v2097 = vadd.f32 0.0, %v2096
    %v2098 = vpop.f32.mrb[0].mxu0
    %2099 = vmatprep.mubr.bf16.mxu0 0
    %2100 = vmatmul.mubr.bf16.gmra.mrb[0].mxu0 %v1954
    %v2101 = vpop.f32.mrb[0].mxu0
    %v2102 = vadd.f32 0.0, %v2101
    %v2103 = vpop.f32.mrb[0].mxu0
    %v2104 = vpop.f32.mrb[0].mxu0
    %v2105 = vadd.f32 0.0, %v2104
    %v2106 = vpop.f32.mrb[0].mxu0
    %2107 = vdwg.mxu0
    %v2108 = vadd.f32 %v1831, %v2046
    %v2109 = vadd.f32 %v1832, %v2049
    %v2110 = vadd.f32 %v1833, %v2054
    %v2111 = vadd.f32 %v1834, %v2057
    %v2112 = vadd.f32 %v1835, %v2062
    %v2113 = vadd.f32 %v1836, %v2065
    %v2114 = vadd.f32 %v1837, %v2070
    %v2115 = vadd.f32 %v1838, %v2073
    %v2116 = vadd.f32 %v1839, %v2078
    %v2117 = vadd.f32 %v1840, %v2081
    %v2118 = vadd.f32 %v1841, %v2086
    %v2119 = vadd.f32 %v1842, %v2089
    %v2120 = vadd.f32 %v1843, %v2094
    %v2121 = vadd.f32 %v1844, %v2097
    %v2122 = vadd.f32 %v1845, %v2102
    %v2123 = vadd.f32 %v1846, %v2105
    %v2124 = vrot.slane %v1397, 5
    %v2125 = vrot.slane %v2124, 4
    %v2126 = vrot.slane %v1398, 5
    %v2127 = vsel %vm1849, %v2125, %v2126
    %v2128 = vrot.slane %v1399, 5
    %v2129 = vrot.slane %v2128, 4
    %v2130 = vrot.slane %v1400, 5
    %v2131 = vsel %vm1849, %v2129, %v2130
    %s2132 = scalar_lea.vmem [#allocation4], 320
    %v2133 = vld [vmem:[%s2132] sm:$0xf]
    %v2134 = vld [vmem:[%s2132 + $0x4] sm:$0xf]
    %v2135 = vld [vmem:[%s2132 + $0x8] sm:$0xf]
    %v2136 = vld [vmem:[%s2132 + $0xc] sm:$0xf]
    %v2137 = vld [vmem:[%s2132 + $0x10] sm:$0xf]
    %v2138 = vld [vmem:[%s2132 + $0x14] sm:$0xf]
    %v2139 = vld [vmem:[%s2132 + $0x18] sm:$0xf]
    %v2140 = vld [vmem:[%s2132 + $0x1c] sm:$0xf]
    %v2141 = vld [vmem:[%s2132 + $0x20] sm:$0xf]
    %v2142 = vld [vmem:[%s2132 + $0x24] sm:$0xf]
    %v2143 = vld [vmem:[%s2132 + $0x28] sm:$0xf]
    %v2144 = vld [vmem:[%s2132 + $0x2c] sm:$0xf]
    %v2145 = vld [vmem:[%s2132 + $0x30] sm:$0xf]
    %v2146 = vld [vmem:[%s2132 + $0x34] sm:$0xf]
    %v2147 = vld [vmem:[%s2132 + $0x38] sm:$0xf]
    %v2148 = vld [vmem:[%s2132 + $0x3c] sm:$0xf]
    %v2149 = vunpack.c.l.b16 %v2127
    %v2150 = vunpack.c.l.b16 %v2131
    %v2151 = vpack.c.b16 %v1933, %v1932
    %v2152 = vpack.c.b16 %v1935, %v1934
    %v2153 = vpack.c.b16 %v1937, %v1936
    %v2154 = vpack.c.b16 %v2149, %v1938
    %v2155 = vpack.c.b16 %v1941, %v1940
    %v2156 = vpack.c.b16 %v1943, %v1942
    %v2157 = vpack.c.b16 %v1945, %v1944
    %v2158 = vpack.c.b16 %v2150, %v1946
    %v2183 = vunpack.c.l.b16 %v2133
    %v2184 = vunpack.c.l.b16 %v2134
    %v2185 = vunpack.c.l.b16 %v2135
    %v2186 = vunpack.c.l.b16 %v2136
    %v2187 = vunpack.c.l.b16 %v2137
    %v2188 = vunpack.c.l.b16 %v2138
    %v2189 = vunpack.c.l.b16 %v2139
    %v2190 = vunpack.c.l.b16 %v2140
    %v2191 = vunpack.c.l.b16 %v2141
    %v2192 = vunpack.c.l.b16 %v2142
    %v2193 = vunpack.c.l.b16 %v2143
    %v2194 = vunpack.c.l.b16 %v2144
    %v2195 = vunpack.c.l.b16 %v2145
    %v2196 = vunpack.c.l.b16 %v2146
    %v2197 = vunpack.c.l.b16 %v2147
    %v2198 = vunpack.c.l.b16 %v2148
    %v2199 = vpack.c.b16 %v2184, %v2183
    %v2200 = vpack.c.b16 %v2186, %v2185
    %v2201 = vpack.c.b16 %v2188, %v2187
    %v2202 = vpack.c.b16 %v2190, %v2189
    %v2203 = vpack.c.b16 %v2192, %v2191
    %v2204 = vpack.c.b16 %v2194, %v2193
    %v2205 = vpack.c.b16 %v2196, %v2195
    %v2206 = vpack.c.b16 %v2198, %v2197
    %2215 = vmatprep.subr.bf16.mxu0 0
    %2216 = vmatpush1.bf16.msra.mxu0 %v2199
    %2217 = vmatprep.subr.bf16.mxu0 0
    %2218 = vmatpush1.bf16.msra.mxu0 %v2200
    %2219 = vmatprep.subr.bf16.mxu0 0
    %2220 = vmatpush1.bf16.msra.mxu0 %v2201
    %2221 = vmatprep.subr.bf16.mxu0 0
    %2222 = vmatpush1.bf16.msra.mxu0 %v2202
    %2223 = vmatprep.subr.bf16.mxu0 0
    %2224 = vmatpush1.bf16.msra.mxu0 %v2203
    %2225 = vmatprep.subr.bf16.mxu0 0
    %2226 = vmatpush1.bf16.msra.mxu0 %v2204
    %2227 = vmatprep.subr.bf16.mxu0 0
    %2228 = vmatpush1.bf16.msra.mxu0 %v2205
    %2229 = vmatprep.subr.bf16.mxu0 0
    %2230 = vmatpush1.bf16.msra.mxu0 %v2206
    %2231 = vmatprep.subr.bf16.mxu0 0
    %2232 = vmatpush1.bf16.msra.mxu0 0
    %2233 = vmatprep.subr.bf16.mxu0 0
    %2234 = vmatpush1.bf16.msra.mxu0 0
    %2235 = vmatprep.subr.bf16.mxu0 0
    %2236 = vmatpush1.bf16.msra.mxu0 0
    %2237 = vmatprep.subr.bf16.mxu0 0
    %2238 = vmatpush1.bf16.msra.mxu0 0
    %2239 = vmatprep.subr.bf16.mxu0 0
    %2240 = vmatpush1.bf16.msra.mxu0 0
    %2241 = vmatprep.subr.bf16.mxu0 0
    %2242 = vmatpush1.bf16.msra.mxu0 0
    %2243 = vmatprep.subr.bf16.mxu0 0
    %2244 = vmatpush1.bf16.msra.mxu0 0
    %2245 = vmatprep.subr.bf16.mxu0 0
    %2246 = vmatpush1.bf16.msra.mxu0 0
    %2247 = vmatprep.mubr.bf16.mxu0 0
    %2248 = vmatmul.mubr.bf16.gmra.mrb[0].mxu0 %v2151
    %v2249 = vpop.f32.mrb[0].mxu0
    %v2250 = vadd.f32 0.0, %v2249
    %v2251 = vpop.f32.mrb[0].mxu0
    %v2252 = vpop.f32.mrb[0].mxu0
    %v2253 = vadd.f32 0.0, %v2252
    %v2254 = vpop.f32.mrb[0].mxu0
    %2255 = vmatprep.mubr.bf16.mxu0 0
    %2256 = vmatmul.mubr.bf16.gmra.mrb[0].mxu0 %v2152
    %v2257 = vpop.f32.mrb[0].mxu0
    %v2258 = vadd.f32 0.0, %v2257
    %v2259 = vpop.f32.mrb[0].mxu0
    %v2260 = vpop.f32.mrb[0].mxu0
    %v2261 = vadd.f32 0.0, %v2260
    %v2262 = vpop.f32.mrb[0].mxu0
    %2263 = vmatprep.mubr.bf16.mxu0 0
    %2264 = vmatmul.mubr.bf16.gmra.mrb[0].mxu0 %v2153
    %v2265 = vpop.f32.mrb[0].mxu0
    %v2266 = vadd.f32 0.0, %v2265
    %v2267 = vpop.f32.mrb[0].mxu0
    %v2268 = vpop.f32.mrb[0].mxu0
    %v2269 = vadd.f32 0.0, %v2268
    %v2270 = vpop.f32.mrb[0].mxu0
    %2271 = vmatprep.mubr.bf16.mxu0 0
    %2272 = vmatmul.mubr.bf16.gmra.mrb[0].mxu0 %v2154
    %v2273 = vpop.f32.mrb[0].mxu0
    %v2274 = vadd.f32 0.0, %v2273
    %v2275 = vpop.f32.mrb[0].mxu0
    %v2276 = vpop.f32.mrb[0].mxu0
    %v2277 = vadd.f32 0.0, %v2276
    %v2278 = vpop.f32.mrb[0].mxu0
    %2279 = vmatprep.mubr.bf16.mxu0 0
    %2280 = vmatmul.mubr.bf16.gmra.mrb[0].mxu0 %v2155
    %v2281 = vpop.f32.mrb[0].mxu0
    %v2282 = vadd.f32 0.0, %v2281
    %v2283 = vpop.f32.mrb[0].mxu0
    %v2284 = vpop.f32.mrb[0].mxu0
    %v2285 = vadd.f32 0.0, %v2284
    %v2286 = vpop.f32.mrb[0].mxu0
    %2287 = vmatprep.mubr.bf16.mxu0 0
    %2288 = vmatmul.mubr.bf16.gmra.mrb[0].mxu0 %v2156
    %v2289 = vpop.f32.mrb[0].mxu0
    %v2290 = vadd.f32 0.0, %v2289
    %v2291 = vpop.f32.mrb[0].mxu0
    %v2292 = vpop.f32.mrb[0].mxu0
    %v2293 = vadd.f32 0.0, %v2292
    %v2294 = vpop.f32.mrb[0].mxu0
    %2295 = vmatprep.mubr.bf16.mxu0 0
    %2296 = vmatmul.mubr.bf16.gmra.mrb[0].mxu0 %v2157
    %v2297 = vpop.f32.mrb[0].mxu0
    %v2298 = vadd.f32 0.0, %v2297
    %v2299 = vpop.f32.mrb[0].mxu0
    %v2300 = vpop.f32.mrb[0].mxu0
    %v2301 = vadd.f32 0.0, %v2300
    %v2302 = vpop.f32.mrb[0].mxu0
    %2303 = vmatprep.mubr.bf16.mxu0 0
    %2304 = vmatmul.mubr.bf16.gmra.mrb[0].mxu0 %v2158
    %v2305 = vpop.f32.mrb[0].mxu0
    %v2306 = vadd.f32 0.0, %v2305
    %v2307 = vpop.f32.mrb[0].mxu0
    %v2308 = vpop.f32.mrb[0].mxu0
    %v2309 = vadd.f32 0.0, %v2308
    %v2310 = vpop.f32.mrb[0].mxu0
    %2311 = vdwg.mxu0
    %v2312 = vadd.f32 %v2108, %v2250
    %v2313 = vadd.f32 %v2109, %v2253
    %v2314 = vadd.f32 %v2110, %v2258
    %v2315 = vadd.f32 %v2111, %v2261
    %v2316 = vadd.f32 %v2112, %v2266
    %v2317 = vadd.f32 %v2113, %v2269
    %v2318 = vadd.f32 %v2114, %v2274
    %v2319 = vadd.f32 %v2115, %v2277
    %v2320 = vadd.f32 %v2116, %v2282
    %v2321 = vadd.f32 %v2117, %v2285
    %v2322 = vadd.f32 %v2118, %v2290
    %v2323 = vadd.f32 %v2119, %v2293
    %v2324 = vadd.f32 %v2120, %v2298
    %v2325 = vadd.f32 %v2121, %v2301
    %v2326 = vadd.f32 %v2122, %v2306
    %v2327 = vadd.f32 %v2123, %v2309
    %v2328 = vrot.slane %v1631, 5
    %v2329 = vrot.slane %v2328, 4
    %v2330 = vrot.slane %v1632, 5
    %v2331 = vsel %vm1849, %v2329, %v2330
    %v2332 = vrot.slane %v1633, 5
    %v2333 = vrot.slane %v2332, 4
    %v2334 = vrot.slane %v1634, 5
    %v2335 = vsel %vm1849, %v2333, %v2334
    %s2336 = scalar_lea.vmem [#allocation4], 512
    %v2337 = vld [vmem:[%s2336] sm:$0xf]
    %v2338 = vld [vmem:[%s2336 + $0x4] sm:$0xf]
    %v2339 = vld [vmem:[%s2336 + $0x8] sm:$0xf]
    %v2340 = vld [vmem:[%s2336 + $0xc] sm:$0xf]
    %v2341 = vld [vmem:[%s2336 + $0x10] sm:$0xf]
    %v2342 = vld [vmem:[%s2336 + $0x14] sm:$0xf]
    %v2343 = vld [vmem:[%s2336 + $0x18] sm:$0xf]
    %v2344 = vld [vmem:[%s2336 + $0x1c] sm:$0xf]
    %v2345 = vld [vmem:[%s2336 + $0x20] sm:$0xf]
    %v2346 = vld [vmem:[%s2336 + $0x24] sm:$0xf]
    %v2347 = vld [vmem:[%s2336 + $0x28] sm:$0xf]
    %v2348 = vld [vmem:[%s2336 + $0x2c] sm:$0xf]
    %v2349 = vld [vmem:[%s2336 + $0x30] sm:$0xf]
    %v2350 = vld [vmem:[%s2336 + $0x34] sm:$0xf]
    %v2351 = vld [vmem:[%s2336 + $0x38] sm:$0xf]
    %v2352 = vld [vmem:[%s2336 + $0x3c] sm:$0xf]
    %v2353 = vunpack.c.l.b16 %v2331
    %v2354 = vunpack.c.l.b16 %v2335
    %v2355 = vpack.c.b16 %v2353, %v2149
    %v2356 = vpack.c.b16 %v2354, %v2150
    %v2375 = vunpack.c.l.b16 %v2337
    %v2376 = vunpack.c.l.b16 %v2338
    %v2377 = vunpack.c.l.b16 %v2339
    %v2378 = vunpack.c.l.b16 %v2340
    %v2379 = vunpack.c.l.b16 %v2341
    %v2380 = vunpack.c.l.b16 %v2342
    %v2381 = vunpack.c.l.b16 %v2343
    %v2382 = vunpack.c.l.b16 %v2344
    %v2383 = vunpack.c.l.b16 %v2345
    %v2384 = vunpack.c.l.b16 %v2346
    %v2385 = vunpack.c.l.b16 %v2347
    %v2386 = vunpack.c.l.b16 %v2348
    %v2387 = vunpack.c.l.b16 %v2349
    %v2388 = vunpack.c.l.b16 %v2350
    %v2389 = vunpack.c.l.b16 %v2351
    %v2390 = vunpack.c.l.b16 %v2352
    %v2391 = vpack.c.b16 %v2376, %v2375
    %v2392 = vpack.c.b16 %v2378, %v2377
    %v2393 = vpack.c.b16 %v2380, %v2379
    %v2394 = vpack.c.b16 %v2382, %v2381
    %v2395 = vpack.c.b16 %v2384, %v2383
    %v2396 = vpack.c.b16 %v2386, %v2385
    %v2397 = vpack.c.b16 %v2388, %v2387
    %v2398 = vpack.c.b16 %v2390, %v2389
    %2407 = vmatprep.subr.bf16.mxu0 0
    %2408 = vmatpush1.bf16.msra.mxu0 %v2391
    %2409 = vmatprep.subr.bf16.mxu0 0
    %2410 = vmatpush1.bf16.msra.mxu0 %v2392
    %2411 = vmatprep.subr.bf16.mxu0 0
    %2412 = vmatpush1.bf16.msra.mxu0 %v2393
    %2413 = vmatprep.subr.bf16.mxu0 0
    %2414 = vmatpush1.bf16.msra.mxu0 %v2394
    %2415 = vmatprep.subr.bf16.mxu0 0
    %2416 = vmatpush1.bf16.msra.mxu0 %v2395
    %2417 = vmatprep.subr.bf16.mxu0 0
    %2418 = vmatpush1.bf16.msra.mxu0 %v2396
    %2419 = vmatprep.subr.bf16.mxu0 0
    %2420 = vmatpush1.bf16.msra.mxu0 %v2397
    %2421 = vmatprep.subr.bf16.mxu0 0
    %2422 = vmatpush1.bf16.msra.mxu0 %v2398
    %2423 = vmatprep.subr.bf16.mxu0 0
    %2424 = vmatpush1.bf16.msra.mxu0 0
    %2425 = vmatprep.subr.bf16.mxu0 0
    %2426 = vmatpush1.bf16.msra.mxu0 0
    %2427 = vmatprep.subr.bf16.mxu0 0
    %2428 = vmatpush1.bf16.msra.mxu0 0
    %2429 = vmatprep.subr.bf16.mxu0 0
    %2430 = vmatpush1.bf16.msra.mxu0 0
    %2431 = vmatprep.subr.bf16.mxu0 0
    %2432 = vmatpush1.bf16.msra.mxu0 0
    %2433 = vmatprep.subr.bf16.mxu0 0
    %2434 = vmatpush1.bf16.msra.mxu0 0
    %2435 = vmatprep.subr.bf16.mxu0 0
    %2436 = vmatpush1.bf16.msra.mxu0 0
    %2437 = vmatprep.subr.bf16.mxu0 0
    %2438 = vmatpush1.bf16.msra.mxu0 0
    %2439 = vmatprep.mubr.bf16.mxu0 0
    %2440 = vmatmul.mubr.bf16.gmra.mrb[0].mxu0 %v1948
    %v2441 = vpop.f32.mrb[0].mxu0
    %v2442 = vadd.f32 0.0, %v2441
    %v2443 = vpop.f32.mrb[0].mxu0
    %v2444 = vpop.f32.mrb[0].mxu0
    %v2445 = vadd.f32 0.0, %v2444
    %v2446 = vpop.f32.mrb[0].mxu0
    %2447 = vmatprep.mubr.bf16.mxu0 0
    %2448 = vmatmul.mubr.bf16.gmra.mrb[0].mxu0 %v1949
    %v2449 = vpop.f32.mrb[0].mxu0
    %v2450 = vadd.f32 0.0, %v2449
    %v2451 = vpop.f32.mrb[0].mxu0
    %v2452 = vpop.f32.mrb[0].mxu0
    %v2453 = vadd.f32 0.0, %v2452
    %v2454 = vpop.f32.mrb[0].mxu0
    %2455 = vmatprep.mubr.bf16.mxu0 0
    %2456 = vmatmul.mubr.bf16.gmra.mrb[0].mxu0 %v1950
    %v2457 = vpop.f32.mrb[0].mxu0
    %v2458 = vadd.f32 0.0, %v2457
    %v2459 = vpop.f32.mrb[0].mxu0
    %v2460 = vpop.f32.mrb[0].mxu0
    %v2461 = vadd.f32 0.0, %v2460
    %v2462 = vpop.f32.mrb[0].mxu0
    %2463 = vmatprep.mubr.bf16.mxu0 0
    %2464 = vmatmul.mubr.bf16.gmra.mrb[0].mxu0 %v2355
    %v2465 = vpop.f32.mrb[0].mxu0
    %v2466 = vadd.f32 0.0, %v2465
    %v2467 = vpop.f32.mrb[0].mxu0
    %v2468 = vpop.f32.mrb[0].mxu0
    %v2469 = vadd.f32 0.0, %v2468
    %v2470 = vpop.f32.mrb[0].mxu0
    %2471 = vmatprep.mubr.bf16.mxu0 0
    %2472 = vmatmul.mubr.bf16.gmra.mrb[0].mxu0 %v1952
    %v2473 = vpop.f32.mrb[0].mxu0
    %v2474 = vadd.f32 0.0, %v2473
    %v2475 = vpop.f32.mrb[0].mxu0
    %v2476 = vpop.f32.mrb[0].mxu0
    %v2477 = vadd.f32 0.0, %v2476
    %v2478 = vpop.f32.mrb[0].mxu0
    %2479 = vmatprep.mubr.bf16.mxu0 0
    %2480 = vmatmul.mubr.bf16.gmra.mrb[0].mxu0 %v1953
    %v2481 = vpop.f32.mrb[0].mxu0
    %v2482 = vadd.f32 0.0, %v2481
    %v2483 = vpop.f32.mrb[0].mxu0
    %v2484 = vpop.f32.mrb[0].mxu0
    %v2485 = vadd.f32 0.0, %v2484
    %v2486 = vpop.f32.mrb[0].mxu0
    %2487 = vmatprep.mubr.bf16.mxu0 0
    %2488 = vmatmul.mubr.bf16.gmra.mrb[0].mxu0 %v1954
    %v2489 = vpop.f32.mrb[0].mxu0
    %v2490 = vadd.f32 0.0, %v2489
    %v2491 = vpop.f32.mrb[0].mxu0
    %v2492 = vpop.f32.mrb[0].mxu0
    %v2493 = vadd.f32 0.0, %v2492
    %v2494 = vpop.f32.mrb[0].mxu0
    %2495 = vmatprep.mubr.bf16.mxu0 0
    %2496 = vmatmul.mubr.bf16.gmra.mrb[0].mxu0 %v2356
    %v2497 = vpop.f32.mrb[0].mxu0
    %v2498 = vadd.f32 0.0, %v2497
    %v2499 = vpop.f32.mrb[0].mxu0
    %v2500 = vpop.f32.mrb[0].mxu0
    %v2501 = vadd.f32 0.0, %v2500
    %v2502 = vpop.f32.mrb[0].mxu0
    %2503 = vdwg.mxu0
    %v2504 = vadd.f32 %v2312, %v2442
    %v2505 = vadd.f32 %v2313, %v2445
    %v2506 = vadd.f32 %v2314, %v2450
    %v2507 = vadd.f32 %v2315, %v2453
    %v2508 = vadd.f32 %v2316, %v2458
    %v2509 = vadd.f32 %v2317, %v2461
    %v2510 = vadd.f32 %v2318, %v2466
    %v2511 = vadd.f32 %v2319, %v2469
    %v2512 = vadd.f32 %v2320, %v2474
    %v2513 = vadd.f32 %v2321, %v2477
    %v2514 = vadd.f32 %v2322, %v2482
    %v2515 = vadd.f32 %v2323, %v2485
    %v2516 = vadd.f32 %v2324, %v2490
    %v2517 = vadd.f32 %v2325, %v2493
    %v2518 = vadd.f32 %v2326, %v2498
    %v2519 = vadd.f32 %v2327, %v2501
    %v2520 = vld [vmem:[%s5] sm:$0x1]
    %v2522 = vlaneseq
    %v2523 = vshrl.u32 %v2522, 7
    %v2524 = vsub.s32 0, %v2523
    %v2525 = vrot.slane %v2520, %v2524
    %v2527 = vadd.f32 %v2504, %v2525
    %v2528 = vadd.f32 %v2505, %v2525
    %v2529 = vadd.f32 %v2506, %v2525
    %v2530 = vadd.f32 %v2507, %v2525
    %v2531 = vadd.f32 %v2508, %v2525
    %v2532 = vadd.f32 %v2509, %v2525
    %v2533 = vadd.f32 %v2510, %v2525
    %v2534 = vadd.f32 %v2511, %v2525
    %v2535 = vadd.f32 %v2512, %v2525
    %v2536 = vadd.f32 %v2513, %v2525
    %v2537 = vadd.f32 %v2514, %v2525
    %v2538 = vadd.f32 %v2515, %v2525
    %v2539 = vadd.f32 %v2516, %v2525
    %v2540 = vadd.f32 %v2517, %v2525
    %v2541 = vadd.f32 %v2518, %v2525
    %v2542 = vadd.f32 %v2519, %v2525
    %2543 = vst [vmem:[%s6] sm:$0xff] %v2527
    %2544 = vst [vmem:[%s6 + $0x8] sm:$0xff] %v2528
    %2545 = vst [vmem:[%s6 + $0x10] sm:$0xff] %v2529
    %2546 = vst [vmem:[%s6 + $0x18] sm:$0xff] %v2530
    %2547 = vst [vmem:[%s6 + $0x20] sm:$0xff] %v2531
    %2548 = vst [vmem:[%s6 + $0x28] sm:$0xff] %v2532
    %2549 = vst [vmem:[%s6 + $0x30] sm:$0xff] %v2533
    %2550 = vst [vmem:[%s6 + $0x38] sm:$0xff] %v2534
    %2551 = vst [vmem:[%s6 + $0x40] sm:$0xff] %v2535
    %2552 = vst [vmem:[%s6 + $0x48] sm:$0xff] %v2536
    %2553 = vst [vmem:[%s6 + $0x50] sm:$0xff] %v2537
    %2554 = vst [vmem:[%s6 + $0x58] sm:$0xff] %v2538
    %2555 = vst [vmem:[%s6 + $0x60] sm:$0xff] %v2539
    %2556 = vst [vmem:[%s6 + $0x68] sm:$0xff] %v2540
    %2557 = vst [vmem:[%s6 + $0x70] sm:$0xff] %v2541
    %2558 = vst [vmem:[%s6 + $0x78] sm:$0xff] %v2542
    // Predicated region
    $region30: #{mod_inception_forward.5} parent=1 // pred_check
      _
    $region31: #{mod_inception_forward.5} parent=1 // pred_check_branch
      %2560 = sbr.rel (0) target = $region33
    $region32: #{mod_inception_forward.5} parent=1 // pred_region
      _
    $region33: #{mod_inception_forward.5} parent=1 // pred_fallthru
      _
    // Predicated region
    $region34: #{mod_inception_forward.5} parent=1 // pred_check
      _
    $region35: #{mod_inception_forward.5} parent=1 // pred_check_branch
      %2562 = sbr.rel (0) target = $region37
    $region36: #{mod_inception_forward.5} parent=1 // pred_region
      _
    $region37: #{mod_inception_forward.5} parent=1 // pred_fallthru
      _
    %2563 = vsyncpa [#allocation5], 1

// kernel: mod_inception_forward.6
$region0: #{mod_inception_forward.6}
  #allocation0 [shape = 'u32[]', space=smem, size = 0x4, offset = 0x4, fixed_abs, tag = 'smem constant byte address 0x4 - core index']
  #allocation1 [shape = 'u32[144,128]{1,0:T(1,128)}', space=vmem, size = 0x12000, scoped, tag = 'internal scratch']
  #allocation2 [shape = 'f32[2,12,12,128]{3,2,1,0:T(8,128)}', space=vmem, size = 0x30000, scoped, tag = 'scratch operand']
  #allocation3 [shape = 'f32[1,1]{1,0:T(1,128)S(1)}', space=vmem, size = 0x200, scoped, tag = 'scoped memory for mod_inception_forward.6']
  %s0 = inlined_call_operand.vmem [shape: f32[2,8,8,128], index: 0, kind: input, shape index: {}]
  %s1 = inlined_call_operand.vmem [shape: f32[1,128], index: 1, kind: input, shape index: {}]
  %s2 = inlined_call_operand.vmem [shape: f32[1,128], index: 2, kind: input, shape index: {}]
  %s3 = inlined_call_operand.<no memory space> [shape: f32[1,1], index: 3, kind: input, shape index: {}]
  %s4 = inlined_call_operand.vmem [shape: bf16[25,128,128], index: 4, kind: input, shape index: {}]
  %s5 = inlined_call_operand.vmem [shape: f32[1,128], index: 5, kind: input, shape index: {}]
  %s6 = inlined_call_operand.vmem [shape: f32[128,128], index: 6, kind: output, shape index: {}]
  %s7 = sld [smem:[#allocation0]]
  $region34: #{mod_inception_forward.6} parent=0
    _
  %s9 = ssub.s32 1, %s7
  %s10 = scalar_select 0, %s9, %s7
  %v11 = vstv %s3
  %12 = vst [vmem:[#allocation3] sm:$0x1] %v11
  // Predicated region
  $region2: #{mod_inception_forward.6} parent=0 // pred_check
    _
  $region3: #{mod_inception_forward.6} parent=0 // pred_check_branch
    %14 = sbr.rel (0) target = $region5
  $region4: #{mod_inception_forward.6} parent=0 // pred_region
    _
  $region5: #{mod_inception_forward.6} parent=0 // pred_fallthru
    _
  // Predicated region
  $region6: #{mod_inception_forward.6} parent=0 // pred_check
    _
  $region7: #{mod_inception_forward.6} parent=0 // pred_check_branch
    %16 = sbr.rel (0) target = $region9
  $region8: #{mod_inception_forward.6} parent=0 // pred_region
    _
  $region9: #{mod_inception_forward.6} parent=0 // pred_fallthru
    _
  // Predicated region
  $region10: #{mod_inception_forward.6} parent=0 // pred_check
    _
  $region11: #{mod_inception_forward.6} parent=0 // pred_check_branch
    %18 = sbr.rel (0) target = $region13
  $region12: #{mod_inception_forward.6} parent=0 // pred_region
    _
  $region13: #{mod_inception_forward.6} parent=0 // pred_fallthru
    _
  // Predicated region
  $region14: #{mod_inception_forward.6} parent=0 // pred_check
    _
  $region15: #{mod_inception_forward.6} parent=0 // pred_check_branch
    %20 = sbr.rel (0) target = $region17
  $region16: #{mod_inception_forward.6} parent=0 // pred_region
    _
  $region17: #{mod_inception_forward.6} parent=0 // pred_fallthru
    _
  // Predicated region
  $region18: #{mod_inception_forward.6} parent=0 // pred_check
    _
  $region19: #{mod_inception_forward.6} parent=0 // pred_check_branch
    %22 = sbr.rel (0) target = $region21
  $region20: #{mod_inception_forward.6} parent=0 // pred_region
    _
  $region21: #{mod_inception_forward.6} parent=0 // pred_fallthru
    _
  // Predicated region
  $region22: #{mod_inception_forward.6} parent=0 // pred_check
    _
  $region23: #{mod_inception_forward.6} parent=0 // pred_check_branch
    %24 = sbr.rel (0) target = $region25
  $region24: #{mod_inception_forward.6} parent=0 // pred_region
    _
  $region25: #{mod_inception_forward.6} parent=0 // pred_fallthru
    _
  %v26 = vld [vmem:[%s0] sm:$0xff]
  %v27 = vld [vmem:[%s0 + $0x8] sm:$0xff]
  %v28 = vld [vmem:[%s0 + $0x10] sm:$0xff]
  %v29 = vld [vmem:[%s0 + $0x18] sm:$0xff]
  %v30 = vld [vmem:[%s0 + $0x20] sm:$0xff]
  %v31 = vld [vmem:[%s0 + $0x28] sm:$0xff]
  %v32 = vld [vmem:[%s0 + $0x30] sm:$0xff]
  %v33 = vld [vmem:[%s0 + $0x38] sm:$0xff]
  %v34 = vld [vmem:[%s0 + $0x40] sm:$0xff]
  %v35 = vld [vmem:[%s0 + $0x48] sm:$0xff]
  %v36 = vld [vmem:[%s0 + $0x50] sm:$0xff]
  %v37 = vld [vmem:[%s0 + $0x58] sm:$0xff]
  %v38 = vld [vmem:[%s0 + $0x60] sm:$0xff]
  %v39 = vld [vmem:[%s0 + $0x68] sm:$0xff]
  %v40 = vld [vmem:[%s0 + $0x70] sm:$0xff]
  %v41 = vld [vmem:[%s0 + $0x78] sm:$0xff]
  %v42 = vld [vmem:[%s1] sm:$0x1]
  %v44 = vlaneseq
  %v45 = vshrl.u32 %v44, 7
  %v46 = vsub.s32 0, %v45
  %v47 = vrot.slane %v42, %v46
  %v49 = vmul.f32 %v26, %v47
  %v50 = vmul.f32 %v27, %v47
  %v51 = vmul.f32 %v28, %v47
  %v52 = vmul.f32 %v29, %v47
  %v53 = vmul.f32 %v30, %v47
  %v54 = vmul.f32 %v31, %v47
  %v55 = vmul.f32 %v32, %v47
  %v56 = vmul.f32 %v33, %v47
  %v57 = vmul.f32 %v34, %v47
  %v58 = vmul.f32 %v35, %v47
  %v59 = vmul.f32 %v36, %v47
  %v60 = vmul.f32 %v37, %v47
  %v61 = vmul.f32 %v38, %v47
  %v62 = vmul.f32 %v39, %v47
  %v63 = vmul.f32 %v40, %v47
  %v64 = vmul.f32 %v41, %v47
  %v65 = vld [vmem:[%s2] sm:$0x1]
  %v67 = vlaneseq
  %v68 = vshrl.u32 %v67, 7
  %v69 = vsub.s32 0, %v68
  %v70 = vrot.slane %v65, %v69
  %v72 = vadd.f32 %v49, %v70
  %v73 = vadd.f32 %v50, %v70
  %v74 = vadd.f32 %v51, %v70
  %v75 = vadd.f32 %v52, %v70
  %v76 = vadd.f32 %v53, %v70
  %v77 = vadd.f32 %v54, %v70
  %v78 = vadd.f32 %v55, %v70
  %v79 = vadd.f32 %v56, %v70
  %v80 = vadd.f32 %v57, %v70
  %v81 = vadd.f32 %v58, %v70
  %v82 = vadd.f32 %v59, %v70
  %v83 = vadd.f32 %v60, %v70
  %v84 = vadd.f32 %v61, %v70
  %v85 = vadd.f32 %v62, %v70
  %v86 = vadd.f32 %v63, %v70
  %v87 = vadd.f32 %v64, %v70
  %vm88 = vcmp.ge.f32.partialorder %v72, 0.0
  %vm89 = vcmp.ge.f32.partialorder %v73, 0.0
  %vm90 = vcmp.ge.f32.partialorder %v74, 0.0
  %vm91 = vcmp.ge.f32.partialorder %v75, 0.0
  %vm92 = vcmp.ge.f32.partialorder %v76, 0.0
  %vm93 = vcmp.ge.f32.partialorder %v77, 0.0
  %vm94 = vcmp.ge.f32.partialorder %v78, 0.0
  %vm95 = vcmp.ge.f32.partialorder %v79, 0.0
  %vm96 = vcmp.ge.f32.partialorder %v80, 0.0
  %vm97 = vcmp.ge.f32.partialorder %v81, 0.0
  %vm98 = vcmp.ge.f32.partialorder %v82, 0.0
  %vm99 = vcmp.ge.f32.partialorder %v83, 0.0
  %vm100 = vcmp.ge.f32.partialorder %v84, 0.0
  %vm101 = vcmp.ge.f32.partialorder %v85, 0.0
  %vm102 = vcmp.ge.f32.partialorder %v86, 0.0
  %vm103 = vcmp.ge.f32.partialorder %v87, 0.0
  %v104 = vld [vmem:[#allocation3] sm:$0x1]
  %v106 = vlaneseq
  %v107 = vshrl.u32 %v106, 7
  %v108 = vsub.s32 0, %v107
  %v109 = vrot.slane %v104, %v108
  %110 = vset.pattern.permute.xlu0 0
  %111 = vperm.xlu0 %110, %v109
  %v112 = vpop.permute.xlu0 %111
  %v114 = vmul.f32 %v112, %v72
  %v115 = vmul.f32 %v112, %v73
  %v116 = vmul.f32 %v112, %v74
  %v117 = vmul.f32 %v112, %v75
  %v118 = vmul.f32 %v112, %v76
  %v119 = vmul.f32 %v112, %v77
  %v120 = vmul.f32 %v112, %v78
  %v121 = vmul.f32 %v112, %v79
  %v122 = vmul.f32 %v112, %v80
  %v123 = vmul.f32 %v112, %v81
  %v124 = vmul.f32 %v112, %v82
  %v125 = vmul.f32 %v112, %v83
  %v126 = vmul.f32 %v112, %v84
  %v127 = vmul.f32 %v112, %v85
  %v128 = vmul.f32 %v112, %v86
  %v129 = vmul.f32 %v112, %v87
  %v130 = vsel %vm88, %v72, %v114
  %v131 = vsel %vm89, %v73, %v115
  %v132 = vsel %vm90, %v74, %v116
  %v133 = vsel %vm91, %v75, %v117
  %v134 = vsel %vm92, %v76, %v118
  %v135 = vsel %vm93, %v77, %v119
  %v136 = vsel %vm94, %v78, %v120
  %v137 = vsel %vm95, %v79, %v121
  %v138 = vsel %vm96, %v80, %v122
  %v139 = vsel %vm97, %v81, %v123
  %v140 = vsel %vm98, %v82, %v124
  %v141 = vsel %vm99, %v83, %v125
  %v142 = vsel %vm100, %v84, %v126
  %v143 = vsel %vm101, %v85, %v127
  %v144 = vsel %vm102, %v86, %v128
  %v145 = vsel %vm103, %v87, %v129
  %146 = vst [vmem:[#allocation2] sm:$0xff] 0.0
  %147 = vst [vmem:[#allocation2 + $0x8] sm:$0xf] 0.0
  %148 = vst [vmem:[#allocation2 + $0x10] sm:$0xff] 0.0
  %149 = vst [vmem:[#allocation2 + $0x18] sm:$0xf] 0.0
  %150 = vst [vmem:[#allocation2 + $0x20] sm:$0xff] 0.0
  %151 = vst [vmem:[#allocation2 + $0x28] sm:$0xf] 0.0
  %152 = vst [vmem:[#allocation2 + $0x30] sm:$0xff] 0.0
  %153 = vst [vmem:[#allocation2 + $0x38] sm:$0xf] 0.0
  %154 = vst [vmem:[#allocation2 + $0x40] sm:$0xff] 0.0
  %155 = vst [vmem:[#allocation2 + $0x48] sm:$0xf] 0.0
  %156 = vst [vmem:[#allocation2 + $0x50] sm:$0xff] 0.0
  %157 = vst [vmem:[#allocation2 + $0x58] sm:$0xf] 0.0
  %158 = vst [vmem:[#allocation2 + $0x60] sm:$0xff] 0.0
  %159 = vst [vmem:[#allocation2 + $0x68] sm:$0xf] 0.0
  %160 = vst [vmem:[#allocation2 + $0x70] sm:$0xff] 0.0
  %161 = vst [vmem:[#allocation2 + $0x78] sm:$0xf] 0.0
  %162 = vst [vmem:[#allocation2 + $0x80] sm:$0xff] 0.0
  %163 = vst [vmem:[#allocation2 + $0x88] sm:$0xf] 0.0
  %164 = vst [vmem:[#allocation2 + $0x90] sm:$0xff] 0.0
  %165 = vst [vmem:[#allocation2 + $0x98] sm:$0xf] 0.0
  %166 = vst [vmem:[#allocation2 + $0xa0] sm:$0xff] 0.0
  %167 = vst [vmem:[#allocation2 + $0xa8] sm:$0xf] 0.0
  %168 = vst [vmem:[#allocation2 + $0xb0] sm:$0xff] 0.0
  %169 = vst [vmem:[#allocation2 + $0xb8] sm:$0xf] 0.0
  %170 = vst [vmem:[#allocation2 + $0xc0] sm:$0xff] 0.0
  %171 = vst [vmem:[#allocation2 + $0xc8] sm:$0xf] 0.0
  %172 = vst [vmem:[#allocation2 + $0xd0] sm:$0xff] 0.0
  %173 = vst [vmem:[#allocation2 + $0xd8] sm:$0xf] 0.0
  %174 = vst [vmem:[#allocation2 + $0xe0] sm:$0xff] 0.0
  %175 = vst [vmem:[#allocation2 + $0xe8] sm:$0xf] 0.0
  %176 = vst [vmem:[#allocation2 + $0xf0] sm:$0xff] 0.0
  %177 = vst [vmem:[#allocation2 + $0xf8] sm:$0xf] 0.0
  %178 = vst [vmem:[#allocation2 + $0x100] sm:$0xff] 0.0
  %179 = vst [vmem:[#allocation2 + $0x108] sm:$0xf] 0.0
  %180 = vst [vmem:[#allocation2 + $0x110] sm:$0xff] 0.0
  %181 = vst [vmem:[#allocation2 + $0x118] sm:$0xf] 0.0
  %182 = vst [vmem:[#allocation2 + $0x120] sm:$0xff] 0.0
  %183 = vst [vmem:[#allocation2 + $0x128] sm:$0xf] 0.0
  %184 = vst [vmem:[#allocation2 + $0x130] sm:$0xff] 0.0
  %185 = vst [vmem:[#allocation2 + $0x138] sm:$0xf] 0.0
  %186 = vst [vmem:[#allocation2 + $0x140] sm:$0xff] 0.0
  %187 = vst [vmem:[#allocation2 + $0x148] sm:$0xf] 0.0
  %188 = vst [vmem:[#allocation2 + $0x150] sm:$0xff] 0.0
  %189 = vst [vmem:[#allocation2 + $0x158] sm:$0xf] 0.0
  %190 = vst [vmem:[#allocation2 + $0x160] sm:$0xff] 0.0
  %191 = vst [vmem:[#allocation2 + $0x168] sm:$0xf] 0.0
  %192 = vst [vmem:[#allocation2 + $0x170] sm:$0xff] 0.0
  %193 = vst [vmem:[#allocation2 + $0x178] sm:$0xf] 0.0
  %s194 = scalar_lea.vmem [#allocation2], 32
  %195 = vst [vmem:[%s194 + $0x2] sm:$0xff] %v130
  %196 = vst [vmem:[%s194 + $0x12] sm:$0xff] %v131
  %197 = vst [vmem:[%s194 + $0x22] sm:$0xff] %v132
  %198 = vst [vmem:[%s194 + $0x32] sm:$0xff] %v133
  %199 = vst [vmem:[%s194 + $0x42] sm:$0xff] %v134
  %200 = vst [vmem:[%s194 + $0x52] sm:$0xff] %v135
  %201 = vst [vmem:[%s194 + $0x62] sm:$0xff] %v136
  %202 = vst [vmem:[%s194 + $0x72] sm:$0xff] %v137
  %203 = vst [vmem:[%s194 + $0xc2] sm:$0xff] %v138
  %204 = vst [vmem:[%s194 + $0xd2] sm:$0xff] %v139
  %205 = vst [vmem:[%s194 + $0xe2] sm:$0xff] %v140
  %206 = vst [vmem:[%s194 + $0xf2] sm:$0xff] %v141
  %207 = vst [vmem:[%s194 + $0x102] sm:$0xff] %v142
  %208 = vst [vmem:[%s194 + $0x112] sm:$0xff] %v143
  %209 = vst [vmem:[%s194 + $0x122] sm:$0xff] %v144
  %210 = vst [vmem:[%s194 + $0x132] sm:$0xff] %v145
  %v211 = vld [vmem:[#allocation2] sm:$0xff]
  %v212 = vld [vmem:[#allocation2 + $0x8] sm:$0xf]
  %v213 = vld [vmem:[#allocation2 + $0x10] sm:$0xff]
  %v214 = vld [vmem:[#allocation2 + $0x18] sm:$0xf]
  %v215 = vld [vmem:[#allocation2 + $0x20] sm:$0xff]
  %v216 = vld [vmem:[#allocation2 + $0x28] sm:$0xf]
  %v217 = vld [vmem:[#allocation2 + $0x30] sm:$0xff]
  %v218 = vld [vmem:[#allocation2 + $0x38] sm:$0xf]
  %v219 = vld [vmem:[#allocation2 + $0x40] sm:$0xff]
  %v220 = vld [vmem:[#allocation2 + $0x48] sm:$0xf]
  %v221 = vld [vmem:[#allocation2 + $0x50] sm:$0xff]
  %v222 = vld [vmem:[#allocation2 + $0x58] sm:$0xf]
  %v223 = vld [vmem:[#allocation2 + $0x60] sm:$0xff]
  %v224 = vld [vmem:[#allocation2 + $0x68] sm:$0xf]
  %v225 = vld [vmem:[#allocation2 + $0x70] sm:$0xff]
  %v226 = vld [vmem:[#allocation2 + $0x78] sm:$0xf]
  %v227 = vld [vmem:[#allocation2 + $0x80] sm:$0xff]
  %v228 = vld [vmem:[#allocation2 + $0x88] sm:$0xf]
  %v229 = vld [vmem:[#allocation2 + $0x90] sm:$0xff]
  %v230 = vld [vmem:[#allocation2 + $0x98] sm:$0xf]
  %v231 = vld [vmem:[#allocation2 + $0xa0] sm:$0xff]
  %v232 = vld [vmem:[#allocation2 + $0xa8] sm:$0xf]
  %v233 = vld [vmem:[#allocation2 + $0xb0] sm:$0xff]
  %v234 = vld [vmem:[#allocation2 + $0xb8] sm:$0xf]
  %v235 = vld [vmem:[#allocation2 + $0xc0] sm:$0xff]
  %v236 = vld [vmem:[#allocation2 + $0xc8] sm:$0xf]
  %v237 = vld [vmem:[#allocation2 + $0xd0] sm:$0xff]
  %v238 = vld [vmem:[#allocation2 + $0xd8] sm:$0xf]
  %v239 = vld [vmem:[#allocation2 + $0xe0] sm:$0xff]
  %v240 = vld [vmem:[#allocation2 + $0xe8] sm:$0xf]
  %v241 = vld [vmem:[#allocation2 + $0xf0] sm:$0xff]
  %v242 = vld [vmem:[#allocation2 + $0xf8] sm:$0xf]
  %v243 = vld [vmem:[#allocation2 + $0x100] sm:$0xff]
  %v244 = vld [vmem:[#allocation2 + $0x108] sm:$0xf]
  %v245 = vld [vmem:[#allocation2 + $0x110] sm:$0xff]
  %v246 = vld [vmem:[#allocation2 + $0x118] sm:$0xf]
  %v247 = vld [vmem:[#allocation2 + $0x120] sm:$0xff]
  %v248 = vld [vmem:[#allocation2 + $0x128] sm:$0xf]
  %v249 = vld [vmem:[#allocation2 + $0x130] sm:$0xff]
  %v250 = vld [vmem:[#allocation2 + $0x138] sm:$0xf]
  %v251 = vld [vmem:[#allocation2 + $0x140] sm:$0xff]
  %v252 = vld [vmem:[#allocation2 + $0x148] sm:$0xf]
  %v253 = vld [vmem:[#allocation2 + $0x150] sm:$0xff]
  %v254 = vld [vmem:[#allocation2 + $0x158] sm:$0xf]
  %v255 = vld [vmem:[#allocation2 + $0x160] sm:$0xff]
  %v256 = vld [vmem:[#allocation2 + $0x168] sm:$0xf]
  %v257 = vld [vmem:[#allocation2 + $0x170] sm:$0xff]
  %v258 = vld [vmem:[#allocation2 + $0x178] sm:$0xf]
  %v259 = vpack.c.bf16 %v211, %v211
  %v260 = vpack.c.bf16 %v213, %v213
  %v261 = vpack.c.bf16 %v215, %v215
  %v262 = vpack.c.bf16 %v217, %v217
  %v263 = vpack.c.bf16 %v219, %v219
  %v264 = vpack.c.bf16 %v221, %v221
  %v265 = vpack.c.bf16 %v223, %v223
  %v266 = vpack.c.bf16 %v225, %v225
  %v267 = vpack.c.bf16 %v227, %v227
  %v268 = vpack.c.bf16 %v229, %v229
  %v269 = vpack.c.bf16 %v231, %v231
  %v270 = vpack.c.bf16 %v233, %v233
  %v271 = vpack.c.bf16 %v235, %v235
  %v272 = vpack.c.bf16 %v237, %v237
  %v273 = vpack.c.bf16 %v239, %v239
  %v274 = vpack.c.bf16 %v241, %v241
  %v275 = vpack.c.bf16 %v243, %v243
  %v276 = vpack.c.bf16 %v245, %v245
  %v277 = vpack.c.bf16 %v247, %v247
  %v278 = vpack.c.bf16 %v249, %v249
  %v279 = vpack.c.bf16 %v251, %v251
  %v280 = vpack.c.bf16 %v253, %v253
  %v281 = vpack.c.bf16 %v255, %v255
  %v282 = vpack.c.bf16 %v257, %v257
  %v283 = vld [vmem:[%s4] sm:$0xf]
  %v284 = vld [vmem:[%s4 + $0x4] sm:$0xf]
  %v285 = vld [vmem:[%s4 + $0x8] sm:$0xf]
  %v286 = vld [vmem:[%s4 + $0xc] sm:$0xf]
  %v287 = vld [vmem:[%s4 + $0x10] sm:$0xf]
  %v288 = vld [vmem:[%s4 + $0x14] sm:$0xf]
  %v289 = vld [vmem:[%s4 + $0x18] sm:$0xf]
  %v290 = vld [vmem:[%s4 + $0x1c] sm:$0xf]
  %v291 = vld [vmem:[%s4 + $0x20] sm:$0xf]
  %v292 = vld [vmem:[%s4 + $0x24] sm:$0xf]
  %v293 = vld [vmem:[%s4 + $0x28] sm:$0xf]
  %v294 = vld [vmem:[%s4 + $0x2c] sm:$0xf]
  %v295 = vld [vmem:[%s4 + $0x30] sm:$0xf]
  %v296 = vld [vmem:[%s4 + $0x34] sm:$0xf]
  %v297 = vld [vmem:[%s4 + $0x38] sm:$0xf]
  %v298 = vld [vmem:[%s4 + $0x3c] sm:$0xf]
  %s299 = scalar_lea.vmem %s4, 320
  %v300 = vld [vmem:[%s299] sm:$0xf]
  %v301 = vld [vmem:[%s299 + $0x4] sm:$0xf]
  %v302 = vld [vmem:[%s299 + $0x8] sm:$0xf]
  %v303 = vld [vmem:[%s299 + $0xc] sm:$0xf]
  %v304 = vld [vmem:[%s299 + $0x10] sm:$0xf]
  %v305 = vld [vmem:[%s299 + $0x14] sm:$0xf]
  %v306 = vld [vmem:[%s299 + $0x18] sm:$0xf]
  %v307 = vld [vmem:[%s299 + $0x1c] sm:$0xf]
  %v308 = vld [vmem:[%s299 + $0x20] sm:$0xf]
  %v309 = vld [vmem:[%s299 + $0x24] sm:$0xf]
  %v310 = vld [vmem:[%s299 + $0x28] sm:$0xf]
  %v311 = vld [vmem:[%s299 + $0x2c] sm:$0xf]
  %v312 = vld [vmem:[%s299 + $0x30] sm:$0xf]
  %v313 = vld [vmem:[%s299 + $0x34] sm:$0xf]
  %v314 = vld [vmem:[%s299 + $0x38] sm:$0xf]
  %v315 = vld [vmem:[%s299 + $0x3c] sm:$0xf]
  %v332 = vunpack.c.l.b16 %v260
  %v333 = vunpack.c.l.b16 %v261
  %v334 = vunpack.c.l.b16 %v262
  %v335 = vunpack.c.l.b16 %v263
  %v336 = vunpack.c.l.b16 %v264
  %v337 = vunpack.c.l.b16 %v265
  %v338 = vunpack.c.l.b16 %v266
  %v339 = vunpack.c.l.b16 %v267
  %v340 = vunpack.c.l.b16 %v272
  %v341 = vunpack.c.l.b16 %v273
  %v342 = vunpack.c.l.b16 %v274
  %v343 = vunpack.c.l.b16 %v275
  %v344 = vunpack.c.l.b16 %v276
  %v345 = vunpack.c.l.b16 %v277
  %v346 = vunpack.c.l.b16 %v278
  %v347 = vunpack.c.l.b16 %v279
  %v348 = vpack.c.b16 %v333, %v332
  %v349 = vpack.c.b16 %v335, %v334
  %v350 = vpack.c.b16 %v337, %v336
  %v351 = vpack.c.b16 %v339, %v338
  %v352 = vpack.c.b16 %v341, %v340
  %v353 = vpack.c.b16 %v343, %v342
  %v354 = vpack.c.b16 %v345, %v344
  %v355 = vpack.c.b16 %v347, %v346
  %v380 = vunpack.c.l.b16 %v300
  %v381 = vunpack.c.l.b16 %v301
  %v382 = vunpack.c.l.b16 %v302
  %v383 = vunpack.c.l.b16 %v303
  %v384 = vunpack.c.l.b16 %v304
  %v385 = vunpack.c.l.b16 %v305
  %v386 = vunpack.c.l.b16 %v306
  %v387 = vunpack.c.l.b16 %v307
  %v388 = vunpack.c.l.b16 %v308
  %v389 = vunpack.c.l.b16 %v309
  %v390 = vunpack.c.l.b16 %v310
  %v391 = vunpack.c.l.b16 %v311
  %v392 = vunpack.c.l.b16 %v312
  %v393 = vunpack.c.l.b16 %v313
  %v394 = vunpack.c.l.b16 %v314
  %v395 = vunpack.c.l.b16 %v315
  %v396 = vpack.c.b16 %v381, %v380
  %v397 = vpack.c.b16 %v383, %v382
  %v398 = vpack.c.b16 %v385, %v384
  %v399 = vpack.c.b16 %v387, %v386
  %v400 = vpack.c.b16 %v389, %v388
  %v401 = vpack.c.b16 %v391, %v390
  %v402 = vpack.c.b16 %v393, %v392
  %v403 = vpack.c.b16 %v395, %v394
  %412 = vmatprep.subr.bf16.mxu0 0
  %413 = vmatpush1.bf16.msra.mxu0 %v396
  %414 = vmatprep.subr.bf16.mxu0 0
  %415 = vmatpush1.bf16.msra.mxu0 %v397
  %416 = vmatprep.subr.bf16.mxu0 0
  %417 = vmatpush1.bf16.msra.mxu0 %v398
  %418 = vmatprep.subr.bf16.mxu0 0
  %419 = vmatpush1.bf16.msra.mxu0 %v399
  %420 = vmatprep.subr.bf16.mxu0 0
  %421 = vmatpush1.bf16.msra.mxu0 %v400
  %422 = vmatprep.subr.bf16.mxu0 0
  %423 = vmatpush1.bf16.msra.mxu0 %v401
  %424 = vmatprep.subr.bf16.mxu0 0
  %425 = vmatpush1.bf16.msra.mxu0 %v402
  %426 = vmatprep.subr.bf16.mxu0 0
  %427 = vmatpush1.bf16.msra.mxu0 %v403
  %428 = vmatprep.subr.bf16.mxu0 0
  %429 = vmatpush1.bf16.msra.mxu0 0
  %430 = vmatprep.subr.bf16.mxu0 0
  %431 = vmatpush1.bf16.msra.mxu0 0
  %432 = vmatprep.subr.bf16.mxu0 0
  %433 = vmatpush1.bf16.msra.mxu0 0
  %434 = vmatprep.subr.bf16.mxu0 0
  %435 = vmatpush1.bf16.msra.mxu0 0
  %436 = vmatprep.subr.bf16.mxu0 0
  %437 = vmatpush1.bf16.msra.mxu0 0
  %438 = vmatprep.subr.bf16.mxu0 0
  %439 = vmatpush1.bf16.msra.mxu0 0
  %440 = vmatprep.subr.bf16.mxu0 0
  %441 = vmatpush1.bf16.msra.mxu0 0
  %442 = vmatprep.subr.bf16.mxu0 0
  %443 = vmatpush1.bf16.msra.mxu0 0
  %444 = vmatprep.mubr.bf16.mxu0 0
  %445 = vmatmul.mubr.bf16.gmra.mrb[0].mxu0 %v348
  %v446 = vpop.f32.mrb[0].mxu0
  %v447 = vadd.f32 0.0, %v446
  %v448 = vpop.f32.mrb[0].mxu0
  %v449 = vpop.f32.mrb[0].mxu0
  %v450 = vadd.f32 0.0, %v449
  %v451 = vpop.f32.mrb[0].mxu0
  %452 = vmatprep.mubr.bf16.mxu0 0
  %453 = vmatmul.mubr.bf16.gmra.mrb[0].mxu0 %v349
  %v454 = vpop.f32.mrb[0].mxu0
  %v455 = vadd.f32 0.0, %v454
  %v456 = vpop.f32.mrb[0].mxu0
  %v457 = vpop.f32.mrb[0].mxu0
  %v458 = vadd.f32 0.0, %v457
  %v459 = vpop.f32.mrb[0].mxu0
  %460 = vmatprep.mubr.bf16.mxu0 0
  %461 = vmatmul.mubr.bf16.gmra.mrb[0].mxu0 %v350
  %v462 = vpop.f32.mrb[0].mxu0
  %v463 = vadd.f32 0.0, %v462
  %v464 = vpop.f32.mrb[0].mxu0
  %v465 = vpop.f32.mrb[0].mxu0
  %v466 = vadd.f32 0.0, %v465
  %v467 = vpop.f32.mrb[0].mxu0
  %468 = vmatprep.mubr.bf16.mxu0 0
  %469 = vmatmul.mubr.bf16.gmra.mrb[0].mxu0 %v351
  %v470 = vpop.f32.mrb[0].mxu0
  %v471 = vadd.f32 0.0, %v470
  %v472 = vpop.f32.mrb[0].mxu0
  %v473 = vpop.f32.mrb[0].mxu0
  %v474 = vadd.f32 0.0, %v473
  %v475 = vpop.f32.mrb[0].mxu0
  %476 = vmatprep.mubr.bf16.mxu0 0
  %477 = vmatmul.mubr.bf16.gmra.mrb[0].mxu0 %v352
  %v478 = vpop.f32.mrb[0].mxu0
  %v479 = vadd.f32 0.0, %v478
  %v480 = vpop.f32.mrb[0].mxu0
  %v481 = vpop.f32.mrb[0].mxu0
  %v482 = vadd.f32 0.0, %v481
  %v483 = vpop.f32.mrb[0].mxu0
  %484 = vmatprep.mubr.bf16.mxu0 0
  %485 = vmatmul.mubr.bf16.gmra.mrb[0].mxu0 %v353
  %v486 = vpop.f32.mrb[0].mxu0
  %v487 = vadd.f32 0.0, %v486
  %v488 = vpop.f32.mrb[0].mxu0
  %v489 = vpop.f32.mrb[0].mxu0
  %v490 = vadd.f32 0.0, %v489
  %v491 = vpop.f32.mrb[0].mxu0
  %492 = vmatprep.mubr.bf16.mxu0 0
  %493 = vmatmul.mubr.bf16.gmra.mrb[0].mxu0 %v354
  %v494 = vpop.f32.mrb[0].mxu0
  %v495 = vadd.f32 0.0, %v494
  %v496 = vpop.f32.mrb[0].mxu0
  %v497 = vpop.f32.mrb[0].mxu0
  %v498 = vadd.f32 0.0, %v497
  %v499 = vpop.f32.mrb[0].mxu0
  %500 = vmatprep.mubr.bf16.mxu0 0
  %501 = vmatmul.mubr.bf16.gmra.mrb[0].mxu0 %v355
  %v502 = vpop.f32.mrb[0].mxu0
  %v503 = vadd.f32 0.0, %v502
  %v504 = vpop.f32.mrb[0].mxu0
  %v505 = vpop.f32.mrb[0].mxu0
  %v506 = vadd.f32 0.0, %v505
  %v507 = vpop.f32.mrb[0].mxu0
  %508 = vdwg.mxu0
  %v511 = vunpack.c.l.b16 %v259
  %v512 = vunpack.c.l.b16 %v271
  %v513 = vpack.c.b16 %v332, %v511
  %v514 = vpack.c.b16 %v334, %v333
  %v515 = vpack.c.b16 %v336, %v335
  %v516 = vpack.c.b16 %v338, %v337
  %v517 = vpack.c.b16 %v340, %v512
  %v518 = vpack.c.b16 %v342, %v341
  %v519 = vpack.c.b16 %v344, %v343
  %v520 = vpack.c.b16 %v346, %v345
  %v545 = vunpack.c.l.b16 %v283
  %v546 = vunpack.c.l.b16 %v284
  %v547 = vunpack.c.l.b16 %v285
  %v548 = vunpack.c.l.b16 %v286
  %v549 = vunpack.c.l.b16 %v287
  %v550 = vunpack.c.l.b16 %v288
  %v551 = vunpack.c.l.b16 %v289
  %v552 = vunpack.c.l.b16 %v290
  %v553 = vunpack.c.l.b16 %v291
  %v554 = vunpack.c.l.b16 %v292
  %v555 = vunpack.c.l.b16 %v293
  %v556 = vunpack.c.l.b16 %v294
  %v557 = vunpack.c.l.b16 %v295
  %v558 = vunpack.c.l.b16 %v296
  %v559 = vunpack.c.l.b16 %v297
  %v560 = vunpack.c.l.b16 %v298
  %v561 = vpack.c.b16 %v546, %v545
  %v562 = vpack.c.b16 %v548, %v547
  %v563 = vpack.c.b16 %v550, %v549
  %v564 = vpack.c.b16 %v552, %v551
  %v565 = vpack.c.b16 %v554, %v553
  %v566 = vpack.c.b16 %v556, %v555
  %v567 = vpack.c.b16 %v558, %v557
  %v568 = vpack.c.b16 %v560, %v559
  %577 = vmatprep.subr.bf16.mxu0 0
  %578 = vmatpush1.bf16.msra.mxu0 %v561
  %579 = vmatprep.subr.bf16.mxu0 0
  %580 = vmatpush1.bf16.msra.mxu0 %v562
  %581 = vmatprep.subr.bf16.mxu0 0
  %582 = vmatpush1.bf16.msra.mxu0 %v563
  %583 = vmatprep.subr.bf16.mxu0 0
  %584 = vmatpush1.bf16.msra.mxu0 %v564
  %585 = vmatprep.subr.bf16.mxu0 0
  %586 = vmatpush1.bf16.msra.mxu0 %v565
  %587 = vmatprep.subr.bf16.mxu0 0
  %588 = vmatpush1.bf16.msra.mxu0 %v566
  %589 = vmatprep.subr.bf16.mxu0 0
  %590 = vmatpush1.bf16.msra.mxu0 %v567
  %591 = vmatprep.subr.bf16.mxu0 0
  %592 = vmatpush1.bf16.msra.mxu0 %v568
  %593 = vmatprep.subr.bf16.mxu0 0
  %594 = vmatpush1.bf16.msra.mxu0 0
  %595 = vmatprep.subr.bf16.mxu0 0
  %596 = vmatpush1.bf16.msra.mxu0 0
  %597 = vmatprep.subr.bf16.mxu0 0
  %598 = vmatpush1.bf16.msra.mxu0 0
  %599 = vmatprep.subr.bf16.mxu0 0
  %600 = vmatpush1.bf16.msra.mxu0 0
  %601 = vmatprep.subr.bf16.mxu0 0
  %602 = vmatpush1.bf16.msra.mxu0 0
  %603 = vmatprep.subr.bf16.mxu0 0
  %604 = vmatpush1.bf16.msra.mxu0 0
  %605 = vmatprep.subr.bf16.mxu0 0
  %606 = vmatpush1.bf16.msra.mxu0 0
  %607 = vmatprep.subr.bf16.mxu0 0
  %608 = vmatpush1.bf16.msra.mxu0 0
  %609 = vmatprep.mubr.bf16.mxu0 0
  %610 = vmatmul.mubr.bf16.gmra.mrb[0].mxu0 %v513
  %v611 = vpop.f32.mrb[0].mxu0
  %v612 = vadd.f32 %v447, %v611
  %v613 = vpop.f32.mrb[0].mxu0
  %v614 = vpop.f32.mrb[0].mxu0
  %v615 = vadd.f32 %v450, %v614
  %v616 = vpop.f32.mrb[0].mxu0
  %617 = vmatprep.mubr.bf16.mxu0 0
  %618 = vmatmul.mubr.bf16.gmra.mrb[0].mxu0 %v514
  %v619 = vpop.f32.mrb[0].mxu0
  %v620 = vadd.f32 %v455, %v619
  %v621 = vpop.f32.mrb[0].mxu0
  %v622 = vpop.f32.mrb[0].mxu0
  %v623 = vadd.f32 %v458, %v622
  %v624 = vpop.f32.mrb[0].mxu0
  %625 = vmatprep.mubr.bf16.mxu0 0
  %626 = vmatmul.mubr.bf16.gmra.mrb[0].mxu0 %v515
  %v627 = vpop.f32.mrb[0].mxu0
  %v628 = vadd.f32 %v463, %v627
  %v629 = vpop.f32.mrb[0].mxu0
  %v630 = vpop.f32.mrb[0].mxu0
  %v631 = vadd.f32 %v466, %v630
  %v632 = vpop.f32.mrb[0].mxu0
  %633 = vmatprep.mubr.bf16.mxu0 0
  %634 = vmatmul.mubr.bf16.gmra.mrb[0].mxu0 %v516
  %v635 = vpop.f32.mrb[0].mxu0
  %v636 = vadd.f32 %v471, %v635
  %v637 = vpop.f32.mrb[0].mxu0
  %v638 = vpop.f32.mrb[0].mxu0
  %v639 = vadd.f32 %v474, %v638
  %v640 = vpop.f32.mrb[0].mxu0
  %641 = vmatprep.mubr.bf16.mxu0 0
  %642 = vmatmul.mubr.bf16.gmra.mrb[0].mxu0 %v517
  %v643 = vpop.f32.mrb[0].mxu0
  %v644 = vadd.f32 %v479, %v643
  %v645 = vpop.f32.mrb[0].mxu0
  %v646 = vpop.f32.mrb[0].mxu0
  %v647 = vadd.f32 %v482, %v646
  %v648 = vpop.f32.mrb[0].mxu0
  %649 = vmatprep.mubr.bf16.mxu0 0
  %650 = vmatmul.mubr.bf16.gmra.mrb[0].mxu0 %v518
  %v651 = vpop.f32.mrb[0].mxu0
  %v652 = vadd.f32 %v487, %v651
  %v653 = vpop.f32.mrb[0].mxu0
  %v654 = vpop.f32.mrb[0].mxu0
  %v655 = vadd.f32 %v490, %v654
  %v656 = vpop.f32.mrb[0].mxu0
  %657 = vmatprep.mubr.bf16.mxu0 0
  %658 = vmatmul.mubr.bf16.gmra.mrb[0].mxu0 %v519
  %v659 = vpop.f32.mrb[0].mxu0
  %v660 = vadd.f32 %v495, %v659
  %v661 = vpop.f32.mrb[0].mxu0
  %v662 = vpop.f32.mrb[0].mxu0
  %v663 = vadd.f32 %v498, %v662
  %v664 = vpop.f32.mrb[0].mxu0
  %665 = vmatprep.mubr.bf16.mxu0 0
  %666 = vmatmul.mubr.bf16.gmra.mrb[0].mxu0 %v520
  %v667 = vpop.f32.mrb[0].mxu0
  %v668 = vadd.f32 %v503, %v667
  %v669 = vpop.f32.mrb[0].mxu0
  %v670 = vpop.f32.mrb[0].mxu0
  %v671 = vadd.f32 %v506, %v670
  %v672 = vpop.f32.mrb[0].mxu0
  %673 = vdwg.mxu0
  %s674 = scalar_lea.vmem %s4, 640
  %v675 = vld [vmem:[%s674] sm:$0xf]
  %v676 = vld [vmem:[%s674 + $0x4] sm:$0xf]
  %v677 = vld [vmem:[%s674 + $0x8] sm:$0xf]
  %v678 = vld [vmem:[%s674 + $0xc] sm:$0xf]
  %v679 = vld [vmem:[%s674 + $0x10] sm:$0xf]
  %v680 = vld [vmem:[%s674 + $0x14] sm:$0xf]
  %v681 = vld [vmem:[%s674 + $0x18] sm:$0xf]
  %v682 = vld [vmem:[%s674 + $0x1c] sm:$0xf]
  %v683 = vld [vmem:[%s674 + $0x20] sm:$0xf]
  %v684 = vld [vmem:[%s674 + $0x24] sm:$0xf]
  %v685 = vld [vmem:[%s674 + $0x28] sm:$0xf]
  %v686 = vld [vmem:[%s674 + $0x2c] sm:$0xf]
  %v687 = vld [vmem:[%s674 + $0x30] sm:$0xf]
  %v688 = vld [vmem:[%s674 + $0x34] sm:$0xf]
  %v689 = vld [vmem:[%s674 + $0x38] sm:$0xf]
  %v690 = vld [vmem:[%s674 + $0x3c] sm:$0xf]
  %v693 = vunpack.c.l.b16 %v268
  %v694 = vunpack.c.l.b16 %v280
  %v695 = vpack.c.b16 %v693, %v339
  %v696 = vpack.c.b16 %v694, %v347
  %v715 = vunpack.c.l.b16 %v675
  %v716 = vunpack.c.l.b16 %v676
  %v717 = vunpack.c.l.b16 %v677
  %v718 = vunpack.c.l.b16 %v678
  %v719 = vunpack.c.l.b16 %v679
  %v720 = vunpack.c.l.b16 %v680
  %v721 = vunpack.c.l.b16 %v681
  %v722 = vunpack.c.l.b16 %v682
  %v723 = vunpack.c.l.b16 %v683
  %v724 = vunpack.c.l.b16 %v684
  %v725 = vunpack.c.l.b16 %v685
  %v726 = vunpack.c.l.b16 %v686
  %v727 = vunpack.c.l.b16 %v687
  %v728 = vunpack.c.l.b16 %v688
  %v729 = vunpack.c.l.b16 %v689
  %v730 = vunpack.c.l.b16 %v690
  %v731 = vpack.c.b16 %v716, %v715
  %v732 = vpack.c.b16 %v718, %v717
  %v733 = vpack.c.b16 %v720, %v719
  %v734 = vpack.c.b16 %v722, %v721
  %v735 = vpack.c.b16 %v724, %v723
  %v736 = vpack.c.b16 %v726, %v725
  %v737 = vpack.c.b16 %v728, %v727
  %v738 = vpack.c.b16 %v730, %v729
  %747 = vmatprep.subr.bf16.mxu0 0
  %748 = vmatpush1.bf16.msra.mxu0 %v731
  %749 = vmatprep.subr.bf16.mxu0 0
  %750 = vmatpush1.bf16.msra.mxu0 %v732
  %751 = vmatprep.subr.bf16.mxu0 0
  %752 = vmatpush1.bf16.msra.mxu0 %v733
  %753 = vmatprep.subr.bf16.mxu0 0
  %754 = vmatpush1.bf16.msra.mxu0 %v734
  %755 = vmatprep.subr.bf16.mxu0 0
  %756 = vmatpush1.bf16.msra.mxu0 %v735
  %757 = vmatprep.subr.bf16.mxu0 0
  %758 = vmatpush1.bf16.msra.mxu0 %v736
  %759 = vmatprep.subr.bf16.mxu0 0
  %760 = vmatpush1.bf16.msra.mxu0 %v737
  %761 = vmatprep.subr.bf16.mxu0 0
  %762 = vmatpush1.bf16.msra.mxu0 %v738
  %763 = vmatprep.subr.bf16.mxu0 0
  %764 = vmatpush1.bf16.msra.mxu0 0
  %765 = vmatprep.subr.bf16.mxu0 0
  %766 = vmatpush1.bf16.msra.mxu0 0
  %767 = vmatprep.subr.bf16.mxu0 0
  %768 = vmatpush1.bf16.msra.mxu0 0
  %769 = vmatprep.subr.bf16.mxu0 0
  %770 = vmatpush1.bf16.msra.mxu0 0
  %771 = vmatprep.subr.bf16.mxu0 0
  %772 = vmatpush1.bf16.msra.mxu0 0
  %773 = vmatprep.subr.bf16.mxu0 0
  %774 = vmatpush1.bf16.msra.mxu0 0
  %775 = vmatprep.subr.bf16.mxu0 0
  %776 = vmatpush1.bf16.msra.mxu0 0
  %777 = vmatprep.subr.bf16.mxu0 0
  %778 = vmatpush1.bf16.msra.mxu0 0
  %779 = vmatprep.mubr.bf16.mxu0 0
  %780 = vmatmul.mubr.bf16.gmra.mrb[0].mxu0 %v514
  %v781 = vpop.f32.mrb[0].mxu0
  %v782 = vadd.f32 0.0, %v781
  %v783 = vpop.f32.mrb[0].mxu0
  %v784 = vpop.f32.mrb[0].mxu0
  %v785 = vadd.f32 0.0, %v784
  %v786 = vpop.f32.mrb[0].mxu0
  %787 = vmatprep.mubr.bf16.mxu0 0
  %788 = vmatmul.mubr.bf16.gmra.mrb[0].mxu0 %v515
  %v789 = vpop.f32.mrb[0].mxu0
  %v790 = vadd.f32 0.0, %v789
  %v791 = vpop.f32.mrb[0].mxu0
  %v792 = vpop.f32.mrb[0].mxu0
  %v793 = vadd.f32 0.0, %v792
  %v794 = vpop.f32.mrb[0].mxu0
  %795 = vmatprep.mubr.bf16.mxu0 0
  %796 = vmatmul.mubr.bf16.gmra.mrb[0].mxu0 %v516
  %v797 = vpop.f32.mrb[0].mxu0
  %v798 = vadd.f32 0.0, %v797
  %v799 = vpop.f32.mrb[0].mxu0
  %v800 = vpop.f32.mrb[0].mxu0
  %v801 = vadd.f32 0.0, %v800
  %v802 = vpop.f32.mrb[0].mxu0
  %803 = vmatprep.mubr.bf16.mxu0 0
  %804 = vmatmul.mubr.bf16.gmra.mrb[0].mxu0 %v695
  %v805 = vpop.f32.mrb[0].mxu0
  %v806 = vadd.f32 0.0, %v805
  %v807 = vpop.f32.mrb[0].mxu0
  %v808 = vpop.f32.mrb[0].mxu0
  %v809 = vadd.f32 0.0, %v808
  %v810 = vpop.f32.mrb[0].mxu0
  %811 = vmatprep.mubr.bf16.mxu0 0
  %812 = vmatmul.mubr.bf16.gmra.mrb[0].mxu0 %v518
  %v813 = vpop.f32.mrb[0].mxu0
  %v814 = vadd.f32 0.0, %v813
  %v815 = vpop.f32.mrb[0].mxu0
  %v816 = vpop.f32.mrb[0].mxu0
  %v817 = vadd.f32 0.0, %v816
  %v818 = vpop.f32.mrb[0].mxu0
  %819 = vmatprep.mubr.bf16.mxu0 0
  %820 = vmatmul.mubr.bf16.gmra.mrb[0].mxu0 %v519
  %v821 = vpop.f32.mrb[0].mxu0
  %v822 = vadd.f32 0.0, %v821
  %v823 = vpop.f32.mrb[0].mxu0
  %v824 = vpop.f32.mrb[0].mxu0
  %v825 = vadd.f32 0.0, %v824
  %v826 = vpop.f32.mrb[0].mxu0
  %827 = vmatprep.mubr.bf16.mxu0 0
  %828 = vmatmul.mubr.bf16.gmra.mrb[0].mxu0 %v520
  %v829 = vpop.f32.mrb[0].mxu0
  %v830 = vadd.f32 0.0, %v829
  %v831 = vpop.f32.mrb[0].mxu0
  %v832 = vpop.f32.mrb[0].mxu0
  %v833 = vadd.f32 0.0, %v832
  %v834 = vpop.f32.mrb[0].mxu0
  %835 = vmatprep.mubr.bf16.mxu0 0
  %836 = vmatmul.mubr.bf16.gmra.mrb[0].mxu0 %v696
  %v837 = vpop.f32.mrb[0].mxu0
  %v838 = vadd.f32 0.0, %v837
  %v839 = vpop.f32.mrb[0].mxu0
  %v840 = vpop.f32.mrb[0].mxu0
  %v841 = vadd.f32 0.0, %v840
  %v842 = vpop.f32.mrb[0].mxu0
  %843 = vdwg.mxu0
  %v844 = vadd.f32 %v612, %v782
  %v845 = vadd.f32 %v615, %v785
  %v846 = vadd.f32 %v620, %v790
  %v847 = vadd.f32 %v623, %v793
  %v848 = vadd.f32 %v628, %v798
  %v849 = vadd.f32 %v631, %v801
  %v850 = vadd.f32 %v636, %v806
  %v851 = vadd.f32 %v639, %v809
  %v852 = vadd.f32 %v644, %v814
  %v853 = vadd.f32 %v647, %v817
  %v854 = vadd.f32 %v652, %v822
  %v855 = vadd.f32 %v655, %v825
  %v856 = vadd.f32 %v660, %v830
  %v857 = vadd.f32 %v663, %v833
  %v858 = vadd.f32 %v668, %v838
  %v859 = vadd.f32 %v671, %v841
  %s860 = scalar_lea.vmem %s4, 960
  %v861 = vld [vmem:[%s860] sm:$0xf]
  %v862 = vld [vmem:[%s860 + $0x4] sm:$0xf]
  %v863 = vld [vmem:[%s860 + $0x8] sm:$0xf]
  %v864 = vld [vmem:[%s860 + $0xc] sm:$0xf]
  %v865 = vld [vmem:[%s860 + $0x10] sm:$0xf]
  %v866 = vld [vmem:[%s860 + $0x14] sm:$0xf]
  %v867 = vld [vmem:[%s860 + $0x18] sm:$0xf]
  %v868 = vld [vmem:[%s860 + $0x1c] sm:$0xf]
  %v869 = vld [vmem:[%s860 + $0x20] sm:$0xf]
  %v870 = vld [vmem:[%s860 + $0x24] sm:$0xf]
  %v871 = vld [vmem:[%s860 + $0x28] sm:$0xf]
  %v872 = vld [vmem:[%s860 + $0x2c] sm:$0xf]
  %v873 = vld [vmem:[%s860 + $0x30] sm:$0xf]
  %v874 = vld [vmem:[%s860 + $0x34] sm:$0xf]
  %v875 = vld [vmem:[%s860 + $0x38] sm:$0xf]
  %v876 = vld [vmem:[%s860 + $0x3c] sm:$0xf]
  %v879 = vunpack.c.l.b16 %v269
  %v880 = vunpack.c.l.b16 %v281
  %v881 = vpack.c.b16 %v879, %v693
  %v882 = vpack.c.b16 %v880, %v694
  %v901 = vunpack.c.l.b16 %v861
  %v902 = vunpack.c.l.b16 %v862
  %v903 = vunpack.c.l.b16 %v863
  %v904 = vunpack.c.l.b16 %v864
  %v905 = vunpack.c.l.b16 %v865
  %v906 = vunpack.c.l.b16 %v866
  %v907 = vunpack.c.l.b16 %v867
  %v908 = vunpack.c.l.b16 %v868
  %v909 = vunpack.c.l.b16 %v869
  %v910 = vunpack.c.l.b16 %v870
  %v911 = vunpack.c.l.b16 %v871
  %v912 = vunpack.c.l.b16 %v872
  %v913 = vunpack.c.l.b16 %v873
  %v914 = vunpack.c.l.b16 %v874
  %v915 = vunpack.c.l.b16 %v875
  %v916 = vunpack.c.l.b16 %v876
  %v917 = vpack.c.b16 %v902, %v901
  %v918 = vpack.c.b16 %v904, %v903
  %v919 = vpack.c.b16 %v906, %v905
  %v920 = vpack.c.b16 %v908, %v907
  %v921 = vpack.c.b16 %v910, %v909
  %v922 = vpack.c.b16 %v912, %v911
  %v923 = vpack.c.b16 %v914, %v913
  %v924 = vpack.c.b16 %v916, %v915
  %933 = vmatprep.subr.bf16.mxu0 0
  %934 = vmatpush1.bf16.msra.mxu0 %v917
  %935 = vmatprep.subr.bf16.mxu0 0
  %936 = vmatpush1.bf16.msra.mxu0 %v918
  %937 = vmatprep.subr.bf16.mxu0 0
  %938 = vmatpush1.bf16.msra.mxu0 %v919
  %939 = vmatprep.subr.bf16.mxu0 0
  %940 = vmatpush1.bf16.msra.mxu0 %v920
  %941 = vmatprep.subr.bf16.mxu0 0
  %942 = vmatpush1.bf16.msra.mxu0 %v921
  %943 = vmatprep.subr.bf16.mxu0 0
  %944 = vmatpush1.bf16.msra.mxu0 %v922
  %945 = vmatprep.subr.bf16.mxu0 0
  %946 = vmatpush1.bf16.msra.mxu0 %v923
  %947 = vmatprep.subr.bf16.mxu0 0
  %948 = vmatpush1.bf16.msra.mxu0 %v924
  %949 = vmatprep.subr.bf16.mxu0 0
  %950 = vmatpush1.bf16.msra.mxu0 0
  %951 = vmatprep.subr.bf16.mxu0 0
  %952 = vmatpush1.bf16.msra.mxu0 0
  %953 = vmatprep.subr.bf16.mxu0 0
  %954 = vmatpush1.bf16.msra.mxu0 0
  %955 = vmatprep.subr.bf16.mxu0 0
  %956 = vmatpush1.bf16.msra.mxu0 0
  %957 = vmatprep.subr.bf16.mxu0 0
  %958 = vmatpush1.bf16.msra.mxu0 0
  %959 = vmatprep.subr.bf16.mxu0 0
  %960 = vmatpush1.bf16.msra.mxu0 0
  %961 = vmatprep.subr.bf16.mxu0 0
  %962 = vmatpush1.bf16.msra.mxu0 0
  %963 = vmatprep.subr.bf16.mxu0 0
  %964 = vmatpush1.bf16.msra.mxu0 0
  %965 = vmatprep.mubr.bf16.mxu0 0
  %966 = vmatmul.mubr.bf16.gmra.mrb[0].mxu0 %v349
  %v967 = vpop.f32.mrb[0].mxu0
  %v968 = vadd.f32 0.0, %v967
  %v969 = vpop.f32.mrb[0].mxu0
  %v970 = vpop.f32.mrb[0].mxu0
  %v971 = vadd.f32 0.0, %v970
  %v972 = vpop.f32.mrb[0].mxu0
  %973 = vmatprep.mubr.bf16.mxu0 0
  %974 = vmatmul.mubr.bf16.gmra.mrb[0].mxu0 %v350
  %v975 = vpop.f32.mrb[0].mxu0
  %v976 = vadd.f32 0.0, %v975
  %v977 = vpop.f32.mrb[0].mxu0
  %v978 = vpop.f32.mrb[0].mxu0
  %v979 = vadd.f32 0.0, %v978
  %v980 = vpop.f32.mrb[0].mxu0
  %981 = vmatprep.mubr.bf16.mxu0 0
  %982 = vmatmul.mubr.bf16.gmra.mrb[0].mxu0 %v351
  %v983 = vpop.f32.mrb[0].mxu0
  %v984 = vadd.f32 0.0, %v983
  %v985 = vpop.f32.mrb[0].mxu0
  %v986 = vpop.f32.mrb[0].mxu0
  %v987 = vadd.f32 0.0, %v986
  %v988 = vpop.f32.mrb[0].mxu0
  %989 = vmatprep.mubr.bf16.mxu0 0
  %990 = vmatmul.mubr.bf16.gmra.mrb[0].mxu0 %v881
  %v991 = vpop.f32.mrb[0].mxu0
  %v992 = vadd.f32 0.0, %v991
  %v993 = vpop.f32.mrb[0].mxu0
  %v994 = vpop.f32.mrb[0].mxu0
  %v995 = vadd.f32 0.0, %v994
  %v996 = vpop.f32.mrb[0].mxu0
  %997 = vmatprep.mubr.bf16.mxu0 0
  %998 = vmatmul.mubr.bf16.gmra.mrb[0].mxu0 %v353
  %v999 = vpop.f32.mrb[0].mxu0
  %v1000 = vadd.f32 0.0, %v999
  %v1001 = vpop.f32.mrb[0].mxu0
  %v1002 = vpop.f32.mrb[0].mxu0
  %v1003 = vadd.f32 0.0, %v1002
  %v1004 = vpop.f32.mrb[0].mxu0
  %1005 = vmatprep.mubr.bf16.mxu0 0
  %1006 = vmatmul.mubr.bf16.gmra.mrb[0].mxu0 %v354
  %v1007 = vpop.f32.mrb[0].mxu0
  %v1008 = vadd.f32 0.0, %v1007
  %v1009 = vpop.f32.mrb[0].mxu0
  %v1010 = vpop.f32.mrb[0].mxu0
  %v1011 = vadd.f32 0.0, %v1010
  %v1012 = vpop.f32.mrb[0].mxu0
  %1013 = vmatprep.mubr.bf16.mxu0 0
  %1014 = vmatmul.mubr.bf16.gmra.mrb[0].mxu0 %v355
  %v1015 = vpop.f32.mrb[0].mxu0
  %v1016 = vadd.f32 0.0, %v1015
  %v1017 = vpop.f32.mrb[0].mxu0
  %v1018 = vpop.f32.mrb[0].mxu0
  %v1019 = vadd.f32 0.0, %v1018
  %v1020 = vpop.f32.mrb[0].mxu0
  %1021 = vmatprep.mubr.bf16.mxu0 0
  %1022 = vmatmul.mubr.bf16.gmra.mrb[0].mxu0 %v882
  %v1023 = vpop.f32.mrb[0].mxu0
  %v1024 = vadd.f32 0.0, %v1023
  %v1025 = vpop.f32.mrb[0].mxu0
  %v1026 = vpop.f32.mrb[0].mxu0
  %v1027 = vadd.f32 0.0, %v1026
  %v1028 = vpop.f32.mrb[0].mxu0
  %1029 = vdwg.mxu0
  %v1030 = vadd.f32 %v844, %v968
  %v1031 = vadd.f32 %v845, %v971
  %v1032 = vadd.f32 %v846, %v976
  %v1033 = vadd.f32 %v847, %v979
  %v1034 = vadd.f32 %v848, %v984
  %v1035 = vadd.f32 %v849, %v987
  %v1036 = vadd.f32 %v850, %v992
  %v1037 = vadd.f32 %v851, %v995
  %v1038 = vadd.f32 %v852, %v1000
  %v1039 = vadd.f32 %v853, %v1003
  %v1040 = vadd.f32 %v854, %v1008
  %v1041 = vadd.f32 %v855, %v1011
  %v1042 = vadd.f32 %v856, %v1016
  %v1043 = vadd.f32 %v857, %v1019
  %v1044 = vadd.f32 %v858, %v1024
  %v1045 = vadd.f32 %v859, %v1027
  %s1046 = scalar_lea.vmem %s4, 1280
  %v1047 = vld [vmem:[%s1046] sm:$0xf]
  %v1048 = vld [vmem:[%s1046 + $0x4] sm:$0xf]
  %v1049 = vld [vmem:[%s1046 + $0x8] sm:$0xf]
  %v1050 = vld [vmem:[%s1046 + $0xc] sm:$0xf]
  %v1051 = vld [vmem:[%s1046 + $0x10] sm:$0xf]
  %v1052 = vld [vmem:[%s1046 + $0x14] sm:$0xf]
  %v1053 = vld [vmem:[%s1046 + $0x18] sm:$0xf]
  %v1054 = vld [vmem:[%s1046 + $0x1c] sm:$0xf]
  %v1055 = vld [vmem:[%s1046 + $0x20] sm:$0xf]
  %v1056 = vld [vmem:[%s1046 + $0x24] sm:$0xf]
  %v1057 = vld [vmem:[%s1046 + $0x28] sm:$0xf]
  %v1058 = vld [vmem:[%s1046 + $0x2c] sm:$0xf]
  %v1059 = vld [vmem:[%s1046 + $0x30] sm:$0xf]
  %v1060 = vld [vmem:[%s1046 + $0x34] sm:$0xf]
  %v1061 = vld [vmem:[%s1046 + $0x38] sm:$0xf]
  %v1062 = vld [vmem:[%s1046 + $0x3c] sm:$0xf]
  %v1065 = vunpack.c.l.b16 %v270
  %v1066 = vunpack.c.l.b16 %v282
  %v1067 = vpack.c.b16 %v1065, %v879
  %v1068 = vpack.c.b16 %v1066, %v880
  %v1087 = vunpack.c.l.b16 %v1047
  %v1088 = vunpack.c.l.b16 %v1048
  %v1089 = vunpack.c.l.b16 %v1049
  %v1090 = vunpack.c.l.b16 %v1050
  %v1091 = vunpack.c.l.b16 %v1051
  %v1092 = vunpack.c.l.b16 %v1052
  %v1093 = vunpack.c.l.b16 %v1053
  %v1094 = vunpack.c.l.b16 %v1054
  %v1095 = vunpack.c.l.b16 %v1055
  %v1096 = vunpack.c.l.b16 %v1056
  %v1097 = vunpack.c.l.b16 %v1057
  %v1098 = vunpack.c.l.b16 %v1058
  %v1099 = vunpack.c.l.b16 %v1059
  %v1100 = vunpack.c.l.b16 %v1060
  %v1101 = vunpack.c.l.b16 %v1061
  %v1102 = vunpack.c.l.b16 %v1062
  %v1103 = vpack.c.b16 %v1088, %v1087
  %v1104 = vpack.c.b16 %v1090, %v1089
  %v1105 = vpack.c.b16 %v1092, %v1091
  %v1106 = vpack.c.b16 %v1094, %v1093
  %v1107 = vpack.c.b16 %v1096, %v1095
  %v1108 = vpack.c.b16 %v1098, %v1097
  %v1109 = vpack.c.b16 %v1100, %v1099
  %v1110 = vpack.c.b16 %v1102, %v1101
  %1119 = vmatprep.subr.bf16.mxu0 0
  %1120 = vmatpush1.bf16.msra.mxu0 %v1103
  %1121 = vmatprep.subr.bf16.mxu0 0
  %1122 = vmatpush1.bf16.msra.mxu0 %v1104
  %1123 = vmatprep.subr.bf16.mxu0 0
  %1124 = vmatpush1.bf16.msra.mxu0 %v1105
  %1125 = vmatprep.subr.bf16.mxu0 0
  %1126 = vmatpush1.bf16.msra.mxu0 %v1106
  %1127 = vmatprep.subr.bf16.mxu0 0
  %1128 = vmatpush1.bf16.msra.mxu0 %v1107
  %1129 = vmatprep.subr.bf16.mxu0 0
  %1130 = vmatpush1.bf16.msra.mxu0 %v1108
  %1131 = vmatprep.subr.bf16.mxu0 0
  %1132 = vmatpush1.bf16.msra.mxu0 %v1109
  %1133 = vmatprep.subr.bf16.mxu0 0
  %1134 = vmatpush1.bf16.msra.mxu0 %v1110
  %1135 = vmatprep.subr.bf16.mxu0 0
  %1136 = vmatpush1.bf16.msra.mxu0 0
  %1137 = vmatprep.subr.bf16.mxu0 0
  %1138 = vmatpush1.bf16.msra.mxu0 0
  %1139 = vmatprep.subr.bf16.mxu0 0
  %1140 = vmatpush1.bf16.msra.mxu0 0
  %1141 = vmatprep.subr.bf16.mxu0 0
  %1142 = vmatpush1.bf16.msra.mxu0 0
  %1143 = vmatprep.subr.bf16.mxu0 0
  %1144 = vmatpush1.bf16.msra.mxu0 0
  %1145 = vmatprep.subr.bf16.mxu0 0
  %1146 = vmatpush1.bf16.msra.mxu0 0
  %1147 = vmatprep.subr.bf16.mxu0 0
  %1148 = vmatpush1.bf16.msra.mxu0 0
  %1149 = vmatprep.subr.bf16.mxu0 0
  %1150 = vmatpush1.bf16.msra.mxu0 0
  %1151 = vmatprep.mubr.bf16.mxu0 0
  %1152 = vmatmul.mubr.bf16.gmra.mrb[0].mxu0 %v515
  %v1153 = vpop.f32.mrb[0].mxu0
  %v1154 = vadd.f32 0.0, %v1153
  %v1155 = vpop.f32.mrb[0].mxu0
  %v1156 = vpop.f32.mrb[0].mxu0
  %v1157 = vadd.f32 0.0, %v1156
  %v1158 = vpop.f32.mrb[0].mxu0
  %1159 = vmatprep.mubr.bf16.mxu0 0
  %1160 = vmatmul.mubr.bf16.gmra.mrb[0].mxu0 %v516
  %v1161 = vpop.f32.mrb[0].mxu0
  %v1162 = vadd.f32 0.0, %v1161
  %v1163 = vpop.f32.mrb[0].mxu0
  %v1164 = vpop.f32.mrb[0].mxu0
  %v1165 = vadd.f32 0.0, %v1164
  %v1166 = vpop.f32.mrb[0].mxu0
  %1167 = vmatprep.mubr.bf16.mxu0 0
  %1168 = vmatmul.mubr.bf16.gmra.mrb[0].mxu0 %v695
  %v1169 = vpop.f32.mrb[0].mxu0
  %v1170 = vadd.f32 0.0, %v1169
  %v1171 = vpop.f32.mrb[0].mxu0
  %v1172 = vpop.f32.mrb[0].mxu0
  %v1173 = vadd.f32 0.0, %v1172
  %v1174 = vpop.f32.mrb[0].mxu0
  %1175 = vmatprep.mubr.bf16.mxu0 0
  %1176 = vmatmul.mubr.bf16.gmra.mrb[0].mxu0 %v1067
  %v1177 = vpop.f32.mrb[0].mxu0
  %v1178 = vadd.f32 0.0, %v1177
  %v1179 = vpop.f32.mrb[0].mxu0
  %v1180 = vpop.f32.mrb[0].mxu0
  %v1181 = vadd.f32 0.0, %v1180
  %v1182 = vpop.f32.mrb[0].mxu0
  %1183 = vmatprep.mubr.bf16.mxu0 0
  %1184 = vmatmul.mubr.bf16.gmra.mrb[0].mxu0 %v519
  %v1185 = vpop.f32.mrb[0].mxu0
  %v1186 = vadd.f32 0.0, %v1185
  %v1187 = vpop.f32.mrb[0].mxu0
  %v1188 = vpop.f32.mrb[0].mxu0
  %v1189 = vadd.f32 0.0, %v1188
  %v1190 = vpop.f32.mrb[0].mxu0
  %1191 = vmatprep.mubr.bf16.mxu0 0
  %1192 = vmatmul.mubr.bf16.gmra.mrb[0].mxu0 %v520
  %v1193 = vpop.f32.mrb[0].mxu0
  %v1194 = vadd.f32 0.0, %v1193
  %v1195 = vpop.f32.mrb[0].mxu0
  %v1196 = vpop.f32.mrb[0].mxu0
  %v1197 = vadd.f32 0.0, %v1196
  %v1198 = vpop.f32.mrb[0].mxu0
  %1199 = vmatprep.mubr.bf16.mxu0 0
  %1200 = vmatmul.mubr.bf16.gmra.mrb[0].mxu0 %v696
  %v1201 = vpop.f32.mrb[0].mxu0
  %v1202 = vadd.f32 0.0, %v1201
  %v1203 = vpop.f32.mrb[0].mxu0
  %v1204 = vpop.f32.mrb[0].mxu0
  %v1205 = vadd.f32 0.0, %v1204
  %v1206 = vpop.f32.mrb[0].mxu0
  %1207 = vmatprep.mubr.bf16.mxu0 0
  %1208 = vmatmul.mubr.bf16.gmra.mrb[0].mxu0 %v1068
  %v1209 = vpop.f32.mrb[0].mxu0
  %v1210 = vadd.f32 0.0, %v1209
  %v1211 = vpop.f32.mrb[0].mxu0
  %v1212 = vpop.f32.mrb[0].mxu0
  %v1213 = vadd.f32 0.0, %v1212
  %v1214 = vpop.f32.mrb[0].mxu0
  %1215 = vdwg.mxu0
  %v1216 = vadd.f32 %v1030, %v1154
  %v1217 = vadd.f32 %v1031, %v1157
  %v1218 = vadd.f32 %v1032, %v1162
  %v1219 = vadd.f32 %v1033, %v1165
  %v1220 = vadd.f32 %v1034, %v1170
  %v1221 = vadd.f32 %v1035, %v1173
  %v1222 = vadd.f32 %v1036, %v1178
  %v1223 = vadd.f32 %v1037, %v1181
  %v1224 = vadd.f32 %v1038, %v1186
  %v1225 = vadd.f32 %v1039, %v1189
  %v1226 = vadd.f32 %v1040, %v1194
  %v1227 = vadd.f32 %v1041, %v1197
  %v1228 = vadd.f32 %v1042, %v1202
  %v1229 = vadd.f32 %v1043, %v1205
  %v1230 = vadd.f32 %v1044, %v1210
  %v1231 = vadd.f32 %v1045, %v1213
  %v1232 = vpack.c.bf16 %v212, %v211
  %v1233 = vpack.c.bf16 %v214, %v213
  %v1234 = vpack.c.bf16 %v216, %v215
  %v1235 = vpack.c.bf16 %v218, %v217
  %v1236 = vpack.c.bf16 %v220, %v219
  %v1237 = vpack.c.bf16 %v222, %v221
  %v1238 = vpack.c.bf16 %v224, %v223
  %v1239 = vpack.c.bf16 %v226, %v225
  %v1240 = vpack.c.bf16 %v228, %v227
  %v1241 = vpack.c.bf16 %v230, %v229
  %v1242 = vpack.c.bf16 %v232, %v231
  %v1243 = vpack.c.bf16 %v234, %v233
  %v1244 = vpack.c.bf16 %v236, %v235
  %v1245 = vpack.c.bf16 %v238, %v237
  %v1246 = vpack.c.bf16 %v240, %v239
  %v1247 = vpack.c.bf16 %v242, %v241
  %v1248 = vpack.c.bf16 %v244, %v243
  %v1249 = vpack.c.bf16 %v246, %v245
  %v1250 = vpack.c.bf16 %v248, %v247
  %v1251 = vpack.c.bf16 %v250, %v249
  %v1252 = vpack.c.bf16 %v252, %v251
  %v1253 = vpack.c.bf16 %v254, %v253
  %v1254 = vpack.c.bf16 %v256, %v255
  %v1255 = vpack.c.bf16 %v258, %v257
  %v1272 = vunpack.c.l.b16 %v1232
  %v1273 = vunpack.c.h.b16 %v1232
  %v1274 = vunpack.c.l.b16 %v1233
  %v1275 = vunpack.c.h.b16 %v1233
  %v1276 = vunpack.c.l.b16 %v1234
  %v1277 = vunpack.c.h.b16 %v1234
  %v1278 = vunpack.c.l.b16 %v1235
  %v1279 = vunpack.c.h.b16 %v1235
  %v1280 = vunpack.c.l.b16 %v1236
  %v1281 = vunpack.c.h.b16 %v1236
  %v1282 = vunpack.c.l.b16 %v1237
  %v1283 = vunpack.c.h.b16 %v1237
  %v1284 = vunpack.c.l.b16 %v1238
  %v1285 = vunpack.c.h.b16 %v1238
  %v1286 = vunpack.c.l.b16 %v1239
  %v1287 = vunpack.c.h.b16 %v1239
  %v1288 = vunpack.c.l.b16 %v1244
  %v1289 = vunpack.c.h.b16 %v1244
  %v1290 = vunpack.c.l.b16 %v1245
  %v1291 = vunpack.c.h.b16 %v1245
  %v1292 = vunpack.c.l.b16 %v1246
  %v1293 = vunpack.c.h.b16 %v1246
  %v1294 = vunpack.c.l.b16 %v1247
  %v1295 = vunpack.c.h.b16 %v1247
  %v1296 = vunpack.c.l.b16 %v1248
  %v1297 = vunpack.c.h.b16 %v1248
  %v1298 = vunpack.c.l.b16 %v1249
  %v1299 = vunpack.c.h.b16 %v1249
  %v1300 = vunpack.c.l.b16 %v1250
  %v1301 = vunpack.c.h.b16 %v1250
  %v1302 = vunpack.c.l.b16 %v1251
  %v1303 = vunpack.c.h.b16 %v1251
  %v1304 = vpack.c.b16 %v1272, %v1272
  %v1305 = vpack.c.b16 %v1273, %v1273
  %v1306 = vpack.c.b16 %v1274, %v1274
  %v1307 = vpack.c.b16 %v1275, %v1275
  %v1308 = vpack.c.b16 %v1276, %v1276
  %v1309 = vpack.c.b16 %v1277, %v1277
  %v1310 = vpack.c.b16 %v1278, %v1278
  %v1311 = vpack.c.b16 %v1279, %v1279
  %v1312 = vpack.c.b16 %v1280, %v1280
  %v1313 = vpack.c.b16 %v1281, %v1281
  %v1314 = vpack.c.b16 %v1282, %v1282
  %v1315 = vpack.c.b16 %v1283, %v1283
  %v1316 = vpack.c.b16 %v1284, %v1284
  %v1317 = vpack.c.b16 %v1285, %v1285
  %v1318 = vpack.c.b16 %v1286, %v1286
  %v1319 = vpack.c.b16 %v1287, %v1287
  %v1320 = vpack.c.b16 %v1288, %v1288
  %v1321 = vpack.c.b16 %v1289, %v1289
  %v1322 = vpack.c.b16 %v1290, %v1290
  %v1323 = vpack.c.b16 %v1291, %v1291
  %v1324 = vpack.c.b16 %v1292, %v1292
  %v1325 = vpack.c.b16 %v1293, %v1293
  %v1326 = vpack.c.b16 %v1294, %v1294
  %v1327 = vpack.c.b16 %v1295, %v1295
  %v1328 = vpack.c.b16 %v1296, %v1296
  %v1329 = vpack.c.b16 %v1297, %v1297
  %v1330 = vpack.c.b16 %v1298, %v1298
  %v1331 = vpack.c.b16 %v1299, %v1299
  %v1332 = vpack.c.b16 %v1300, %v1300
  %v1333 = vpack.c.b16 %v1301, %v1301
  %v1334 = vpack.c.b16 %v1302, %v1302
  %v1335 = vpack.c.b16 %v1303, %v1303
  %vm1336 = vsmask.f32 3328
  %vm1337 = vsmask.f32 7440
  %vm1338 = vmor %vm1336, %vm1337
  %v1340 = vshrl.u32 %v1304, 16
  %v1342 = vrot.slane %v1340, 4
  %v1343 = vshll.u32 %v1304, 16
  %v1345 = vrot.slane %v1343, 5
  %v1346 = vor.u32 %v1342, %v1345
  %v1347 = vrot.slane %v1346, 4
  %v1349 = vshll.u32 %v1305, 16
  %v1351 = vrot.slane %v1349, 5
  %v1352 = vsel %vm1338, %v1347, %v1351
  %v1354 = vshrl.u32 %v1306, 16
  %v1356 = vrot.slane %v1354, 4
  %v1357 = vshll.u32 %v1306, 16
  %v1359 = vrot.slane %v1357, 5
  %v1360 = vor.u32 %v1356, %v1359
  %v1361 = vrot.slane %v1360, 4
  %v1363 = vshll.u32 %v1307, 16
  %v1365 = vrot.slane %v1363, 5
  %v1366 = vsel %vm1338, %v1361, %v1365
  %v1368 = vshrl.u32 %v1308, 16
  %v1370 = vrot.slane %v1368, 4
  %v1371 = vshll.u32 %v1308, 16
  %v1373 = vrot.slane %v1371, 5
  %v1374 = vor.u32 %v1370, %v1373
  %v1375 = vrot.slane %v1374, 4
  %v1377 = vshll.u32 %v1309, 16
  %v1379 = vrot.slane %v1377, 5
  %v1380 = vsel %vm1338, %v1375, %v1379
  %v1382 = vshrl.u32 %v1310, 16
  %v1384 = vrot.slane %v1382, 4
  %v1385 = vshll.u32 %v1310, 16
  %v1387 = vrot.slane %v1385, 5
  %v1388 = vor.u32 %v1384, %v1387
  %v1389 = vrot.slane %v1388, 4
  %v1391 = vshll.u32 %v1311, 16
  %v1393 = vrot.slane %v1391, 5
  %v1394 = vsel %vm1338, %v1389, %v1393
  %v1396 = vshrl.u32 %v1312, 16
  %v1398 = vrot.slane %v1396, 4
  %v1399 = vshll.u32 %v1312, 16
  %v1401 = vrot.slane %v1399, 5
  %v1402 = vor.u32 %v1398, %v1401
  %v1403 = vrot.slane %v1402, 4
  %v1405 = vshll.u32 %v1313, 16
  %v1407 = vrot.slane %v1405, 5
  %v1408 = vsel %vm1338, %v1403, %v1407
  %v1410 = vshrl.u32 %v1314, 16
  %v1412 = vrot.slane %v1410, 4
  %v1413 = vshll.u32 %v1314, 16
  %v1415 = vrot.slane %v1413, 5
  %v1416 = vor.u32 %v1412, %v1415
  %v1417 = vrot.slane %v1416, 4
  %v1419 = vshll.u32 %v1315, 16
  %v1421 = vrot.slane %v1419, 5
  %v1422 = vsel %vm1338, %v1417, %v1421
  %v1424 = vshrl.u32 %v1316, 16
  %v1426 = vrot.slane %v1424, 4
  %v1427 = vshll.u32 %v1316, 16
  %v1429 = vrot.slane %v1427, 5
  %v1430 = vor.u32 %v1426, %v1429
  %v1431 = vrot.slane %v1430, 4
  %v1433 = vshll.u32 %v1317, 16
  %v1435 = vrot.slane %v1433, 5
  %v1436 = vsel %vm1338, %v1431, %v1435
  %v1438 = vshrl.u32 %v1318, 16
  %v1440 = vrot.slane %v1438, 4
  %v1441 = vshll.u32 %v1318, 16
  %v1443 = vrot.slane %v1441, 5
  %v1444 = vor.u32 %v1440, %v1443
  %v1445 = vrot.slane %v1444, 4
  %v1447 = vshll.u32 %v1319, 16
  %v1449 = vrot.slane %v1447, 5
  %v1450 = vsel %vm1338, %v1445, %v1449
  %v1452 = vshrl.u32 %v1320, 16
  %v1454 = vrot.slane %v1452, 4
  %v1455 = vshll.u32 %v1320, 16
  %v1457 = vrot.slane %v1455, 5
  %v1458 = vor.u32 %v1454, %v1457
  %v1459 = vrot.slane %v1458, 4
  %v1461 = vshll.u32 %v1321, 16
  %v1463 = vrot.slane %v1461, 5
  %v1464 = vsel %vm1338, %v1459, %v1463
  %v1466 = vshrl.u32 %v1322, 16
  %v1468 = vrot.slane %v1466, 4
  %v1469 = vshll.u32 %v1322, 16
  %v1471 = vrot.slane %v1469, 5
  %v1472 = vor.u32 %v1468, %v1471
  %v1473 = vrot.slane %v1472, 4
  %v1475 = vshll.u32 %v1323, 16
  %v1477 = vrot.slane %v1475, 5
  %v1478 = vsel %vm1338, %v1473, %v1477
  %v1480 = vshrl.u32 %v1324, 16
  %v1482 = vrot.slane %v1480, 4
  %v1483 = vshll.u32 %v1324, 16
  %v1485 = vrot.slane %v1483, 5
  %v1486 = vor.u32 %v1482, %v1485
  %v1487 = vrot.slane %v1486, 4
  %v1489 = vshll.u32 %v1325, 16
  %v1491 = vrot.slane %v1489, 5
  %v1492 = vsel %vm1338, %v1487, %v1491
  %v1494 = vshrl.u32 %v1326, 16
  %v1496 = vrot.slane %v1494, 4
  %v1497 = vshll.u32 %v1326, 16
  %v1499 = vrot.slane %v1497, 5
  %v1500 = vor.u32 %v1496, %v1499
  %v1501 = vrot.slane %v1500, 4
  %v1503 = vshll.u32 %v1327, 16
  %v1505 = vrot.slane %v1503, 5
  %v1506 = vsel %vm1338, %v1501, %v1505
  %v1508 = vshrl.u32 %v1328, 16
  %v1510 = vrot.slane %v1508, 4
  %v1511 = vshll.u32 %v1328, 16
  %v1513 = vrot.slane %v1511, 5
  %v1514 = vor.u32 %v1510, %v1513
  %v1515 = vrot.slane %v1514, 4
  %v1517 = vshll.u32 %v1329, 16
  %v1519 = vrot.slane %v1517, 5
  %v1520 = vsel %vm1338, %v1515, %v1519
  %v1522 = vshrl.u32 %v1330, 16
  %v1524 = vrot.slane %v1522, 4
  %v1525 = vshll.u32 %v1330, 16
  %v1527 = vrot.slane %v1525, 5
  %v1528 = vor.u32 %v1524, %v1527
  %v1529 = vrot.slane %v1528, 4
  %v1531 = vshll.u32 %v1331, 16
  %v1533 = vrot.slane %v1531, 5
  %v1534 = vsel %vm1338, %v1529, %v1533
  %v1536 = vshrl.u32 %v1332, 16
  %v1538 = vrot.slane %v1536, 4
  %v1539 = vshll.u32 %v1332, 16
  %v1541 = vrot.slane %v1539, 5
  %v1542 = vor.u32 %v1538, %v1541
  %v1543 = vrot.slane %v1542, 4
  %v1545 = vshll.u32 %v1333, 16
  %v1547 = vrot.slane %v1545, 5
  %v1548 = vsel %vm1338, %v1543, %v1547
  %v1550 = vshrl.u32 %v1334, 16
  %v1552 = vrot.slane %v1550, 4
  %v1553 = vshll.u32 %v1334, 16
  %v1555 = vrot.slane %v1553, 5
  %v1556 = vor.u32 %v1552, %v1555
  %v1557 = vrot.slane %v1556, 4
  %v1559 = vshll.u32 %v1335, 16
  %v1561 = vrot.slane %v1559, 5
  %v1562 = vsel %vm1338, %v1557, %v1561
  %s1563 = scalar_lea.vmem %s4, 64
  %v1564 = vld [vmem:[%s1563] sm:$0xf]
  %v1565 = vld [vmem:[%s1563 + $0x4] sm:$0xf]
  %v1566 = vld [vmem:[%s1563 + $0x8] sm:$0xf]
  %v1567 = vld [vmem:[%s1563 + $0xc] sm:$0xf]
  %v1568 = vld [vmem:[%s1563 + $0x10] sm:$0xf]
  %v1569 = vld [vmem:[%s1563 + $0x14] sm:$0xf]
  %v1570 = vld [vmem:[%s1563 + $0x18] sm:$0xf]
  %v1571 = vld [vmem:[%s1563 + $0x1c] sm:$0xf]
  %v1572 = vld [vmem:[%s1563 + $0x20] sm:$0xf]
  %v1573 = vld [vmem:[%s1563 + $0x24] sm:$0xf]
  %v1574 = vld [vmem:[%s1563 + $0x28] sm:$0xf]
  %v1575 = vld [vmem:[%s1563 + $0x2c] sm:$0xf]
  %v1576 = vld [vmem:[%s1563 + $0x30] sm:$0xf]
  %v1577 = vld [vmem:[%s1563 + $0x34] sm:$0xf]
  %v1578 = vld [vmem:[%s1563 + $0x38] sm:$0xf]
  %v1579 = vld [vmem:[%s1563 + $0x3c] sm:$0xf]
  %v1580 = vunpack.c.l.b16 %v1352
  %v1581 = vunpack.c.l.b16 %v1366
  %v1582 = vunpack.c.l.b16 %v1380
  %v1583 = vunpack.c.l.b16 %v1394
  %v1584 = vunpack.c.l.b16 %v1408
  %v1585 = vunpack.c.l.b16 %v1422
  %v1586 = vunpack.c.l.b16 %v1436
  %v1587 = vunpack.c.l.b16 %v1450
  %v1588 = vunpack.c.l.b16 %v1464
  %v1589 = vunpack.c.l.b16 %v1478
  %v1590 = vunpack.c.l.b16 %v1492
  %v1591 = vunpack.c.l.b16 %v1506
  %v1592 = vunpack.c.l.b16 %v1520
  %v1593 = vunpack.c.l.b16 %v1534
  %v1594 = vunpack.c.l.b16 %v1548
  %v1595 = vunpack.c.l.b16 %v1562
  %v1596 = vpack.c.b16 %v1581, %v1580
  %v1597 = vpack.c.b16 %v1583, %v1582
  %v1598 = vpack.c.b16 %v1585, %v1584
  %v1599 = vpack.c.b16 %v1587, %v1586
  %v1600 = vpack.c.b16 %v1589, %v1588
  %v1601 = vpack.c.b16 %v1591, %v1590
  %v1602 = vpack.c.b16 %v1593, %v1592
  %v1603 = vpack.c.b16 %v1595, %v1594
  %v1628 = vunpack.c.l.b16 %v1564
  %v1629 = vunpack.c.l.b16 %v1565
  %v1630 = vunpack.c.l.b16 %v1566
  %v1631 = vunpack.c.l.b16 %v1567
  %v1632 = vunpack.c.l.b16 %v1568
  %v1633 = vunpack.c.l.b16 %v1569
  %v1634 = vunpack.c.l.b16 %v1570
  %v1635 = vunpack.c.l.b16 %v1571
  %v1636 = vunpack.c.l.b16 %v1572
  %v1637 = vunpack.c.l.b16 %v1573
  %v1638 = vunpack.c.l.b16 %v1574
  %v1639 = vunpack.c.l.b16 %v1575
  %v1640 = vunpack.c.l.b16 %v1576
  %v1641 = vunpack.c.l.b16 %v1577
  %v1642 = vunpack.c.l.b16 %v1578
  %v1643 = vunpack.c.l.b16 %v1579
  %v1644 = vpack.c.b16 %v1629, %v1628
  %v1645 = vpack.c.b16 %v1631, %v1630
  %v1646 = vpack.c.b16 %v1633, %v1632
  %v1647 = vpack.c.b16 %v1635, %v1634
  %v1648 = vpack.c.b16 %v1637, %v1636
  %v1649 = vpack.c.b16 %v1639, %v1638
  %v1650 = vpack.c.b16 %v1641, %v1640
  %v1651 = vpack.c.b16 %v1643, %v1642
  %1660 = vmatprep.subr.bf16.mxu0 0
  %1661 = vmatpush1.bf16.msra.mxu0 %v1644
  %1662 = vmatprep.subr.bf16.mxu0 0
  %1663 = vmatpush1.bf16.msra.mxu0 %v1645
  %1664 = vmatprep.subr.bf16.mxu0 0
  %1665 = vmatpush1.bf16.msra.mxu0 %v1646
  %1666 = vmatprep.subr.bf16.mxu0 0
  %1667 = vmatpush1.bf16.msra.mxu0 %v1647
  %1668 = vmatprep.subr.bf16.mxu0 0
  %1669 = vmatpush1.bf16.msra.mxu0 %v1648
  %1670 = vmatprep.subr.bf16.mxu0 0
  %1671 = vmatpush1.bf16.msra.mxu0 %v1649
  %1672 = vmatprep.subr.bf16.mxu0 0
  %1673 = vmatpush1.bf16.msra.mxu0 %v1650
  %1674 = vmatprep.subr.bf16.mxu0 0
  %1675 = vmatpush1.bf16.msra.mxu0 %v1651
  %1676 = vmatprep.subr.bf16.mxu0 0
  %1677 = vmatpush1.bf16.msra.mxu0 0
  %1678 = vmatprep.subr.bf16.mxu0 0
  %1679 = vmatpush1.bf16.msra.mxu0 0
  %1680 = vmatprep.subr.bf16.mxu0 0
  %1681 = vmatpush1.bf16.msra.mxu0 0
  %1682 = vmatprep.subr.bf16.mxu0 0
  %1683 = vmatpush1.bf16.msra.mxu0 0
  %1684 = vmatprep.subr.bf16.mxu0 0
  %1685 = vmatpush1.bf16.msra.mxu0 0
  %1686 = vmatprep.subr.bf16.mxu0 0
  %1687 = vmatpush1.bf16.msra.mxu0 0
  %1688 = vmatprep.subr.bf16.mxu0 0
  %1689 = vmatpush1.bf16.msra.mxu0 0
  %1690 = vmatprep.subr.bf16.mxu0 0
  %1691 = vmatpush1.bf16.msra.mxu0 0
  %1692 = vmatprep.mubr.bf16.mxu0 0
  %1693 = vmatmul.mubr.bf16.gmra.mrb[0].mxu0 %v1596
  %v1694 = vpop.f32.mrb[0].mxu0
  %v1695 = vadd.f32 0.0, %v1694
  %v1696 = vpop.f32.mrb[0].mxu0
  %v1697 = vpop.f32.mrb[0].mxu0
  %v1698 = vadd.f32 0.0, %v1697
  %v1699 = vpop.f32.mrb[0].mxu0
  %1700 = vmatprep.mubr.bf16.mxu0 0
  %1701 = vmatmul.mubr.bf16.gmra.mrb[0].mxu0 %v1597
  %v1702 = vpop.f32.mrb[0].mxu0
  %v1703 = vadd.f32 0.0, %v1702
  %v1704 = vpop.f32.mrb[0].mxu0
  %v1705 = vpop.f32.mrb[0].mxu0
  %v1706 = vadd.f32 0.0, %v1705
  %v1707 = vpop.f32.mrb[0].mxu0
  %1708 = vmatprep.mubr.bf16.mxu0 0
  %1709 = vmatmul.mubr.bf16.gmra.mrb[0].mxu0 %v1598
  %v1710 = vpop.f32.mrb[0].mxu0
  %v1711 = vadd.f32 0.0, %v1710
  %v1712 = vpop.f32.mrb[0].mxu0
  %v1713 = vpop.f32.mrb[0].mxu0
  %v1714 = vadd.f32 0.0, %v1713
  %v1715 = vpop.f32.mrb[0].mxu0
  %1716 = vmatprep.mubr.bf16.mxu0 0
  %1717 = vmatmul.mubr.bf16.gmra.mrb[0].mxu0 %v1599
  %v1718 = vpop.f32.mrb[0].mxu0
  %v1719 = vadd.f32 0.0, %v1718
  %v1720 = vpop.f32.mrb[0].mxu0
  %v1721 = vpop.f32.mrb[0].mxu0
  %v1722 = vadd.f32 0.0, %v1721
  %v1723 = vpop.f32.mrb[0].mxu0
  %1724 = vmatprep.mubr.bf16.mxu0 0
  %1725 = vmatmul.mubr.bf16.gmra.mrb[0].mxu0 %v1600
  %v1726 = vpop.f32.mrb[0].mxu0
  %v1727 = vadd.f32 0.0, %v1726
  %v1728 = vpop.f32.mrb[0].mxu0
  %v1729 = vpop.f32.mrb[0].mxu0
  %v1730 = vadd.f32 0.0, %v1729
  %v1731 = vpop.f32.mrb[0].mxu0
  %1732 = vmatprep.mubr.bf16.mxu0 0
  %1733 = vmatmul.mubr.bf16.gmra.mrb[0].mxu0 %v1601
  %v1734 = vpop.f32.mrb[0].mxu0
  %v1735 = vadd.f32 0.0, %v1734
  %v1736 = vpop.f32.mrb[0].mxu0
  %v1737 = vpop.f32.mrb[0].mxu0
  %v1738 = vadd.f32 0.0, %v1737
  %v1739 = vpop.f32.mrb[0].mxu0
  %1740 = vmatprep.mubr.bf16.mxu0 0
  %1741 = vmatmul.mubr.bf16.gmra.mrb[0].mxu0 %v1602
  %v1742 = vpop.f32.mrb[0].mxu0
  %v1743 = vadd.f32 0.0, %v1742
  %v1744 = vpop.f32.mrb[0].mxu0
  %v1745 = vpop.f32.mrb[0].mxu0
  %v1746 = vadd.f32 0.0, %v1745
  %v1747 = vpop.f32.mrb[0].mxu0
  %1748 = vmatprep.mubr.bf16.mxu0 0
  %1749 = vmatmul.mubr.bf16.gmra.mrb[0].mxu0 %v1603
  %v1750 = vpop.f32.mrb[0].mxu0
  %v1751 = vadd.f32 0.0, %v1750
  %v1752 = vpop.f32.mrb[0].mxu0
  %v1753 = vpop.f32.mrb[0].mxu0
  %v1754 = vadd.f32 0.0, %v1753
  %v1755 = vpop.f32.mrb[0].mxu0
  %1756 = vdwg.mxu0
  %v1757 = vadd.f32 %v1216, %v1695
  %v1758 = vadd.f32 %v1217, %v1698
  %v1759 = vadd.f32 %v1218, %v1703
  %v1760 = vadd.f32 %v1219, %v1706
  %v1761 = vadd.f32 %v1220, %v1711
  %v1762 = vadd.f32 %v1221, %v1714
  %v1763 = vadd.f32 %v1222, %v1719
  %v1764 = vadd.f32 %v1223, %v1722
  %v1765 = vadd.f32 %v1224, %v1727
  %v1766 = vadd.f32 %v1225, %v1730
  %v1767 = vadd.f32 %v1226, %v1735
  %v1768 = vadd.f32 %v1227, %v1738
  %v1769 = vadd.f32 %v1228, %v1743
  %v1770 = vadd.f32 %v1229, %v1746
  %v1771 = vadd.f32 %v1230, %v1751
  %v1772 = vadd.f32 %v1231, %v1754
  %v1775 = vunpack.c.l.b16 %v1240
  %v1776 = vunpack.c.h.b16 %v1240
  %v1777 = vunpack.c.l.b16 %v1252
  %v1778 = vunpack.c.h.b16 %v1252
  %v1779 = vpack.c.b16 %v1775, %v1775
  %v1780 = vpack.c.b16 %v1776, %v1776
  %v1781 = vpack.c.b16 %v1777, %v1777
  %v1782 = vpack.c.b16 %v1778, %v1778
  %v1784 = vshrl.u32 %v1779, 16
  %v1786 = vrot.slane %v1784, 4
  %v1787 = vshll.u32 %v1779, 16
  %v1789 = vrot.slane %v1787, 5
  %v1790 = vor.u32 %v1786, %v1789
  %v1791 = vrot.slane %v1790, 4
  %v1793 = vshll.u32 %v1780, 16
  %v1795 = vrot.slane %v1793, 5
  %v1796 = vsel %vm1338, %v1791, %v1795
  %v1798 = vshrl.u32 %v1781, 16
  %v1800 = vrot.slane %v1798, 4
  %v1801 = vshll.u32 %v1781, 16
  %v1803 = vrot.slane %v1801, 5
  %v1804 = vor.u32 %v1800, %v1803
  %v1805 = vrot.slane %v1804, 4
  %v1807 = vshll.u32 %v1782, 16
  %v1809 = vrot.slane %v1807, 5
  %v1810 = vsel %vm1338, %v1805, %v1809
  %s1811 = scalar_lea.vmem %s4, 384
  %v1812 = vld [vmem:[%s1811] sm:$0xf]
  %v1813 = vld [vmem:[%s1811 + $0x4] sm:$0xf]
  %v1814 = vld [vmem:[%s1811 + $0x8] sm:$0xf]
  %v1815 = vld [vmem:[%s1811 + $0xc] sm:$0xf]
  %v1816 = vld [vmem:[%s1811 + $0x10] sm:$0xf]
  %v1817 = vld [vmem:[%s1811 + $0x14] sm:$0xf]
  %v1818 = vld [vmem:[%s1811 + $0x18] sm:$0xf]
  %v1819 = vld [vmem:[%s1811 + $0x1c] sm:$0xf]
  %v1820 = vld [vmem:[%s1811 + $0x20] sm:$0xf]
  %v1821 = vld [vmem:[%s1811 + $0x24] sm:$0xf]
  %v1822 = vld [vmem:[%s1811 + $0x28] sm:$0xf]
  %v1823 = vld [vmem:[%s1811 + $0x2c] sm:$0xf]
  %v1824 = vld [vmem:[%s1811 + $0x30] sm:$0xf]
  %v1825 = vld [vmem:[%s1811 + $0x34] sm:$0xf]
  %v1826 = vld [vmem:[%s1811 + $0x38] sm:$0xf]
  %v1827 = vld [vmem:[%s1811 + $0x3c] sm:$0xf]
  %v1828 = vunpack.c.l.b16 %v1796
  %v1829 = vunpack.c.l.b16 %v1810
  %v1830 = vpack.c.b16 %v1582, %v1581
  %v1831 = vpack.c.b16 %v1584, %v1583
  %v1832 = vpack.c.b16 %v1586, %v1585
  %v1833 = vpack.c.b16 %v1828, %v1587
  %v1834 = vpack.c.b16 %v1590, %v1589
  %v1835 = vpack.c.b16 %v1592, %v1591
  %v1836 = vpack.c.b16 %v1594, %v1593
  %v1837 = vpack.c.b16 %v1829, %v1595
  %v1862 = vunpack.c.l.b16 %v1812
  %v1863 = vunpack.c.l.b16 %v1813
  %v1864 = vunpack.c.l.b16 %v1814
  %v1865 = vunpack.c.l.b16 %v1815
  %v1866 = vunpack.c.l.b16 %v1816
  %v1867 = vunpack.c.l.b16 %v1817
  %v1868 = vunpack.c.l.b16 %v1818
  %v1869 = vunpack.c.l.b16 %v1819
  %v1870 = vunpack.c.l.b16 %v1820
  %v1871 = vunpack.c.l.b16 %v1821
  %v1872 = vunpack.c.l.b16 %v1822
  %v1873 = vunpack.c.l.b16 %v1823
  %v1874 = vunpack.c.l.b16 %v1824
  %v1875 = vunpack.c.l.b16 %v1825
  %v1876 = vunpack.c.l.b16 %v1826
  %v1877 = vunpack.c.l.b16 %v1827
  %v1878 = vpack.c.b16 %v1863, %v1862
  %v1879 = vpack.c.b16 %v1865, %v1864
  %v1880 = vpack.c.b16 %v1867, %v1866
  %v1881 = vpack.c.b16 %v1869, %v1868
  %v1882 = vpack.c.b16 %v1871, %v1870
  %v1883 = vpack.c.b16 %v1873, %v1872
  %v1884 = vpack.c.b16 %v1875, %v1874
  %v1885 = vpack.c.b16 %v1877, %v1876
  %1894 = vmatprep.subr.bf16.mxu0 0
  %1895 = vmatpush1.bf16.msra.mxu0 %v1878
  %1896 = vmatprep.subr.bf16.mxu0 0
  %1897 = vmatpush1.bf16.msra.mxu0 %v1879
  %1898 = vmatprep.subr.bf16.mxu0 0
  %1899 = vmatpush1.bf16.msra.mxu0 %v1880
  %1900 = vmatprep.subr.bf16.mxu0 0
  %1901 = vmatpush1.bf16.msra.mxu0 %v1881
  %1902 = vmatprep.subr.bf16.mxu0 0
  %1903 = vmatpush1.bf16.msra.mxu0 %v1882
  %1904 = vmatprep.subr.bf16.mxu0 0
  %1905 = vmatpush1.bf16.msra.mxu0 %v1883
  %1906 = vmatprep.subr.bf16.mxu0 0
  %1907 = vmatpush1.bf16.msra.mxu0 %v1884
  %1908 = vmatprep.subr.bf16.mxu0 0
  %1909 = vmatpush1.bf16.msra.mxu0 %v1885
  %1910 = vmatprep.subr.bf16.mxu0 0
  %1911 = vmatpush1.bf16.msra.mxu0 0
  %1912 = vmatprep.subr.bf16.mxu0 0
  %1913 = vmatpush1.bf16.msra.mxu0 0
  %1914 = vmatprep.subr.bf16.mxu0 0
  %1915 = vmatpush1.bf16.msra.mxu0 0
  %1916 = vmatprep.subr.bf16.mxu0 0
  %1917 = vmatpush1.bf16.msra.mxu0 0
  %1918 = vmatprep.subr.bf16.mxu0 0
  %1919 = vmatpush1.bf16.msra.mxu0 0
  %1920 = vmatprep.subr.bf16.mxu0 0
  %1921 = vmatpush1.bf16.msra.mxu0 0
  %1922 = vmatprep.subr.bf16.mxu0 0
  %1923 = vmatpush1.bf16.msra.mxu0 0
  %1924 = vmatprep.subr.bf16.mxu0 0
  %1925 = vmatpush1.bf16.msra.mxu0 0
  %1926 = vmatprep.mubr.bf16.mxu0 0
  %1927 = vmatmul.mubr.bf16.gmra.mrb[0].mxu0 %v1830
  %v1928 = vpop.f32.mrb[0].mxu0
  %v1929 = vadd.f32 0.0, %v1928
  %v1930 = vpop.f32.mrb[0].mxu0
  %v1931 = vpop.f32.mrb[0].mxu0
  %v1932 = vadd.f32 0.0, %v1931
  %v1933 = vpop.f32.mrb[0].mxu0
  %1934 = vmatprep.mubr.bf16.mxu0 0
  %1935 = vmatmul.mubr.bf16.gmra.mrb[0].mxu0 %v1831
  %v1936 = vpop.f32.mrb[0].mxu0
  %v1937 = vadd.f32 0.0, %v1936
  %v1938 = vpop.f32.mrb[0].mxu0
  %v1939 = vpop.f32.mrb[0].mxu0
  %v1940 = vadd.f32 0.0, %v1939
  %v1941 = vpop.f32.mrb[0].mxu0
  %1942 = vmatprep.mubr.bf16.mxu0 0
  %1943 = vmatmul.mubr.bf16.gmra.mrb[0].mxu0 %v1832
  %v1944 = vpop.f32.mrb[0].mxu0
  %v1945 = vadd.f32 0.0, %v1944
  %v1946 = vpop.f32.mrb[0].mxu0
  %v1947 = vpop.f32.mrb[0].mxu0
  %v1948 = vadd.f32 0.0, %v1947
  %v1949 = vpop.f32.mrb[0].mxu0
  %1950 = vmatprep.mubr.bf16.mxu0 0
  %1951 = vmatmul.mubr.bf16.gmra.mrb[0].mxu0 %v1833
  %v1952 = vpop.f32.mrb[0].mxu0
  %v1953 = vadd.f32 0.0, %v1952
  %v1954 = vpop.f32.mrb[0].mxu0
  %v1955 = vpop.f32.mrb[0].mxu0
  %v1956 = vadd.f32 0.0, %v1955
  %v1957 = vpop.f32.mrb[0].mxu0
  %1958 = vmatprep.mubr.bf16.mxu0 0
  %1959 = vmatmul.mubr.bf16.gmra.mrb[0].mxu0 %v1834
  %v1960 = vpop.f32.mrb[0].mxu0
  %v1961 = vadd.f32 0.0, %v1960
  %v1962 = vpop.f32.mrb[0].mxu0
  %v1963 = vpop.f32.mrb[0].mxu0
  %v1964 = vadd.f32 0.0, %v1963
  %v1965 = vpop.f32.mrb[0].mxu0
  %1966 = vmatprep.mubr.bf16.mxu0 0
  %1967 = vmatmul.mubr.bf16.gmra.mrb[0].mxu0 %v1835
  %v1968 = vpop.f32.mrb[0].mxu0
  %v1969 = vadd.f32 0.0, %v1968
  %v1970 = vpop.f32.mrb[0].mxu0
  %v1971 = vpop.f32.mrb[0].mxu0
  %v1972 = vadd.f32 0.0, %v1971
  %v1973 = vpop.f32.mrb[0].mxu0
  %1974 = vmatprep.mubr.bf16.mxu0 0
  %1975 = vmatmul.mubr.bf16.gmra.mrb[0].mxu0 %v1836
  %v1976 = vpop.f32.mrb[0].mxu0
  %v1977 = vadd.f32 0.0, %v1976
  %v1978 = vpop.f32.mrb[0].mxu0
  %v1979 = vpop.f32.mrb[0].mxu0
  %v1980 = vadd.f32 0.0, %v1979
  %v1981 = vpop.f32.mrb[0].mxu0
  %1982 = vmatprep.mubr.bf16.mxu0 0
  %1983 = vmatmul.mubr.bf16.gmra.mrb[0].mxu0 %v1837
  %v1984 = vpop.f32.mrb[0].mxu0
  %v1985 = vadd.f32 0.0, %v1984
  %v1986 = vpop.f32.mrb[0].mxu0
  %v1987 = vpop.f32.mrb[0].mxu0
  %v1988 = vadd.f32 0.0, %v1987
  %v1989 = vpop.f32.mrb[0].mxu0
  %1990 = vdwg.mxu0
  %v1991 = vadd.f32 %v1757, %v1929
  %v1992 = vadd.f32 %v1758, %v1932
  %v1993 = vadd.f32 %v1759, %v1937
  %v1994 = vadd.f32 %v1760, %v1940
  %v1995 = vadd.f32 %v1761, %v1945
  %v1996 = vadd.f32 %v1762, %v1948
  %v1997 = vadd.f32 %v1763, %v1953
  %v1998 = vadd.f32 %v1764, %v1956
  %v1999 = vadd.f32 %v1765, %v1961
  %v2000 = vadd.f32 %v1766, %v1964
  %v2001 = vadd.f32 %v1767, %v1969
  %v2002 = vadd.f32 %v1768, %v1972
  %v2003 = vadd.f32 %v1769, %v1977
  %v2004 = vadd.f32 %v1770, %v1980
  %v2005 = vadd.f32 %v1771, %v1985
  %v2006 = vadd.f32 %v1772, %v1988
  %v2009 = vunpack.c.l.b16 %v1241
  %v2010 = vunpack.c.h.b16 %v1241
  %v2011 = vunpack.c.l.b16 %v1253
  %v2012 = vunpack.c.h.b16 %v1253
  %v2013 = vpack.c.b16 %v2009, %v2009
  %v2014 = vpack.c.b16 %v2010, %v2010
  %v2015 = vpack.c.b16 %v2011, %v2011
  %v2016 = vpack.c.b16 %v2012, %v2012
  %v2018 = vshrl.u32 %v2013, 16
  %v2020 = vrot.slane %v2018, 4
  %v2021 = vshll.u32 %v2013, 16
  %v2023 = vrot.slane %v2021, 5
  %v2024 = vor.u32 %v2020, %v2023
  %v2025 = vrot.slane %v2024, 4
  %v2027 = vshll.u32 %v2014, 16
  %v2029 = vrot.slane %v2027, 5
  %v2030 = vsel %vm1338, %v2025, %v2029
  %v2032 = vshrl.u32 %v2015, 16
  %v2034 = vrot.slane %v2032, 4
  %v2035 = vshll.u32 %v2015, 16
  %v2037 = vrot.slane %v2035, 5
  %v2038 = vor.u32 %v2034, %v2037
  %v2039 = vrot.slane %v2038, 4
  %v2041 = vshll.u32 %v2016, 16
  %v2043 = vrot.slane %v2041, 5
  %v2044 = vsel %vm1338, %v2039, %v2043
  %s2045 = scalar_lea.vmem %s4, 704
  %v2046 = vld [vmem:[%s2045] sm:$0xf]
  %v2047 = vld [vmem:[%s2045 + $0x4] sm:$0xf]
  %v2048 = vld [vmem:[%s2045 + $0x8] sm:$0xf]
  %v2049 = vld [vmem:[%s2045 + $0xc] sm:$0xf]
  %v2050 = vld [vmem:[%s2045 + $0x10] sm:$0xf]
  %v2051 = vld [vmem:[%s2045 + $0x14] sm:$0xf]
  %v2052 = vld [vmem:[%s2045 + $0x18] sm:$0xf]
  %v2053 = vld [vmem:[%s2045 + $0x1c] sm:$0xf]
  %v2054 = vld [vmem:[%s2045 + $0x20] sm:$0xf]
  %v2055 = vld [vmem:[%s2045 + $0x24] sm:$0xf]
  %v2056 = vld [vmem:[%s2045 + $0x28] sm:$0xf]
  %v2057 = vld [vmem:[%s2045 + $0x2c] sm:$0xf]
  %v2058 = vld [vmem:[%s2045 + $0x30] sm:$0xf]
  %v2059 = vld [vmem:[%s2045 + $0x34] sm:$0xf]
  %v2060 = vld [vmem:[%s2045 + $0x38] sm:$0xf]
  %v2061 = vld [vmem:[%s2045 + $0x3c] sm:$0xf]
  %v2062 = vunpack.c.l.b16 %v2030
  %v2063 = vunpack.c.l.b16 %v2044
  %v2064 = vpack.c.b16 %v2062, %v1828
  %v2065 = vpack.c.b16 %v2063, %v1829
  %v2084 = vunpack.c.l.b16 %v2046
  %v2085 = vunpack.c.l.b16 %v2047
  %v2086 = vunpack.c.l.b16 %v2048
  %v2087 = vunpack.c.l.b16 %v2049
  %v2088 = vunpack.c.l.b16 %v2050
  %v2089 = vunpack.c.l.b16 %v2051
  %v2090 = vunpack.c.l.b16 %v2052
  %v2091 = vunpack.c.l.b16 %v2053
  %v2092 = vunpack.c.l.b16 %v2054
  %v2093 = vunpack.c.l.b16 %v2055
  %v2094 = vunpack.c.l.b16 %v2056
  %v2095 = vunpack.c.l.b16 %v2057
  %v2096 = vunpack.c.l.b16 %v2058
  %v2097 = vunpack.c.l.b16 %v2059
  %v2098 = vunpack.c.l.b16 %v2060
  %v2099 = vunpack.c.l.b16 %v2061
  %v2100 = vpack.c.b16 %v2085, %v2084
  %v2101 = vpack.c.b16 %v2087, %v2086
  %v2102 = vpack.c.b16 %v2089, %v2088
  %v2103 = vpack.c.b16 %v2091, %v2090
  %v2104 = vpack.c.b16 %v2093, %v2092
  %v2105 = vpack.c.b16 %v2095, %v2094
  %v2106 = vpack.c.b16 %v2097, %v2096
  %v2107 = vpack.c.b16 %v2099, %v2098
  %2116 = vmatprep.subr.bf16.mxu0 0
  %2117 = vmatpush1.bf16.msra.mxu0 %v2100
  %2118 = vmatprep.subr.bf16.mxu0 0
  %2119 = vmatpush1.bf16.msra.mxu0 %v2101
  %2120 = vmatprep.subr.bf16.mxu0 0
  %2121 = vmatpush1.bf16.msra.mxu0 %v2102
  %2122 = vmatprep.subr.bf16.mxu0 0
  %2123 = vmatpush1.bf16.msra.mxu0 %v2103
  %2124 = vmatprep.subr.bf16.mxu0 0
  %2125 = vmatpush1.bf16.msra.mxu0 %v2104
  %2126 = vmatprep.subr.bf16.mxu0 0
  %2127 = vmatpush1.bf16.msra.mxu0 %v2105
  %2128 = vmatprep.subr.bf16.mxu0 0
  %2129 = vmatpush1.bf16.msra.mxu0 %v2106
  %2130 = vmatprep.subr.bf16.mxu0 0
  %2131 = vmatpush1.bf16.msra.mxu0 %v2107
  %2132 = vmatprep.subr.bf16.mxu0 0
  %2133 = vmatpush1.bf16.msra.mxu0 0
  %2134 = vmatprep.subr.bf16.mxu0 0
  %2135 = vmatpush1.bf16.msra.mxu0 0
  %2136 = vmatprep.subr.bf16.mxu0 0
  %2137 = vmatpush1.bf16.msra.mxu0 0
  %2138 = vmatprep.subr.bf16.mxu0 0
  %2139 = vmatpush1.bf16.msra.mxu0 0
  %2140 = vmatprep.subr.bf16.mxu0 0
  %2141 = vmatpush1.bf16.msra.mxu0 0
  %2142 = vmatprep.subr.bf16.mxu0 0
  %2143 = vmatpush1.bf16.msra.mxu0 0
  %2144 = vmatprep.subr.bf16.mxu0 0
  %2145 = vmatpush1.bf16.msra.mxu0 0
  %2146 = vmatprep.subr.bf16.mxu0 0
  %2147 = vmatpush1.bf16.msra.mxu0 0
  %2148 = vmatprep.mubr.bf16.mxu0 0
  %2149 = vmatmul.mubr.bf16.gmra.mrb[0].mxu0 %v1597
  %v2150 = vpop.f32.mrb[0].mxu0
  %v2151 = vadd.f32 0.0, %v2150
  %v2152 = vpop.f32.mrb[0].mxu0
  %v2153 = vpop.f32.mrb[0].mxu0
  %v2154 = vadd.f32 0.0, %v2153
  %v2155 = vpop.f32.mrb[0].mxu0
  %2156 = vmatprep.mubr.bf16.mxu0 0
  %2157 = vmatmul.mubr.bf16.gmra.mrb[0].mxu0 %v1598
  %v2158 = vpop.f32.mrb[0].mxu0
  %v2159 = vadd.f32 0.0, %v2158
  %v2160 = vpop.f32.mrb[0].mxu0
  %v2161 = vpop.f32.mrb[0].mxu0
  %v2162 = vadd.f32 0.0, %v2161
  %v2163 = vpop.f32.mrb[0].mxu0
  %2164 = vmatprep.mubr.bf16.mxu0 0
  %2165 = vmatmul.mubr.bf16.gmra.mrb[0].mxu0 %v1599
  %v2166 = vpop.f32.mrb[0].mxu0
  %v2167 = vadd.f32 0.0, %v2166
  %v2168 = vpop.f32.mrb[0].mxu0
  %v2169 = vpop.f32.mrb[0].mxu0
  %v2170 = vadd.f32 0.0, %v2169
  %v2171 = vpop.f32.mrb[0].mxu0
  %2172 = vmatprep.mubr.bf16.mxu0 0
  %2173 = vmatmul.mubr.bf16.gmra.mrb[0].mxu0 %v2064
  %v2174 = vpop.f32.mrb[0].mxu0
  %v2175 = vadd.f32 0.0, %v2174
  %v2176 = vpop.f32.mrb[0].mxu0
  %v2177 = vpop.f32.mrb[0].mxu0
  %v2178 = vadd.f32 0.0, %v2177
  %v2179 = vpop.f32.mrb[0].mxu0
  %2180 = vmatprep.mubr.bf16.mxu0 0
  %2181 = vmatmul.mubr.bf16.gmra.mrb[0].mxu0 %v1601
  %v2182 = vpop.f32.mrb[0].mxu0
  %v2183 = vadd.f32 0.0, %v2182
  %v2184 = vpop.f32.mrb[0].mxu0
  %v2185 = vpop.f32.mrb[0].mxu0
  %v2186 = vadd.f32 0.0, %v2185
  %v2187 = vpop.f32.mrb[0].mxu0
  %2188 = vmatprep.mubr.bf16.mxu0 0
  %2189 = vmatmul.mubr.bf16.gmra.mrb[0].mxu0 %v1602
  %v2190 = vpop.f32.mrb[0].mxu0
  %v2191 = vadd.f32 0.0, %v2190
  %v2192 = vpop.f32.mrb[0].mxu0
  %v2193 = vpop.f32.mrb[0].mxu0
  %v2194 = vadd.f32 0.0, %v2193
  %v2195 = vpop.f32.mrb[0].mxu0
  %2196 = vmatprep.mubr.bf16.mxu0 0
  %2197 = vmatmul.mubr.bf16.gmra.mrb[0].mxu0 %v1603
  %v2198 = vpop.f32.mrb[0].mxu0
  %v2199 = vadd.f32 0.0, %v2198
  %v2200 = vpop.f32.mrb[0].mxu0
  %v2201 = vpop.f32.mrb[0].mxu0
  %v2202 = vadd.f32 0.0, %v2201
  %v2203 = vpop.f32.mrb[0].mxu0
  %2204 = vmatprep.mubr.bf16.mxu0 0
  %2205 = vmatmul.mubr.bf16.gmra.mrb[0].mxu0 %v2065
  %v2206 = vpop.f32.mrb[0].mxu0
  %v2207 = vadd.f32 0.0, %v2206
  %v2208 = vpop.f32.mrb[0].mxu0
  %v2209 = vpop.f32.mrb[0].mxu0
  %v2210 = vadd.f32 0.0, %v2209
  %v2211 = vpop.f32.mrb[0].mxu0
  %2212 = vdwg.mxu0
  %v2213 = vadd.f32 %v1991, %v2151
  %v2214 = vadd.f32 %v1992, %v2154
  %v2215 = vadd.f32 %v1993, %v2159
  %v2216 = vadd.f32 %v1994, %v2162
  %v2217 = vadd.f32 %v1995, %v2167
  %v2218 = vadd.f32 %v1996, %v2170
  %v2219 = vadd.f32 %v1997, %v2175
  %v2220 = vadd.f32 %v1998, %v2178
  %v2221 = vadd.f32 %v1999, %v2183
  %v2222 = vadd.f32 %v2000, %v2186
  %v2223 = vadd.f32 %v2001, %v2191
  %v2224 = vadd.f32 %v2002, %v2194
  %v2225 = vadd.f32 %v2003, %v2199
  %v2226 = vadd.f32 %v2004, %v2202
  %v2227 = vadd.f32 %v2005, %v2207
  %v2228 = vadd.f32 %v2006, %v2210
  %v2231 = vunpack.c.l.b16 %v1242
  %v2232 = vunpack.c.h.b16 %v1242
  %v2233 = vunpack.c.l.b16 %v1254
  %v2234 = vunpack.c.h.b16 %v1254
  %v2235 = vpack.c.b16 %v2231, %v2231
  %v2236 = vpack.c.b16 %v2232, %v2232
  %v2237 = vpack.c.b16 %v2233, %v2233
  %v2238 = vpack.c.b16 %v2234, %v2234
  %v2240 = vshrl.u32 %v2235, 16
  %v2242 = vrot.slane %v2240, 4
  %v2243 = vshll.u32 %v2235, 16
  %v2245 = vrot.slane %v2243, 5
  %v2246 = vor.u32 %v2242, %v2245
  %v2247 = vrot.slane %v2246, 4
  %v2249 = vshll.u32 %v2236, 16
  %v2251 = vrot.slane %v2249, 5
  %v2252 = vsel %vm1338, %v2247, %v2251
  %v2254 = vshrl.u32 %v2237, 16
  %v2256 = vrot.slane %v2254, 4
  %v2257 = vshll.u32 %v2237, 16
  %v2259 = vrot.slane %v2257, 5
  %v2260 = vor.u32 %v2256, %v2259
  %v2261 = vrot.slane %v2260, 4
  %v2263 = vshll.u32 %v2238, 16
  %v2265 = vrot.slane %v2263, 5
  %v2266 = vsel %vm1338, %v2261, %v2265
  %s2267 = scalar_lea.vmem %s4, 1024
  %v2268 = vld [vmem:[%s2267] sm:$0xf]
  %v2269 = vld [vmem:[%s2267 + $0x4] sm:$0xf]
  %v2270 = vld [vmem:[%s2267 + $0x8] sm:$0xf]
  %v2271 = vld [vmem:[%s2267 + $0xc] sm:$0xf]
  %v2272 = vld [vmem:[%s2267 + $0x10] sm:$0xf]
  %v2273 = vld [vmem:[%s2267 + $0x14] sm:$0xf]
  %v2274 = vld [vmem:[%s2267 + $0x18] sm:$0xf]
  %v2275 = vld [vmem:[%s2267 + $0x1c] sm:$0xf]
  %v2276 = vld [vmem:[%s2267 + $0x20] sm:$0xf]
  %v2277 = vld [vmem:[%s2267 + $0x24] sm:$0xf]
  %v2278 = vld [vmem:[%s2267 + $0x28] sm:$0xf]
  %v2279 = vld [vmem:[%s2267 + $0x2c] sm:$0xf]
  %v2280 = vld [vmem:[%s2267 + $0x30] sm:$0xf]
  %v2281 = vld [vmem:[%s2267 + $0x34] sm:$0xf]
  %v2282 = vld [vmem:[%s2267 + $0x38] sm:$0xf]
  %v2283 = vld [vmem:[%s2267 + $0x3c] sm:$0xf]
  %v2284 = vunpack.c.l.b16 %v2252
  %v2285 = vunpack.c.l.b16 %v2266
  %v2286 = vpack.c.b16 %v2284, %v2062
  %v2287 = vpack.c.b16 %v2285, %v2063
  %v2306 = vunpack.c.l.b16 %v2268
  %v2307 = vunpack.c.l.b16 %v2269
  %v2308 = vunpack.c.l.b16 %v2270
  %v2309 = vunpack.c.l.b16 %v2271
  %v2310 = vunpack.c.l.b16 %v2272
  %v2311 = vunpack.c.l.b16 %v2273
  %v2312 = vunpack.c.l.b16 %v2274
  %v2313 = vunpack.c.l.b16 %v2275
  %v2314 = vunpack.c.l.b16 %v2276
  %v2315 = vunpack.c.l.b16 %v2277
  %v2316 = vunpack.c.l.b16 %v2278
  %v2317 = vunpack.c.l.b16 %v2279
  %v2318 = vunpack.c.l.b16 %v2280
  %v2319 = vunpack.c.l.b16 %v2281
  %v2320 = vunpack.c.l.b16 %v2282
  %v2321 = vunpack.c.l.b16 %v2283
  %v2322 = vpack.c.b16 %v2307, %v2306
  %v2323 = vpack.c.b16 %v2309, %v2308
  %v2324 = vpack.c.b16 %v2311, %v2310
  %v2325 = vpack.c.b16 %v2313, %v2312
  %v2326 = vpack.c.b16 %v2315, %v2314
  %v2327 = vpack.c.b16 %v2317, %v2316
  %v2328 = vpack.c.b16 %v2319, %v2318
  %v2329 = vpack.c.b16 %v2321, %v2320
  %2338 = vmatprep.subr.bf16.mxu0 0
  %2339 = vmatpush1.bf16.msra.mxu0 %v2322
  %2340 = vmatprep.subr.bf16.mxu0 0
  %2341 = vmatpush1.bf16.msra.mxu0 %v2323
  %2342 = vmatprep.subr.bf16.mxu0 0
  %2343 = vmatpush1.bf16.msra.mxu0 %v2324
  %2344 = vmatprep.subr.bf16.mxu0 0
  %2345 = vmatpush1.bf16.msra.mxu0 %v2325
  %2346 = vmatprep.subr.bf16.mxu0 0
  %2347 = vmatpush1.bf16.msra.mxu0 %v2326
  %2348 = vmatprep.subr.bf16.mxu0 0
  %2349 = vmatpush1.bf16.msra.mxu0 %v2327
  %2350 = vmatprep.subr.bf16.mxu0 0
  %2351 = vmatpush1.bf16.msra.mxu0 %v2328
  %2352 = vmatprep.subr.bf16.mxu0 0
  %2353 = vmatpush1.bf16.msra.mxu0 %v2329
  %2354 = vmatprep.subr.bf16.mxu0 0
  %2355 = vmatpush1.bf16.msra.mxu0 0
  %2356 = vmatprep.subr.bf16.mxu0 0
  %2357 = vmatpush1.bf16.msra.mxu0 0
  %2358 = vmatprep.subr.bf16.mxu0 0
  %2359 = vmatpush1.bf16.msra.mxu0 0
  %2360 = vmatprep.subr.bf16.mxu0 0
  %2361 = vmatpush1.bf16.msra.mxu0 0
  %2362 = vmatprep.subr.bf16.mxu0 0
  %2363 = vmatpush1.bf16.msra.mxu0 0
  %2364 = vmatprep.subr.bf16.mxu0 0
  %2365 = vmatpush1.bf16.msra.mxu0 0
  %2366 = vmatprep.subr.bf16.mxu0 0
  %2367 = vmatpush1.bf16.msra.mxu0 0
  %2368 = vmatprep.subr.bf16.mxu0 0
  %2369 = vmatpush1.bf16.msra.mxu0 0
  %2370 = vmatprep.mubr.bf16.mxu0 0
  %2371 = vmatmul.mubr.bf16.gmra.mrb[0].mxu0 %v1831
  %v2372 = vpop.f32.mrb[0].mxu0
  %v2373 = vadd.f32 0.0, %v2372
  %v2374 = vpop.f32.mrb[0].mxu0
  %v2375 = vpop.f32.mrb[0].mxu0
  %v2376 = vadd.f32 0.0, %v2375
  %v2377 = vpop.f32.mrb[0].mxu0
  %2378 = vmatprep.mubr.bf16.mxu0 0
  %2379 = vmatmul.mubr.bf16.gmra.mrb[0].mxu0 %v1832
  %v2380 = vpop.f32.mrb[0].mxu0
  %v2381 = vadd.f32 0.0, %v2380
  %v2382 = vpop.f32.mrb[0].mxu0
  %v2383 = vpop.f32.mrb[0].mxu0
  %v2384 = vadd.f32 0.0, %v2383
  %v2385 = vpop.f32.mrb[0].mxu0
  %2386 = vmatprep.mubr.bf16.mxu0 0
  %2387 = vmatmul.mubr.bf16.gmra.mrb[0].mxu0 %v1833
  %v2388 = vpop.f32.mrb[0].mxu0
  %v2389 = vadd.f32 0.0, %v2388
  %v2390 = vpop.f32.mrb[0].mxu0
  %v2391 = vpop.f32.mrb[0].mxu0
  %v2392 = vadd.f32 0.0, %v2391
  %v2393 = vpop.f32.mrb[0].mxu0
  %2394 = vmatprep.mubr.bf16.mxu0 0
  %2395 = vmatmul.mubr.bf16.gmra.mrb[0].mxu0 %v2286
  %v2396 = vpop.f32.mrb[0].mxu0
  %v2397 = vadd.f32 0.0, %v2396
  %v2398 = vpop.f32.mrb[0].mxu0
  %v2399 = vpop.f32.mrb[0].mxu0
  %v2400 = vadd.f32 0.0, %v2399
  %v2401 = vpop.f32.mrb[0].mxu0
  %2402 = vmatprep.mubr.bf16.mxu0 0
  %2403 = vmatmul.mubr.bf16.gmra.mrb[0].mxu0 %v1835
  %v2404 = vpop.f32.mrb[0].mxu0
  %v2405 = vadd.f32 0.0, %v2404
  %v2406 = vpop.f32.mrb[0].mxu0
  %v2407 = vpop.f32.mrb[0].mxu0
  %v2408 = vadd.f32 0.0, %v2407
  %v2409 = vpop.f32.mrb[0].mxu0
  %2410 = vmatprep.mubr.bf16.mxu0 0
  %2411 = vmatmul.mubr.bf16.gmra.mrb[0].mxu0 %v1836
  %v2412 = vpop.f32.mrb[0].mxu0
  %v2413 = vadd.f32 0.0, %v2412
  %v2414 = vpop.f32.mrb[0].mxu0
  %v2415 = vpop.f32.mrb[0].mxu0
  %v2416 = vadd.f32 0.0, %v2415
  %v2417 = vpop.f32.mrb[0].mxu0
  %2418 = vmatprep.mubr.bf16.mxu0 0
  %2419 = vmatmul.mubr.bf16.gmra.mrb[0].mxu0 %v1837
  %v2420 = vpop.f32.mrb[0].mxu0
  %v2421 = vadd.f32 0.0, %v2420
  %v2422 = vpop.f32.mrb[0].mxu0
  %v2423 = vpop.f32.mrb[0].mxu0
  %v2424 = vadd.f32 0.0, %v2423
  %v2425 = vpop.f32.mrb[0].mxu0
  %2426 = vmatprep.mubr.bf16.mxu0 0
  %2427 = vmatmul.mubr.bf16.gmra.mrb[0].mxu0 %v2287
  %v2428 = vpop.f32.mrb[0].mxu0
  %v2429 = vadd.f32 0.0, %v2428
  %v2430 = vpop.f32.mrb[0].mxu0
  %v2431 = vpop.f32.mrb[0].mxu0
  %v2432 = vadd.f32 0.0, %v2431
  %v2433 = vpop.f32.mrb[0].mxu0
  %2434 = vdwg.mxu0
  %v2435 = vadd.f32 %v2213, %v2373
  %v2436 = vadd.f32 %v2214, %v2376
  %v2437 = vadd.f32 %v2215, %v2381
  %v2438 = vadd.f32 %v2216, %v2384
  %v2439 = vadd.f32 %v2217, %v2389
  %v2440 = vadd.f32 %v2218, %v2392
  %v2441 = vadd.f32 %v2219, %v2397
  %v2442 = vadd.f32 %v2220, %v2400
  %v2443 = vadd.f32 %v2221, %v2405
  %v2444 = vadd.f32 %v2222, %v2408
  %v2445 = vadd.f32 %v2223, %v2413
  %v2446 = vadd.f32 %v2224, %v2416
  %v2447 = vadd.f32 %v2225, %v2421
  %v2448 = vadd.f32 %v2226, %v2424
  %v2449 = vadd.f32 %v2227, %v2429
  %v2450 = vadd.f32 %v2228, %v2432
  %v2453 = vunpack.c.l.b16 %v1243
  %v2454 = vunpack.c.h.b16 %v1243
  %v2455 = vunpack.c.l.b16 %v1255
  %v2456 = vunpack.c.h.b16 %v1255
  %v2457 = vpack.c.b16 %v2453, %v2453
  %v2458 = vpack.c.b16 %v2454, %v2454
  %v2459 = vpack.c.b16 %v2455, %v2455
  %v2460 = vpack.c.b16 %v2456, %v2456
  %v2462 = vshrl.u32 %v2457, 16
  %v2464 = vrot.slane %v2462, 4
  %v2465 = vshll.u32 %v2457, 16
  %v2467 = vrot.slane %v2465, 5
  %v2468 = vor.u32 %v2464, %v2467
  %v2469 = vrot.slane %v2468, 4
  %v2471 = vshll.u32 %v2458, 16
  %v2473 = vrot.slane %v2471, 5
  %v2474 = vsel %vm1338, %v2469, %v2473
  %v2476 = vshrl.u32 %v2459, 16
  %v2478 = vrot.slane %v2476, 4
  %v2479 = vshll.u32 %v2459, 16
  %v2481 = vrot.slane %v2479, 5
  %v2482 = vor.u32 %v2478, %v2481
  %v2483 = vrot.slane %v2482, 4
  %v2485 = vshll.u32 %v2460, 16
  %v2487 = vrot.slane %v2485, 5
  %v2488 = vsel %vm1338, %v2483, %v2487
  %s2489 = scalar_lea.vmem %s4, 1344
  %v2490 = vld [vmem:[%s2489] sm:$0xf]
  %v2491 = vld [vmem:[%s2489 + $0x4] sm:$0xf]
  %v2492 = vld [vmem:[%s2489 + $0x8] sm:$0xf]
  %v2493 = vld [vmem:[%s2489 + $0xc] sm:$0xf]
  %v2494 = vld [vmem:[%s2489 + $0x10] sm:$0xf]
  %v2495 = vld [vmem:[%s2489 + $0x14] sm:$0xf]
  %v2496 = vld [vmem:[%s2489 + $0x18] sm:$0xf]
  %v2497 = vld [vmem:[%s2489 + $0x1c] sm:$0xf]
  %v2498 = vld [vmem:[%s2489 + $0x20] sm:$0xf]
  %v2499 = vld [vmem:[%s2489 + $0x24] sm:$0xf]
  %v2500 = vld [vmem:[%s2489 + $0x28] sm:$0xf]
  %v2501 = vld [vmem:[%s2489 + $0x2c] sm:$0xf]
  %v2502 = vld [vmem:[%s2489 + $0x30] sm:$0xf]
  %v2503 = vld [vmem:[%s2489 + $0x34] sm:$0xf]
  %v2504 = vld [vmem:[%s2489 + $0x38] sm:$0xf]
  %v2505 = vld [vmem:[%s2489 + $0x3c] sm:$0xf]
  %v2506 = vunpack.c.l.b16 %v2474
  %v2507 = vunpack.c.l.b16 %v2488
  %v2508 = vpack.c.b16 %v2506, %v2284
  %v2509 = vpack.c.b16 %v2507, %v2285
  %v2528 = vunpack.c.l.b16 %v2490
  %v2529 = vunpack.c.l.b16 %v2491
  %v2530 = vunpack.c.l.b16 %v2492
  %v2531 = vunpack.c.l.b16 %v2493
  %v2532 = vunpack.c.l.b16 %v2494
  %v2533 = vunpack.c.l.b16 %v2495
  %v2534 = vunpack.c.l.b16 %v2496
  %v2535 = vunpack.c.l.b16 %v2497
  %v2536 = vunpack.c.l.b16 %v2498
  %v2537 = vunpack.c.l.b16 %v2499
  %v2538 = vunpack.c.l.b16 %v2500
  %v2539 = vunpack.c.l.b16 %v2501
  %v2540 = vunpack.c.l.b16 %v2502
  %v2541 = vunpack.c.l.b16 %v2503
  %v2542 = vunpack.c.l.b16 %v2504
  %v2543 = vunpack.c.l.b16 %v2505
  %v2544 = vpack.c.b16 %v2529, %v2528
  %v2545 = vpack.c.b16 %v2531, %v2530
  %v2546 = vpack.c.b16 %v2533, %v2532
  %v2547 = vpack.c.b16 %v2535, %v2534
  %v2548 = vpack.c.b16 %v2537, %v2536
  %v2549 = vpack.c.b16 %v2539, %v2538
  %v2550 = vpack.c.b16 %v2541, %v2540
  %v2551 = vpack.c.b16 %v2543, %v2542
  %2560 = vmatprep.subr.bf16.mxu0 0
  %2561 = vmatpush1.bf16.msra.mxu0 %v2544
  %2562 = vmatprep.subr.bf16.mxu0 0
  %2563 = vmatpush1.bf16.msra.mxu0 %v2545
  %2564 = vmatprep.subr.bf16.mxu0 0
  %2565 = vmatpush1.bf16.msra.mxu0 %v2546
  %2566 = vmatprep.subr.bf16.mxu0 0
  %2567 = vmatpush1.bf16.msra.mxu0 %v2547
  %2568 = vmatprep.subr.bf16.mxu0 0
  %2569 = vmatpush1.bf16.msra.mxu0 %v2548
  %2570 = vmatprep.subr.bf16.mxu0 0
  %2571 = vmatpush1.bf16.msra.mxu0 %v2549
  %2572 = vmatprep.subr.bf16.mxu0 0
  %2573 = vmatpush1.bf16.msra.mxu0 %v2550
  %2574 = vmatprep.subr.bf16.mxu0 0
  %2575 = vmatpush1.bf16.msra.mxu0 %v2551
  %2576 = vmatprep.subr.bf16.mxu0 0
  %2577 = vmatpush1.bf16.msra.mxu0 0
  %2578 = vmatprep.subr.bf16.mxu0 0
  %2579 = vmatpush1.bf16.msra.mxu0 0
  %2580 = vmatprep.subr.bf16.mxu0 0
  %2581 = vmatpush1.bf16.msra.mxu0 0
  %2582 = vmatprep.subr.bf16.mxu0 0
  %2583 = vmatpush1.bf16.msra.mxu0 0
  %2584 = vmatprep.subr.bf16.mxu0 0
  %2585 = vmatpush1.bf16.msra.mxu0 0
  %2586 = vmatprep.subr.bf16.mxu0 0
  %2587 = vmatpush1.bf16.msra.mxu0 0
  %2588 = vmatprep.subr.bf16.mxu0 0
  %2589 = vmatpush1.bf16.msra.mxu0 0
  %2590 = vmatprep.subr.bf16.mxu0 0
  %2591 = vmatpush1.bf16.msra.mxu0 0
  %2592 = vmatprep.mubr.bf16.mxu0 0
  %2593 = vmatmul.mubr.bf16.gmra.mrb[0].mxu0 %v1598
  %v2594 = vpop.f32.mrb[0].mxu0
  %v2595 = vadd.f32 0.0, %v2594
  %v2596 = vpop.f32.mrb[0].mxu0
  %v2597 = vpop.f32.mrb[0].mxu0
  %v2598 = vadd.f32 0.0, %v2597
  %v2599 = vpop.f32.mrb[0].mxu0
  %2600 = vmatprep.mubr.bf16.mxu0 0
  %2601 = vmatmul.mubr.bf16.gmra.mrb[0].mxu0 %v1599
  %v2602 = vpop.f32.mrb[0].mxu0
  %v2603 = vadd.f32 0.0, %v2602
  %v2604 = vpop.f32.mrb[0].mxu0
  %v2605 = vpop.f32.mrb[0].mxu0
  %v2606 = vadd.f32 0.0, %v2605
  %v2607 = vpop.f32.mrb[0].mxu0
  %2608 = vmatprep.mubr.bf16.mxu0 0
  %2609 = vmatmul.mubr.bf16.gmra.mrb[0].mxu0 %v2064
  %v2610 = vpop.f32.mrb[0].mxu0
  %v2611 = vadd.f32 0.0, %v2610
  %v2612 = vpop.f32.mrb[0].mxu0
  %v2613 = vpop.f32.mrb[0].mxu0
  %v2614 = vadd.f32 0.0, %v2613
  %v2615 = vpop.f32.mrb[0].mxu0
  %2616 = vmatprep.mubr.bf16.mxu0 0
  %2617 = vmatmul.mubr.bf16.gmra.mrb[0].mxu0 %v2508
  %v2618 = vpop.f32.mrb[0].mxu0
  %v2619 = vadd.f32 0.0, %v2618
  %v2620 = vpop.f32.mrb[0].mxu0
  %v2621 = vpop.f32.mrb[0].mxu0
  %v2622 = vadd.f32 0.0, %v2621
  %v2623 = vpop.f32.mrb[0].mxu0
  %2624 = vmatprep.mubr.bf16.mxu0 0
  %2625 = vmatmul.mubr.bf16.gmra.mrb[0].mxu0 %v1602
  %v2626 = vpop.f32.mrb[0].mxu0
  %v2627 = vadd.f32 0.0, %v2626
  %v2628 = vpop.f32.mrb[0].mxu0
  %v2629 = vpop.f32.mrb[0].mxu0
  %v2630 = vadd.f32 0.0, %v2629
  %v2631 = vpop.f32.mrb[0].mxu0
  %2632 = vmatprep.mubr.bf16.mxu0 0
  %2633 = vmatmul.mubr.bf16.gmra.mrb[0].mxu0 %v1603
  %v2634 = vpop.f32.mrb[0].mxu0
  %v2635 = vadd.f32 0.0, %v2634
  %v2636 = vpop.f32.mrb[0].mxu0
  %v2637 = vpop.f32.mrb[0].mxu0
  %v2638 = vadd.f32 0.0, %v2637
  %v2639 = vpop.f32.mrb[0].mxu0
  %2640 = vmatprep.mubr.bf16.mxu0 0
  %2641 = vmatmul.mubr.bf16.gmra.mrb[0].mxu0 %v2065
  %v2642 = vpop.f32.mrb[0].mxu0
  %v2643 = vadd.f32 0.0, %v2642
  %v2644 = vpop.f32.mrb[0].mxu0
  %v2645 = vpop.f32.mrb[0].mxu0
  %v2646 = vadd.f32 0.0, %v2645
  %v2647 = vpop.f32.mrb[0].mxu0
  %2648 = vmatprep.mubr.bf16.mxu0 0
  %2649 = vmatmul.mubr.bf16.gmra.mrb[0].mxu0 %v2509
  %v2650 = vpop.f32.mrb[0].mxu0
  %v2651 = vadd.f32 0.0, %v2650
  %v2652 = vpop.f32.mrb[0].mxu0
  %v2653 = vpop.f32.mrb[0].mxu0
  %v2654 = vadd.f32 0.0, %v2653
  %v2655 = vpop.f32.mrb[0].mxu0
  %2656 = vdwg.mxu0
  %v2657 = vadd.f32 %v2435, %v2595
  %v2658 = vadd.f32 %v2436, %v2598
  %v2659 = vadd.f32 %v2437, %v2603
  %v2660 = vadd.f32 %v2438, %v2606
  %v2661 = vadd.f32 %v2439, %v2611
  %v2662 = vadd.f32 %v2440, %v2614
  %v2663 = vadd.f32 %v2441, %v2619
  %v2664 = vadd.f32 %v2442, %v2622
  %v2665 = vadd.f32 %v2443, %v2627
  %v2666 = vadd.f32 %v2444, %v2630
  %v2667 = vadd.f32 %v2445, %v2635
  %v2668 = vadd.f32 %v2446, %v2638
  %v2669 = vadd.f32 %v2447, %v2643
  %v2670 = vadd.f32 %v2448, %v2646
  %v2671 = vadd.f32 %v2449, %v2651
  %v2672 = vadd.f32 %v2450, %v2654
  %vm2673 = vcmask 1042432
  %vm2674 = vcmask 1046532
  %vm2675 = vmor %vm2673, %vm2674
  %v2676 = vrot.slane %v1304, 5
  %v2677 = vrot.slane %v2676, 4
  %v2678 = vrot.slane %v1305, 5
  %v2679 = vsel %vm2675, %v2677, %v2678
  %v2680 = vrot.slane %v1306, 5
  %v2681 = vrot.slane %v2680, 4
  %v2682 = vrot.slane %v1307, 5
  %v2683 = vsel %vm2675, %v2681, %v2682
  %v2684 = vrot.slane %v1308, 5
  %v2685 = vrot.slane %v2684, 4
  %v2686 = vrot.slane %v1309, 5
  %v2687 = vsel %vm2675, %v2685, %v2686
  %v2688 = vrot.slane %v1310, 5
  %v2689 = vrot.slane %v2688, 4
  %v2690 = vrot.slane %v1311, 5
  %v2691 = vsel %vm2675, %v2689, %v2690
  %v2692 = vrot.slane %v1312, 5
  %v2693 = vrot.slane %v2692, 4
  %v2694 = vrot.slane %v1313, 5
  %v2695 = vsel %vm2675, %v2693, %v2694
  %v2696 = vrot.slane %v1314, 5
  %v2697 = vrot.slane %v2696, 4
  %v2698 = vrot.slane %v1315, 5
  %v2699 = vsel %vm2675, %v2697, %v2698
  %v2700 = vrot.slane %v1316, 5
  %v2701 = vrot.slane %v2700, 4
  %v2702 = vrot.slane %v1317, 5
  %v2703 = vsel %vm2675, %v2701, %v2702
  %v2704 = vrot.slane %v1318, 5
  %v2705 = vrot.slane %v2704, 4
  %v2706 = vrot.slane %v1319, 5
  %v2707 = vsel %vm2675, %v2705, %v2706
  %v2708 = vrot.slane %v1320, 5
  %v2709 = vrot.slane %v2708, 4
  %v2710 = vrot.slane %v1321, 5
  %v2711 = vsel %vm2675, %v2709, %v2710
  %v2712 = vrot.slane %v1322, 5
  %v2713 = vrot.slane %v2712, 4
  %v2714 = vrot.slane %v1323, 5
  %v2715 = vsel %vm2675, %v2713, %v2714
  %v2716 = vrot.slane %v1324, 5
  %v2717 = vrot.slane %v2716, 4
  %v2718 = vrot.slane %v1325, 5
  %v2719 = vsel %vm2675, %v2717, %v2718
  %v2720 = vrot.slane %v1326, 5
  %v2721 = vrot.slane %v2720, 4
  %v2722 = vrot.slane %v1327, 5
  %v2723 = vsel %vm2675, %v2721, %v2722
  %v2724 = vrot.slane %v1328, 5
  %v2725 = vrot.slane %v2724, 4
  %v2726 = vrot.slane %v1329, 5
  %v2727 = vsel %vm2675, %v2725, %v2726
  %v2728 = vrot.slane %v1330, 5
  %v2729 = vrot.slane %v2728, 4
  %v2730 = vrot.slane %v1331, 5
  %v2731 = vsel %vm2675, %v2729, %v2730
  %v2732 = vrot.slane %v1332, 5
  %v2733 = vrot.slane %v2732, 4
  %v2734 = vrot.slane %v1333, 5
  %v2735 = vsel %vm2675, %v2733, %v2734
  %v2736 = vrot.slane %v1334, 5
  %v2737 = vrot.slane %v2736, 4
  %v2738 = vrot.slane %v1335, 5
  %v2739 = vsel %vm2675, %v2737, %v2738
  %s2740 = scalar_lea.vmem %s4, 128
  %v2741 = vld [vmem:[%s2740] sm:$0xf]
  %v2742 = vld [vmem:[%s2740 + $0x4] sm:$0xf]
  %v2743 = vld [vmem:[%s2740 + $0x8] sm:$0xf]
  %v2744 = vld [vmem:[%s2740 + $0xc] sm:$0xf]
  %v2745 = vld [vmem:[%s2740 + $0x10] sm:$0xf]
  %v2746 = vld [vmem:[%s2740 + $0x14] sm:$0xf]
  %v2747 = vld [vmem:[%s2740 + $0x18] sm:$0xf]
  %v2748 = vld [vmem:[%s2740 + $0x1c] sm:$0xf]
  %v2749 = vld [vmem:[%s2740 + $0x20] sm:$0xf]
  %v2750 = vld [vmem:[%s2740 + $0x24] sm:$0xf]
  %v2751 = vld [vmem:[%s2740 + $0x28] sm:$0xf]
  %v2752 = vld [vmem:[%s2740 + $0x2c] sm:$0xf]
  %v2753 = vld [vmem:[%s2740 + $0x30] sm:$0xf]
  %v2754 = vld [vmem:[%s2740 + $0x34] sm:$0xf]
  %v2755 = vld [vmem:[%s2740 + $0x38] sm:$0xf]
  %v2756 = vld [vmem:[%s2740 + $0x3c] sm:$0xf]
  %v2757 = vunpack.c.l.b16 %v2679
  %v2758 = vunpack.c.l.b16 %v2683
  %v2759 = vunpack.c.l.b16 %v2687
  %v2760 = vunpack.c.l.b16 %v2691
  %v2761 = vunpack.c.l.b16 %v2695
  %v2762 = vunpack.c.l.b16 %v2699
  %v2763 = vunpack.c.l.b16 %v2703
  %v2764 = vunpack.c.l.b16 %v2707
  %v2765 = vunpack.c.l.b16 %v2711
  %v2766 = vunpack.c.l.b16 %v2715
  %v2767 = vunpack.c.l.b16 %v2719
  %v2768 = vunpack.c.l.b16 %v2723
  %v2769 = vunpack.c.l.b16 %v2727
  %v2770 = vunpack.c.l.b16 %v2731
  %v2771 = vunpack.c.l.b16 %v2735
  %v2772 = vunpack.c.l.b16 %v2739
  %v2773 = vpack.c.b16 %v2758, %v2757
  %v2774 = vpack.c.b16 %v2760, %v2759
  %v2775 = vpack.c.b16 %v2762, %v2761
  %v2776 = vpack.c.b16 %v2764, %v2763
  %v2777 = vpack.c.b16 %v2766, %v2765
  %v2778 = vpack.c.b16 %v2768, %v2767
  %v2779 = vpack.c.b16 %v2770, %v2769
  %v2780 = vpack.c.b16 %v2772, %v2771
  %v2805 = vunpack.c.l.b16 %v2741
  %v2806 = vunpack.c.l.b16 %v2742
  %v2807 = vunpack.c.l.b16 %v2743
  %v2808 = vunpack.c.l.b16 %v2744
  %v2809 = vunpack.c.l.b16 %v2745
  %v2810 = vunpack.c.l.b16 %v2746
  %v2811 = vunpack.c.l.b16 %v2747
  %v2812 = vunpack.c.l.b16 %v2748
  %v2813 = vunpack.c.l.b16 %v2749
  %v2814 = vunpack.c.l.b16 %v2750
  %v2815 = vunpack.c.l.b16 %v2751
  %v2816 = vunpack.c.l.b16 %v2752
  %v2817 = vunpack.c.l.b16 %v2753
  %v2818 = vunpack.c.l.b16 %v2754
  %v2819 = vunpack.c.l.b16 %v2755
  %v2820 = vunpack.c.l.b16 %v2756
  %v2821 = vpack.c.b16 %v2806, %v2805
  %v2822 = vpack.c.b16 %v2808, %v2807
  %v2823 = vpack.c.b16 %v2810, %v2809
  %v2824 = vpack.c.b16 %v2812, %v2811
  %v2825 = vpack.c.b16 %v2814, %v2813
  %v2826 = vpack.c.b16 %v2816, %v2815
  %v2827 = vpack.c.b16 %v2818, %v2817
  %v2828 = vpack.c.b16 %v2820, %v2819
  %2837 = vmatprep.subr.bf16.mxu0 0
  %2838 = vmatpush1.bf16.msra.mxu0 %v2821
  %2839 = vmatprep.subr.bf16.mxu0 0
  %2840 = vmatpush1.bf16.msra.mxu0 %v2822
  %2841 = vmatprep.subr.bf16.mxu0 0
  %2842 = vmatpush1.bf16.msra.mxu0 %v2823
  %2843 = vmatprep.subr.bf16.mxu0 0
  %2844 = vmatpush1.bf16.msra.mxu0 %v2824
  %2845 = vmatprep.subr.bf16.mxu0 0
  %2846 = vmatpush1.bf16.msra.mxu0 %v2825
  %2847 = vmatprep.subr.bf16.mxu0 0
  %2848 = vmatpush1.bf16.msra.mxu0 %v2826
  %2849 = vmatprep.subr.bf16.mxu0 0
  %2850 = vmatpush1.bf16.msra.mxu0 %v2827
  %2851 = vmatprep.subr.bf16.mxu0 0
  %2852 = vmatpush1.bf16.msra.mxu0 %v2828
  %2853 = vmatprep.subr.bf16.mxu0 0
  %2854 = vmatpush1.bf16.msra.mxu0 0
  %2855 = vmatprep.subr.bf16.mxu0 0
  %2856 = vmatpush1.bf16.msra.mxu0 0
  %2857 = vmatprep.subr.bf16.mxu0 0
  %2858 = vmatpush1.bf16.msra.mxu0 0
  %2859 = vmatprep.subr.bf16.mxu0 0
  %2860 = vmatpush1.bf16.msra.mxu0 0
  %2861 = vmatprep.subr.bf16.mxu0 0
  %2862 = vmatpush1.bf16.msra.mxu0 0
  %2863 = vmatprep.subr.bf16.mxu0 0
  %2864 = vmatpush1.bf16.msra.mxu0 0
  %2865 = vmatprep.subr.bf16.mxu0 0
  %2866 = vmatpush1.bf16.msra.mxu0 0
  %2867 = vmatprep.subr.bf16.mxu0 0
  %2868 = vmatpush1.bf16.msra.mxu0 0
  %2869 = vmatprep.mubr.bf16.mxu0 0
  %2870 = vmatmul.mubr.bf16.gmra.mrb[0].mxu0 %v2773
  %v2871 = vpop.f32.mrb[0].mxu0
  %v2872 = vadd.f32 0.0, %v2871
  %v2873 = vpop.f32.mrb[0].mxu0
  %v2874 = vpop.f32.mrb[0].mxu0
  %v2875 = vadd.f32 0.0, %v2874
  %v2876 = vpop.f32.mrb[0].mxu0
  %2877 = vmatprep.mubr.bf16.mxu0 0
  %2878 = vmatmul.mubr.bf16.gmra.mrb[0].mxu0 %v2774
  %v2879 = vpop.f32.mrb[0].mxu0
  %v2880 = vadd.f32 0.0, %v2879
  %v2881 = vpop.f32.mrb[0].mxu0
  %v2882 = vpop.f32.mrb[0].mxu0
  %v2883 = vadd.f32 0.0, %v2882
  %v2884 = vpop.f32.mrb[0].mxu0
  %2885 = vmatprep.mubr.bf16.mxu0 0
  %2886 = vmatmul.mubr.bf16.gmra.mrb[0].mxu0 %v2775
  %v2887 = vpop.f32.mrb[0].mxu0
  %v2888 = vadd.f32 0.0, %v2887
  %v2889 = vpop.f32.mrb[0].mxu0
  %v2890 = vpop.f32.mrb[0].mxu0
  %v2891 = vadd.f32 0.0, %v2890
  %v2892 = vpop.f32.mrb[0].mxu0
  %2893 = vmatprep.mubr.bf16.mxu0 0
  %2894 = vmatmul.mubr.bf16.gmra.mrb[0].mxu0 %v2776
  %v2895 = vpop.f32.mrb[0].mxu0
  %v2896 = vadd.f32 0.0, %v2895
  %v2897 = vpop.f32.mrb[0].mxu0
  %v2898 = vpop.f32.mrb[0].mxu0
  %v2899 = vadd.f32 0.0, %v2898
  %v2900 = vpop.f32.mrb[0].mxu0
  %2901 = vmatprep.mubr.bf16.mxu0 0
  %2902 = vmatmul.mubr.bf16.gmra.mrb[0].mxu0 %v2777
  %v2903 = vpop.f32.mrb[0].mxu0
  %v2904 = vadd.f32 0.0, %v2903
  %v2905 = vpop.f32.mrb[0].mxu0
  %v2906 = vpop.f32.mrb[0].mxu0
  %v2907 = vadd.f32 0.0, %v2906
  %v2908 = vpop.f32.mrb[0].mxu0
  %2909 = vmatprep.mubr.bf16.mxu0 0
  %2910 = vmatmul.mubr.bf16.gmra.mrb[0].mxu0 %v2778
  %v2911 = vpop.f32.mrb[0].mxu0
  %v2912 = vadd.f32 0.0, %v2911
  %v2913 = vpop.f32.mrb[0].mxu0
  %v2914 = vpop.f32.mrb[0].mxu0
  %v2915 = vadd.f32 0.0, %v2914
  %v2916 = vpop.f32.mrb[0].mxu0
  %2917 = vmatprep.mubr.bf16.mxu0 0
  %2918 = vmatmul.mubr.bf16.gmra.mrb[0].mxu0 %v2779
  %v2919 = vpop.f32.mrb[0].mxu0
  %v2920 = vadd.f32 0.0, %v2919
  %v2921 = vpop.f32.mrb[0].mxu0
  %v2922 = vpop.f32.mrb[0].mxu0
  %v2923 = vadd.f32 0.0, %v2922
  %v2924 = vpop.f32.mrb[0].mxu0
  %2925 = vmatprep.mubr.bf16.mxu0 0
  %2926 = vmatmul.mubr.bf16.gmra.mrb[0].mxu0 %v2780
  %v2927 = vpop.f32.mrb[0].mxu0
  %v2928 = vadd.f32 0.0, %v2927
  %v2929 = vpop.f32.mrb[0].mxu0
  %v2930 = vpop.f32.mrb[0].mxu0
  %v2931 = vadd.f32 0.0, %v2930
  %v2932 = vpop.f32.mrb[0].mxu0
  %2933 = vdwg.mxu0
  %v2934 = vadd.f32 %v2657, %v2872
  %v2935 = vadd.f32 %v2658, %v2875
  %v2936 = vadd.f32 %v2659, %v2880
  %v2937 = vadd.f32 %v2660, %v2883
  %v2938 = vadd.f32 %v2661, %v2888
  %v2939 = vadd.f32 %v2662, %v2891
  %v2940 = vadd.f32 %v2663, %v2896
  %v2941 = vadd.f32 %v2664, %v2899
  %v2942 = vadd.f32 %v2665, %v2904
  %v2943 = vadd.f32 %v2666, %v2907
  %v2944 = vadd.f32 %v2667, %v2912
  %v2945 = vadd.f32 %v2668, %v2915
  %v2946 = vadd.f32 %v2669, %v2920
  %v2947 = vadd.f32 %v2670, %v2923
  %v2948 = vadd.f32 %v2671, %v2928
  %v2949 = vadd.f32 %v2672, %v2931
  %v2950 = vrot.slane %v1779, 5
  %v2951 = vrot.slane %v2950, 4
  %v2952 = vrot.slane %v1780, 5
  %v2953 = vsel %vm2675, %v2951, %v2952
  %v2954 = vrot.slane %v1781, 5
  %v2955 = vrot.slane %v2954, 4
  %v2956 = vrot.slane %v1782, 5
  %v2957 = vsel %vm2675, %v2955, %v2956
  %s2958 = scalar_lea.vmem %s4, 448
  %v2959 = vld [vmem:[%s2958] sm:$0xf]
  %v2960 = vld [vmem:[%s2958 + $0x4] sm:$0xf]
  %v2961 = vld [vmem:[%s2958 + $0x8] sm:$0xf]
  %v2962 = vld [vmem:[%s2958 + $0xc] sm:$0xf]
  %v2963 = vld [vmem:[%s2958 + $0x10] sm:$0xf]
  %v2964 = vld [vmem:[%s2958 + $0x14] sm:$0xf]
  %v2965 = vld [vmem:[%s2958 + $0x18] sm:$0xf]
  %v2966 = vld [vmem:[%s2958 + $0x1c] sm:$0xf]
  %v2967 = vld [vmem:[%s2958 + $0x20] sm:$0xf]
  %v2968 = vld [vmem:[%s2958 + $0x24] sm:$0xf]
  %v2969 = vld [vmem:[%s2958 + $0x28] sm:$0xf]
  %v2970 = vld [vmem:[%s2958 + $0x2c] sm:$0xf]
  %v2971 = vld [vmem:[%s2958 + $0x30] sm:$0xf]
  %v2972 = vld [vmem:[%s2958 + $0x34] sm:$0xf]
  %v2973 = vld [vmem:[%s2958 + $0x38] sm:$0xf]
  %v2974 = vld [vmem:[%s2958 + $0x3c] sm:$0xf]
  %v2975 = vunpack.c.l.b16 %v2953
  %v2976 = vunpack.c.l.b16 %v2957
  %v2977 = vpack.c.b16 %v2759, %v2758
  %v2978 = vpack.c.b16 %v2761, %v2760
  %v2979 = vpack.c.b16 %v2763, %v2762
  %v2980 = vpack.c.b16 %v2975, %v2764
  %v2981 = vpack.c.b16 %v2767, %v2766
  %v2982 = vpack.c.b16 %v2769, %v2768
  %v2983 = vpack.c.b16 %v2771, %v2770
  %v2984 = vpack.c.b16 %v2976, %v2772
  %v3009 = vunpack.c.l.b16 %v2959
  %v3010 = vunpack.c.l.b16 %v2960
  %v3011 = vunpack.c.l.b16 %v2961
  %v3012 = vunpack.c.l.b16 %v2962
  %v3013 = vunpack.c.l.b16 %v2963
  %v3014 = vunpack.c.l.b16 %v2964
  %v3015 = vunpack.c.l.b16 %v2965
  %v3016 = vunpack.c.l.b16 %v2966
  %v3017 = vunpack.c.l.b16 %v2967
  %v3018 = vunpack.c.l.b16 %v2968
  %v3019 = vunpack.c.l.b16 %v2969
  %v3020 = vunpack.c.l.b16 %v2970
  %v3021 = vunpack.c.l.b16 %v2971
  %v3022 = vunpack.c.l.b16 %v2972
  %v3023 = vunpack.c.l.b16 %v2973
  %v3024 = vunpack.c.l.b16 %v2974
  %v3025 = vpack.c.b16 %v3010, %v3009
  %v3026 = vpack.c.b16 %v3012, %v3011
  %v3027 = vpack.c.b16 %v3014, %v3013
  %v3028 = vpack.c.b16 %v3016, %v3015
  %v3029 = vpack.c.b16 %v3018, %v3017
  %v3030 = vpack.c.b16 %v3020, %v3019
  %v3031 = vpack.c.b16 %v3022, %v3021
  %v3032 = vpack.c.b16 %v3024, %v3023
  %3041 = vmatprep.subr.bf16.mxu0 0
  %3042 = vmatpush1.bf16.msra.mxu0 %v3025
  %3043 = vmatprep.subr.bf16.mxu0 0
  %3044 = vmatpush1.bf16.msra.mxu0 %v3026
  %3045 = vmatprep.subr.bf16.mxu0 0
  %3046 = vmatpush1.bf16.msra.mxu0 %v3027
  %3047 = vmatprep.subr.bf16.mxu0 0
  %3048 = vmatpush1.bf16.msra.mxu0 %v3028
  %3049 = vmatprep.subr.bf16.mxu0 0
  %3050 = vmatpush1.bf16.msra.mxu0 %v3029
  %3051 = vmatprep.subr.bf16.mxu0 0
  %3052 = vmatpush1.bf16.msra.mxu0 %v3030
  %3053 = vmatprep.subr.bf16.mxu0 0
  %3054 = vmatpush1.bf16.msra.mxu0 %v3031
  %3055 = vmatprep.subr.bf16.mxu0 0
  %3056 = vmatpush1.bf16.msra.mxu0 %v3032
  %3057 = vmatprep.subr.bf16.mxu0 0
  %3058 = vmatpush1.bf16.msra.mxu0 0
  %3059 = vmatprep.subr.bf16.mxu0 0
  %3060 = vmatpush1.bf16.msra.mxu0 0
  %3061 = vmatprep.subr.bf16.mxu0 0
  %3062 = vmatpush1.bf16.msra.mxu0 0
  %3063 = vmatprep.subr.bf16.mxu0 0
  %3064 = vmatpush1.bf16.msra.mxu0 0
  %3065 = vmatprep.subr.bf16.mxu0 0
  %3066 = vmatpush1.bf16.msra.mxu0 0
  %3067 = vmatprep.subr.bf16.mxu0 0
  %3068 = vmatpush1.bf16.msra.mxu0 0
  %3069 = vmatprep.subr.bf16.mxu0 0
  %3070 = vmatpush1.bf16.msra.mxu0 0
  %3071 = vmatprep.subr.bf16.mxu0 0
  %3072 = vmatpush1.bf16.msra.mxu0 0
  %3073 = vmatprep.mubr.bf16.mxu0 0
  %3074 = vmatmul.mubr.bf16.gmra.mrb[0].mxu0 %v2977
  %v3075 = vpop.f32.mrb[0].mxu0
  %v3076 = vadd.f32 0.0, %v3075
  %v3077 = vpop.f32.mrb[0].mxu0
  %v3078 = vpop.f32.mrb[0].mxu0
  %v3079 = vadd.f32 0.0, %v3078
  %v3080 = vpop.f32.mrb[0].mxu0
  %3081 = vmatprep.mubr.bf16.mxu0 0
  %3082 = vmatmul.mubr.bf16.gmra.mrb[0].mxu0 %v2978
  %v3083 = vpop.f32.mrb[0].mxu0
  %v3084 = vadd.f32 0.0, %v3083
  %v3085 = vpop.f32.mrb[0].mxu0
  %v3086 = vpop.f32.mrb[0].mxu0
  %v3087 = vadd.f32 0.0, %v3086
  %v3088 = vpop.f32.mrb[0].mxu0
  %3089 = vmatprep.mubr.bf16.mxu0 0
  %3090 = vmatmul.mubr.bf16.gmra.mrb[0].mxu0 %v2979
  %v3091 = vpop.f32.mrb[0].mxu0
  %v3092 = vadd.f32 0.0, %v3091
  %v3093 = vpop.f32.mrb[0].mxu0
  %v3094 = vpop.f32.mrb[0].mxu0
  %v3095 = vadd.f32 0.0, %v3094
  %v3096 = vpop.f32.mrb[0].mxu0
  %3097 = vmatprep.mubr.bf16.mxu0 0
  %3098 = vmatmul.mubr.bf16.gmra.mrb[0].mxu0 %v2980
  %v3099 = vpop.f32.mrb[0].mxu0
  %v3100 = vadd.f32 0.0, %v3099
  %v3101 = vpop.f32.mrb[0].mxu0
  %v3102 = vpop.f32.mrb[0].mxu0
  %v3103 = vadd.f32 0.0, %v3102
  %v3104 = vpop.f32.mrb[0].mxu0
  %3105 = vmatprep.mubr.bf16.mxu0 0
  %3106 = vmatmul.mubr.bf16.gmra.mrb[0].mxu0 %v2981
  %v3107 = vpop.f32.mrb[0].mxu0
  %v3108 = vadd.f32 0.0, %v3107
  %v3109 = vpop.f32.mrb[0].mxu0
  %v3110 = vpop.f32.mrb[0].mxu0
  %v3111 = vadd.f32 0.0, %v3110
  %v3112 = vpop.f32.mrb[0].mxu0
  %3113 = vmatprep.mubr.bf16.mxu0 0
  %3114 = vmatmul.mubr.bf16.gmra.mrb[0].mxu0 %v2982
  %v3115 = vpop.f32.mrb[0].mxu0
  %v3116 = vadd.f32 0.0, %v3115
  %v3117 = vpop.f32.mrb[0].mxu0
  %v3118 = vpop.f32.mrb[0].mxu0
  %v3119 = vadd.f32 0.0, %v3118
  %v3120 = vpop.f32.mrb[0].mxu0
  %3121 = vmatprep.mubr.bf16.mxu0 0
  %3122 = vmatmul.mubr.bf16.gmra.mrb[0].mxu0 %v2983
  %v3123 = vpop.f32.mrb[0].mxu0
  %v3124 = vadd.f32 0.0, %v3123
  %v3125 = vpop.f32.mrb[0].mxu0
  %v3126 = vpop.f32.mrb[0].mxu0
  %v3127 = vadd.f32 0.0, %v3126
  %v3128 = vpop.f32.mrb[0].mxu0
  %3129 = vmatprep.mubr.bf16.mxu0 0
  %3130 = vmatmul.mubr.bf16.gmra.mrb[0].mxu0 %v2984
  %v3131 = vpop.f32.mrb[0].mxu0
  %v3132 = vadd.f32 0.0, %v3131
  %v3133 = vpop.f32.mrb[0].mxu0
  %v3134 = vpop.f32.mrb[0].mxu0
  %v3135 = vadd.f32 0.0, %v3134
  %v3136 = vpop.f32.mrb[0].mxu0
  %3137 = vdwg.mxu0
  %v3138 = vadd.f32 %v2934, %v3076
  %v3139 = vadd.f32 %v2935, %v3079
  %v3140 = vadd.f32 %v2936, %v3084
  %v3141 = vadd.f32 %v2937, %v3087
  %v3142 = vadd.f32 %v2938, %v3092
  %v3143 = vadd.f32 %v2939, %v3095
  %v3144 = vadd.f32 %v2940, %v3100
  %v3145 = vadd.f32 %v2941, %v3103
  %v3146 = vadd.f32 %v2942, %v3108
  %v3147 = vadd.f32 %v2943, %v3111
  %v3148 = vadd.f32 %v2944, %v3116
  %v3149 = vadd.f32 %v2945, %v3119
  %v3150 = vadd.f32 %v2946, %v3124
  %v3151 = vadd.f32 %v2947, %v3127
  %v3152 = vadd.f32 %v2948, %v3132
  %v3153 = vadd.f32 %v2949, %v3135
  %v3154 = vrot.slane %v2013, 5
  %v3155 = vrot.slane %v3154, 4
  %v3156 = vrot.slane %v2014, 5
  %v3157 = vsel %vm2675, %v3155, %v3156
  %v3158 = vrot.slane %v2015, 5
  %v3159 = vrot.slane %v3158, 4
  %v3160 = vrot.slane %v2016, 5
  %v3161 = vsel %vm2675, %v3159, %v3160
  %s3162 = scalar_lea.vmem %s4, 768
  %v3163 = vld [vmem:[%s3162] sm:$0xf]
  %v3164 = vld [vmem:[%s3162 + $0x4] sm:$0xf]
  %v3165 = vld [vmem:[%s3162 + $0x8] sm:$0xf]
  %v3166 = vld [vmem:[%s3162 + $0xc] sm:$0xf]
  %v3167 = vld [vmem:[%s3162 + $0x10] sm:$0xf]
  %v3168 = vld [vmem:[%s3162 + $0x14] sm:$0xf]
  %v3169 = vld [vmem:[%s3162 + $0x18] sm:$0xf]
  %v3170 = vld [vmem:[%s3162 + $0x1c] sm:$0xf]
  %v3171 = vld [vmem:[%s3162 + $0x20] sm:$0xf]
  %v3172 = vld [vmem:[%s3162 + $0x24] sm:$0xf]
  %v3173 = vld [vmem:[%s3162 + $0x28] sm:$0xf]
  %v3174 = vld [vmem:[%s3162 + $0x2c] sm:$0xf]
  %v3175 = vld [vmem:[%s3162 + $0x30] sm:$0xf]
  %v3176 = vld [vmem:[%s3162 + $0x34] sm:$0xf]
  %v3177 = vld [vmem:[%s3162 + $0x38] sm:$0xf]
  %v3178 = vld [vmem:[%s3162 + $0x3c] sm:$0xf]
  %v3179 = vunpack.c.l.b16 %v3157
  %v3180 = vunpack.c.l.b16 %v3161
  %v3181 = vpack.c.b16 %v3179, %v2975
  %v3182 = vpack.c.b16 %v3180, %v2976
  %v3201 = vunpack.c.l.b16 %v3163
  %v3202 = vunpack.c.l.b16 %v3164
  %v3203 = vunpack.c.l.b16 %v3165
  %v3204 = vunpack.c.l.b16 %v3166
  %v3205 = vunpack.c.l.b16 %v3167
  %v3206 = vunpack.c.l.b16 %v3168
  %v3207 = vunpack.c.l.b16 %v3169
  %v3208 = vunpack.c.l.b16 %v3170
  %v3209 = vunpack.c.l.b16 %v3171
  %v3210 = vunpack.c.l.b16 %v3172
  %v3211 = vunpack.c.l.b16 %v3173
  %v3212 = vunpack.c.l.b16 %v3174
  %v3213 = vunpack.c.l.b16 %v3175
  %v3214 = vunpack.c.l.b16 %v3176
  %v3215 = vunpack.c.l.b16 %v3177
  %v3216 = vunpack.c.l.b16 %v3178
  %v3217 = vpack.c.b16 %v3202, %v3201
  %v3218 = vpack.c.b16 %v3204, %v3203
  %v3219 = vpack.c.b16 %v3206, %v3205
  %v3220 = vpack.c.b16 %v3208, %v3207
  %v3221 = vpack.c.b16 %v3210, %v3209
  %v3222 = vpack.c.b16 %v3212, %v3211
  %v3223 = vpack.c.b16 %v3214, %v3213
  %v3224 = vpack.c.b16 %v3216, %v3215
  %3233 = vmatprep.subr.bf16.mxu0 0
  %3234 = vmatpush1.bf16.msra.mxu0 %v3217
  %3235 = vmatprep.subr.bf16.mxu0 0
  %3236 = vmatpush1.bf16.msra.mxu0 %v3218
  %3237 = vmatprep.subr.bf16.mxu0 0
  %3238 = vmatpush1.bf16.msra.mxu0 %v3219
  %3239 = vmatprep.subr.bf16.mxu0 0
  %3240 = vmatpush1.bf16.msra.mxu0 %v3220
  %3241 = vmatprep.subr.bf16.mxu0 0
  %3242 = vmatpush1.bf16.msra.mxu0 %v3221
  %3243 = vmatprep.subr.bf16.mxu0 0
  %3244 = vmatpush1.bf16.msra.mxu0 %v3222
  %3245 = vmatprep.subr.bf16.mxu0 0
  %3246 = vmatpush1.bf16.msra.mxu0 %v3223
  %3247 = vmatprep.subr.bf16.mxu0 0
  %3248 = vmatpush1.bf16.msra.mxu0 %v3224
  %3249 = vmatprep.subr.bf16.mxu0 0
  %3250 = vmatpush1.bf16.msra.mxu0 0
  %3251 = vmatprep.subr.bf16.mxu0 0
  %3252 = vmatpush1.bf16.msra.mxu0 0
  %3253 = vmatprep.subr.bf16.mxu0 0
  %3254 = vmatpush1.bf16.msra.mxu0 0
  %3255 = vmatprep.subr.bf16.mxu0 0
  %3256 = vmatpush1.bf16.msra.mxu0 0
  %3257 = vmatprep.subr.bf16.mxu0 0
  %3258 = vmatpush1.bf16.msra.mxu0 0
  %3259 = vmatprep.subr.bf16.mxu0 0
  %3260 = vmatpush1.bf16.msra.mxu0 0
  %3261 = vmatprep.subr.bf16.mxu0 0
  %3262 = vmatpush1.bf16.msra.mxu0 0
  %3263 = vmatprep.subr.bf16.mxu0 0
  %3264 = vmatpush1.bf16.msra.mxu0 0
  %3265 = vmatprep.mubr.bf16.mxu0 0
  %3266 = vmatmul.mubr.bf16.gmra.mrb[0].mxu0 %v2774
  %v3267 = vpop.f32.mrb[0].mxu0
  %v3268 = vadd.f32 0.0, %v3267
  %v3269 = vpop.f32.mrb[0].mxu0
  %v3270 = vpop.f32.mrb[0].mxu0
  %v3271 = vadd.f32 0.0, %v3270
  %v3272 = vpop.f32.mrb[0].mxu0
  %3273 = vmatprep.mubr.bf16.mxu0 0
  %3274 = vmatmul.mubr.bf16.gmra.mrb[0].mxu0 %v2775
  %v3275 = vpop.f32.mrb[0].mxu0
  %v3276 = vadd.f32 0.0, %v3275
  %v3277 = vpop.f32.mrb[0].mxu0
  %v3278 = vpop.f32.mrb[0].mxu0
  %v3279 = vadd.f32 0.0, %v3278
  %v3280 = vpop.f32.mrb[0].mxu0
  %3281 = vmatprep.mubr.bf16.mxu0 0
  %3282 = vmatmul.mubr.bf16.gmra.mrb[0].mxu0 %v2776
  %v3283 = vpop.f32.mrb[0].mxu0
  %v3284 = vadd.f32 0.0, %v3283
  %v3285 = vpop.f32.mrb[0].mxu0
  %v3286 = vpop.f32.mrb[0].mxu0
  %v3287 = vadd.f32 0.0, %v3286
  %v3288 = vpop.f32.mrb[0].mxu0
  %3289 = vmatprep.mubr.bf16.mxu0 0
  %3290 = vmatmul.mubr.bf16.gmra.mrb[0].mxu0 %v3181
  %v3291 = vpop.f32.mrb[0].mxu0
  %v3292 = vadd.f32 0.0, %v3291
  %v3293 = vpop.f32.mrb[0].mxu0
  %v3294 = vpop.f32.mrb[0].mxu0
  %v3295 = vadd.f32 0.0, %v3294
  %v3296 = vpop.f32.mrb[0].mxu0
  %3297 = vmatprep.mubr.bf16.mxu0 0
  %3298 = vmatmul.mubr.bf16.gmra.mrb[0].mxu0 %v2778
  %v3299 = vpop.f32.mrb[0].mxu0
  %v3300 = vadd.f32 0.0, %v3299
  %v3301 = vpop.f32.mrb[0].mxu0
  %v3302 = vpop.f32.mrb[0].mxu0
  %v3303 = vadd.f32 0.0, %v3302
  %v3304 = vpop.f32.mrb[0].mxu0
  %3305 = vmatprep.mubr.bf16.mxu0 0
  %3306 = vmatmul.mubr.bf16.gmra.mrb[0].mxu0 %v2779
  %v3307 = vpop.f32.mrb[0].mxu0
  %v3308 = vadd.f32 0.0, %v3307
  %v3309 = vpop.f32.mrb[0].mxu0
  %v3310 = vpop.f32.mrb[0].mxu0
  %v3311 = vadd.f32 0.0, %v3310
  %v3312 = vpop.f32.mrb[0].mxu0
  %3313 = vmatprep.mubr.bf16.mxu0 0
  %3314 = vmatmul.mubr.bf16.gmra.mrb[0].mxu0 %v2780
  %v3315 = vpop.f32.mrb[0].mxu0
  %v3316 = vadd.f32 0.0, %v3315
  %v3317 = vpop.f32.mrb[0].mxu0
  %v3318 = vpop.f32.mrb[0].mxu0
  %v3319 = vadd.f32 0.0, %v3318
  %v3320 = vpop.f32.mrb[0].mxu0
  %3321 = vmatprep.mubr.bf16.mxu0 0
  %3322 = vmatmul.mubr.bf16.gmra.mrb[0].mxu0 %v3182
  %v3323 = vpop.f32.mrb[0].mxu0
  %v3324 = vadd.f32 0.0, %v3323
  %v3325 = vpop.f32.mrb[0].mxu0
  %v3326 = vpop.f32.mrb[0].mxu0
  %v3327 = vadd.f32 0.0, %v3326
  %v3328 = vpop.f32.mrb[0].mxu0
  %3329 = vdwg.mxu0
  %v3330 = vadd.f32 %v3138, %v3268
  %v3331 = vadd.f32 %v3139, %v3271
  %v3332 = vadd.f32 %v3140, %v3276
  %v3333 = vadd.f32 %v3141, %v3279
  %v3334 = vadd.f32 %v3142, %v3284
  %v3335 = vadd.f32 %v3143, %v3287
  %v3336 = vadd.f32 %v3144, %v3292
  %v3337 = vadd.f32 %v3145, %v3295
  %v3338 = vadd.f32 %v3146, %v3300
  %v3339 = vadd.f32 %v3147, %v3303
  %v3340 = vadd.f32 %v3148, %v3308
  %v3341 = vadd.f32 %v3149, %v3311
  %v3342 = vadd.f32 %v3150, %v3316
  %v3343 = vadd.f32 %v3151, %v3319
  %v3344 = vadd.f32 %v3152, %v3324
  %v3345 = vadd.f32 %v3153, %v3327
  %v3346 = vrot.slane %v2235, 5
  %v3347 = vrot.slane %v3346, 4
  %v3348 = vrot.slane %v2236, 5
  %v3349 = vsel %vm2675, %v3347, %v3348
  %v3350 = vrot.slane %v2237, 5
  %v3351 = vrot.slane %v3350, 4
  %v3352 = vrot.slane %v2238, 5
  %v3353 = vsel %vm2675, %v3351, %v3352
  %s3354 = scalar_lea.vmem %s4, 1088
  %v3355 = vld [vmem:[%s3354] sm:$0xf]
  %v3356 = vld [vmem:[%s3354 + $0x4] sm:$0xf]
  %v3357 = vld [vmem:[%s3354 + $0x8] sm:$0xf]
  %v3358 = vld [vmem:[%s3354 + $0xc] sm:$0xf]
  %v3359 = vld [vmem:[%s3354 + $0x10] sm:$0xf]
  %v3360 = vld [vmem:[%s3354 + $0x14] sm:$0xf]
  %v3361 = vld [vmem:[%s3354 + $0x18] sm:$0xf]
  %v3362 = vld [vmem:[%s3354 + $0x1c] sm:$0xf]
  %v3363 = vld [vmem:[%s3354 + $0x20] sm:$0xf]
  %v3364 = vld [vmem:[%s3354 + $0x24] sm:$0xf]
  %v3365 = vld [vmem:[%s3354 + $0x28] sm:$0xf]
  %v3366 = vld [vmem:[%s3354 + $0x2c] sm:$0xf]
  %v3367 = vld [vmem:[%s3354 + $0x30] sm:$0xf]
  %v3368 = vld [vmem:[%s3354 + $0x34] sm:$0xf]
  %v3369 = vld [vmem:[%s3354 + $0x38] sm:$0xf]
  %v3370 = vld [vmem:[%s3354 + $0x3c] sm:$0xf]
  %v3371 = vunpack.c.l.b16 %v3349
  %v3372 = vunpack.c.l.b16 %v3353
  %v3373 = vpack.c.b16 %v3371, %v3179
  %v3374 = vpack.c.b16 %v3372, %v3180
  %v3393 = vunpack.c.l.b16 %v3355
  %v3394 = vunpack.c.l.b16 %v3356
  %v3395 = vunpack.c.l.b16 %v3357
  %v3396 = vunpack.c.l.b16 %v3358
  %v3397 = vunpack.c.l.b16 %v3359
  %v3398 = vunpack.c.l.b16 %v3360
  %v3399 = vunpack.c.l.b16 %v3361
  %v3400 = vunpack.c.l.b16 %v3362
  %v3401 = vunpack.c.l.b16 %v3363
  %v3402 = vunpack.c.l.b16 %v3364
  %v3403 = vunpack.c.l.b16 %v3365
  %v3404 = vunpack.c.l.b16 %v3366
  %v3405 = vunpack.c.l.b16 %v3367
  %v3406 = vunpack.c.l.b16 %v3368
  %v3407 = vunpack.c.l.b16 %v3369
  %v3408 = vunpack.c.l.b16 %v3370
  %v3409 = vpack.c.b16 %v3394, %v3393
  %v3410 = vpack.c.b16 %v3396, %v3395
  %v3411 = vpack.c.b16 %v3398, %v3397
  %v3412 = vpack.c.b16 %v3400, %v3399
  %v3413 = vpack.c.b16 %v3402, %v3401
  %v3414 = vpack.c.b16 %v3404, %v3403
  %v3415 = vpack.c.b16 %v3406, %v3405
  %v3416 = vpack.c.b16 %v3408, %v3407
  %3425 = vmatprep.subr.bf16.mxu0 0
  %3426 = vmatpush1.bf16.msra.mxu0 %v3409
  %3427 = vmatprep.subr.bf16.mxu0 0
  %3428 = vmatpush1.bf16.msra.mxu0 %v3410
  %3429 = vmatprep.subr.bf16.mxu0 0
  %3430 = vmatpush1.bf16.msra.mxu0 %v3411
  %3431 = vmatprep.subr.bf16.mxu0 0
  %3432 = vmatpush1.bf16.msra.mxu0 %v3412
  %3433 = vmatprep.subr.bf16.mxu0 0
  %3434 = vmatpush1.bf16.msra.mxu0 %v3413
  %3435 = vmatprep.subr.bf16.mxu0 0
  %3436 = vmatpush1.bf16.msra.mxu0 %v3414
  %3437 = vmatprep.subr.bf16.mxu0 0
  %3438 = vmatpush1.bf16.msra.mxu0 %v3415
  %3439 = vmatprep.subr.bf16.mxu0 0
  %3440 = vmatpush1.bf16.msra.mxu0 %v3416
  %3441 = vmatprep.subr.bf16.mxu0 0
  %3442 = vmatpush1.bf16.msra.mxu0 0
  %3443 = vmatprep.subr.bf16.mxu0 0
  %3444 = vmatpush1.bf16.msra.mxu0 0
  %3445 = vmatprep.subr.bf16.mxu0 0
  %3446 = vmatpush1.bf16.msra.mxu0 0
  %3447 = vmatprep.subr.bf16.mxu0 0
  %3448 = vmatpush1.bf16.msra.mxu0 0
  %3449 = vmatprep.subr.bf16.mxu0 0
  %3450 = vmatpush1.bf16.msra.mxu0 0
  %3451 = vmatprep.subr.bf16.mxu0 0
  %3452 = vmatpush1.bf16.msra.mxu0 0
  %3453 = vmatprep.subr.bf16.mxu0 0
  %3454 = vmatpush1.bf16.msra.mxu0 0
  %3455 = vmatprep.subr.bf16.mxu0 0
  %3456 = vmatpush1.bf16.msra.mxu0 0
  %3457 = vmatprep.mubr.bf16.mxu0 0
  %3458 = vmatmul.mubr.bf16.gmra.mrb[0].mxu0 %v2978
  %v3459 = vpop.f32.mrb[0].mxu0
  %v3460 = vadd.f32 0.0, %v3459
  %v3461 = vpop.f32.mrb[0].mxu0
  %v3462 = vpop.f32.mrb[0].mxu0
  %v3463 = vadd.f32 0.0, %v3462
  %v3464 = vpop.f32.mrb[0].mxu0
  %3465 = vmatprep.mubr.bf16.mxu0 0
  %3466 = vmatmul.mubr.bf16.gmra.mrb[0].mxu0 %v2979
  %v3467 = vpop.f32.mrb[0].mxu0
  %v3468 = vadd.f32 0.0, %v3467
  %v3469 = vpop.f32.mrb[0].mxu0
  %v3470 = vpop.f32.mrb[0].mxu0
  %v3471 = vadd.f32 0.0, %v3470
  %v3472 = vpop.f32.mrb[0].mxu0
  %3473 = vmatprep.mubr.bf16.mxu0 0
  %3474 = vmatmul.mubr.bf16.gmra.mrb[0].mxu0 %v2980
  %v3475 = vpop.f32.mrb[0].mxu0
  %v3476 = vadd.f32 0.0, %v3475
  %v3477 = vpop.f32.mrb[0].mxu0
  %v3478 = vpop.f32.mrb[0].mxu0
  %v3479 = vadd.f32 0.0, %v3478
  %v3480 = vpop.f32.mrb[0].mxu0
  %3481 = vmatprep.mubr.bf16.mxu0 0
  %3482 = vmatmul.mubr.bf16.gmra.mrb[0].mxu0 %v3373
  %v3483 = vpop.f32.mrb[0].mxu0
  %v3484 = vadd.f32 0.0, %v3483
  %v3485 = vpop.f32.mrb[0].mxu0
  %v3486 = vpop.f32.mrb[0].mxu0
  %v3487 = vadd.f32 0.0, %v3486
  %v3488 = vpop.f32.mrb[0].mxu0
  %3489 = vmatprep.mubr.bf16.mxu0 0
  %3490 = vmatmul.mubr.bf16.gmra.mrb[0].mxu0 %v2982
  %v3491 = vpop.f32.mrb[0].mxu0
  %v3492 = vadd.f32 0.0, %v3491
  %v3493 = vpop.f32.mrb[0].mxu0
  %v3494 = vpop.f32.mrb[0].mxu0
  %v3495 = vadd.f32 0.0, %v3494
  %v3496 = vpop.f32.mrb[0].mxu0
  %3497 = vmatprep.mubr.bf16.mxu0 0
  %3498 = vmatmul.mubr.bf16.gmra.mrb[0].mxu0 %v2983
  %v3499 = vpop.f32.mrb[0].mxu0
  %v3500 = vadd.f32 0.0, %v3499
  %v3501 = vpop.f32.mrb[0].mxu0
  %v3502 = vpop.f32.mrb[0].mxu0
  %v3503 = vadd.f32 0.0, %v3502
  %v3504 = vpop.f32.mrb[0].mxu0
  %3505 = vmatprep.mubr.bf16.mxu0 0
  %3506 = vmatmul.mubr.bf16.gmra.mrb[0].mxu0 %v2984
  %v3507 = vpop.f32.mrb[0].mxu0
  %v3508 = vadd.f32 0.0, %v3507
  %v3509 = vpop.f32.mrb[0].mxu0
  %v3510 = vpop.f32.mrb[0].mxu0
  %v3511 = vadd.f32 0.0, %v3510
  %v3512 = vpop.f32.mrb[0].mxu0
  %3513 = vmatprep.mubr.bf16.mxu0 0
  %3514 = vmatmul.mubr.bf16.gmra.mrb[0].mxu0 %v3374
  %v3515 = vpop.f32.mrb[0].mxu0
  %v3516 = vadd.f32 0.0, %v3515
  %v3517 = vpop.f32.mrb[0].mxu0
  %v3518 = vpop.f32.mrb[0].mxu0
  %v3519 = vadd.f32 0.0, %v3518
  %v3520 = vpop.f32.mrb[0].mxu0
  %3521 = vdwg.mxu0
  %v3522 = vadd.f32 %v3330, %v3460
  %v3523 = vadd.f32 %v3331, %v3463
  %v3524 = vadd.f32 %v3332, %v3468
  %v3525 = vadd.f32 %v3333, %v3471
  %v3526 = vadd.f32 %v3334, %v3476
  %v3527 = vadd.f32 %v3335, %v3479
  %v3528 = vadd.f32 %v3336, %v3484
  %v3529 = vadd.f32 %v3337, %v3487
  %v3530 = vadd.f32 %v3338, %v3492
  %v3531 = vadd.f32 %v3339, %v3495
  %v3532 = vadd.f32 %v3340, %v3500
  %v3533 = vadd.f32 %v3341, %v3503
  %v3534 = vadd.f32 %v3342, %v3508
  %v3535 = vadd.f32 %v3343, %v3511
  %v3536 = vadd.f32 %v3344, %v3516
  %v3537 = vadd.f32 %v3345, %v3519
  %v3538 = vrot.slane %v2457, 5
  %v3539 = vrot.slane %v3538, 4
  %v3540 = vrot.slane %v2458, 5
  %v3541 = vsel %vm2675, %v3539, %v3540
  %v3542 = vrot.slane %v2459, 5
  %v3543 = vrot.slane %v3542, 4
  %v3544 = vrot.slane %v2460, 5
  %v3545 = vsel %vm2675, %v3543, %v3544
  %s3546 = scalar_lea.vmem %s4, 1408
  %v3547 = vld [vmem:[%s3546] sm:$0xf]
  %v3548 = vld [vmem:[%s3546 + $0x4] sm:$0xf]
  %v3549 = vld [vmem:[%s3546 + $0x8] sm:$0xf]
  %v3550 = vld [vmem:[%s3546 + $0xc] sm:$0xf]
  %v3551 = vld [vmem:[%s3546 + $0x10] sm:$0xf]
  %v3552 = vld [vmem:[%s3546 + $0x14] sm:$0xf]
  %v3553 = vld [vmem:[%s3546 + $0x18] sm:$0xf]
  %v3554 = vld [vmem:[%s3546 + $0x1c] sm:$0xf]
  %v3555 = vld [vmem:[%s3546 + $0x20] sm:$0xf]
  %v3556 = vld [vmem:[%s3546 + $0x24] sm:$0xf]
  %v3557 = vld [vmem:[%s3546 + $0x28] sm:$0xf]
  %v3558 = vld [vmem:[%s3546 + $0x2c] sm:$0xf]
  %v3559 = vld [vmem:[%s3546 + $0x30] sm:$0xf]
  %v3560 = vld [vmem:[%s3546 + $0x34] sm:$0xf]
  %v3561 = vld [vmem:[%s3546 + $0x38] sm:$0xf]
  %v3562 = vld [vmem:[%s3546 + $0x3c] sm:$0xf]
  %v3563 = vunpack.c.l.b16 %v3541
  %v3564 = vunpack.c.l.b16 %v3545
  %v3565 = vpack.c.b16 %v3563, %v3371
  %v3566 = vpack.c.b16 %v3564, %v3372
  %v3585 = vunpack.c.l.b16 %v3547
  %v3586 = vunpack.c.l.b16 %v3548
  %v3587 = vunpack.c.l.b16 %v3549
  %v3588 = vunpack.c.l.b16 %v3550
  %v3589 = vunpack.c.l.b16 %v3551
  %v3590 = vunpack.c.l.b16 %v3552
  %v3591 = vunpack.c.l.b16 %v3553
  %v3592 = vunpack.c.l.b16 %v3554
  %v3593 = vunpack.c.l.b16 %v3555
  %v3594 = vunpack.c.l.b16 %v3556
  %v3595 = vunpack.c.l.b16 %v3557
  %v3596 = vunpack.c.l.b16 %v3558
  %v3597 = vunpack.c.l.b16 %v3559
  %v3598 = vunpack.c.l.b16 %v3560
  %v3599 = vunpack.c.l.b16 %v3561
  %v3600 = vunpack.c.l.b16 %v3562
  %v3601 = vpack.c.b16 %v3586, %v3585
  %v3602 = vpack.c.b16 %v3588, %v3587
  %v3603 = vpack.c.b16 %v3590, %v3589
  %v3604 = vpack.c.b16 %v3592, %v3591
  %v3605 = vpack.c.b16 %v3594, %v3593
  %v3606 = vpack.c.b16 %v3596, %v3595
  %v3607 = vpack.c.b16 %v3598, %v3597
  %v3608 = vpack.c.b16 %v3600, %v3599
  %3617 = vmatprep.subr.bf16.mxu0 0
  %3618 = vmatpush1.bf16.msra.mxu0 %v3601
  %3619 = vmatprep.subr.bf16.mxu0 0
  %3620 = vmatpush1.bf16.msra.mxu0 %v3602
  %3621 = vmatprep.subr.bf16.mxu0 0
  %3622 = vmatpush1.bf16.msra.mxu0 %v3603
  %3623 = vmatprep.subr.bf16.mxu0 0
  %3624 = vmatpush1.bf16.msra.mxu0 %v3604
  %3625 = vmatprep.subr.bf16.mxu0 0
  %3626 = vmatpush1.bf16.msra.mxu0 %v3605
  %3627 = vmatprep.subr.bf16.mxu0 0
  %3628 = vmatpush1.bf16.msra.mxu0 %v3606
  %3629 = vmatprep.subr.bf16.mxu0 0
  %3630 = vmatpush1.bf16.msra.mxu0 %v3607
  %3631 = vmatprep.subr.bf16.mxu0 0
  %3632 = vmatpush1.bf16.msra.mxu0 %v3608
  %3633 = vmatprep.subr.bf16.mxu0 0
  %3634 = vmatpush1.bf16.msra.mxu0 0
  %3635 = vmatprep.subr.bf16.mxu0 0
  %3636 = vmatpush1.bf16.msra.mxu0 0
  %3637 = vmatprep.subr.bf16.mxu0 0
  %3638 = vmatpush1.bf16.msra.mxu0 0
  %3639 = vmatprep.subr.bf16.mxu0 0
  %3640 = vmatpush1.bf16.msra.mxu0 0
  %3641 = vmatprep.subr.bf16.mxu0 0
  %3642 = vmatpush1.bf16.msra.mxu0 0
  %3643 = vmatprep.subr.bf16.mxu0 0
  %3644 = vmatpush1.bf16.msra.mxu0 0
  %3645 = vmatprep.subr.bf16.mxu0 0
  %3646 = vmatpush1.bf16.msra.mxu0 0
  %3647 = vmatprep.subr.bf16.mxu0 0
  %3648 = vmatpush1.bf16.msra.mxu0 0
  %3649 = vmatprep.mubr.bf16.mxu0 0
  %3650 = vmatmul.mubr.bf16.gmra.mrb[0].mxu0 %v2775
  %v3651 = vpop.f32.mrb[0].mxu0
  %v3652 = vadd.f32 0.0, %v3651
  %v3653 = vpop.f32.mrb[0].mxu0
  %v3654 = vpop.f32.mrb[0].mxu0
  %v3655 = vadd.f32 0.0, %v3654
  %v3656 = vpop.f32.mrb[0].mxu0
  %3657 = vmatprep.mubr.bf16.mxu0 0
  %3658 = vmatmul.mubr.bf16.gmra.mrb[0].mxu0 %v2776
  %v3659 = vpop.f32.mrb[0].mxu0
  %v3660 = vadd.f32 0.0, %v3659
  %v3661 = vpop.f32.mrb[0].mxu0
  %v3662 = vpop.f32.mrb[0].mxu0
  %v3663 = vadd.f32 0.0, %v3662
  %v3664 = vpop.f32.mrb[0].mxu0
  %3665 = vmatprep.mubr.bf16.mxu0 0
  %3666 = vmatmul.mubr.bf16.gmra.mrb[0].mxu0 %v3181
  %v3667 = vpop.f32.mrb[0].mxu0
  %v3668 = vadd.f32 0.0, %v3667
  %v3669 = vpop.f32.mrb[0].mxu0
  %v3670 = vpop.f32.mrb[0].mxu0
  %v3671 = vadd.f32 0.0, %v3670
  %v3672 = vpop.f32.mrb[0].mxu0
  %3673 = vmatprep.mubr.bf16.mxu0 0
  %3674 = vmatmul.mubr.bf16.gmra.mrb[0].mxu0 %v3565
  %v3675 = vpop.f32.mrb[0].mxu0
  %v3676 = vadd.f32 0.0, %v3675
  %v3677 = vpop.f32.mrb[0].mxu0
  %v3678 = vpop.f32.mrb[0].mxu0
  %v3679 = vadd.f32 0.0, %v3678
  %v3680 = vpop.f32.mrb[0].mxu0
  %3681 = vmatprep.mubr.bf16.mxu0 0
  %3682 = vmatmul.mubr.bf16.gmra.mrb[0].mxu0 %v2779
  %v3683 = vpop.f32.mrb[0].mxu0
  %v3684 = vadd.f32 0.0, %v3683
  %v3685 = vpop.f32.mrb[0].mxu0
  %v3686 = vpop.f32.mrb[0].mxu0
  %v3687 = vadd.f32 0.0, %v3686
  %v3688 = vpop.f32.mrb[0].mxu0
  %3689 = vmatprep.mubr.bf16.mxu0 0
  %3690 = vmatmul.mubr.bf16.gmra.mrb[0].mxu0 %v2780
  %v3691 = vpop.f32.mrb[0].mxu0
  %v3692 = vadd.f32 0.0, %v3691
  %v3693 = vpop.f32.mrb[0].mxu0
  %v3694 = vpop.f32.mrb[0].mxu0
  %v3695 = vadd.f32 0.0, %v3694
  %v3696 = vpop.f32.mrb[0].mxu0
  %3697 = vmatprep.mubr.bf16.mxu0 0
  %3698 = vmatmul.mubr.bf16.gmra.mrb[0].mxu0 %v3182
  %v3699 = vpop.f32.mrb[0].mxu0
  %v3700 = vadd.f32 0.0, %v3699
  %v3701 = vpop.f32.mrb[0].mxu0
  %v3702 = vpop.f32.mrb[0].mxu0
  %v3703 = vadd.f32 0.0, %v3702
  %v3704 = vpop.f32.mrb[0].mxu0
  %3705 = vmatprep.mubr.bf16.mxu0 0
  %3706 = vmatmul.mubr.bf16.gmra.mrb[0].mxu0 %v3566
  %v3707 = vpop.f32.mrb[0].mxu0
  %v3708 = vadd.f32 0.0, %v3707
  %v3709 = vpop.f32.mrb[0].mxu0
  %v3710 = vpop.f32.mrb[0].mxu0
  %v3711 = vadd.f32 0.0, %v3710
  %v3712 = vpop.f32.mrb[0].mxu0
  %3713 = vdwg.mxu0
  %v3714 = vadd.f32 %v3522, %v3652
  %v3715 = vadd.f32 %v3523, %v3655
  %v3716 = vadd.f32 %v3524, %v3660
  %v3717 = vadd.f32 %v3525, %v3663
  %v3718 = vadd.f32 %v3526, %v3668
  %v3719 = vadd.f32 %v3527, %v3671
  %v3720 = vadd.f32 %v3528, %v3676
  %v3721 = vadd.f32 %v3529, %v3679
  %v3722 = vadd.f32 %v3530, %v3684
  %v3723 = vadd.f32 %v3531, %v3687
  %v3724 = vadd.f32 %v3532, %v3692
  %v3725 = vadd.f32 %v3533, %v3695
  %v3726 = vadd.f32 %v3534, %v3700
  %v3727 = vadd.f32 %v3535, %v3703
  %v3728 = vadd.f32 %v3536, %v3708
  %v3729 = vadd.f32 %v3537, %v3711
  %vm3730 = vsmask.f32 2304
  %vm3731 = vsmask.f32 6416
  %vm3732 = vmor %vm3730, %vm3731
  %v3733 = vrot.slane %v1340, 5
  %v3734 = vrot.slane %v1343, 6
  %v3735 = vor.u32 %v3733, %v3734
  %v3736 = vrot.slane %v3735, 4
  %v3737 = vshrl.u32 %v1305, 16
  %v3739 = vrot.slane %v3737, 5
  %v3740 = vrot.slane %v1349, 6
  %v3741 = vor.u32 %v3739, %v3740
  %v3742 = vsel %vm3732, %v3736, %v3741
  %v3743 = vrot.slane %v1354, 5
  %v3744 = vrot.slane %v1357, 6
  %v3745 = vor.u32 %v3743, %v3744
  %v3746 = vrot.slane %v3745, 4
  %v3747 = vshrl.u32 %v1307, 16
  %v3749 = vrot.slane %v3747, 5
  %v3750 = vrot.slane %v1363, 6
  %v3751 = vor.u32 %v3749, %v3750
  %v3752 = vsel %vm3732, %v3746, %v3751
  %v3753 = vrot.slane %v1368, 5
  %v3754 = vrot.slane %v1371, 6
  %v3755 = vor.u32 %v3753, %v3754
  %v3756 = vrot.slane %v3755, 4
  %v3757 = vshrl.u32 %v1309, 16
  %v3759 = vrot.slane %v3757, 5
  %v3760 = vrot.slane %v1377, 6
  %v3761 = vor.u32 %v3759, %v3760
  %v3762 = vsel %vm3732, %v3756, %v3761
  %v3763 = vrot.slane %v1382, 5
  %v3764 = vrot.slane %v1385, 6
  %v3765 = vor.u32 %v3763, %v3764
  %v3766 = vrot.slane %v3765, 4
  %v3767 = vshrl.u32 %v1311, 16
  %v3769 = vrot.slane %v3767, 5
  %v3770 = vrot.slane %v1391, 6
  %v3771 = vor.u32 %v3769, %v3770
  %v3772 = vsel %vm3732, %v3766, %v3771
  %v3773 = vrot.slane %v1396, 5
  %v3774 = vrot.slane %v1399, 6
  %v3775 = vor.u32 %v3773, %v3774
  %v3776 = vrot.slane %v3775, 4
  %v3777 = vshrl.u32 %v1313, 16
  %v3779 = vrot.slane %v3777, 5
  %v3780 = vrot.slane %v1405, 6
  %v3781 = vor.u32 %v3779, %v3780
  %v3782 = vsel %vm3732, %v3776, %v3781
  %v3783 = vrot.slane %v1410, 5
  %v3784 = vrot.slane %v1413, 6
  %v3785 = vor.u32 %v3783, %v3784
  %v3786 = vrot.slane %v3785, 4
  %v3787 = vshrl.u32 %v1315, 16
  %v3789 = vrot.slane %v3787, 5
  %v3790 = vrot.slane %v1419, 6
  %v3791 = vor.u32 %v3789, %v3790
  %v3792 = vsel %vm3732, %v3786, %v3791
  %v3793 = vrot.slane %v1424, 5
  %v3794 = vrot.slane %v1427, 6
  %v3795 = vor.u32 %v3793, %v3794
  %v3796 = vrot.slane %v3795, 4
  %v3797 = vshrl.u32 %v1317, 16
  %v3799 = vrot.slane %v3797, 5
  %v3800 = vrot.slane %v1433, 6
  %v3801 = vor.u32 %v3799, %v3800
  %v3802 = vsel %vm3732, %v3796, %v3801
  %v3803 = vrot.slane %v1438, 5
  %v3804 = vrot.slane %v1441, 6
  %v3805 = vor.u32 %v3803, %v3804
  %v3806 = vrot.slane %v3805, 4
  %v3807 = vshrl.u32 %v1319, 16
  %v3809 = vrot.slane %v3807, 5
  %v3810 = vrot.slane %v1447, 6
  %v3811 = vor.u32 %v3809, %v3810
  %v3812 = vsel %vm3732, %v3806, %v3811
  %v3813 = vrot.slane %v1452, 5
  %v3814 = vrot.slane %v1455, 6
  %v3815 = vor.u32 %v3813, %v3814
  %v3816 = vrot.slane %v3815, 4
  %v3817 = vshrl.u32 %v1321, 16
  %v3819 = vrot.slane %v3817, 5
  %v3820 = vrot.slane %v1461, 6
  %v3821 = vor.u32 %v3819, %v3820
  %v3822 = vsel %vm3732, %v3816, %v3821
  %v3823 = vrot.slane %v1466, 5
  %v3824 = vrot.slane %v1469, 6
  %v3825 = vor.u32 %v3823, %v3824
  %v3826 = vrot.slane %v3825, 4
  %v3827 = vshrl.u32 %v1323, 16
  %v3829 = vrot.slane %v3827, 5
  %v3830 = vrot.slane %v1475, 6
  %v3831 = vor.u32 %v3829, %v3830
  %v3832 = vsel %vm3732, %v3826, %v3831
  %v3833 = vrot.slane %v1480, 5
  %v3834 = vrot.slane %v1483, 6
  %v3835 = vor.u32 %v3833, %v3834
  %v3836 = vrot.slane %v3835, 4
  %v3837 = vshrl.u32 %v1325, 16
  %v3839 = vrot.slane %v3837, 5
  %v3840 = vrot.slane %v1489, 6
  %v3841 = vor.u32 %v3839, %v3840
  %v3842 = vsel %vm3732, %v3836, %v3841
  %v3843 = vrot.slane %v1494, 5
  %v3844 = vrot.slane %v1497, 6
  %v3845 = vor.u32 %v3843, %v3844
  %v3846 = vrot.slane %v3845, 4
  %v3847 = vshrl.u32 %v1327, 16
  %v3849 = vrot.slane %v3847, 5
  %v3850 = vrot.slane %v1503, 6
  %v3851 = vor.u32 %v3849, %v3850
  %v3852 = vsel %vm3732, %v3846, %v3851
  %v3853 = vrot.slane %v1508, 5
  %v3854 = vrot.slane %v1511, 6
  %v3855 = vor.u32 %v3853, %v3854
  %v3856 = vrot.slane %v3855, 4
  %v3857 = vshrl.u32 %v1329, 16
  %v3859 = vrot.slane %v3857, 5
  %v3860 = vrot.slane %v1517, 6
  %v3861 = vor.u32 %v3859, %v3860
  %v3862 = vsel %vm3732, %v3856, %v3861
  %v3863 = vrot.slane %v1522, 5
  %v3864 = vrot.slane %v1525, 6
  %v3865 = vor.u32 %v3863, %v3864
  %v3866 = vrot.slane %v3865, 4
  %v3867 = vshrl.u32 %v1331, 16
  %v3869 = vrot.slane %v3867, 5
  %v3870 = vrot.slane %v1531, 6
  %v3871 = vor.u32 %v3869, %v3870
  %v3872 = vsel %vm3732, %v3866, %v3871
  %v3873 = vrot.slane %v1536, 5
  %v3874 = vrot.slane %v1539, 6
  %v3875 = vor.u32 %v3873, %v3874
  %v3876 = vrot.slane %v3875, 4
  %v3877 = vshrl.u32 %v1333, 16
  %v3879 = vrot.slane %v3877, 5
  %v3880 = vrot.slane %v1545, 6
  %v3881 = vor.u32 %v3879, %v3880
  %v3882 = vsel %vm3732, %v3876, %v3881
  %v3883 = vrot.slane %v1550, 5
  %v3884 = vrot.slane %v1553, 6
  %v3885 = vor.u32 %v3883, %v3884
  %v3886 = vrot.slane %v3885, 4
  %v3887 = vshrl.u32 %v1335, 16
  %v3889 = vrot.slane %v3887, 5
  %v3890 = vrot.slane %v1559, 6
  %v3891 = vor.u32 %v3889, %v3890
  %v3892 = vsel %vm3732, %v3886, %v3891
  %s3893 = scalar_lea.vmem %s4, 192
  %v3894 = vld [vmem:[%s3893] sm:$0xf]
  %v3895 = vld [vmem:[%s3893 + $0x4] sm:$0xf]
  %v3896 = vld [vmem:[%s3893 + $0x8] sm:$0xf]
  %v3897 = vld [vmem:[%s3893 + $0xc] sm:$0xf]
  %v3898 = vld [vmem:[%s3893 + $0x10] sm:$0xf]
  %v3899 = vld [vmem:[%s3893 + $0x14] sm:$0xf]
  %v3900 = vld [vmem:[%s3893 + $0x18] sm:$0xf]
  %v3901 = vld [vmem:[%s3893 + $0x1c] sm:$0xf]
  %v3902 = vld [vmem:[%s3893 + $0x20] sm:$0xf]
  %v3903 = vld [vmem:[%s3893 + $0x24] sm:$0xf]
  %v3904 = vld [vmem:[%s3893 + $0x28] sm:$0xf]
  %v3905 = vld [vmem:[%s3893 + $0x2c] sm:$0xf]
  %v3906 = vld [vmem:[%s3893 + $0x30] sm:$0xf]
  %v3907 = vld [vmem:[%s3893 + $0x34] sm:$0xf]
  %v3908 = vld [vmem:[%s3893 + $0x38] sm:$0xf]
  %v3909 = vld [vmem:[%s3893 + $0x3c] sm:$0xf]
  %v3910 = vunpack.c.l.b16 %v3742
  %v3911 = vunpack.c.l.b16 %v3752
  %v3912 = vunpack.c.l.b16 %v3762
  %v3913 = vunpack.c.l.b16 %v3772
  %v3914 = vunpack.c.l.b16 %v3782
  %v3915 = vunpack.c.l.b16 %v3792
  %v3916 = vunpack.c.l.b16 %v3802
  %v3917 = vunpack.c.l.b16 %v3812
  %v3918 = vunpack.c.l.b16 %v3822
  %v3919 = vunpack.c.l.b16 %v3832
  %v3920 = vunpack.c.l.b16 %v3842
  %v3921 = vunpack.c.l.b16 %v3852
  %v3922 = vunpack.c.l.b16 %v3862
  %v3923 = vunpack.c.l.b16 %v3872
  %v3924 = vunpack.c.l.b16 %v3882
  %v3925 = vunpack.c.l.b16 %v3892
  %v3926 = vpack.c.b16 %v3911, %v3910
  %v3927 = vpack.c.b16 %v3913, %v3912
  %v3928 = vpack.c.b16 %v3915, %v3914
  %v3929 = vpack.c.b16 %v3917, %v3916
  %v3930 = vpack.c.b16 %v3919, %v3918
  %v3931 = vpack.c.b16 %v3921, %v3920
  %v3932 = vpack.c.b16 %v3923, %v3922
  %v3933 = vpack.c.b16 %v3925, %v3924
  %v3958 = vunpack.c.l.b16 %v3894
  %v3959 = vunpack.c.l.b16 %v3895
  %v3960 = vunpack.c.l.b16 %v3896
  %v3961 = vunpack.c.l.b16 %v3897
  %v3962 = vunpack.c.l.b16 %v3898
  %v3963 = vunpack.c.l.b16 %v3899
  %v3964 = vunpack.c.l.b16 %v3900
  %v3965 = vunpack.c.l.b16 %v3901
  %v3966 = vunpack.c.l.b16 %v3902
  %v3967 = vunpack.c.l.b16 %v3903
  %v3968 = vunpack.c.l.b16 %v3904
  %v3969 = vunpack.c.l.b16 %v3905
  %v3970 = vunpack.c.l.b16 %v3906
  %v3971 = vunpack.c.l.b16 %v3907
  %v3972 = vunpack.c.l.b16 %v3908
  %v3973 = vunpack.c.l.b16 %v3909
  %v3974 = vpack.c.b16 %v3959, %v3958
  %v3975 = vpack.c.b16 %v3961, %v3960
  %v3976 = vpack.c.b16 %v3963, %v3962
  %v3977 = vpack.c.b16 %v3965, %v3964
  %v3978 = vpack.c.b16 %v3967, %v3966
  %v3979 = vpack.c.b16 %v3969, %v3968
  %v3980 = vpack.c.b16 %v3971, %v3970
  %v3981 = vpack.c.b16 %v3973, %v3972
  %3990 = vmatprep.subr.bf16.mxu0 0
  %3991 = vmatpush1.bf16.msra.mxu0 %v3974
  %3992 = vmatprep.subr.bf16.mxu0 0
  %3993 = vmatpush1.bf16.msra.mxu0 %v3975
  %3994 = vmatprep.subr.bf16.mxu0 0
  %3995 = vmatpush1.bf16.msra.mxu0 %v3976
  %3996 = vmatprep.subr.bf16.mxu0 0
  %3997 = vmatpush1.bf16.msra.mxu0 %v3977
  %3998 = vmatprep.subr.bf16.mxu0 0
  %3999 = vmatpush1.bf16.msra.mxu0 %v3978
  %4000 = vmatprep.subr.bf16.mxu0 0
  %4001 = vmatpush1.bf16.msra.mxu0 %v3979
  %4002 = vmatprep.subr.bf16.mxu0 0
  %4003 = vmatpush1.bf16.msra.mxu0 %v3980
  %4004 = vmatprep.subr.bf16.mxu0 0
  %4005 = vmatpush1.bf16.msra.mxu0 %v3981
  %4006 = vmatprep.subr.bf16.mxu0 0
  %4007 = vmatpush1.bf16.msra.mxu0 0
  %4008 = vmatprep.subr.bf16.mxu0 0
  %4009 = vmatpush1.bf16.msra.mxu0 0
  %4010 = vmatprep.subr.bf16.mxu0 0
  %4011 = vmatpush1.bf16.msra.mxu0 0
  %4012 = vmatprep.subr.bf16.mxu0 0
  %4013 = vmatpush1.bf16.msra.mxu0 0
  %4014 = vmatprep.subr.bf16.mxu0 0
  %4015 = vmatpush1.bf16.msra.mxu0 0
  %4016 = vmatprep.subr.bf16.mxu0 0
  %4017 = vmatpush1.bf16.msra.mxu0 0
  %4018 = vmatprep.subr.bf16.mxu0 0
  %4019 = vmatpush1.bf16.msra.mxu0 0
  %4020 = vmatprep.subr.bf16.mxu0 0
  %4021 = vmatpush1.bf16.msra.mxu0 0
  %4022 = vmatprep.mubr.bf16.mxu0 0
  %4023 = vmatmul.mubr.bf16.gmra.mrb[0].mxu0 %v3926
  %v4024 = vpop.f32.mrb[0].mxu0
  %v4025 = vadd.f32 0.0, %v4024
  %v4026 = vpop.f32.mrb[0].mxu0
  %v4027 = vpop.f32.mrb[0].mxu0
  %v4028 = vadd.f32 0.0, %v4027
  %v4029 = vpop.f32.mrb[0].mxu0
  %4030 = vmatprep.mubr.bf16.mxu0 0
  %4031 = vmatmul.mubr.bf16.gmra.mrb[0].mxu0 %v3927
  %v4032 = vpop.f32.mrb[0].mxu0
  %v4033 = vadd.f32 0.0, %v4032
  %v4034 = vpop.f32.mrb[0].mxu0
  %v4035 = vpop.f32.mrb[0].mxu0
  %v4036 = vadd.f32 0.0, %v4035
  %v4037 = vpop.f32.mrb[0].mxu0
  %4038 = vmatprep.mubr.bf16.mxu0 0
  %4039 = vmatmul.mubr.bf16.gmra.mrb[0].mxu0 %v3928
  %v4040 = vpop.f32.mrb[0].mxu0
  %v4041 = vadd.f32 0.0, %v4040
  %v4042 = vpop.f32.mrb[0].mxu0
  %v4043 = vpop.f32.mrb[0].mxu0
  %v4044 = vadd.f32 0.0, %v4043
  %v4045 = vpop.f32.mrb[0].mxu0
  %4046 = vmatprep.mubr.bf16.mxu0 0
  %4047 = vmatmul.mubr.bf16.gmra.mrb[0].mxu0 %v3929
  %v4048 = vpop.f32.mrb[0].mxu0
  %v4049 = vadd.f32 0.0, %v4048
  %v4050 = vpop.f32.mrb[0].mxu0
  %v4051 = vpop.f32.mrb[0].mxu0
  %v4052 = vadd.f32 0.0, %v4051
  %v4053 = vpop.f32.mrb[0].mxu0
  %4054 = vmatprep.mubr.bf16.mxu0 0
  %4055 = vmatmul.mubr.bf16.gmra.mrb[0].mxu0 %v3930
  %v4056 = vpop.f32.mrb[0].mxu0
  %v4057 = vadd.f32 0.0, %v4056
  %v4058 = vpop.f32.mrb[0].mxu0
  %v4059 = vpop.f32.mrb[0].mxu0
  %v4060 = vadd.f32 0.0, %v4059
  %v4061 = vpop.f32.mrb[0].mxu0
  %4062 = vmatprep.mubr.bf16.mxu0 0
  %4063 = vmatmul.mubr.bf16.gmra.mrb[0].mxu0 %v3931
  %v4064 = vpop.f32.mrb[0].mxu0
  %v4065 = vadd.f32 0.0, %v4064
  %v4066 = vpop.f32.mrb[0].mxu0
  %v4067 = vpop.f32.mrb[0].mxu0
  %v4068 = vadd.f32 0.0, %v4067
  %v4069 = vpop.f32.mrb[0].mxu0
  %4070 = vmatprep.mubr.bf16.mxu0 0
  %4071 = vmatmul.mubr.bf16.gmra.mrb[0].mxu0 %v3932
  %v4072 = vpop.f32.mrb[0].mxu0
  %v4073 = vadd.f32 0.0, %v4072
  %v4074 = vpop.f32.mrb[0].mxu0
  %v4075 = vpop.f32.mrb[0].mxu0
  %v4076 = vadd.f32 0.0, %v4075
  %v4077 = vpop.f32.mrb[0].mxu0
  %4078 = vmatprep.mubr.bf16.mxu0 0
  %4079 = vmatmul.mubr.bf16.gmra.mrb[0].mxu0 %v3933
  %v4080 = vpop.f32.mrb[0].mxu0
  %v4081 = vadd.f32 0.0, %v4080
  %v4082 = vpop.f32.mrb[0].mxu0
  %v4083 = vpop.f32.mrb[0].mxu0
  %v4084 = vadd.f32 0.0, %v4083
  %v4085 = vpop.f32.mrb[0].mxu0
  %4086 = vdwg.mxu0
  %v4087 = vadd.f32 %v3714, %v4025
  %v4088 = vadd.f32 %v3715, %v4028
  %v4089 = vadd.f32 %v3716, %v4033
  %v4090 = vadd.f32 %v3717, %v4036
  %v4091 = vadd.f32 %v3718, %v4041
  %v4092 = vadd.f32 %v3719, %v4044
  %v4093 = vadd.f32 %v3720, %v4049
  %v4094 = vadd.f32 %v3721, %v4052
  %v4095 = vadd.f32 %v3722, %v4057
  %v4096 = vadd.f32 %v3723, %v4060
  %v4097 = vadd.f32 %v3724, %v4065
  %v4098 = vadd.f32 %v3725, %v4068
  %v4099 = vadd.f32 %v3726, %v4073
  %v4100 = vadd.f32 %v3727, %v4076
  %v4101 = vadd.f32 %v3728, %v4081
  %v4102 = vadd.f32 %v3729, %v4084
  %v4103 = vrot.slane %v1784, 5
  %v4104 = vrot.slane %v1787, 6
  %v4105 = vor.u32 %v4103, %v4104
  %v4106 = vrot.slane %v4105, 4
  %v4107 = vshrl.u32 %v1780, 16
  %v4109 = vrot.slane %v4107, 5
  %v4110 = vrot.slane %v1793, 6
  %v4111 = vor.u32 %v4109, %v4110
  %v4112 = vsel %vm3732, %v4106, %v4111
  %v4113 = vrot.slane %v1798, 5
  %v4114 = vrot.slane %v1801, 6
  %v4115 = vor.u32 %v4113, %v4114
  %v4116 = vrot.slane %v4115, 4
  %v4117 = vshrl.u32 %v1782, 16
  %v4119 = vrot.slane %v4117, 5
  %v4120 = vrot.slane %v1807, 6
  %v4121 = vor.u32 %v4119, %v4120
  %v4122 = vsel %vm3732, %v4116, %v4121
  %s4123 = scalar_lea.vmem %s4, 512
  %v4124 = vld [vmem:[%s4123] sm:$0xf]
  %v4125 = vld [vmem:[%s4123 + $0x4] sm:$0xf]
  %v4126 = vld [vmem:[%s4123 + $0x8] sm:$0xf]
  %v4127 = vld [vmem:[%s4123 + $0xc] sm:$0xf]
  %v4128 = vld [vmem:[%s4123 + $0x10] sm:$0xf]
  %v4129 = vld [vmem:[%s4123 + $0x14] sm:$0xf]
  %v4130 = vld [vmem:[%s4123 + $0x18] sm:$0xf]
  %v4131 = vld [vmem:[%s4123 + $0x1c] sm:$0xf]
  %v4132 = vld [vmem:[%s4123 + $0x20] sm:$0xf]
  %v4133 = vld [vmem:[%s4123 + $0x24] sm:$0xf]
  %v4134 = vld [vmem:[%s4123 + $0x28] sm:$0xf]
  %v4135 = vld [vmem:[%s4123 + $0x2c] sm:$0xf]
  %v4136 = vld [vmem:[%s4123 + $0x30] sm:$0xf]
  %v4137 = vld [vmem:[%s4123 + $0x34] sm:$0xf]
  %v4138 = vld [vmem:[%s4123 + $0x38] sm:$0xf]
  %v4139 = vld [vmem:[%s4123 + $0x3c] sm:$0xf]
  %v4140 = vunpack.c.l.b16 %v4112
  %v4141 = vunpack.c.l.b16 %v4122
  %v4142 = vpack.c.b16 %v3912, %v3911
  %v4143 = vpack.c.b16 %v3914, %v3913
  %v4144 = vpack.c.b16 %v3916, %v3915
  %v4145 = vpack.c.b16 %v4140, %v3917
  %v4146 = vpack.c.b16 %v3920, %v3919
  %v4147 = vpack.c.b16 %v3922, %v3921
  %v4148 = vpack.c.b16 %v3924, %v3923
  %v4149 = vpack.c.b16 %v4141, %v3925
  %v4174 = vunpack.c.l.b16 %v4124
  %v4175 = vunpack.c.l.b16 %v4125
  %v4176 = vunpack.c.l.b16 %v4126
  %v4177 = vunpack.c.l.b16 %v4127
  %v4178 = vunpack.c.l.b16 %v4128
  %v4179 = vunpack.c.l.b16 %v4129
  %v4180 = vunpack.c.l.b16 %v4130
  %v4181 = vunpack.c.l.b16 %v4131
  %v4182 = vunpack.c.l.b16 %v4132
  %v4183 = vunpack.c.l.b16 %v4133
  %v4184 = vunpack.c.l.b16 %v4134
  %v4185 = vunpack.c.l.b16 %v4135
  %v4186 = vunpack.c.l.b16 %v4136
  %v4187 = vunpack.c.l.b16 %v4137
  %v4188 = vunpack.c.l.b16 %v4138
  %v4189 = vunpack.c.l.b16 %v4139
  %v4190 = vpack.c.b16 %v4175, %v4174
  %v4191 = vpack.c.b16 %v4177, %v4176
  %v4192 = vpack.c.b16 %v4179, %v4178
  %v4193 = vpack.c.b16 %v4181, %v4180
  %v4194 = vpack.c.b16 %v4183, %v4182
  %v4195 = vpack.c.b16 %v4185, %v4184
  %v4196 = vpack.c.b16 %v4187, %v4186
  %v4197 = vpack.c.b16 %v4189, %v4188
  %4206 = vmatprep.subr.bf16.mxu0 0
  %4207 = vmatpush1.bf16.msra.mxu0 %v4190
  %4208 = vmatprep.subr.bf16.mxu0 0
  %4209 = vmatpush1.bf16.msra.mxu0 %v4191
  %4210 = vmatprep.subr.bf16.mxu0 0
  %4211 = vmatpush1.bf16.msra.mxu0 %v4192
  %4212 = vmatprep.subr.bf16.mxu0 0
  %4213 = vmatpush1.bf16.msra.mxu0 %v4193
  %4214 = vmatprep.subr.bf16.mxu0 0
  %4215 = vmatpush1.bf16.msra.mxu0 %v4194
  %4216 = vmatprep.subr.bf16.mxu0 0
  %4217 = vmatpush1.bf16.msra.mxu0 %v4195
  %4218 = vmatprep.subr.bf16.mxu0 0
  %4219 = vmatpush1.bf16.msra.mxu0 %v4196
  %4220 = vmatprep.subr.bf16.mxu0 0
  %4221 = vmatpush1.bf16.msra.mxu0 %v4197
  %4222 = vmatprep.subr.bf16.mxu0 0
  %4223 = vmatpush1.bf16.msra.mxu0 0
  %4224 = vmatprep.subr.bf16.mxu0 0
  %4225 = vmatpush1.bf16.msra.mxu0 0
  %4226 = vmatprep.subr.bf16.mxu0 0
  %4227 = vmatpush1.bf16.msra.mxu0 0
  %4228 = vmatprep.subr.bf16.mxu0 0
  %4229 = vmatpush1.bf16.msra.mxu0 0
  %4230 = vmatprep.subr.bf16.mxu0 0
  %4231 = vmatpush1.bf16.msra.mxu0 0
  %4232 = vmatprep.subr.bf16.mxu0 0
  %4233 = vmatpush1.bf16.msra.mxu0 0
  %4234 = vmatprep.subr.bf16.mxu0 0
  %4235 = vmatpush1.bf16.msra.mxu0 0
  %4236 = vmatprep.subr.bf16.mxu0 0
  %4237 = vmatpush1.bf16.msra.mxu0 0
  %4238 = vmatprep.mubr.bf16.mxu0 0
  %4239 = vmatmul.mubr.bf16.gmra.mrb[0].mxu0 %v4142
  %v4240 = vpop.f32.mrb[0].mxu0
  %v4241 = vadd.f32 0.0, %v4240
  %v4242 = vpop.f32.mrb[0].mxu0
  %v4243 = vpop.f32.mrb[0].mxu0
  %v4244 = vadd.f32 0.0, %v4243
  %v4245 = vpop.f32.mrb[0].mxu0
  %4246 = vmatprep.mubr.bf16.mxu0 0
  %4247 = vmatmul.mubr.bf16.gmra.mrb[0].mxu0 %v4143
  %v4248 = vpop.f32.mrb[0].mxu0
  %v4249 = vadd.f32 0.0, %v4248
  %v4250 = vpop.f32.mrb[0].mxu0
  %v4251 = vpop.f32.mrb[0].mxu0
  %v4252 = vadd.f32 0.0, %v4251
  %v4253 = vpop.f32.mrb[0].mxu0
  %4254 = vmatprep.mubr.bf16.mxu0 0
  %4255 = vmatmul.mubr.bf16.gmra.mrb[0].mxu0 %v4144
  %v4256 = vpop.f32.mrb[0].mxu0
  %v4257 = vadd.f32 0.0, %v4256
  %v4258 = vpop.f32.mrb[0].mxu0
  %v4259 = vpop.f32.mrb[0].mxu0
  %v4260 = vadd.f32 0.0, %v4259
  %v4261 = vpop.f32.mrb[0].mxu0
  %4262 = vmatprep.mubr.bf16.mxu0 0
  %4263 = vmatmul.mubr.bf16.gmra.mrb[0].mxu0 %v4145
  %v4264 = vpop.f32.mrb[0].mxu0
  %v4265 = vadd.f32 0.0, %v4264
  %v4266 = vpop.f32.mrb[0].mxu0
  %v4267 = vpop.f32.mrb[0].mxu0
  %v4268 = vadd.f32 0.0, %v4267
  %v4269 = vpop.f32.mrb[0].mxu0
  %4270 = vmatprep.mubr.bf16.mxu0 0
  %4271 = vmatmul.mubr.bf16.gmra.mrb[0].mxu0 %v4146
  %v4272 = vpop.f32.mrb[0].mxu0
  %v4273 = vadd.f32 0.0, %v4272
  %v4274 = vpop.f32.mrb[0].mxu0
  %v4275 = vpop.f32.mrb[0].mxu0
  %v4276 = vadd.f32 0.0, %v4275
  %v4277 = vpop.f32.mrb[0].mxu0
  %4278 = vmatprep.mubr.bf16.mxu0 0
  %4279 = vmatmul.mubr.bf16.gmra.mrb[0].mxu0 %v4147
  %v4280 = vpop.f32.mrb[0].mxu0
  %v4281 = vadd.f32 0.0, %v4280
  %v4282 = vpop.f32.mrb[0].mxu0
  %v4283 = vpop.f32.mrb[0].mxu0
  %v4284 = vadd.f32 0.0, %v4283
  %v4285 = vpop.f32.mrb[0].mxu0
  %4286 = vmatprep.mubr.bf16.mxu0 0
  %4287 = vmatmul.mubr.bf16.gmra.mrb[0].mxu0 %v4148
  %v4288 = vpop.f32.mrb[0].mxu0
  %v4289 = vadd.f32 0.0, %v4288
  %v4290 = vpop.f32.mrb[0].mxu0
  %v4291 = vpop.f32.mrb[0].mxu0
  %v4292 = vadd.f32 0.0, %v4291
  %v4293 = vpop.f32.mrb[0].mxu0
  %4294 = vmatprep.mubr.bf16.mxu0 0
  %4295 = vmatmul.mubr.bf16.gmra.mrb[0].mxu0 %v4149
  %v4296 = vpop.f32.mrb[0].mxu0
  %v4297 = vadd.f32 0.0, %v4296
  %v4298 = vpop.f32.mrb[0].mxu0
  %v4299 = vpop.f32.mrb[0].mxu0
  %v4300 = vadd.f32 0.0, %v4299
  %v4301 = vpop.f32.mrb[0].mxu0
  %4302 = vdwg.mxu0
  %v4303 = vadd.f32 %v4087, %v4241
  %v4304 = vadd.f32 %v4088, %v4244
  %v4305 = vadd.f32 %v4089, %v4249
  %v4306 = vadd.f32 %v4090, %v4252
  %v4307 = vadd.f32 %v4091, %v4257
  %v4308 = vadd.f32 %v4092, %v4260
  %v4309 = vadd.f32 %v4093, %v4265
  %v4310 = vadd.f32 %v4094, %v4268
  %v4311 = vadd.f32 %v4095, %v4273
  %v4312 = vadd.f32 %v4096, %v4276
  %v4313 = vadd.f32 %v4097, %v4281
  %v4314 = vadd.f32 %v4098, %v4284
  %v4315 = vadd.f32 %v4099, %v4289
  %v4316 = vadd.f32 %v4100, %v4292
  %v4317 = vadd.f32 %v4101, %v4297
  %v4318 = vadd.f32 %v4102, %v4300
  %v4319 = vrot.slane %v2018, 5
  %v4320 = vrot.slane %v2021, 6
  %v4321 = vor.u32 %v4319, %v4320
  %v4322 = vrot.slane %v4321, 4
  %v4323 = vshrl.u32 %v2014, 16
  %v4325 = vrot.slane %v4323, 5
  %v4326 = vrot.slane %v2027, 6
  %v4327 = vor.u32 %v4325, %v4326
  %v4328 = vsel %vm3732, %v4322, %v4327
  %v4329 = vrot.slane %v2032, 5
  %v4330 = vrot.slane %v2035, 6
  %v4331 = vor.u32 %v4329, %v4330
  %v4332 = vrot.slane %v4331, 4
  %v4333 = vshrl.u32 %v2016, 16
  %v4335 = vrot.slane %v4333, 5
  %v4336 = vrot.slane %v2041, 6
  %v4337 = vor.u32 %v4335, %v4336
  %v4338 = vsel %vm3732, %v4332, %v4337
  %s4339 = scalar_lea.vmem %s4, 832
  %v4340 = vld [vmem:[%s4339] sm:$0xf]
  %v4341 = vld [vmem:[%s4339 + $0x4] sm:$0xf]
  %v4342 = vld [vmem:[%s4339 + $0x8] sm:$0xf]
  %v4343 = vld [vmem:[%s4339 + $0xc] sm:$0xf]
  %v4344 = vld [vmem:[%s4339 + $0x10] sm:$0xf]
  %v4345 = vld [vmem:[%s4339 + $0x14] sm:$0xf]
  %v4346 = vld [vmem:[%s4339 + $0x18] sm:$0xf]
  %v4347 = vld [vmem:[%s4339 + $0x1c] sm:$0xf]
  %v4348 = vld [vmem:[%s4339 + $0x20] sm:$0xf]
  %v4349 = vld [vmem:[%s4339 + $0x24] sm:$0xf]
  %v4350 = vld [vmem:[%s4339 + $0x28] sm:$0xf]
  %v4351 = vld [vmem:[%s4339 + $0x2c] sm:$0xf]
  %v4352 = vld [vmem:[%s4339 + $0x30] sm:$0xf]
  %v4353 = vld [vmem:[%s4339 + $0x34] sm:$0xf]
  %v4354 = vld [vmem:[%s4339 + $0x38] sm:$0xf]
  %v4355 = vld [vmem:[%s4339 + $0x3c] sm:$0xf]
  %v4356 = vunpack.c.l.b16 %v4328
  %v4357 = vunpack.c.l.b16 %v4338
  %v4358 = vpack.c.b16 %v4356, %v4140
  %v4359 = vpack.c.b16 %v4357, %v4141
  %v4378 = vunpack.c.l.b16 %v4340
  %v4379 = vunpack.c.l.b16 %v4341
  %v4380 = vunpack.c.l.b16 %v4342
  %v4381 = vunpack.c.l.b16 %v4343
  %v4382 = vunpack.c.l.b16 %v4344
  %v4383 = vunpack.c.l.b16 %v4345
  %v4384 = vunpack.c.l.b16 %v4346
  %v4385 = vunpack.c.l.b16 %v4347
  %v4386 = vunpack.c.l.b16 %v4348
  %v4387 = vunpack.c.l.b16 %v4349
  %v4388 = vunpack.c.l.b16 %v4350
  %v4389 = vunpack.c.l.b16 %v4351
  %v4390 = vunpack.c.l.b16 %v4352
  %v4391 = vunpack.c.l.b16 %v4353
  %v4392 = vunpack.c.l.b16 %v4354
  %v4393 = vunpack.c.l.b16 %v4355
  %v4394 = vpack.c.b16 %v4379, %v4378
  %v4395 = vpack.c.b16 %v4381, %v4380
  %v4396 = vpack.c.b16 %v4383, %v4382
  %v4397 = vpack.c.b16 %v4385, %v4384
  %v4398 = vpack.c.b16 %v4387, %v4386
  %v4399 = vpack.c.b16 %v4389, %v4388
  %v4400 = vpack.c.b16 %v4391, %v4390
  %v4401 = vpack.c.b16 %v4393, %v4392
  %4410 = vmatprep.subr.bf16.mxu0 0
  %4411 = vmatpush1.bf16.msra.mxu0 %v4394
  %4412 = vmatprep.subr.bf16.mxu0 0
  %4413 = vmatpush1.bf16.msra.mxu0 %v4395
  %4414 = vmatprep.subr.bf16.mxu0 0
  %4415 = vmatpush1.bf16.msra.mxu0 %v4396
  %4416 = vmatprep.subr.bf16.mxu0 0
  %4417 = vmatpush1.bf16.msra.mxu0 %v4397
  %4418 = vmatprep.subr.bf16.mxu0 0
  %4419 = vmatpush1.bf16.msra.mxu0 %v4398
  %4420 = vmatprep.subr.bf16.mxu0 0
  %4421 = vmatpush1.bf16.msra.mxu0 %v4399
  %4422 = vmatprep.subr.bf16.mxu0 0
  %4423 = vmatpush1.bf16.msra.mxu0 %v4400
  %4424 = vmatprep.subr.bf16.mxu0 0
  %4425 = vmatpush1.bf16.msra.mxu0 %v4401
  %4426 = vmatprep.subr.bf16.mxu0 0
  %4427 = vmatpush1.bf16.msra.mxu0 0
  %4428 = vmatprep.subr.bf16.mxu0 0
  %4429 = vmatpush1.bf16.msra.mxu0 0
  %4430 = vmatprep.subr.bf16.mxu0 0
  %4431 = vmatpush1.bf16.msra.mxu0 0
  %4432 = vmatprep.subr.bf16.mxu0 0
  %4433 = vmatpush1.bf16.msra.mxu0 0
  %4434 = vmatprep.subr.bf16.mxu0 0
  %4435 = vmatpush1.bf16.msra.mxu0 0
  %4436 = vmatprep.subr.bf16.mxu0 0
  %4437 = vmatpush1.bf16.msra.mxu0 0
  %4438 = vmatprep.subr.bf16.mxu0 0
  %4439 = vmatpush1.bf16.msra.mxu0 0
  %4440 = vmatprep.subr.bf16.mxu0 0
  %4441 = vmatpush1.bf16.msra.mxu0 0
  %4442 = vmatprep.mubr.bf16.mxu0 0
  %4443 = vmatmul.mubr.bf16.gmra.mrb[0].mxu0 %v3927
  %v4444 = vpop.f32.mrb[0].mxu0
  %v4445 = vadd.f32 0.0, %v4444
  %v4446 = vpop.f32.mrb[0].mxu0
  %v4447 = vpop.f32.mrb[0].mxu0
  %v4448 = vadd.f32 0.0, %v4447
  %v4449 = vpop.f32.mrb[0].mxu0
  %4450 = vmatprep.mubr.bf16.mxu0 0
  %4451 = vmatmul.mubr.bf16.gmra.mrb[0].mxu0 %v3928
  %v4452 = vpop.f32.mrb[0].mxu0
  %v4453 = vadd.f32 0.0, %v4452
  %v4454 = vpop.f32.mrb[0].mxu0
  %v4455 = vpop.f32.mrb[0].mxu0
  %v4456 = vadd.f32 0.0, %v4455
  %v4457 = vpop.f32.mrb[0].mxu0
  %4458 = vmatprep.mubr.bf16.mxu0 0
  %4459 = vmatmul.mubr.bf16.gmra.mrb[0].mxu0 %v3929
  %v4460 = vpop.f32.mrb[0].mxu0
  %v4461 = vadd.f32 0.0, %v4460
  %v4462 = vpop.f32.mrb[0].mxu0
  %v4463 = vpop.f32.mrb[0].mxu0
  %v4464 = vadd.f32 0.0, %v4463
  %v4465 = vpop.f32.mrb[0].mxu0
  %4466 = vmatprep.mubr.bf16.mxu0 0
  %4467 = vmatmul.mubr.bf16.gmra.mrb[0].mxu0 %v4358
  %v4468 = vpop.f32.mrb[0].mxu0
  %v4469 = vadd.f32 0.0, %v4468
  %v4470 = vpop.f32.mrb[0].mxu0
  %v4471 = vpop.f32.mrb[0].mxu0
  %v4472 = vadd.f32 0.0, %v4471
  %v4473 = vpop.f32.mrb[0].mxu0
  %4474 = vmatprep.mubr.bf16.mxu0 0
  %4475 = vmatmul.mubr.bf16.gmra.mrb[0].mxu0 %v3931
  %v4476 = vpop.f32.mrb[0].mxu0
  %v4477 = vadd.f32 0.0, %v4476
  %v4478 = vpop.f32.mrb[0].mxu0
  %v4479 = vpop.f32.mrb[0].mxu0
  %v4480 = vadd.f32 0.0, %v4479
  %v4481 = vpop.f32.mrb[0].mxu0
  %4482 = vmatprep.mubr.bf16.mxu0 0
  %4483 = vmatmul.mubr.bf16.gmra.mrb[0].mxu0 %v3932
  %v4484 = vpop.f32.mrb[0].mxu0
  %v4485 = vadd.f32 0.0, %v4484
  %v4486 = vpop.f32.mrb[0].mxu0
  %v4487 = vpop.f32.mrb[0].mxu0
  %v4488 = vadd.f32 0.0, %v4487
  %v4489 = vpop.f32.mrb[0].mxu0
  %4490 = vmatprep.mubr.bf16.mxu0 0
  %4491 = vmatmul.mubr.bf16.gmra.mrb[0].mxu0 %v3933
  %v4492 = vpop.f32.mrb[0].mxu0
  %v4493 = vadd.f32 0.0, %v4492
  %v4494 = vpop.f32.mrb[0].mxu0
  %v4495 = vpop.f32.mrb[0].mxu0
  %v4496 = vadd.f32 0.0, %v4495
  %v4497 = vpop.f32.mrb[0].mxu0
  %4498 = vmatprep.mubr.bf16.mxu0 0
  %4499 = vmatmul.mubr.bf16.gmra.mrb[0].mxu0 %v4359
  %v4500 = vpop.f32.mrb[0].mxu0
  %v4501 = vadd.f32 0.0, %v4500
  %v4502 = vpop.f32.mrb[0].mxu0
  %v4503 = vpop.f32.mrb[0].mxu0
  %v4504 = vadd.f32 0.0, %v4503
  %v4505 = vpop.f32.mrb[0].mxu0
  %4506 = vdwg.mxu0
  %v4507 = vadd.f32 %v4303, %v4445
  %v4508 = vadd.f32 %v4304, %v4448
  %v4509 = vadd.f32 %v4305, %v4453
  %v4510 = vadd.f32 %v4306, %v4456
  %v4511 = vadd.f32 %v4307, %v4461
  %v4512 = vadd.f32 %v4308, %v4464
  %v4513 = vadd.f32 %v4309, %v4469
  %v4514 = vadd.f32 %v4310, %v4472
  %v4515 = vadd.f32 %v4311, %v4477
  %v4516 = vadd.f32 %v4312, %v4480
  %v4517 = vadd.f32 %v4313, %v4485
  %v4518 = vadd.f32 %v4314, %v4488
  %v4519 = vadd.f32 %v4315, %v4493
  %v4520 = vadd.f32 %v4316, %v4496
  %v4521 = vadd.f32 %v4317, %v4501
  %v4522 = vadd.f32 %v4318, %v4504
  %v4523 = vrot.slane %v2240, 5
  %v4524 = vrot.slane %v2243, 6
  %v4525 = vor.u32 %v4523, %v4524
  %v4526 = vrot.slane %v4525, 4
  %v4527 = vshrl.u32 %v2236, 16
  %v4529 = vrot.slane %v4527, 5
  %v4530 = vrot.slane %v2249, 6
  %v4531 = vor.u32 %v4529, %v4530
  %v4532 = vsel %vm3732, %v4526, %v4531
  %v4533 = vrot.slane %v2254, 5
  %v4534 = vrot.slane %v2257, 6
  %v4535 = vor.u32 %v4533, %v4534
  %v4536 = vrot.slane %v4535, 4
  %v4537 = vshrl.u32 %v2238, 16
  %v4539 = vrot.slane %v4537, 5
  %v4540 = vrot.slane %v2263, 6
  %v4541 = vor.u32 %v4539, %v4540
  %v4542 = vsel %vm3732, %v4536, %v4541
  %s4543 = scalar_lea.vmem %s4, 1152
  %v4544 = vld [vmem:[%s4543] sm:$0xf]
  %v4545 = vld [vmem:[%s4543 + $0x4] sm:$0xf]
  %v4546 = vld [vmem:[%s4543 + $0x8] sm:$0xf]
  %v4547 = vld [vmem:[%s4543 + $0xc] sm:$0xf]
  %v4548 = vld [vmem:[%s4543 + $0x10] sm:$0xf]
  %v4549 = vld [vmem:[%s4543 + $0x14] sm:$0xf]
  %v4550 = vld [vmem:[%s4543 + $0x18] sm:$0xf]
  %v4551 = vld [vmem:[%s4543 + $0x1c] sm:$0xf]
  %v4552 = vld [vmem:[%s4543 + $0x20] sm:$0xf]
  %v4553 = vld [vmem:[%s4543 + $0x24] sm:$0xf]
  %v4554 = vld [vmem:[%s4543 + $0x28] sm:$0xf]
  %v4555 = vld [vmem:[%s4543 + $0x2c] sm:$0xf]
  %v4556 = vld [vmem:[%s4543 + $0x30] sm:$0xf]
  %v4557 = vld [vmem:[%s4543 + $0x34] sm:$0xf]
  %v4558 = vld [vmem:[%s4543 + $0x38] sm:$0xf]
  %v4559 = vld [vmem:[%s4543 + $0x3c] sm:$0xf]
  %v4560 = vunpack.c.l.b16 %v4532
  %v4561 = vunpack.c.l.b16 %v4542
  %v4562 = vpack.c.b16 %v4560, %v4356
  %v4563 = vpack.c.b16 %v4561, %v4357
  %v4582 = vunpack.c.l.b16 %v4544
  %v4583 = vunpack.c.l.b16 %v4545
  %v4584 = vunpack.c.l.b16 %v4546
  %v4585 = vunpack.c.l.b16 %v4547
  %v4586 = vunpack.c.l.b16 %v4548
  %v4587 = vunpack.c.l.b16 %v4549
  %v4588 = vunpack.c.l.b16 %v4550
  %v4589 = vunpack.c.l.b16 %v4551
  %v4590 = vunpack.c.l.b16 %v4552
  %v4591 = vunpack.c.l.b16 %v4553
  %v4592 = vunpack.c.l.b16 %v4554
  %v4593 = vunpack.c.l.b16 %v4555
  %v4594 = vunpack.c.l.b16 %v4556
  %v4595 = vunpack.c.l.b16 %v4557
  %v4596 = vunpack.c.l.b16 %v4558
  %v4597 = vunpack.c.l.b16 %v4559
  %v4598 = vpack.c.b16 %v4583, %v4582
  %v4599 = vpack.c.b16 %v4585, %v4584
  %v4600 = vpack.c.b16 %v4587, %v4586
  %v4601 = vpack.c.b16 %v4589, %v4588
  %v4602 = vpack.c.b16 %v4591, %v4590
  %v4603 = vpack.c.b16 %v4593, %v4592
  %v4604 = vpack.c.b16 %v4595, %v4594
  %v4605 = vpack.c.b16 %v4597, %v4596
  %4614 = vmatprep.subr.bf16.mxu0 0
  %4615 = vmatpush1.bf16.msra.mxu0 %v4598
  %4616 = vmatprep.subr.bf16.mxu0 0
  %4617 = vmatpush1.bf16.msra.mxu0 %v4599
  %4618 = vmatprep.subr.bf16.mxu0 0
  %4619 = vmatpush1.bf16.msra.mxu0 %v4600
  %4620 = vmatprep.subr.bf16.mxu0 0
  %4621 = vmatpush1.bf16.msra.mxu0 %v4601
  %4622 = vmatprep.subr.bf16.mxu0 0
  %4623 = vmatpush1.bf16.msra.mxu0 %v4602
  %4624 = vmatprep.subr.bf16.mxu0 0
  %4625 = vmatpush1.bf16.msra.mxu0 %v4603
  %4626 = vmatprep.subr.bf16.mxu0 0
  %4627 = vmatpush1.bf16.msra.mxu0 %v4604
  %4628 = vmatprep.subr.bf16.mxu0 0
  %4629 = vmatpush1.bf16.msra.mxu0 %v4605
  %4630 = vmatprep.subr.bf16.mxu0 0
  %4631 = vmatpush1.bf16.msra.mxu0 0
  %4632 = vmatprep.subr.bf16.mxu0 0
  %4633 = vmatpush1.bf16.msra.mxu0 0
  %4634 = vmatprep.subr.bf16.mxu0 0
  %4635 = vmatpush1.bf16.msra.mxu0 0
  %4636 = vmatprep.subr.bf16.mxu0 0
  %4637 = vmatpush1.bf16.msra.mxu0 0
  %4638 = vmatprep.subr.bf16.mxu0 0
  %4639 = vmatpush1.bf16.msra.mxu0 0
  %4640 = vmatprep.subr.bf16.mxu0 0
  %4641 = vmatpush1.bf16.msra.mxu0 0
  %4642 = vmatprep.subr.bf16.mxu0 0
  %4643 = vmatpush1.bf16.msra.mxu0 0
  %4644 = vmatprep.subr.bf16.mxu0 0
  %4645 = vmatpush1.bf16.msra.mxu0 0
  %4646 = vmatprep.mubr.bf16.mxu0 0
  %4647 = vmatmul.mubr.bf16.gmra.mrb[0].mxu0 %v4143
  %v4648 = vpop.f32.mrb[0].mxu0
  %v4649 = vadd.f32 0.0, %v4648
  %v4650 = vpop.f32.mrb[0].mxu0
  %v4651 = vpop.f32.mrb[0].mxu0
  %v4652 = vadd.f32 0.0, %v4651
  %v4653 = vpop.f32.mrb[0].mxu0
  %4654 = vmatprep.mubr.bf16.mxu0 0
  %4655 = vmatmul.mubr.bf16.gmra.mrb[0].mxu0 %v4144
  %v4656 = vpop.f32.mrb[0].mxu0
  %v4657 = vadd.f32 0.0, %v4656
  %v4658 = vpop.f32.mrb[0].mxu0
  %v4659 = vpop.f32.mrb[0].mxu0
  %v4660 = vadd.f32 0.0, %v4659
  %v4661 = vpop.f32.mrb[0].mxu0
  %4662 = vmatprep.mubr.bf16.mxu0 0
  %4663 = vmatmul.mubr.bf16.gmra.mrb[0].mxu0 %v4145
  %v4664 = vpop.f32.mrb[0].mxu0
  %v4665 = vadd.f32 0.0, %v4664
  %v4666 = vpop.f32.mrb[0].mxu0
  %v4667 = vpop.f32.mrb[0].mxu0
  %v4668 = vadd.f32 0.0, %v4667
  %v4669 = vpop.f32.mrb[0].mxu0
  %4670 = vmatprep.mubr.bf16.mxu0 0
  %4671 = vmatmul.mubr.bf16.gmra.mrb[0].mxu0 %v4562
  %v4672 = vpop.f32.mrb[0].mxu0
  %v4673 = vadd.f32 0.0, %v4672
  %v4674 = vpop.f32.mrb[0].mxu0
  %v4675 = vpop.f32.mrb[0].mxu0
  %v4676 = vadd.f32 0.0, %v4675
  %v4677 = vpop.f32.mrb[0].mxu0
  %4678 = vmatprep.mubr.bf16.mxu0 0
  %4679 = vmatmul.mubr.bf16.gmra.mrb[0].mxu0 %v4147
  %v4680 = vpop.f32.mrb[0].mxu0
  %v4681 = vadd.f32 0.0, %v4680
  %v4682 = vpop.f32.mrb[0].mxu0
  %v4683 = vpop.f32.mrb[0].mxu0
  %v4684 = vadd.f32 0.0, %v4683
  %v4685 = vpop.f32.mrb[0].mxu0
  %4686 = vmatprep.mubr.bf16.mxu0 0
  %4687 = vmatmul.mubr.bf16.gmra.mrb[0].mxu0 %v4148
  %v4688 = vpop.f32.mrb[0].mxu0
  %v4689 = vadd.f32 0.0, %v4688
  %v4690 = vpop.f32.mrb[0].mxu0
  %v4691 = vpop.f32.mrb[0].mxu0
  %v4692 = vadd.f32 0.0, %v4691
  %v4693 = vpop.f32.mrb[0].mxu0
  %4694 = vmatprep.mubr.bf16.mxu0 0
  %4695 = vmatmul.mubr.bf16.gmra.mrb[0].mxu0 %v4149
  %v4696 = vpop.f32.mrb[0].mxu0
  %v4697 = vadd.f32 0.0, %v4696
  %v4698 = vpop.f32.mrb[0].mxu0
  %v4699 = vpop.f32.mrb[0].mxu0
  %v4700 = vadd.f32 0.0, %v4699
  %v4701 = vpop.f32.mrb[0].mxu0
  %4702 = vmatprep.mubr.bf16.mxu0 0
  %4703 = vmatmul.mubr.bf16.gmra.mrb[0].mxu0 %v4563
  %v4704 = vpop.f32.mrb[0].mxu0
  %v4705 = vadd.f32 0.0, %v4704
  %v4706 = vpop.f32.mrb[0].mxu0
  %v4707 = vpop.f32.mrb[0].mxu0
  %v4708 = vadd.f32 0.0, %v4707
  %v4709 = vpop.f32.mrb[0].mxu0
  %4710 = vdwg.mxu0
  %v4711 = vadd.f32 %v4507, %v4649
  %v4712 = vadd.f32 %v4508, %v4652
  %v4713 = vadd.f32 %v4509, %v4657
  %v4714 = vadd.f32 %v4510, %v4660
  %v4715 = vadd.f32 %v4511, %v4665
  %v4716 = vadd.f32 %v4512, %v4668
  %v4717 = vadd.f32 %v4513, %v4673
  %v4718 = vadd.f32 %v4514, %v4676
  %v4719 = vadd.f32 %v4515, %v4681
  %v4720 = vadd.f32 %v4516, %v4684
  %v4721 = vadd.f32 %v4517, %v4689
  %v4722 = vadd.f32 %v4518, %v4692
  %v4723 = vadd.f32 %v4519, %v4697
  %v4724 = vadd.f32 %v4520, %v4700
  %v4725 = vadd.f32 %v4521, %v4705
  %v4726 = vadd.f32 %v4522, %v4708
  %v4727 = vrot.slane %v2462, 5
  %v4728 = vrot.slane %v2465, 6
  %v4729 = vor.u32 %v4727, %v4728
  %v4730 = vrot.slane %v4729, 4
  %v4731 = vshrl.u32 %v2458, 16
  %v4733 = vrot.slane %v4731, 5
  %v4734 = vrot.slane %v2471, 6
  %v4735 = vor.u32 %v4733, %v4734
  %v4736 = vsel %vm3732, %v4730, %v4735
  %v4737 = vrot.slane %v2476, 5
  %v4738 = vrot.slane %v2479, 6
  %v4739 = vor.u32 %v4737, %v4738
  %v4740 = vrot.slane %v4739, 4
  %v4741 = vshrl.u32 %v2460, 16
  %v4743 = vrot.slane %v4741, 5
  %v4744 = vrot.slane %v2485, 6
  %v4745 = vor.u32 %v4743, %v4744
  %v4746 = vsel %vm3732, %v4740, %v4745
  %s4747 = scalar_lea.vmem %s4, 1472
  %v4748 = vld [vmem:[%s4747] sm:$0xf]
  %v4749 = vld [vmem:[%s4747 + $0x4] sm:$0xf]
  %v4750 = vld [vmem:[%s4747 + $0x8] sm:$0xf]
  %v4751 = vld [vmem:[%s4747 + $0xc] sm:$0xf]
  %v4752 = vld [vmem:[%s4747 + $0x10] sm:$0xf]
  %v4753 = vld [vmem:[%s4747 + $0x14] sm:$0xf]
  %v4754 = vld [vmem:[%s4747 + $0x18] sm:$0xf]
  %v4755 = vld [vmem:[%s4747 + $0x1c] sm:$0xf]
  %v4756 = vld [vmem:[%s4747 + $0x20] sm:$0xf]
  %v4757 = vld [vmem:[%s4747 + $0x24] sm:$0xf]
  %v4758 = vld [vmem:[%s4747 + $0x28] sm:$0xf]
  %v4759 = vld [vmem:[%s4747 + $0x2c] sm:$0xf]
  %v4760 = vld [vmem:[%s4747 + $0x30] sm:$0xf]
  %v4761 = vld [vmem:[%s4747 + $0x34] sm:$0xf]
  %v4762 = vld [vmem:[%s4747 + $0x38] sm:$0xf]
  %v4763 = vld [vmem:[%s4747 + $0x3c] sm:$0xf]
  %v4764 = vunpack.c.l.b16 %v4736
  %v4765 = vunpack.c.l.b16 %v4746
  %v4766 = vpack.c.b16 %v4764, %v4560
  %v4767 = vpack.c.b16 %v4765, %v4561
  %v4786 = vunpack.c.l.b16 %v4748
  %v4787 = vunpack.c.l.b16 %v4749
  %v4788 = vunpack.c.l.b16 %v4750
  %v4789 = vunpack.c.l.b16 %v4751
  %v4790 = vunpack.c.l.b16 %v4752
  %v4791 = vunpack.c.l.b16 %v4753
  %v4792 = vunpack.c.l.b16 %v4754
  %v4793 = vunpack.c.l.b16 %v4755
  %v4794 = vunpack.c.l.b16 %v4756
  %v4795 = vunpack.c.l.b16 %v4757
  %v4796 = vunpack.c.l.b16 %v4758
  %v4797 = vunpack.c.l.b16 %v4759
  %v4798 = vunpack.c.l.b16 %v4760
  %v4799 = vunpack.c.l.b16 %v4761
  %v4800 = vunpack.c.l.b16 %v4762
  %v4801 = vunpack.c.l.b16 %v4763
  %v4802 = vpack.c.b16 %v4787, %v4786
  %v4803 = vpack.c.b16 %v4789, %v4788
  %v4804 = vpack.c.b16 %v4791, %v4790
  %v4805 = vpack.c.b16 %v4793, %v4792
  %v4806 = vpack.c.b16 %v4795, %v4794
  %v4807 = vpack.c.b16 %v4797, %v4796
  %v4808 = vpack.c.b16 %v4799, %v4798
  %v4809 = vpack.c.b16 %v4801, %v4800
  %4818 = vmatprep.subr.bf16.mxu0 0
  %4819 = vmatpush1.bf16.msra.mxu0 %v4802
  %4820 = vmatprep.subr.bf16.mxu0 0
  %4821 = vmatpush1.bf16.msra.mxu0 %v4803
  %4822 = vmatprep.subr.bf16.mxu0 0
  %4823 = vmatpush1.bf16.msra.mxu0 %v4804
  %4824 = vmatprep.subr.bf16.mxu0 0
  %4825 = vmatpush1.bf16.msra.mxu0 %v4805
  %4826 = vmatprep.subr.bf16.mxu0 0
  %4827 = vmatpush1.bf16.msra.mxu0 %v4806
  %4828 = vmatprep.subr.bf16.mxu0 0
  %4829 = vmatpush1.bf16.msra.mxu0 %v4807
  %4830 = vmatprep.subr.bf16.mxu0 0
  %4831 = vmatpush1.bf16.msra.mxu0 %v4808
  %4832 = vmatprep.subr.bf16.mxu0 0
  %4833 = vmatpush1.bf16.msra.mxu0 %v4809
  %4834 = vmatprep.subr.bf16.mxu0 0
  %4835 = vmatpush1.bf16.msra.mxu0 0
  %4836 = vmatprep.subr.bf16.mxu0 0
  %4837 = vmatpush1.bf16.msra.mxu0 0
  %4838 = vmatprep.subr.bf16.mxu0 0
  %4839 = vmatpush1.bf16.msra.mxu0 0
  %4840 = vmatprep.subr.bf16.mxu0 0
  %4841 = vmatpush1.bf16.msra.mxu0 0
  %4842 = vmatprep.subr.bf16.mxu0 0
  %4843 = vmatpush1.bf16.msra.mxu0 0
  %4844 = vmatprep.subr.bf16.mxu0 0
  %4845 = vmatpush1.bf16.msra.mxu0 0
  %4846 = vmatprep.subr.bf16.mxu0 0
  %4847 = vmatpush1.bf16.msra.mxu0 0
  %4848 = vmatprep.subr.bf16.mxu0 0
  %4849 = vmatpush1.bf16.msra.mxu0 0
  %4850 = vmatprep.mubr.bf16.mxu0 0
  %4851 = vmatmul.mubr.bf16.gmra.mrb[0].mxu0 %v3928
  %v4852 = vpop.f32.mrb[0].mxu0
  %v4853 = vadd.f32 0.0, %v4852
  %v4854 = vpop.f32.mrb[0].mxu0
  %v4855 = vpop.f32.mrb[0].mxu0
  %v4856 = vadd.f32 0.0, %v4855
  %v4857 = vpop.f32.mrb[0].mxu0
  %4858 = vmatprep.mubr.bf16.mxu0 0
  %4859 = vmatmul.mubr.bf16.gmra.mrb[0].mxu0 %v3929
  %v4860 = vpop.f32.mrb[0].mxu0
  %v4861 = vadd.f32 0.0, %v4860
  %v4862 = vpop.f32.mrb[0].mxu0
  %v4863 = vpop.f32.mrb[0].mxu0
  %v4864 = vadd.f32 0.0, %v4863
  %v4865 = vpop.f32.mrb[0].mxu0
  %4866 = vmatprep.mubr.bf16.mxu0 0
  %4867 = vmatmul.mubr.bf16.gmra.mrb[0].mxu0 %v4358
  %v4868 = vpop.f32.mrb[0].mxu0
  %v4869 = vadd.f32 0.0, %v4868
  %v4870 = vpop.f32.mrb[0].mxu0
  %v4871 = vpop.f32.mrb[0].mxu0
  %v4872 = vadd.f32 0.0, %v4871
  %v4873 = vpop.f32.mrb[0].mxu0
  %4874 = vmatprep.mubr.bf16.mxu0 0
  %4875 = vmatmul.mubr.bf16.gmra.mrb[0].mxu0 %v4766
  %v4876 = vpop.f32.mrb[0].mxu0
  %v4877 = vadd.f32 0.0, %v4876
  %v4878 = vpop.f32.mrb[0].mxu0
  %v4879 = vpop.f32.mrb[0].mxu0
  %v4880 = vadd.f32 0.0, %v4879
  %v4881 = vpop.f32.mrb[0].mxu0
  %4882 = vmatprep.mubr.bf16.mxu0 0
  %4883 = vmatmul.mubr.bf16.gmra.mrb[0].mxu0 %v3932
  %v4884 = vpop.f32.mrb[0].mxu0
  %v4885 = vadd.f32 0.0, %v4884
  %v4886 = vpop.f32.mrb[0].mxu0
  %v4887 = vpop.f32.mrb[0].mxu0
  %v4888 = vadd.f32 0.0, %v4887
  %v4889 = vpop.f32.mrb[0].mxu0
  %4890 = vmatprep.mubr.bf16.mxu0 0
  %4891 = vmatmul.mubr.bf16.gmra.mrb[0].mxu0 %v3933
  %v4892 = vpop.f32.mrb[0].mxu0
  %v4893 = vadd.f32 0.0, %v4892
  %v4894 = vpop.f32.mrb[0].mxu0
  %v4895 = vpop.f32.mrb[0].mxu0
  %v4896 = vadd.f32 0.0, %v4895
  %v4897 = vpop.f32.mrb[0].mxu0
  %4898 = vmatprep.mubr.bf16.mxu0 0
  %4899 = vmatmul.mubr.bf16.gmra.mrb[0].mxu0 %v4359
  %v4900 = vpop.f32.mrb[0].mxu0
  %v4901 = vadd.f32 0.0, %v4900
  %v4902 = vpop.f32.mrb[0].mxu0
  %v4903 = vpop.f32.mrb[0].mxu0
  %v4904 = vadd.f32 0.0, %v4903
  %v4905 = vpop.f32.mrb[0].mxu0
  %4906 = vmatprep.mubr.bf16.mxu0 0
  %4907 = vmatmul.mubr.bf16.gmra.mrb[0].mxu0 %v4767
  %v4908 = vpop.f32.mrb[0].mxu0
  %v4909 = vadd.f32 0.0, %v4908
  %v4910 = vpop.f32.mrb[0].mxu0
  %v4911 = vpop.f32.mrb[0].mxu0
  %v4912 = vadd.f32 0.0, %v4911
  %v4913 = vpop.f32.mrb[0].mxu0
  %4914 = vdwg.mxu0
  %v4915 = vadd.f32 %v4711, %v4853
  %v4916 = vadd.f32 %v4712, %v4856
  %v4917 = vadd.f32 %v4713, %v4861
  %v4918 = vadd.f32 %v4714, %v4864
  %v4919 = vadd.f32 %v4715, %v4869
  %v4920 = vadd.f32 %v4716, %v4872
  %v4921 = vadd.f32 %v4717, %v4877
  %v4922 = vadd.f32 %v4718, %v4880
  %v4923 = vadd.f32 %v4719, %v4885
  %v4924 = vadd.f32 %v4720, %v4888
  %v4925 = vadd.f32 %v4721, %v4893
  %v4926 = vadd.f32 %v4722, %v4896
  %v4927 = vadd.f32 %v4723, %v4901
  %v4928 = vadd.f32 %v4724, %v4904
  %v4929 = vadd.f32 %v4725, %v4909
  %v4930 = vadd.f32 %v4726, %v4912
  %vm4931 = vcmask 1041408
  %vm4932 = vcmask 1045508
  %vm4933 = vmor %vm4931, %vm4932
  %v4934 = vrot.slane %v1304, 6
  %v4935 = vrot.slane %v4934, 4
  %v4936 = vrot.slane %v1305, 6
  %v4937 = vsel %vm4933, %v4935, %v4936
  %v4938 = vrot.slane %v1306, 6
  %v4939 = vrot.slane %v4938, 4
  %v4940 = vrot.slane %v1307, 6
  %v4941 = vsel %vm4933, %v4939, %v4940
  %v4942 = vrot.slane %v1308, 6
  %v4943 = vrot.slane %v4942, 4
  %v4944 = vrot.slane %v1309, 6
  %v4945 = vsel %vm4933, %v4943, %v4944
  %v4946 = vrot.slane %v1310, 6
  %v4947 = vrot.slane %v4946, 4
  %v4948 = vrot.slane %v1311, 6
  %v4949 = vsel %vm4933, %v4947, %v4948
  %v4950 = vrot.slane %v1312, 6
  %v4951 = vrot.slane %v4950, 4
  %v4952 = vrot.slane %v1313, 6
  %v4953 = vsel %vm4933, %v4951, %v4952
  %v4954 = vrot.slane %v1314, 6
  %v4955 = vrot.slane %v4954, 4
  %v4956 = vrot.slane %v1315, 6
  %v4957 = vsel %vm4933, %v4955, %v4956
  %v4958 = vrot.slane %v1316, 6
  %v4959 = vrot.slane %v4958, 4
  %v4960 = vrot.slane %v1317, 6
  %v4961 = vsel %vm4933, %v4959, %v4960
  %v4962 = vrot.slane %v1318, 6
  %v4963 = vrot.slane %v4962, 4
  %v4964 = vrot.slane %v1319, 6
  %v4965 = vsel %vm4933, %v4963, %v4964
  %v4966 = vrot.slane %v1320, 6
  %v4967 = vrot.slane %v4966, 4
  %v4968 = vrot.slane %v1321, 6
  %v4969 = vsel %vm4933, %v4967, %v4968
  %v4970 = vrot.slane %v1322, 6
  %v4971 = vrot.slane %v4970, 4
  %v4972 = vrot.slane %v1323, 6
  %v4973 = vsel %vm4933, %v4971, %v4972
  %v4974 = vrot.slane %v1324, 6
  %v4975 = vrot.slane %v4974, 4
  %v4976 = vrot.slane %v1325, 6
  %v4977 = vsel %vm4933, %v4975, %v4976
  %v4978 = vrot.slane %v1326, 6
  %v4979 = vrot.slane %v4978, 4
  %v4980 = vrot.slane %v1327, 6
  %v4981 = vsel %vm4933, %v4979, %v4980
  %v4982 = vrot.slane %v1328, 6
  %v4983 = vrot.slane %v4982, 4
  %v4984 = vrot.slane %v1329, 6
  %v4985 = vsel %vm4933, %v4983, %v4984
  %v4986 = vrot.slane %v1330, 6
  %v4987 = vrot.slane %v4986, 4
  %v4988 = vrot.slane %v1331, 6
  %v4989 = vsel %vm4933, %v4987, %v4988
  %v4990 = vrot.slane %v1332, 6
  %v4991 = vrot.slane %v4990, 4
  %v4992 = vrot.slane %v1333, 6
  %v4993 = vsel %vm4933, %v4991, %v4992
  %v4994 = vrot.slane %v1334, 6
  %v4995 = vrot.slane %v4994, 4
  %v4996 = vrot.slane %v1335, 6
  %v4997 = vsel %vm4933, %v4995, %v4996
  %s4998 = scalar_lea.vmem %s4, 256
  %v4999 = vld [vmem:[%s4998] sm:$0xf]
  %v5000 = vld [vmem:[%s4998 + $0x4] sm:$0xf]
  %v5001 = vld [vmem:[%s4998 + $0x8] sm:$0xf]
  %v5002 = vld [vmem:[%s4998 + $0xc] sm:$0xf]
  %v5003 = vld [vmem:[%s4998 + $0x10] sm:$0xf]
  %v5004 = vld [vmem:[%s4998 + $0x14] sm:$0xf]
  %v5005 = vld [vmem:[%s4998 + $0x18] sm:$0xf]
  %v5006 = vld [vmem:[%s4998 + $0x1c] sm:$0xf]
  %v5007 = vld [vmem:[%s4998 + $0x20] sm:$0xf]
  %v5008 = vld [vmem:[%s4998 + $0x24] sm:$0xf]
  %v5009 = vld [vmem:[%s4998 + $0x28] sm:$0xf]
  %v5010 = vld [vmem:[%s4998 + $0x2c] sm:$0xf]
  %v5011 = vld [vmem:[%s4998 + $0x30] sm:$0xf]
  %v5012 = vld [vmem:[%s4998 + $0x34] sm:$0xf]
  %v5013 = vld [vmem:[%s4998 + $0x38] sm:$0xf]
  %v5014 = vld [vmem:[%s4998 + $0x3c] sm:$0xf]
  %v5015 = vunpack.c.l.b16 %v4937
  %v5016 = vunpack.c.l.b16 %v4941
  %v5017 = vunpack.c.l.b16 %v4945
  %v5018 = vunpack.c.l.b16 %v4949
  %v5019 = vunpack.c.l.b16 %v4953
  %v5020 = vunpack.c.l.b16 %v4957
  %v5021 = vunpack.c.l.b16 %v4961
  %v5022 = vunpack.c.l.b16 %v4965
  %v5023 = vunpack.c.l.b16 %v4969
  %v5024 = vunpack.c.l.b16 %v4973
  %v5025 = vunpack.c.l.b16 %v4977
  %v5026 = vunpack.c.l.b16 %v4981
  %v5027 = vunpack.c.l.b16 %v4985
  %v5028 = vunpack.c.l.b16 %v4989
  %v5029 = vunpack.c.l.b16 %v4993
  %v5030 = vunpack.c.l.b16 %v4997
  %v5031 = vpack.c.b16 %v5016, %v5015
  %v5032 = vpack.c.b16 %v5018, %v5017
  %v5033 = vpack.c.b16 %v5020, %v5019
  %v5034 = vpack.c.b16 %v5022, %v5021
  %v5035 = vpack.c.b16 %v5024, %v5023
  %v5036 = vpack.c.b16 %v5026, %v5025
  %v5037 = vpack.c.b16 %v5028, %v5027
  %v5038 = vpack.c.b16 %v5030, %v5029
  %v5063 = vunpack.c.l.b16 %v4999
  %v5064 = vunpack.c.l.b16 %v5000
  %v5065 = vunpack.c.l.b16 %v5001
  %v5066 = vunpack.c.l.b16 %v5002
  %v5067 = vunpack.c.l.b16 %v5003
  %v5068 = vunpack.c.l.b16 %v5004
  %v5069 = vunpack.c.l.b16 %v5005
  %v5070 = vunpack.c.l.b16 %v5006
  %v5071 = vunpack.c.l.b16 %v5007
  %v5072 = vunpack.c.l.b16 %v5008
  %v5073 = vunpack.c.l.b16 %v5009
  %v5074 = vunpack.c.l.b16 %v5010
  %v5075 = vunpack.c.l.b16 %v5011
  %v5076 = vunpack.c.l.b16 %v5012
  %v5077 = vunpack.c.l.b16 %v5013
  %v5078 = vunpack.c.l.b16 %v5014
  %v5079 = vpack.c.b16 %v5064, %v5063
  %v5080 = vpack.c.b16 %v5066, %v5065
  %v5081 = vpack.c.b16 %v5068, %v5067
  %v5082 = vpack.c.b16 %v5070, %v5069
  %v5083 = vpack.c.b16 %v5072, %v5071
  %v5084 = vpack.c.b16 %v5074, %v5073
  %v5085 = vpack.c.b16 %v5076, %v5075
  %v5086 = vpack.c.b16 %v5078, %v5077
  %5095 = vmatprep.subr.bf16.mxu0 0
  %5096 = vmatpush1.bf16.msra.mxu0 %v5079
  %5097 = vmatprep.subr.bf16.mxu0 0
  %5098 = vmatpush1.bf16.msra.mxu0 %v5080
  %5099 = vmatprep.subr.bf16.mxu0 0
  %5100 = vmatpush1.bf16.msra.mxu0 %v5081
  %5101 = vmatprep.subr.bf16.mxu0 0
  %5102 = vmatpush1.bf16.msra.mxu0 %v5082
  %5103 = vmatprep.subr.bf16.mxu0 0
  %5104 = vmatpush1.bf16.msra.mxu0 %v5083
  %5105 = vmatprep.subr.bf16.mxu0 0
  %5106 = vmatpush1.bf16.msra.mxu0 %v5084
  %5107 = vmatprep.subr.bf16.mxu0 0
  %5108 = vmatpush1.bf16.msra.mxu0 %v5085
  %5109 = vmatprep.subr.bf16.mxu0 0
  %5110 = vmatpush1.bf16.msra.mxu0 %v5086
  %5111 = vmatprep.subr.bf16.mxu0 0
  %5112 = vmatpush1.bf16.msra.mxu0 0
  %5113 = vmatprep.subr.bf16.mxu0 0
  %5114 = vmatpush1.bf16.msra.mxu0 0
  %5115 = vmatprep.subr.bf16.mxu0 0
  %5116 = vmatpush1.bf16.msra.mxu0 0
  %5117 = vmatprep.subr.bf16.mxu0 0
  %5118 = vmatpush1.bf16.msra.mxu0 0
  %5119 = vmatprep.subr.bf16.mxu0 0
  %5120 = vmatpush1.bf16.msra.mxu0 0
  %5121 = vmatprep.subr.bf16.mxu0 0
  %5122 = vmatpush1.bf16.msra.mxu0 0
  %5123 = vmatprep.subr.bf16.mxu0 0
  %5124 = vmatpush1.bf16.msra.mxu0 0
  %5125 = vmatprep.subr.bf16.mxu0 0
  %5126 = vmatpush1.bf16.msra.mxu0 0
  %5127 = vmatprep.mubr.bf16.mxu0 0
  %5128 = vmatmul.mubr.bf16.gmra.mrb[0].mxu0 %v5031
  %v5129 = vpop.f32.mrb[0].mxu0
  %v5130 = vadd.f32 0.0, %v5129
  %v5131 = vpop.f32.mrb[0].mxu0
  %v5132 = vpop.f32.mrb[0].mxu0
  %v5133 = vadd.f32 0.0, %v5132
  %v5134 = vpop.f32.mrb[0].mxu0
  %5135 = vmatprep.mubr.bf16.mxu0 0
  %5136 = vmatmul.mubr.bf16.gmra.mrb[0].mxu0 %v5032
  %v5137 = vpop.f32.mrb[0].mxu0
  %v5138 = vadd.f32 0.0, %v5137
  %v5139 = vpop.f32.mrb[0].mxu0
  %v5140 = vpop.f32.mrb[0].mxu0
  %v5141 = vadd.f32 0.0, %v5140
  %v5142 = vpop.f32.mrb[0].mxu0
  %5143 = vmatprep.mubr.bf16.mxu0 0
  %5144 = vmatmul.mubr.bf16.gmra.mrb[0].mxu0 %v5033
  %v5145 = vpop.f32.mrb[0].mxu0
  %v5146 = vadd.f32 0.0, %v5145
  %v5147 = vpop.f32.mrb[0].mxu0
  %v5148 = vpop.f32.mrb[0].mxu0
  %v5149 = vadd.f32 0.0, %v5148
  %v5150 = vpop.f32.mrb[0].mxu0
  %5151 = vmatprep.mubr.bf16.mxu0 0
  %5152 = vmatmul.mubr.bf16.gmra.mrb[0].mxu0 %v5034
  %v5153 = vpop.f32.mrb[0].mxu0
  %v5154 = vadd.f32 0.0, %v5153
  %v5155 = vpop.f32.mrb[0].mxu0
  %v5156 = vpop.f32.mrb[0].mxu0
  %v5157 = vadd.f32 0.0, %v5156
  %v5158 = vpop.f32.mrb[0].mxu0
  %5159 = vmatprep.mubr.bf16.mxu0 0
  %5160 = vmatmul.mubr.bf16.gmra.mrb[0].mxu0 %v5035
  %v5161 = vpop.f32.mrb[0].mxu0
  %v5162 = vadd.f32 0.0, %v5161
  %v5163 = vpop.f32.mrb[0].mxu0
  %v5164 = vpop.f32.mrb[0].mxu0
  %v5165 = vadd.f32 0.0, %v5164
  %v5166 = vpop.f32.mrb[0].mxu0
  %5167 = vmatprep.mubr.bf16.mxu0 0
  %5168 = vmatmul.mubr.bf16.gmra.mrb[0].mxu0 %v5036
  %v5169 = vpop.f32.mrb[0].mxu0
  %v5170 = vadd.f32 0.0, %v5169
  %v5171 = vpop.f32.mrb[0].mxu0
  %v5172 = vpop.f32.mrb[0].mxu0
  %v5173 = vadd.f32 0.0, %v5172
  %v5174 = vpop.f32.mrb[0].mxu0
  %5175 = vmatprep.mubr.bf16.mxu0 0
  %5176 = vmatmul.mubr.bf16.gmra.mrb[0].mxu0 %v5037
  %v5177 = vpop.f32.mrb[0].mxu0
  %v5178 = vadd.f32 0.0, %v5177
  %v5179 = vpop.f32.mrb[0].mxu0
  %v5180 = vpop.f32.mrb[0].mxu0
  %v5181 = vadd.f32 0.0, %v5180
  %v5182 = vpop.f32.mrb[0].mxu0
  %5183 = vmatprep.mubr.bf16.mxu0 0
  %5184 = vmatmul.mubr.bf16.gmra.mrb[0].mxu0 %v5038
  %v5185 = vpop.f32.mrb[0].mxu0
  %v5186 = vadd.f32 0.0, %v5185
  %v5187 = vpop.f32.mrb[0].mxu0
  %v5188 = vpop.f32.mrb[0].mxu0
  %v5189 = vadd.f32 0.0, %v5188
  %v5190 = vpop.f32.mrb[0].mxu0
  %5191 = vdwg.mxu0
  %v5192 = vadd.f32 %v4915, %v5130
  %v5193 = vadd.f32 %v4916, %v5133
  %v5194 = vadd.f32 %v4917, %v5138
  %v5195 = vadd.f32 %v4918, %v5141
  %v5196 = vadd.f32 %v4919, %v5146
  %v5197 = vadd.f32 %v4920, %v5149
  %v5198 = vadd.f32 %v4921, %v5154
  %v5199 = vadd.f32 %v4922, %v5157
  %v5200 = vadd.f32 %v4923, %v5162
  %v5201 = vadd.f32 %v4924, %v5165
  %v5202 = vadd.f32 %v4925, %v5170
  %v5203 = vadd.f32 %v4926, %v5173
  %v5204 = vadd.f32 %v4927, %v5178
  %v5205 = vadd.f32 %v4928, %v5181
  %v5206 = vadd.f32 %v4929, %v5186
  %v5207 = vadd.f32 %v4930, %v5189
  %v5208 = vrot.slane %v1779, 6
  %v5209 = vrot.slane %v5208, 4
  %v5210 = vrot.slane %v1780, 6
  %v5211 = vsel %vm4933, %v5209, %v5210
  %v5212 = vrot.slane %v1781, 6
  %v5213 = vrot.slane %v5212, 4
  %v5214 = vrot.slane %v1782, 6
  %v5215 = vsel %vm4933, %v5213, %v5214
  %s5216 = scalar_lea.vmem %s4, 576
  %v5217 = vld [vmem:[%s5216] sm:$0xf]
  %v5218 = vld [vmem:[%s5216 + $0x4] sm:$0xf]
  %v5219 = vld [vmem:[%s5216 + $0x8] sm:$0xf]
  %v5220 = vld [vmem:[%s5216 + $0xc] sm:$0xf]
  %v5221 = vld [vmem:[%s5216 + $0x10] sm:$0xf]
  %v5222 = vld [vmem:[%s5216 + $0x14] sm:$0xf]
  %v5223 = vld [vmem:[%s5216 + $0x18] sm:$0xf]
  %v5224 = vld [vmem:[%s5216 + $0x1c] sm:$0xf]
  %v5225 = vld [vmem:[%s5216 + $0x20] sm:$0xf]
  %v5226 = vld [vmem:[%s5216 + $0x24] sm:$0xf]
  %v5227 = vld [vmem:[%s5216 + $0x28] sm:$0xf]
  %v5228 = vld [vmem:[%s5216 + $0x2c] sm:$0xf]
  %v5229 = vld [vmem:[%s5216 + $0x30] sm:$0xf]
  %v5230 = vld [vmem:[%s5216 + $0x34] sm:$0xf]
  %v5231 = vld [vmem:[%s5216 + $0x38] sm:$0xf]
  %v5232 = vld [vmem:[%s5216 + $0x3c] sm:$0xf]
  %v5233 = vunpack.c.l.b16 %v5211
  %v5234 = vunpack.c.l.b16 %v5215
  %v5235 = vpack.c.b16 %v5017, %v5016
  %v5236 = vpack.c.b16 %v5019, %v5018
  %v5237 = vpack.c.b16 %v5021, %v5020
  %v5238 = vpack.c.b16 %v5233, %v5022
  %v5239 = vpack.c.b16 %v5025, %v5024
  %v5240 = vpack.c.b16 %v5027, %v5026
  %v5241 = vpack.c.b16 %v5029, %v5028
  %v5242 = vpack.c.b16 %v5234, %v5030
  %v5267 = vunpack.c.l.b16 %v5217
  %v5268 = vunpack.c.l.b16 %v5218
  %v5269 = vunpack.c.l.b16 %v5219
  %v5270 = vunpack.c.l.b16 %v5220
  %v5271 = vunpack.c.l.b16 %v5221
  %v5272 = vunpack.c.l.b16 %v5222
  %v5273 = vunpack.c.l.b16 %v5223
  %v5274 = vunpack.c.l.b16 %v5224
  %v5275 = vunpack.c.l.b16 %v5225
  %v5276 = vunpack.c.l.b16 %v5226
  %v5277 = vunpack.c.l.b16 %v5227
  %v5278 = vunpack.c.l.b16 %v5228
  %v5279 = vunpack.c.l.b16 %v5229
  %v5280 = vunpack.c.l.b16 %v5230
  %v5281 = vunpack.c.l.b16 %v5231
  %v5282 = vunpack.c.l.b16 %v5232
  %v5283 = vpack.c.b16 %v5268, %v5267
  %v5284 = vpack.c.b16 %v5270, %v5269
  %v5285 = vpack.c.b16 %v5272, %v5271
  %v5286 = vpack.c.b16 %v5274, %v5273
  %v5287 = vpack.c.b16 %v5276, %v5275
  %v5288 = vpack.c.b16 %v5278, %v5277
  %v5289 = vpack.c.b16 %v5280, %v5279
  %v5290 = vpack.c.b16 %v5282, %v5281
  %5299 = vmatprep.subr.bf16.mxu0 0
  %5300 = vmatpush1.bf16.msra.mxu0 %v5283
  %5301 = vmatprep.subr.bf16.mxu0 0
  %5302 = vmatpush1.bf16.msra.mxu0 %v5284
  %5303 = vmatprep.subr.bf16.mxu0 0
  %5304 = vmatpush1.bf16.msra.mxu0 %v5285
  %5305 = vmatprep.subr.bf16.mxu0 0
  %5306 = vmatpush1.bf16.msra.mxu0 %v5286
  %5307 = vmatprep.subr.bf16.mxu0 0
  %5308 = vmatpush1.bf16.msra.mxu0 %v5287
  %5309 = vmatprep.subr.bf16.mxu0 0
  %5310 = vmatpush1.bf16.msra.mxu0 %v5288
  %5311 = vmatprep.subr.bf16.mxu0 0
  %5312 = vmatpush1.bf16.msra.mxu0 %v5289
  %5313 = vmatprep.subr.bf16.mxu0 0
  %5314 = vmatpush1.bf16.msra.mxu0 %v5290
  %5315 = vmatprep.subr.bf16.mxu0 0
  %5316 = vmatpush1.bf16.msra.mxu0 0
  %5317 = vmatprep.subr.bf16.mxu0 0
  %5318 = vmatpush1.bf16.msra.mxu0 0
  %5319 = vmatprep.subr.bf16.mxu0 0
  %5320 = vmatpush1.bf16.msra.mxu0 0
  %5321 = vmatprep.subr.bf16.mxu0 0
  %5322 = vmatpush1.bf16.msra.mxu0 0
  %5323 = vmatprep.subr.bf16.mxu0 0
  %5324 = vmatpush1.bf16.msra.mxu0 0
  %5325 = vmatprep.subr.bf16.mxu0 0
  %5326 = vmatpush1.bf16.msra.mxu0 0
  %5327 = vmatprep.subr.bf16.mxu0 0
  %5328 = vmatpush1.bf16.msra.mxu0 0
  %5329 = vmatprep.subr.bf16.mxu0 0
  %5330 = vmatpush1.bf16.msra.mxu0 0
  %5331 = vmatprep.mubr.bf16.mxu0 0
  %5332 = vmatmul.mubr.bf16.gmra.mrb[0].mxu0 %v5235
  %v5333 = vpop.f32.mrb[0].mxu0
  %v5334 = vadd.f32 0.0, %v5333
  %v5335 = vpop.f32.mrb[0].mxu0
  %v5336 = vpop.f32.mrb[0].mxu0
  %v5337 = vadd.f32 0.0, %v5336
  %v5338 = vpop.f32.mrb[0].mxu0
  %5339 = vmatprep.mubr.bf16.mxu0 0
  %5340 = vmatmul.mubr.bf16.gmra.mrb[0].mxu0 %v5236
  %v5341 = vpop.f32.mrb[0].mxu0
  %v5342 = vadd.f32 0.0, %v5341
  %v5343 = vpop.f32.mrb[0].mxu0
  %v5344 = vpop.f32.mrb[0].mxu0
  %v5345 = vadd.f32 0.0, %v5344
  %v5346 = vpop.f32.mrb[0].mxu0
  %5347 = vmatprep.mubr.bf16.mxu0 0
  %5348 = vmatmul.mubr.bf16.gmra.mrb[0].mxu0 %v5237
  %v5349 = vpop.f32.mrb[0].mxu0
  %v5350 = vadd.f32 0.0, %v5349
  %v5351 = vpop.f32.mrb[0].mxu0
  %v5352 = vpop.f32.mrb[0].mxu0
  %v5353 = vadd.f32 0.0, %v5352
  %v5354 = vpop.f32.mrb[0].mxu0
  %5355 = vmatprep.mubr.bf16.mxu0 0
  %5356 = vmatmul.mubr.bf16.gmra.mrb[0].mxu0 %v5238
  %v5357 = vpop.f32.mrb[0].mxu0
  %v5358 = vadd.f32 0.0, %v5357
  %v5359 = vpop.f32.mrb[0].mxu0
  %v5360 = vpop.f32.mrb[0].mxu0
  %v5361 = vadd.f32 0.0, %v5360
  %v5362 = vpop.f32.mrb[0].mxu0
  %5363 = vmatprep.mubr.bf16.mxu0 0
  %5364 = vmatmul.mubr.bf16.gmra.mrb[0].mxu0 %v5239
  %v5365 = vpop.f32.mrb[0].mxu0
  %v5366 = vadd.f32 0.0, %v5365
  %v5367 = vpop.f32.mrb[0].mxu0
  %v5368 = vpop.f32.mrb[0].mxu0
  %v5369 = vadd.f32 0.0, %v5368
  %v5370 = vpop.f32.mrb[0].mxu0
  %5371 = vmatprep.mubr.bf16.mxu0 0
  %5372 = vmatmul.mubr.bf16.gmra.mrb[0].mxu0 %v5240
  %v5373 = vpop.f32.mrb[0].mxu0
  %v5374 = vadd.f32 0.0, %v5373
  %v5375 = vpop.f32.mrb[0].mxu0
  %v5376 = vpop.f32.mrb[0].mxu0
  %v5377 = vadd.f32 0.0, %v5376
  %v5378 = vpop.f32.mrb[0].mxu0
  %5379 = vmatprep.mubr.bf16.mxu0 0
  %5380 = vmatmul.mubr.bf16.gmra.mrb[0].mxu0 %v5241
  %v5381 = vpop.f32.mrb[0].mxu0
  %v5382 = vadd.f32 0.0, %v5381
  %v5383 = vpop.f32.mrb[0].mxu0
  %v5384 = vpop.f32.mrb[0].mxu0
  %v5385 = vadd.f32 0.0, %v5384
  %v5386 = vpop.f32.mrb[0].mxu0
  %5387 = vmatprep.mubr.bf16.mxu0 0
  %5388 = vmatmul.mubr.bf16.gmra.mrb[0].mxu0 %v5242
  %v5389 = vpop.f32.mrb[0].mxu0
  %v5390 = vadd.f32 0.0, %v5389
  %v5391 = vpop.f32.mrb[0].mxu0
  %v5392 = vpop.f32.mrb[0].mxu0
  %v5393 = vadd.f32 0.0, %v5392
  %v5394 = vpop.f32.mrb[0].mxu0
  %5395 = vdwg.mxu0
  %v5396 = vadd.f32 %v5192, %v5334
  %v5397 = vadd.f32 %v5193, %v5337
  %v5398 = vadd.f32 %v5194, %v5342
  %v5399 = vadd.f32 %v5195, %v5345
  %v5400 = vadd.f32 %v5196, %v5350
  %v5401 = vadd.f32 %v5197, %v5353
  %v5402 = vadd.f32 %v5198, %v5358
  %v5403 = vadd.f32 %v5199, %v5361
  %v5404 = vadd.f32 %v5200, %v5366
  %v5405 = vadd.f32 %v5201, %v5369
  %v5406 = vadd.f32 %v5202, %v5374
  %v5407 = vadd.f32 %v5203, %v5377
  %v5408 = vadd.f32 %v5204, %v5382
  %v5409 = vadd.f32 %v5205, %v5385
  %v5410 = vadd.f32 %v5206, %v5390
  %v5411 = vadd.f32 %v5207, %v5393
  %v5412 = vrot.slane %v2013, 6
  %v5413 = vrot.slane %v5412, 4
  %v5414 = vrot.slane %v2014, 6
  %v5415 = vsel %vm4933, %v5413, %v5414
  %v5416 = vrot.slane %v2015, 6
  %v5417 = vrot.slane %v5416, 4
  %v5418 = vrot.slane %v2016, 6
  %v5419 = vsel %vm4933, %v5417, %v5418
  %s5420 = scalar_lea.vmem %s4, 896
  %v5421 = vld [vmem:[%s5420] sm:$0xf]
  %v5422 = vld [vmem:[%s5420 + $0x4] sm:$0xf]
  %v5423 = vld [vmem:[%s5420 + $0x8] sm:$0xf]
  %v5424 = vld [vmem:[%s5420 + $0xc] sm:$0xf]
  %v5425 = vld [vmem:[%s5420 + $0x10] sm:$0xf]
  %v5426 = vld [vmem:[%s5420 + $0x14] sm:$0xf]
  %v5427 = vld [vmem:[%s5420 + $0x18] sm:$0xf]
  %v5428 = vld [vmem:[%s5420 + $0x1c] sm:$0xf]
  %v5429 = vld [vmem:[%s5420 + $0x20] sm:$0xf]
  %v5430 = vld [vmem:[%s5420 + $0x24] sm:$0xf]
  %v5431 = vld [vmem:[%s5420 + $0x28] sm:$0xf]
  %v5432 = vld [vmem:[%s5420 + $0x2c] sm:$0xf]
  %v5433 = vld [vmem:[%s5420 + $0x30] sm:$0xf]
  %v5434 = vld [vmem:[%s5420 + $0x34] sm:$0xf]
  %v5435 = vld [vmem:[%s5420 + $0x38] sm:$0xf]
  %v5436 = vld [vmem:[%s5420 + $0x3c] sm:$0xf]
  %v5437 = vunpack.c.l.b16 %v5415
  %v5438 = vunpack.c.l.b16 %v5419
  %v5439 = vpack.c.b16 %v5437, %v5233
  %v5440 = vpack.c.b16 %v5438, %v5234
  %v5459 = vunpack.c.l.b16 %v5421
  %v5460 = vunpack.c.l.b16 %v5422
  %v5461 = vunpack.c.l.b16 %v5423
  %v5462 = vunpack.c.l.b16 %v5424
  %v5463 = vunpack.c.l.b16 %v5425
  %v5464 = vunpack.c.l.b16 %v5426
  %v5465 = vunpack.c.l.b16 %v5427
  %v5466 = vunpack.c.l.b16 %v5428
  %v5467 = vunpack.c.l.b16 %v5429
  %v5468 = vunpack.c.l.b16 %v5430
  %v5469 = vunpack.c.l.b16 %v5431
  %v5470 = vunpack.c.l.b16 %v5432
  %v5471 = vunpack.c.l.b16 %v5433
  %v5472 = vunpack.c.l.b16 %v5434
  %v5473 = vunpack.c.l.b16 %v5435
  %v5474 = vunpack.c.l.b16 %v5436
  %v5475 = vpack.c.b16 %v5460, %v5459
  %v5476 = vpack.c.b16 %v5462, %v5461
  %v5477 = vpack.c.b16 %v5464, %v5463
  %v5478 = vpack.c.b16 %v5466, %v5465
  %v5479 = vpack.c.b16 %v5468, %v5467
  %v5480 = vpack.c.b16 %v5470, %v5469
  %v5481 = vpack.c.b16 %v5472, %v5471
  %v5482 = vpack.c.b16 %v5474, %v5473
  %5491 = vmatprep.subr.bf16.mxu0 0
  %5492 = vmatpush1.bf16.msra.mxu0 %v5475
  %5493 = vmatprep.subr.bf16.mxu0 0
  %5494 = vmatpush1.bf16.msra.mxu0 %v5476
  %5495 = vmatprep.subr.bf16.mxu0 0
  %5496 = vmatpush1.bf16.msra.mxu0 %v5477
  %5497 = vmatprep.subr.bf16.mxu0 0
  %5498 = vmatpush1.bf16.msra.mxu0 %v5478
  %5499 = vmatprep.subr.bf16.mxu0 0
  %5500 = vmatpush1.bf16.msra.mxu0 %v5479
  %5501 = vmatprep.subr.bf16.mxu0 0
  %5502 = vmatpush1.bf16.msra.mxu0 %v5480
  %5503 = vmatprep.subr.bf16.mxu0 0
  %5504 = vmatpush1.bf16.msra.mxu0 %v5481
  %5505 = vmatprep.subr.bf16.mxu0 0
  %5506 = vmatpush1.bf16.msra.mxu0 %v5482
  %5507 = vmatprep.subr.bf16.mxu0 0
  %5508 = vmatpush1.bf16.msra.mxu0 0
  %5509 = vmatprep.subr.bf16.mxu0 0
  %5510 = vmatpush1.bf16.msra.mxu0 0
  %5511 = vmatprep.subr.bf16.mxu0 0
  %5512 = vmatpush1.bf16.msra.mxu0 0
  %5513 = vmatprep.subr.bf16.mxu0 0
  %5514 = vmatpush1.bf16.msra.mxu0 0
  %5515 = vmatprep.subr.bf16.mxu0 0
  %5516 = vmatpush1.bf16.msra.mxu0 0
  %5517 = vmatprep.subr.bf16.mxu0 0
  %5518 = vmatpush1.bf16.msra.mxu0 0
  %5519 = vmatprep.subr.bf16.mxu0 0
  %5520 = vmatpush1.bf16.msra.mxu0 0
  %5521 = vmatprep.subr.bf16.mxu0 0
  %5522 = vmatpush1.bf16.msra.mxu0 0
  %5523 = vmatprep.mubr.bf16.mxu0 0
  %5524 = vmatmul.mubr.bf16.gmra.mrb[0].mxu0 %v5032
  %v5525 = vpop.f32.mrb[0].mxu0
  %v5526 = vadd.f32 0.0, %v5525
  %v5527 = vpop.f32.mrb[0].mxu0
  %v5528 = vpop.f32.mrb[0].mxu0
  %v5529 = vadd.f32 0.0, %v5528
  %v5530 = vpop.f32.mrb[0].mxu0
  %5531 = vmatprep.mubr.bf16.mxu0 0
  %5532 = vmatmul.mubr.bf16.gmra.mrb[0].mxu0 %v5033
  %v5533 = vpop.f32.mrb[0].mxu0
  %v5534 = vadd.f32 0.0, %v5533
  %v5535 = vpop.f32.mrb[0].mxu0
  %v5536 = vpop.f32.mrb[0].mxu0
  %v5537 = vadd.f32 0.0, %v5536
  %v5538 = vpop.f32.mrb[0].mxu0
  %5539 = vmatprep.mubr.bf16.mxu0 0
  %5540 = vmatmul.mubr.bf16.gmra.mrb[0].mxu0 %v5034
  %v5541 = vpop.f32.mrb[0].mxu0
  %v5542 = vadd.f32 0.0, %v5541
  %v5543 = vpop.f32.mrb[0].mxu0
  %v5544 = vpop.f32.mrb[0].mxu0
  %v5545 = vadd.f32 0.0, %v5544
  %v5546 = vpop.f32.mrb[0].mxu0
  %5547 = vmatprep.mubr.bf16.mxu0 0
  %5548 = vmatmul.mubr.bf16.gmra.mrb[0].mxu0 %v5439
  %v5549 = vpop.f32.mrb[0].mxu0
  %v5550 = vadd.f32 0.0, %v5549
  %v5551 = vpop.f32.mrb[0].mxu0
  %v5552 = vpop.f32.mrb[0].mxu0
  %v5553 = vadd.f32 0.0, %v5552
  %v5554 = vpop.f32.mrb[0].mxu0
  %5555 = vmatprep.mubr.bf16.mxu0 0
  %5556 = vmatmul.mubr.bf16.gmra.mrb[0].mxu0 %v5036
  %v5557 = vpop.f32.mrb[0].mxu0
  %v5558 = vadd.f32 0.0, %v5557
  %v5559 = vpop.f32.mrb[0].mxu0
  %v5560 = vpop.f32.mrb[0].mxu0
  %v5561 = vadd.f32 0.0, %v5560
  %v5562 = vpop.f32.mrb[0].mxu0
  %5563 = vmatprep.mubr.bf16.mxu0 0
  %5564 = vmatmul.mubr.bf16.gmra.mrb[0].mxu0 %v5037
  %v5565 = vpop.f32.mrb[0].mxu0
  %v5566 = vadd.f32 0.0, %v5565
  %v5567 = vpop.f32.mrb[0].mxu0
  %v5568 = vpop.f32.mrb[0].mxu0
  %v5569 = vadd.f32 0.0, %v5568
  %v5570 = vpop.f32.mrb[0].mxu0
  %5571 = vmatprep.mubr.bf16.mxu0 0
  %5572 = vmatmul.mubr.bf16.gmra.mrb[0].mxu0 %v5038
  %v5573 = vpop.f32.mrb[0].mxu0
  %v5574 = vadd.f32 0.0, %v5573
  %v5575 = vpop.f32.mrb[0].mxu0
  %v5576 = vpop.f32.mrb[0].mxu0
  %v5577 = vadd.f32 0.0, %v5576
  %v5578 = vpop.f32.mrb[0].mxu0
  %5579 = vmatprep.mubr.bf16.mxu0 0
  %5580 = vmatmul.mubr.bf16.gmra.mrb[0].mxu0 %v5440
  %v5581 = vpop.f32.mrb[0].mxu0
  %v5582 = vadd.f32 0.0, %v5581
  %v5583 = vpop.f32.mrb[0].mxu0
  %v5584 = vpop.f32.mrb[0].mxu0
  %v5585 = vadd.f32 0.0, %v5584
  %v5586 = vpop.f32.mrb[0].mxu0
  %5587 = vdwg.mxu0
  %v5588 = vadd.f32 %v5396, %v5526
  %v5589 = vadd.f32 %v5397, %v5529
  %v5590 = vadd.f32 %v5398, %v5534
  %v5591 = vadd.f32 %v5399, %v5537
  %v5592 = vadd.f32 %v5400, %v5542
  %v5593 = vadd.f32 %v5401, %v5545
  %v5594 = vadd.f32 %v5402, %v5550
  %v5595 = vadd.f32 %v5403, %v5553
  %v5596 = vadd.f32 %v5404, %v5558
  %v5597 = vadd.f32 %v5405, %v5561
  %v5598 = vadd.f32 %v5406, %v5566
  %v5599 = vadd.f32 %v5407, %v5569
  %v5600 = vadd.f32 %v5408, %v5574
  %v5601 = vadd.f32 %v5409, %v5577
  %v5602 = vadd.f32 %v5410, %v5582
  %v5603 = vadd.f32 %v5411, %v5585
  %v5604 = vrot.slane %v2235, 6
  %v5605 = vrot.slane %v5604, 4
  %v5606 = vrot.slane %v2236, 6
  %v5607 = vsel %vm4933, %v5605, %v5606
  %v5608 = vrot.slane %v2237, 6
  %v5609 = vrot.slane %v5608, 4
  %v5610 = vrot.slane %v2238, 6
  %v5611 = vsel %vm4933, %v5609, %v5610
  %s5612 = scalar_lea.vmem %s4, 1216
  %v5613 = vld [vmem:[%s5612] sm:$0xf]
  %v5614 = vld [vmem:[%s5612 + $0x4] sm:$0xf]
  %v5615 = vld [vmem:[%s5612 + $0x8] sm:$0xf]
  %v5616 = vld [vmem:[%s5612 + $0xc] sm:$0xf]
  %v5617 = vld [vmem:[%s5612 + $0x10] sm:$0xf]
  %v5618 = vld [vmem:[%s5612 + $0x14] sm:$0xf]
  %v5619 = vld [vmem:[%s5612 + $0x18] sm:$0xf]
  %v5620 = vld [vmem:[%s5612 + $0x1c] sm:$0xf]
  %v5621 = vld [vmem:[%s5612 + $0x20] sm:$0xf]
  %v5622 = vld [vmem:[%s5612 + $0x24] sm:$0xf]
  %v5623 = vld [vmem:[%s5612 + $0x28] sm:$0xf]
  %v5624 = vld [vmem:[%s5612 + $0x2c] sm:$0xf]
  %v5625 = vld [vmem:[%s5612 + $0x30] sm:$0xf]
  %v5626 = vld [vmem:[%s5612 + $0x34] sm:$0xf]
  %v5627 = vld [vmem:[%s5612 + $0x38] sm:$0xf]
  %v5628 = vld [vmem:[%s5612 + $0x3c] sm:$0xf]
  %v5629 = vunpack.c.l.b16 %v5607
  %v5630 = vunpack.c.l.b16 %v5611
  %v5631 = vpack.c.b16 %v5629, %v5437
  %v5632 = vpack.c.b16 %v5630, %v5438
  %v5651 = vunpack.c.l.b16 %v5613
  %v5652 = vunpack.c.l.b16 %v5614
  %v5653 = vunpack.c.l.b16 %v5615
  %v5654 = vunpack.c.l.b16 %v5616
  %v5655 = vunpack.c.l.b16 %v5617
  %v5656 = vunpack.c.l.b16 %v5618
  %v5657 = vunpack.c.l.b16 %v5619
  %v5658 = vunpack.c.l.b16 %v5620
  %v5659 = vunpack.c.l.b16 %v5621
  %v5660 = vunpack.c.l.b16 %v5622
  %v5661 = vunpack.c.l.b16 %v5623
  %v5662 = vunpack.c.l.b16 %v5624
  %v5663 = vunpack.c.l.b16 %v5625
  %v5664 = vunpack.c.l.b16 %v5626
  %v5665 = vunpack.c.l.b16 %v5627
  %v5666 = vunpack.c.l.b16 %v5628
  %v5667 = vpack.c.b16 %v5652, %v5651
  %v5668 = vpack.c.b16 %v5654, %v5653
  %v5669 = vpack.c.b16 %v5656, %v5655
  %v5670 = vpack.c.b16 %v5658, %v5657
  %v5671 = vpack.c.b16 %v5660, %v5659
  %v5672 = vpack.c.b16 %v5662, %v5661
  %v5673 = vpack.c.b16 %v5664, %v5663
  %v5674 = vpack.c.b16 %v5666, %v5665
  %5683 = vmatprep.subr.bf16.mxu0 0
  %5684 = vmatpush1.bf16.msra.mxu0 %v5667
  %5685 = vmatprep.subr.bf16.mxu0 0
  %5686 = vmatpush1.bf16.msra.mxu0 %v5668
  %5687 = vmatprep.subr.bf16.mxu0 0
  %5688 = vmatpush1.bf16.msra.mxu0 %v5669
  %5689 = vmatprep.subr.bf16.mxu0 0
  %5690 = vmatpush1.bf16.msra.mxu0 %v5670
  %5691 = vmatprep.subr.bf16.mxu0 0
  %5692 = vmatpush1.bf16.msra.mxu0 %v5671
  %5693 = vmatprep.subr.bf16.mxu0 0
  %5694 = vmatpush1.bf16.msra.mxu0 %v5672
  %5695 = vmatprep.subr.bf16.mxu0 0
  %5696 = vmatpush1.bf16.msra.mxu0 %v5673
  %5697 = vmatprep.subr.bf16.mxu0 0
  %5698 = vmatpush1.bf16.msra.mxu0 %v5674
  %5699 = vmatprep.subr.bf16.mxu0 0
  %5700 = vmatpush1.bf16.msra.mxu0 0
  %5701 = vmatprep.subr.bf16.mxu0 0
  %5702 = vmatpush1.bf16.msra.mxu0 0
  %5703 = vmatprep.subr.bf16.mxu0 0
  %5704 = vmatpush1.bf16.msra.mxu0 0
  %5705 = vmatprep.subr.bf16.mxu0 0
  %5706 = vmatpush1.bf16.msra.mxu0 0
  %5707 = vmatprep.subr.bf16.mxu0 0
  %5708 = vmatpush1.bf16.msra.mxu0 0
  %5709 = vmatprep.subr.bf16.mxu0 0
  %5710 = vmatpush1.bf16.msra.mxu0 0
  %5711 = vmatprep.subr.bf16.mxu0 0
  %5712 = vmatpush1.bf16.msra.mxu0 0
  %5713 = vmatprep.subr.bf16.mxu0 0
  %5714 = vmatpush1.bf16.msra.mxu0 0
  %5715 = vmatprep.mubr.bf16.mxu0 0
  %5716 = vmatmul.mubr.bf16.gmra.mrb[0].mxu0 %v5236
  %v5717 = vpop.f32.mrb[0].mxu0
  %v5718 = vadd.f32 0.0, %v5717
  %v5719 = vpop.f32.mrb[0].mxu0
  %v5720 = vpop.f32.mrb[0].mxu0
  %v5721 = vadd.f32 0.0, %v5720
  %v5722 = vpop.f32.mrb[0].mxu0
  %5723 = vmatprep.mubr.bf16.mxu0 0
  %5724 = vmatmul.mubr.bf16.gmra.mrb[0].mxu0 %v5237
  %v5725 = vpop.f32.mrb[0].mxu0
  %v5726 = vadd.f32 0.0, %v5725
  %v5727 = vpop.f32.mrb[0].mxu0
  %v5728 = vpop.f32.mrb[0].mxu0
  %v5729 = vadd.f32 0.0, %v5728
  %v5730 = vpop.f32.mrb[0].mxu0
  %5731 = vmatprep.mubr.bf16.mxu0 0
  %5732 = vmatmul.mubr.bf16.gmra.mrb[0].mxu0 %v5238
  %v5733 = vpop.f32.mrb[0].mxu0
  %v5734 = vadd.f32 0.0, %v5733
  %v5735 = vpop.f32.mrb[0].mxu0
  %v5736 = vpop.f32.mrb[0].mxu0
  %v5737 = vadd.f32 0.0, %v5736
  %v5738 = vpop.f32.mrb[0].mxu0
  %5739 = vmatprep.mubr.bf16.mxu0 0
  %5740 = vmatmul.mubr.bf16.gmra.mrb[0].mxu0 %v5631
  %v5741 = vpop.f32.mrb[0].mxu0
  %v5742 = vadd.f32 0.0, %v5741
  %v5743 = vpop.f32.mrb[0].mxu0
  %v5744 = vpop.f32.mrb[0].mxu0
  %v5745 = vadd.f32 0.0, %v5744
  %v5746 = vpop.f32.mrb[0].mxu0
  %5747 = vmatprep.mubr.bf16.mxu0 0
  %5748 = vmatmul.mubr.bf16.gmra.mrb[0].mxu0 %v5240
  %v5749 = vpop.f32.mrb[0].mxu0
  %v5750 = vadd.f32 0.0, %v5749
  %v5751 = vpop.f32.mrb[0].mxu0
  %v5752 = vpop.f32.mrb[0].mxu0
  %v5753 = vadd.f32 0.0, %v5752
  %v5754 = vpop.f32.mrb[0].mxu0
  %5755 = vmatprep.mubr.bf16.mxu0 0
  %5756 = vmatmul.mubr.bf16.gmra.mrb[0].mxu0 %v5241
  %v5757 = vpop.f32.mrb[0].mxu0
  %v5758 = vadd.f32 0.0, %v5757
  %v5759 = vpop.f32.mrb[0].mxu0
  %v5760 = vpop.f32.mrb[0].mxu0
  %v5761 = vadd.f32 0.0, %v5760
  %v5762 = vpop.f32.mrb[0].mxu0
  %5763 = vmatprep.mubr.bf16.mxu0 0
  %5764 = vmatmul.mubr.bf16.gmra.mrb[0].mxu0 %v5242
  %v5765 = vpop.f32.mrb[0].mxu0
  %v5766 = vadd.f32 0.0, %v5765
  %v5767 = vpop.f32.mrb[0].mxu0
  %v5768 = vpop.f32.mrb[0].mxu0
  %v5769 = vadd.f32 0.0, %v5768
  %v5770 = vpop.f32.mrb[0].mxu0
  %5771 = vmatprep.mubr.bf16.mxu0 0
  %5772 = vmatmul.mubr.bf16.gmra.mrb[0].mxu0 %v5632
  %v5773 = vpop.f32.mrb[0].mxu0
  %v5774 = vadd.f32 0.0, %v5773
  %v5775 = vpop.f32.mrb[0].mxu0
  %v5776 = vpop.f32.mrb[0].mxu0
  %v5777 = vadd.f32 0.0, %v5776
  %v5778 = vpop.f32.mrb[0].mxu0
  %5779 = vdwg.mxu0
  %v5780 = vadd.f32 %v5588, %v5718
  %v5781 = vadd.f32 %v5589, %v5721
  %v5782 = vadd.f32 %v5590, %v5726
  %v5783 = vadd.f32 %v5591, %v5729
  %v5784 = vadd.f32 %v5592, %v5734
  %v5785 = vadd.f32 %v5593, %v5737
  %v5786 = vadd.f32 %v5594, %v5742
  %v5787 = vadd.f32 %v5595, %v5745
  %v5788 = vadd.f32 %v5596, %v5750
  %v5789 = vadd.f32 %v5597, %v5753
  %v5790 = vadd.f32 %v5598, %v5758
  %v5791 = vadd.f32 %v5599, %v5761
  %v5792 = vadd.f32 %v5600, %v5766
  %v5793 = vadd.f32 %v5601, %v5769
  %v5794 = vadd.f32 %v5602, %v5774
  %v5795 = vadd.f32 %v5603, %v5777
  %v5796 = vrot.slane %v2457, 6
  %v5797 = vrot.slane %v5796, 4
  %v5798 = vrot.slane %v2458, 6
  %v5799 = vsel %vm4933, %v5797, %v5798
  %v5800 = vrot.slane %v2459, 6
  %v5801 = vrot.slane %v5800, 4
  %v5802 = vrot.slane %v2460, 6
  %v5803 = vsel %vm4933, %v5801, %v5802
  %s5804 = scalar_lea.vmem %s4, 1536
  %v5805 = vld [vmem:[%s5804] sm:$0xf]
  %v5806 = vld [vmem:[%s5804 + $0x4] sm:$0xf]
  %v5807 = vld [vmem:[%s5804 + $0x8] sm:$0xf]
  %v5808 = vld [vmem:[%s5804 + $0xc] sm:$0xf]
  %v5809 = vld [vmem:[%s5804 + $0x10] sm:$0xf]
  %v5810 = vld [vmem:[%s5804 + $0x14] sm:$0xf]
  %v5811 = vld [vmem:[%s5804 + $0x18] sm:$0xf]
  %v5812 = vld [vmem:[%s5804 + $0x1c] sm:$0xf]
  %v5813 = vld [vmem:[%s5804 + $0x20] sm:$0xf]
  %v5814 = vld [vmem:[%s5804 + $0x24] sm:$0xf]
  %v5815 = vld [vmem:[%s5804 + $0x28] sm:$0xf]
  %v5816 = vld [vmem:[%s5804 + $0x2c] sm:$0xf]
  %v5817 = vld [vmem:[%s5804 + $0x30] sm:$0xf]
  %v5818 = vld [vmem:[%s5804 + $0x34] sm:$0xf]
  %v5819 = vld [vmem:[%s5804 + $0x38] sm:$0xf]
  %v5820 = vld [vmem:[%s5804 + $0x3c] sm:$0xf]
  %v5821 = vunpack.c.l.b16 %v5799
  %v5822 = vunpack.c.l.b16 %v5803
  %v5823 = vpack.c.b16 %v5821, %v5629
  %v5824 = vpack.c.b16 %v5822, %v5630
  %v5843 = vunpack.c.l.b16 %v5805
  %v5844 = vunpack.c.l.b16 %v5806
  %v5845 = vunpack.c.l.b16 %v5807
  %v5846 = vunpack.c.l.b16 %v5808
  %v5847 = vunpack.c.l.b16 %v5809
  %v5848 = vunpack.c.l.b16 %v5810
  %v5849 = vunpack.c.l.b16 %v5811
  %v5850 = vunpack.c.l.b16 %v5812
  %v5851 = vunpack.c.l.b16 %v5813
  %v5852 = vunpack.c.l.b16 %v5814
  %v5853 = vunpack.c.l.b16 %v5815
  %v5854 = vunpack.c.l.b16 %v5816
  %v5855 = vunpack.c.l.b16 %v5817
  %v5856 = vunpack.c.l.b16 %v5818
  %v5857 = vunpack.c.l.b16 %v5819
  %v5858 = vunpack.c.l.b16 %v5820
  %v5859 = vpack.c.b16 %v5844, %v5843
  %v5860 = vpack.c.b16 %v5846, %v5845
  %v5861 = vpack.c.b16 %v5848, %v5847
  %v5862 = vpack.c.b16 %v5850, %v5849
  %v5863 = vpack.c.b16 %v5852, %v5851
  %v5864 = vpack.c.b16 %v5854, %v5853
  %v5865 = vpack.c.b16 %v5856, %v5855
  %v5866 = vpack.c.b16 %v5858, %v5857
  %5875 = vmatprep.subr.bf16.mxu0 0
  %5876 = vmatpush1.bf16.msra.mxu0 %v5859
  %5877 = vmatprep.subr.bf16.mxu0 0
  %5878 = vmatpush1.bf16.msra.mxu0 %v5860
  %5879 = vmatprep.subr.bf16.mxu0 0
  %5880 = vmatpush1.bf16.msra.mxu0 %v5861
  %5881 = vmatprep.subr.bf16.mxu0 0
  %5882 = vmatpush1.bf16.msra.mxu0 %v5862
  %5883 = vmatprep.subr.bf16.mxu0 0
  %5884 = vmatpush1.bf16.msra.mxu0 %v5863
  %5885 = vmatprep.subr.bf16.mxu0 0
  %5886 = vmatpush1.bf16.msra.mxu0 %v5864
  %5887 = vmatprep.subr.bf16.mxu0 0
  %5888 = vmatpush1.bf16.msra.mxu0 %v5865
  %5889 = vmatprep.subr.bf16.mxu0 0
  %5890 = vmatpush1.bf16.msra.mxu0 %v5866
  %5891 = vmatprep.subr.bf16.mxu0 0
  %5892 = vmatpush1.bf16.msra.mxu0 0
  %5893 = vmatprep.subr.bf16.mxu0 0
  %5894 = vmatpush1.bf16.msra.mxu0 0
  %5895 = vmatprep.subr.bf16.mxu0 0
  %5896 = vmatpush1.bf16.msra.mxu0 0
  %5897 = vmatprep.subr.bf16.mxu0 0
  %5898 = vmatpush1.bf16.msra.mxu0 0
  %5899 = vmatprep.subr.bf16.mxu0 0
  %5900 = vmatpush1.bf16.msra.mxu0 0
  %5901 = vmatprep.subr.bf16.mxu0 0
  %5902 = vmatpush1.bf16.msra.mxu0 0
  %5903 = vmatprep.subr.bf16.mxu0 0
  %5904 = vmatpush1.bf16.msra.mxu0 0
  %5905 = vmatprep.subr.bf16.mxu0 0
  %5906 = vmatpush1.bf16.msra.mxu0 0
  %5907 = vmatprep.mubr.bf16.mxu0 0
  %5908 = vmatmul.mubr.bf16.gmra.mrb[0].mxu0 %v5033
  %v5909 = vpop.f32.mrb[0].mxu0
  %v5910 = vadd.f32 0.0, %v5909
  %v5911 = vpop.f32.mrb[0].mxu0
  %v5912 = vpop.f32.mrb[0].mxu0
  %v5913 = vadd.f32 0.0, %v5912
  %v5914 = vpop.f32.mrb[0].mxu0
  %5915 = vmatprep.mubr.bf16.mxu0 0
  %5916 = vmatmul.mubr.bf16.gmra.mrb[0].mxu0 %v5034
  %v5917 = vpop.f32.mrb[0].mxu0
  %v5918 = vadd.f32 0.0, %v5917
  %v5919 = vpop.f32.mrb[0].mxu0
  %v5920 = vpop.f32.mrb[0].mxu0
  %v5921 = vadd.f32 0.0, %v5920
  %v5922 = vpop.f32.mrb[0].mxu0
  %5923 = vmatprep.mubr.bf16.mxu0 0
  %5924 = vmatmul.mubr.bf16.gmra.mrb[0].mxu0 %v5439
  %v5925 = vpop.f32.mrb[0].mxu0
  %v5926 = vadd.f32 0.0, %v5925
  %v5927 = vpop.f32.mrb[0].mxu0
  %v5928 = vpop.f32.mrb[0].mxu0
  %v5929 = vadd.f32 0.0, %v5928
  %v5930 = vpop.f32.mrb[0].mxu0
  %5931 = vmatprep.mubr.bf16.mxu0 0
  %5932 = vmatmul.mubr.bf16.gmra.mrb[0].mxu0 %v5823
  %v5933 = vpop.f32.mrb[0].mxu0
  %v5934 = vadd.f32 0.0, %v5933
  %v5935 = vpop.f32.mrb[0].mxu0
  %v5936 = vpop.f32.mrb[0].mxu0
  %v5937 = vadd.f32 0.0, %v5936
  %v5938 = vpop.f32.mrb[0].mxu0
  %5939 = vmatprep.mubr.bf16.mxu0 0
  %5940 = vmatmul.mubr.bf16.gmra.mrb[0].mxu0 %v5037
  %v5941 = vpop.f32.mrb[0].mxu0
  %v5942 = vadd.f32 0.0, %v5941
  %v5943 = vpop.f32.mrb[0].mxu0
  %v5944 = vpop.f32.mrb[0].mxu0
  %v5945 = vadd.f32 0.0, %v5944
  %v5946 = vpop.f32.mrb[0].mxu0
  %5947 = vmatprep.mubr.bf16.mxu0 0
  %5948 = vmatmul.mubr.bf16.gmra.mrb[0].mxu0 %v5038
  %v5949 = vpop.f32.mrb[0].mxu0
  %v5950 = vadd.f32 0.0, %v5949
  %v5951 = vpop.f32.mrb[0].mxu0
  %v5952 = vpop.f32.mrb[0].mxu0
  %v5953 = vadd.f32 0.0, %v5952
  %v5954 = vpop.f32.mrb[0].mxu0
  %5955 = vmatprep.mubr.bf16.mxu0 0
  %5956 = vmatmul.mubr.bf16.gmra.mrb[0].mxu0 %v5440
  %v5957 = vpop.f32.mrb[0].mxu0
  %v5958 = vadd.f32 0.0, %v5957
  %v5959 = vpop.f32.mrb[0].mxu0
  %v5960 = vpop.f32.mrb[0].mxu0
  %v5961 = vadd.f32 0.0, %v5960
  %v5962 = vpop.f32.mrb[0].mxu0
  %5963 = vmatprep.mubr.bf16.mxu0 0
  %5964 = vmatmul.mubr.bf16.gmra.mrb[0].mxu0 %v5824
  %v5965 = vpop.f32.mrb[0].mxu0
  %v5966 = vadd.f32 0.0, %v5965
  %v5967 = vpop.f32.mrb[0].mxu0
  %v5968 = vpop.f32.mrb[0].mxu0
  %v5969 = vadd.f32 0.0, %v5968
  %v5970 = vpop.f32.mrb[0].mxu0
  %5971 = vdwg.mxu0
  %v5972 = vadd.f32 %v5780, %v5910
  %v5973 = vadd.f32 %v5781, %v5913
  %v5974 = vadd.f32 %v5782, %v5918
  %v5975 = vadd.f32 %v5783, %v5921
  %v5976 = vadd.f32 %v5784, %v5926
  %v5977 = vadd.f32 %v5785, %v5929
  %v5978 = vadd.f32 %v5786, %v5934
  %v5979 = vadd.f32 %v5787, %v5937
  %v5980 = vadd.f32 %v5788, %v5942
  %v5981 = vadd.f32 %v5789, %v5945
  %v5982 = vadd.f32 %v5790, %v5950
  %v5983 = vadd.f32 %v5791, %v5953
  %v5984 = vadd.f32 %v5792, %v5958
  %v5985 = vadd.f32 %v5793, %v5961
  %v5986 = vadd.f32 %v5794, %v5966
  %v5987 = vadd.f32 %v5795, %v5969
  %v5988 = vld [vmem:[%s5] sm:$0x1]
  %v5990 = vlaneseq
  %v5991 = vshrl.u32 %v5990, 7
  %v5992 = vsub.s32 0, %v5991
  %v5993 = vrot.slane %v5988, %v5992
  %v5995 = vadd.f32 %v5972, %v5993
  %v5996 = vadd.f32 %v5973, %v5993
  %v5997 = vadd.f32 %v5974, %v5993
  %v5998 = vadd.f32 %v5975, %v5993
  %v5999 = vadd.f32 %v5976, %v5993
  %v6000 = vadd.f32 %v5977, %v5993
  %v6001 = vadd.f32 %v5978, %v5993
  %v6002 = vadd.f32 %v5979, %v5993
  %v6003 = vadd.f32 %v5980, %v5993
  %v6004 = vadd.f32 %v5981, %v5993
  %v6005 = vadd.f32 %v5982, %v5993
  %v6006 = vadd.f32 %v5983, %v5993
  %v6007 = vadd.f32 %v5984, %v5993
  %v6008 = vadd.f32 %v5985, %v5993
  %v6009 = vadd.f32 %v5986, %v5993
  %v6010 = vadd.f32 %v5987, %v5993
  %6011 = vst [vmem:[%s6] sm:$0xff] %v5995
  %6012 = vst [vmem:[%s6 + $0x8] sm:$0xff] %v5996
  %6013 = vst [vmem:[%s6 + $0x10] sm:$0xff] %v5997
  %6014 = vst [vmem:[%s6 + $0x18] sm:$0xff] %v5998
  %6015 = vst [vmem:[%s6 + $0x20] sm:$0xff] %v5999
  %6016 = vst [vmem:[%s6 + $0x28] sm:$0xff] %v6000
  %6017 = vst [vmem:[%s6 + $0x30] sm:$0xff] %v6001
  %6018 = vst [vmem:[%s6 + $0x38] sm:$0xff] %v6002
  %6019 = vst [vmem:[%s6 + $0x40] sm:$0xff] %v6003
  %6020 = vst [vmem:[%s6 + $0x48] sm:$0xff] %v6004
  %6021 = vst [vmem:[%s6 + $0x50] sm:$0xff] %v6005
  %6022 = vst [vmem:[%s6 + $0x58] sm:$0xff] %v6006
  %6023 = vst [vmem:[%s6 + $0x60] sm:$0xff] %v6007
  %6024 = vst [vmem:[%s6 + $0x68] sm:$0xff] %v6008
  %6025 = vst [vmem:[%s6 + $0x70] sm:$0xff] %v6009
  %6026 = vst [vmem:[%s6 + $0x78] sm:$0xff] %v6010
  // Predicated region
  $region26: #{mod_inception_forward.6} parent=0 // pred_check
    _
  $region27: #{mod_inception_forward.6} parent=0 // pred_check_branch
    %6028 = sbr.rel (0) target = $region29
  $region28: #{mod_inception_forward.6} parent=0 // pred_region
    _
  $region29: #{mod_inception_forward.6} parent=0 // pred_fallthru
    _
  // Predicated region
  $region30: #{mod_inception_forward.6} parent=0 // pred_check
    _
  $region31: #{mod_inception_forward.6} parent=0 // pred_check_branch
    %6030 = sbr.rel (0) target = $region33
  $region32: #{mod_inception_forward.6} parent=0 // pred_region
    _
  $region33: #{mod_inception_forward.6} parent=0 // pred_fallthru
    _

</llo_original>
